<compile_context>
chip_gen: v6e
topology: v6e:2x2x1
jax: 0.10.0
libtpu: 0.0.40
codegen_flags: <defaults>
</compile_context>

<pallas_src>
import functools

import numpy as np
import jax
import jax.numpy as jnp
from jax import lax
from jax.experimental import pallas as pl
from jax.experimental.pallas import tpu as pltpu

_VMEM_LIMIT = 32 * 1024 * 1024  # explicit scoped-VMEM budget (safe on v5e/v6e/v7x)


# ----------------------------------------------------------------------------
# Row-tiling helpers (large tiles, cdiv grid, padded remainder)
# ----------------------------------------------------------------------------
def _round_up(v, m):
    return ((v + m - 1) // m) * m


def _row_tiling(M, max_tile=2048):
    """Row tile (multiple of 8), padded row extent, grid size.

    Large tiles amortize the ~0.35us per-grid-step overhead; for M > 256 we
    always emit >= 2 grid steps so the 'parallel' axis can use both v7x TCs.
    """
    if M > 256:
        tm = min(max_tile, _round_up((M + 1) // 2, 8))
    else:
        tm = _round_up(M, 8)
    m_pad = _round_up(M, tm)
    return tm, m_pad, m_pad // tm


def _pad_rows(x, m_pad):
    if x.shape[0] == m_pad:
        return x
    return jnp.pad(x, ((0, m_pad - x.shape[0]),) + ((0, 0),) * (x.ndim - 1))


# ----------------------------------------------------------------------------
# Pallas kernels
# ----------------------------------------------------------------------------
def _mm_kernel(x_ref, w_ref, o_ref):
    o_ref[...] = jnp.dot(x_ref[...], w_ref[...],
                         preferred_element_type=jnp.float32).astype(o_ref.dtype)


def _mm_bias_kernel(x_ref, w_ref, b_ref, o_ref):
    o_ref[...] = (jnp.dot(x_ref[...], w_ref[...],
                          preferred_element_type=jnp.float32)
                  + b_ref[...]).astype(o_ref.dtype)


def pallas_matmul(x, w, b=None, max_tile=2048):
    """x:(M,K) @ w:(K,N) [+ b:(1,N)] -> (M,N); rows tiled, remainder padded."""
    M, K = x.shape
    N = w.shape[1]
    tm, m_pad, grid = _row_tiling(M, max_tile)
    xp = _pad_rows(x, m_pad)
    x_spec = pl.BlockSpec((tm, K), lambda i: (i, 0))
    w_spec = pl.BlockSpec((K, N), lambda i: (0, 0))
    if b is None:
        kernel, args, in_specs = _mm_kernel, (xp, w), [x_spec, w_spec]
    else:
        kernel, args = _mm_bias_kernel, (xp, w, b)
        in_specs = [x_spec, w_spec, pl.BlockSpec((1, N), lambda i: (0, 0))]
    out = pl.pallas_call(
        kernel,
        out_shape=jax.ShapeDtypeStruct((m_pad, N), jnp.float32),
        grid=(grid,),
        in_specs=in_specs,
        out_specs=pl.BlockSpec((tm, N), lambda i: (i, 0)),
        compiler_params=pltpu.CompilerParams(
            dimension_semantics=("parallel",), vmem_limit_bytes=_VMEM_LIMIT),
    )(*args)
    return out if m_pad == M else out[:M]


def _pool7x3_kernel(p_ref, o_ref, *, hp, wp):
    # p_ref: (9, hp+2, wp+2, f) = the 9 stride-3 phase views of one batch item.
    # Running max over the 49 (phase, shift) combos; all slices are unit
    # stride, channels stay in the lane dim, nothing is 49x-expanded in HBM.
    acc = None
    for r in range(3):
        for s in range(3):
            idx = r * 3 + s
            for qi in range(3 if r == 0 else 2):      # 3*qi + r <= 6
                for qj in range(3 if s == 0 else 2):  # 3*qj + s <= 6
                    v = p_ref[idx, qi:qi + hp, qj:qj + wp, :]
                    acc = v if acc is None else jnp.maximum(acc, v)
    o_ref[0] = acc


def pallas_maxpool7x3(c1):
    """F.max_pool2d(kernel=7, stride=3) on NHWC c1: (B, h2, w2, f)."""
    B, h2, w2, f = c1.shape
    hp = (h2 - 7) // 3 + 1
    wp = (w2 - 7) // 3 + 1
    # Phase decimation: window offset d = 3*q + r, r in {0,1,2}.  The nine
    # decimated views together hold exactly the input data (1x, not 49x).
    phases = []
    for r in range(3):
        for s in range(3):
            d = c1[:, r::3, s::3, :][:, :hp + 2, :wp + 2, :]
            ph, pw = hp + 2 - d.shape[1], wp + 2 - d.shape[2]
            if ph or pw:  # defensive padding; never read by valid shifts
                d = jnp.pad(d, ((0, 0), (0, ph), (0, pw), (0, 0)),
                            constant_values=-jnp.inf)
            phases.append(d)
    P = jnp.stack(phases, axis=1).reshape(B * 9, hp + 2, wp + 2, f)

    kernel = functools.partial(_pool7x3_kernel, hp=hp, wp=wp)
    return pl.pallas_call(
        kernel,
        out_shape=jax.ShapeDtypeStruct((B, hp, wp, f), jnp.float32),
        grid=(B,),
        in_specs=[pl.BlockSpec((9, hp + 2, wp + 2, f), lambda b: (b, 0, 0, 0))],
        out_specs=pl.BlockSpec((1, hp, wp, f), lambda b: (b, 0, 0, 0)),
        compiler_params=pltpu.CompilerParams(
            dimension_semantics=("parallel",), vmem_limit_bytes=_VMEM_LIMIT),
    )(P)


def _esa_tail_kernel(x_ref, c1_ref, c3_ref, wf_ref, bf_ref, w4_ref, b4_ref, o_ref):
    # conv_f (1x1) is computed in-kernel so cf never round-trips HBM.
    cf = jnp.dot(c1_ref[...], wf_ref[...],
                 preferred_element_type=jnp.float32) + bf_ref[...]
    s = c3_ref[...] + cf
    logits = jnp.dot(s, w4_ref[...],
                     preferred_element_type=jnp.float32) + b4_ref[...]
    o_ref[...] = (x_ref[...] * jax.nn.sigmoid(logits)).astype(o_ref.dtype)


def pallas_esa_tail(x_flat, c1_flat, c3_flat, wf, bf, w4, b4):
    """Fused conv_f + (c3 + cf) + conv4 + sigmoid + x*m."""
    M, Cn = x_flat.shape
    f = c1_flat.shape[1]
    tm, m_pad, grid = _row_tiling(M)
    xp = _pad_rows(x_flat, m_pad)
    c1p = _pad_rows(c1_flat, m_pad)
    c3p = _pad_rows(c3_flat, m_pad)
    out = pl.pallas_call(
        _esa_tail_kernel,
        out_shape=jax.ShapeDtypeStruct((m_pad, Cn), jnp.float32),
        grid=(grid,),
        in_specs=[pl.BlockSpec((tm, Cn), lambda i: (i, 0)),
                  pl.BlockSpec((tm, f), lambda i: (i, 0)),
                  pl.BlockSpec((tm, f), lambda i: (i, 0)),
                  pl.BlockSpec((f, f), lambda i: (0, 0)),
                  pl.BlockSpec((1, f), lambda i: (0, 0)),
                  pl.BlockSpec((f, Cn), lambda i: (0, 0)),
                  pl.BlockSpec((1, Cn), lambda i: (0, 0))],
        out_specs=pl.BlockSpec((tm, Cn), lambda i: (i, 0)),
        compiler_params=pltpu.CompilerParams(
            dimension_semantics=("parallel",), vmem_limit_bytes=_VMEM_LIMIT),
    )(xp, c1p, c3p, wf, bf, w4, b4)
    return out if m_pad == M else out[:M]


# ----------------------------------------------------------------------------
# Glue (reshape / im2col / interpolation matrices) in plain JAX / numpy
# ----------------------------------------------------------------------------
def im2col(x_nhwc, k, stride, pad):
    if pad > 0:
        x_nhwc = jnp.pad(x_nhwc, ((0, 0), (pad, pad), (pad, pad), (0, 0)))
    B, H, W, C = x_nhwc.shape
    oh = (H - k) // stride + 1
    ow = (W - k) // stride + 1
    cols = []
    for i in range(k):
        for j in range(k):
            cols.append(x_nhwc[:, i:i + stride * (oh - 1) + 1:stride,
                               j:j + stride * (ow - 1) + 1:stride, :])
    return jnp.concatenate(cols, axis=-1), oh, ow  # (B, oh, ow, k*k*C)


def bilinear_matrix_np(in_size, out_size):
    # PyTorch bilinear, align_corners=False (half-pixel centers, clamp at 0).
    # Built with numpy so it becomes a compile-time constant inside jit.
    i = np.arange(out_size, dtype=np.float32)
    src = (i + np.float32(0.5)) * np.float32(in_size / out_size) - np.float32(0.5)
    src = np.maximum(src, np.float32(0.0))
    i0f = np.floor(src)
    l1 = (src - i0f).astype(np.float32)
    i0 = np.minimum(i0f.astype(np.int64), in_size - 1)
    i1 = np.minimum(i0 + 1, in_size - 1)
    Wm = np.zeros((out_size, in_size), np.float32)
    rows = np.arange(out_size)
    np.add.at(Wm, (rows, i0), (1.0 - l1).astype(np.float32))
    np.add.at(Wm, (rows, i1), l1)
    return jnp.asarray(Wm)


def _w_oihw_to_mat(w):
    # (O, I, kh, kw) -> (kh*kw*I, O), matching im2col patch layout
    O, I, kh, kw = w.shape
    return jnp.transpose(w, (2, 3, 1, 0)).reshape(kh * kw * I, O)


# ----------------------------------------------------------------------------
# ESA forward (Pallas path)
# ----------------------------------------------------------------------------
def esa_forward(x_nchw, p):
    x = jnp.transpose(x_nchw, (0, 2, 3, 1)).astype(jnp.float32)  # NHWC
    B, H, W, Cn = x.shape
    f = p["w1"].shape[0]
    M = B * H * W
    x_flat = x.reshape(M, Cn)

    # conv1: 1x1, n_feats -> f
    c1_flat = pallas_matmul(x_flat, p["w1"].reshape(f, Cn).T, p["b1"][None, :])
    c1_ = c1_flat.reshape(B, H, W, f)

    # conv2: 3x3, stride 2, pad 0 (im2col in glue, matmul on MXU)
    p2, h2, w2 = im2col(c1_, 3, 2, 0)
    c1 = pallas_matmul(p2.reshape(B * h2 * w2, 9 * f),
                       _w_oihw_to_mat(p["w2"]), p["b2"][None, :]
                       ).reshape(B, h2, w2, f)

    # max_pool2d kernel=7 stride=3 (phase-decimated Pallas kernel)
    v_max = pallas_maxpool7x3(c1)                                 # (B, hp, wp, f)

    # conv3: 3x3, pad 1
    p3, h3, w3 = im2col(v_max, 3, 1, 1)
    c3 = pallas_matmul(p3.reshape(B * h3 * w3, 9 * f),
                       _w_oihw_to_mat(p["w3"]), p["b3"][None, :]
                       ).reshape(B, h3, w3, f)

    # bilinear upsample to (H, W): separable, two bias-free Pallas matmuls
    Wh = bilinear_matrix_np(h3, H)                                # (H, h3)
    Ww = bilinear_matrix_np(w3, W)                                # (W, w3)
    t = jnp.transpose(c3, (1, 0, 2, 3)).reshape(h3, B * w3 * f)
    t = pallas_matmul(Wh, t)                                      # (H, B*w3*f)
    t = jnp.transpose(t.reshape(H, B, w3, f), (2, 1, 0, 3)).reshape(w3, B * H * f)
    t = pallas_matmul(Ww, t)                                      # (W, B*H*f)
    c3u = jnp.transpose(t.reshape(W, B, H, f), (1, 2, 0, 3))      # (B, H, W, f)

    # fused: conv_f (1x1) + add + conv4 (1x1) + sigmoid + x*m
    out_flat = pallas_esa_tail(x_flat, c1_flat, c3u.reshape(M, f),
                               p["wf"].reshape(f, f).T, p["bf"][None, :],
                               p["w4"].reshape(Cn, f).T, p["b4"][None, :])
    return jnp.transpose(out_flat.reshape(B, H, W, Cn), (0, 3, 1, 2))


# ----------------------------------------------------------------------------
# Pure-JAX reference (for correctness check)
# ----------------------------------------------------------------------------
def _conv_ref(x, w, b, stride, pad):
    dn = ("NCHW", "OIHW", "NCHW")
    y = lax.conv_general_dilated(x, w, (stride, stride), pad,
                                 dimension_numbers=dn,
                                 precision=lax.Precision.HIGHEST)
    return y + b[None, :, None, None]


def _interp_coefs_ref(in_size, out_size):
    i = jnp.arange(out_size, dtype=jnp.float32)
    src = (i + 0.5) * (in_size / out_size) - 0.5
    src = jnp.maximum(src, 0.0)
    i0f = jnp.floor(src)
    l1 = src - i0f
    i0 = jnp.minimum(i0f.astype(jnp.int32), in_size - 1)
    i1 = jnp.minimum(i0 + 1, in_size - 1)
    return i0, i1, 1.0 - l1, l1


def _bilinear_ref(x, Hout, Wout):
    B, C, h, w = x.shape
    r0, r1, a0, a1 = _interp_coefs_ref(h, Hout)
    c0, c1, b0, b1 = _interp_coefs_ref(w, Wout)
    top = (x[:, :, r0, :] * a0[None, None, :, None]
           + x[:, :, r1, :] * a1[None, None, :, None])
    return top[:, :, :, c0] * b0 + top[:, :, :, c1] * b1


def esa_ref(x, p):
    c1_ = _conv_ref(x, p["w1"], p["b1"], 1, "VALID")
    c1 = _conv_ref(c1_, p["w2"], p["b2"], 2, "VALID")
    v_max = lax.reduce_window(c1, -jnp.inf, lax.max, (1, 1, 7, 7), (1, 1, 3, 3), "VALID")
    c3 = _conv_ref(v_max, p["w3"], p["b3"], 1, ((1, 1), (1, 1)))
    c3 = _bilinear_ref(c3, x.shape[2], x.shape[3])
    cf = _conv_ref(c1_, p["wf"], p["bf"], 1, "VALID")
    c4 = _conv_ref(c3 + cf, p["w4"], p["b4"], 1, "VALID")
    return x * jax.nn.sigmoid(c4)


# ----------------------------------------------------------------------------
if __name__ == "__main__":
    n_feats, f = 16, 8
    B, H, W = 2, 32, 32

    key = jax.random.PRNGKey(0)
    ks = jax.random.split(key, 12)
    params = {
        "w1": 0.1 * jax.random.normal(ks[0], (f, n_feats, 1, 1), jnp.float32),
        "b1": 0.05 * jax.random.normal(ks[1], (f,), jnp.float32),
        "wf": 0.1 * jax.random.normal(ks[2], (f, f, 1, 1), jnp.float32),
        "bf": 0.05 * jax.random.normal(ks[3], (f,), jnp.float32),
        "w2": 0.1 * jax.random.normal(ks[4], (f, f, 3, 3), jnp.float32),
        "b2": 0.05 * jax.random.normal(ks[5], (f,), jnp.float32),
        "w3": 0.1 * jax.random.normal(ks[6], (f, f, 3, 3), jnp.float32),
        "b3": 0.05 * jax.random.normal(ks[7], (f,), jnp.float32),
        "w4": 0.1 * jax.random.normal(ks[8], (n_feats, f, 1, 1), jnp.float32),
        "b4": 0.05 * jax.random.normal(ks[9], (n_feats,), jnp.float32),
    }
    x = jax.random.normal(ks[10], (B, n_feats, H, W), jnp.float32)

    out = jax.jit(esa_forward)(x, params)
    out = jax.block_until_ready(out)

    ref = jax.block_until_ready(esa_ref(x, params))
    err = float(jnp.max(jnp.abs(out - ref)))
    # tolerance tightened 15x vs. previous version (covers matmul-precision modes)
    assert out.shape == x.shape and err < 2e-3, f"max abs diff too large: {err}"

    print("KERNEL_OK")
</pallas_src>

<mosaic_0001>
module attributes {stable_mosaic.version = 11 : i64} {
  func.func @_mm_bias_kernel(%arg0: i32, %arg1: memref<1024x16xf32, #tpu.memory_space<vmem>>, %arg2: memref<16x8xf32, #tpu.memory_space<vmem>>, %arg3: memref<1x8xf32, #tpu.memory_space<vmem>>, %arg4: memref<1024x8xf32, #tpu.memory_space<vmem>>) attributes {dimension_semantics = [#tpu.dimension_semantics<parallel>], iteration_bounds = array<i64: 2>, scalar_prefetch = 0 : i64, scratch_operands = 0 : i64, tpu.core_type = #tpu.core_type<tc>, window_params = [{transform_indices = @transform_0, window_bounds = array<i64: 1024, 16>}, {pipeline_mode = #tpu.pipeline_mode<synchronous>, transform_indices = @transform_1, window_bounds = array<i64: 16, 8>}, {pipeline_mode = #tpu.pipeline_mode<synchronous>, transform_indices = @transform_2, window_bounds = array<i64: 1, 8>}, {transform_indices = @transform_3, window_bounds = array<i64: 1024, 8>}]} {
    %c0 = arith.constant 0 : index
    %c0_0 = arith.constant 0 : index
    %0 = vector.load %arg1[%c0, %c0_0] : memref<1024x16xf32, #tpu.memory_space<vmem>>, vector<1024x16xf32>
    %c0_1 = arith.constant 0 : index
    %c0_2 = arith.constant 0 : index
    %1 = vector.load %arg2[%c0_1, %c0_2] : memref<16x8xf32, #tpu.memory_space<vmem>>, vector<16x8xf32>
    %cst = arith.constant dense<0.000000e+00> : vector<1024x8xf32>
    %2 = tpu.matmul %0, %1, %cst {dimension_numbers = #tpu.dot_dimension_numbers<[1], [0], [0], [1], [0, 0, 1, 1], [], []>} : vector<1024x16xf32>, vector<16x8xf32>, vector<1024x8xf32> -> vector<1024x8xf32>
    %c0_3 = arith.constant 0 : index
    %c0_4 = arith.constant 0 : index
    %3 = vector.load %arg3[%c0_3, %c0_4] : memref<1x8xf32, #tpu.memory_space<vmem>>, vector<1x8xf32>
    %4 = vector.broadcast %3 : vector<1x8xf32> to vector<1024x8xf32>
    %5 = arith.addf %2, %4 : vector<1024x8xf32>
    %c0_5 = arith.constant 0 : index
    %c0_6 = arith.constant 0 : index
    %6 = vector.load %arg4[%c0_5, %c0_6] : memref<1024x8xf32, #tpu.memory_space<vmem>>, vector<1024x8xf32>
    tpu.vector_store %arg4[%c0_5, %c0_6], %5 {strides = array<i32>} : memref<1024x8xf32, #tpu.memory_space<vmem>>, vector<1024x8xf32>,
    return
  }
  func.func @transform_0(%arg0: i32) -> (i32, i32) {
    %c0_i32 = arith.constant 0 : i32
    %c0_i32_0 = arith.constant 0 : i32
    return %arg0, %c0_i32 : i32, i32
  }
  func.func @transform_1(%arg0: i32) -> (i32, i32) {
    %c0_i32 = arith.constant 0 : i32
    %c0_i32_0 = arith.constant 0 : i32
    %c0_i32_1 = arith.constant 0 : i32
    return %c0_i32, %c0_i32_0 : i32, i32
  }
  func.func @transform_2(%arg0: i32) -> (i32, i32) {
    %c0_i32 = arith.constant 0 : i32
    %c0_i32_0 = arith.constant 0 : i32
    %c0_i32_1 = arith.constant 0 : i32
    return %c0_i32, %c0_i32_0 : i32, i32
  }
  func.func @transform_3(%arg0: i32) -> (i32, i32) {
    %c0_i32 = arith.constant 0 : i32
    %c0_i32_0 = arith.constant 0 : i32
    return %arg0, %c0_i32 : i32, i32
  }
}

module attributes {stable_mosaic.version = 11 : i64} {
  func.func @_mm_bias_kernel(%arg0: i32, %arg1: memref<232x72xf32, #tpu.memory_space<vmem>>, %arg2: memref<72x8xf32, #tpu.memory_space<vmem>>, %arg3: memref<1x8xf32, #tpu.memory_space<vmem>>, %arg4: memref<232x8xf32, #tpu.memory_space<vmem>>) attributes {dimension_semantics = [#tpu.dimension_semantics<parallel>], iteration_bounds = array<i64: 2>, scalar_prefetch = 0 : i64, scratch_operands = 0 : i64, tpu.core_type = #tpu.core_type<tc>, window_params = [{transform_indices = @transform_0, window_bounds = array<i64: 232, 72>}, {pipeline_mode = #tpu.pipeline_mode<synchronous>, transform_indices = @transform_1, window_bounds = array<i64: 72, 8>}, {pipeline_mode = #tpu.pipeline_mode<synchronous>, transform_indices = @transform_2, window_bounds = array<i64: 1, 8>}, {transform_indices = @transform_3, window_bounds = array<i64: 232, 8>}]} {
    %c0 = arith.constant 0 : index
    %c0_0 = arith.constant 0 : index
    %0 = vector.load %arg1[%c0, %c0_0] : memref<232x72xf32, #tpu.memory_space<vmem>>, vector<232x72xf32>
    %c0_1 = arith.constant 0 : index
    %c0_2 = arith.constant 0 : index
    %1 = vector.load %arg2[%c0_1, %c0_2] : memref<72x8xf32, #tpu.memory_space<vmem>>, vector<72x8xf32>
    %cst = arith.constant dense<0.000000e+00> : vector<232x8xf32>
    %2 = tpu.matmul %0, %1, %cst {dimension_numbers = #tpu.dot_dimension_numbers<[1], [0], [0], [1], [0, 0, 1, 1], [], []>} : vector<232x72xf32>, vector<72x8xf32>, vector<232x8xf32> -> vector<232x8xf32>
    %c0_3 = arith.constant 0 : index
    %c0_4 = arith.constant 0 : index
    %3 = vector.load %arg3[%c0_3, %c0_4] : memref<1x8xf32, #tpu.memory_space<vmem>>, vector<1x8xf32>
    %4 = vector.broadcast %3 : vector<1x8xf32> to vector<232x8xf32>
    %5 = arith.addf %2, %4 : vector<232x8xf32>
    %c0_5 = arith.constant 0 : index
    %c0_6 = arith.constant 0 : index
    %6 = vector.load %arg4[%c0_5, %c0_6] : memref<232x8xf32, #tpu.memory_space<vmem>>, vector<232x8xf32>
    tpu.vector_store %arg4[%c0_5, %c0_6], %5 {strides = array<i32>} : memref<232x8xf32, #tpu.memory_space<vmem>>, vector<232x8xf32>,
    return
  }
  func.func @transform_0(%arg0: i32) -> (i32, i32) {
    %c0_i32 = arith.constant 0 : i32
    %c0_i32_0 = arith.constant 0 : i32
    return %arg0, %c0_i32 : i32, i32
  }
  func.func @transform_1(%arg0: i32) -> (i32, i32) {
    %c0_i32 = arith.constant 0 : i32
    %c0_i32_0 = arith.constant 0 : i32
    %c0_i32_1 = arith.constant 0 : i32
    return %c0_i32, %c0_i32_0 : i32, i32
  }
  func.func @transform_2(%arg0: i32) -> (i32, i32) {
    %c0_i32 = arith.constant 0 : i32
    %c0_i32_0 = arith.constant 0 : i32
    %c0_i32_1 = arith.constant 0 : i32
    return %c0_i32, %c0_i32_0 : i32, i32
  }
  func.func @transform_3(%arg0: i32) -> (i32, i32) {
    %c0_i32 = arith.constant 0 : i32
    %c0_i32_0 = arith.constant 0 : i32
    return %arg0, %c0_i32 : i32, i32
  }
}

module attributes {stable_mosaic.version = 11 : i64} {
  func.func @_pool7x3_kernel(%arg0: i32, %arg1: memref<9x5x5x8xf32, #tpu.memory_space<vmem>>, %arg2: memref<1x3x3x8xf32, #tpu.memory_space<vmem>>) attributes {dimension_semantics = [#tpu.dimension_semantics<parallel>], iteration_bounds = array<i64: 2>, scalar_prefetch = 0 : i64, scratch_operands = 0 : i64, tpu.core_type = #tpu.core_type<tc>, window_params = [{transform_indices = @transform_0, window_bounds = array<i64: 9, 5, 5, 8>}, {transform_indices = @transform_1, window_bounds = array<i64: 1, 3, 3, 8>}]} {
    %c0 = arith.constant 0 : index
    %c0_0 = arith.constant 0 : index
    %c0_1 = arith.constant 0 : index
    %c0_2 = arith.constant 0 : index
    %0 = vector.load %arg1[%c0, %c0_0, %c0_1, %c0_2] : memref<9x5x5x8xf32, #tpu.memory_space<vmem>>, vector<1x3x3x8xf32>
    %1 = vector.shape_cast %0 : vector<1x3x3x8xf32> to vector<3x3x8xf32>
    %c0_3 = arith.constant 0 : index
    %c0_4 = arith.constant 0 : index
    %c1 = arith.constant 1 : index
    %c0_5 = arith.constant 0 : index
    %2 = vector.load %arg1[%c0_3, %c0_4, %c1, %c0_5] : memref<9x5x5x8xf32, #tpu.memory_space<vmem>>, vector<1x3x3x8xf32>
    %3 = vector.shape_cast %2 : vector<1x3x3x8xf32> to vector<3x3x8xf32>
    %4 = arith.maximumf %1, %3 : vector<3x3x8xf32>
    %c0_6 = arith.constant 0 : index
    %c0_7 = arith.constant 0 : index
    %c2 = arith.constant 2 : index
    %c0_8 = arith.constant 0 : index
    %5 = vector.load %arg1[%c0_6, %c0_7, %c2, %c0_8] : memref<9x5x5x8xf32, #tpu.memory_space<vmem>>, vector<1x3x3x8xf32>
    %6 = vector.shape_cast %5 : vector<1x3x3x8xf32> to vector<3x3x8xf32>
    %7 = arith.maximumf %4, %6 : vector<3x3x8xf32>
    %c0_9 = arith.constant 0 : index
    %c1_10 = arith.constant 1 : index
    %c0_11 = arith.constant 0 : index
    %c0_12 = arith.constant 0 : index
    %8 = vector.load %arg1[%c0_9, %c1_10, %c0_11, %c0_12] : memref<9x5x5x8xf32, #tpu.memory_space<vmem>>, vector<1x3x3x8xf32>
    %9 = vector.shape_cast %8 : vector<1x3x3x8xf32> to vector<3x3x8xf32>
    %10 = arith.maximumf %7, %9 : vector<3x3x8xf32>
    %c0_13 = arith.constant 0 : index
    %c1_14 = arith.constant 1 : index
    %c1_15 = arith.constant 1 : index
    %c0_16 = arith.constant 0 : index
    %11 = vector.load %arg1[%c0_13, %c1_14, %c1_15, %c0_16] : memref<9x5x5x8xf32, #tpu.memory_space<vmem>>, vector<1x3x3x8xf32>
    %12 = vector.shape_cast %11 : vector<1x3x3x8xf32> to vector<3x3x8xf32>
    %13 = arith.maximumf %10, %12 : vector<3x3x8xf32>
    %c0_17 = arith.constant 0 : index
    %c1_18 = arith.constant 1 : index
    %c2_19 = arith.constant 2 : index
    %c0_20 = arith.constant 0 : index
    %14 = vector.load %arg1[%c0_17, %c1_18, %c2_19, %c0_20] : memref<9x5x5x8xf32, #tpu.memory_space<vmem>>, vector<1x3x3x8xf32>
    %15 = vector.shape_cast %14 : vector<1x3x3x8xf32> to vector<3x3x8xf32>
    %16 = arith.maximumf %13, %15 : vector<3x3x8xf32>
    %c0_21 = arith.constant 0 : index
    %c2_22 = arith.constant 2 : index
    %c0_23 = arith.constant 0 : index
    %c0_24 = arith.constant 0 : index
    %17 = vector.load %arg1[%c0_21, %c2_22, %c0_23, %c0_24] : memref<9x5x5x8xf32, #tpu.memory_space<vmem>>, vector<1x3x3x8xf32>
    %18 = vector.shape_cast %17 : vector<1x3x3x8xf32> to vector<3x3x8xf32>
    %19 = arith.maximumf %16, %18 : vector<3x3x8xf32>
    %c0_25 = arith.constant 0 : index
    %c2_26 = arith.constant 2 : index
    %c1_27 = arith.constant 1 : index
    %c0_28 = arith.constant 0 : index
    %20 = vector.load %arg1[%c0_25, %c2_26, %c1_27, %c0_28] : memref<9x5x5x8xf32, #tpu.memory_space<vmem>>, vector<1x3x3x8xf32>
    %21 = vector.shape_cast %20 : vector<1x3x3x8xf32> to vector<3x3x8xf32>
    %22 = arith.maximumf %19, %21 : vector<3x3x8xf32>
    %c0_29 = arith.constant 0 : index
    %c2_30 = arith.constant 2 : index
    %c2_31 = arith.constant 2 : index
    %c0_32 = arith.constant 0 : index
    %23 = vector.load %arg1[%c0_29, %c2_30, %c2_31, %c0_32] : memref<9x5x5x8xf32, #tpu.memory_space<vmem>>, vector<1x3x3x8xf32>
    %24 = vector.shape_cast %23 : vector<1x3x3x8xf32> to vector<3x3x8xf32>
    %25 = arith.maximumf %22, %24 : vector<3x3x8xf32>
    %c1_33 = arith.constant 1 : index
    %c0_34 = arith.constant 0 : index
    %c0_35 = arith.constant 0 : index
    %c0_36 = arith.constant 0 : index
    %26 = vector.load %arg1[%c1_33, %c0_34, %c0_35, %c0_36] : memref<9x5x5x8xf32, #tpu.memory_space<vmem>>, vector<1x3x3x8xf32>
    %27 = vector.shape_cast %26 : vector<1x3x3x8xf32> to vector<3x3x8xf32>
    %28 = arith.maximumf %25, %27 : vector<3x3x8xf32>
    %c1_37 = arith.constant 1 : index
    %c0_38 = arith.constant 0 : index
    %c1_39 = arith.constant 1 : index
    %c0_40 = arith.constant 0 : index
    %29 = vector.load %arg1[%c1_37, %c0_38, %c1_39, %c0_40] : memref<9x5x5x8xf32, #tpu.memory_space<vmem>>, vector<1x3x3x8xf32>
    %30 = vector.shape_cast %29 : vector<1x3x3x8xf32> to vector<3x3x8xf32>
    %31 = arith.maximumf %28, %30 : vector<3x3x8xf32>
    %c1_41 = arith.constant 1 : index
    %c1_42 = arith.constant 1 : index
    %c0_43 = arith.constant 0 : index
    %c0_44 = arith.constant 0 : index
    %32 = vector.load %arg1[%c1_41, %c1_42, %c0_43, %c0_44] : memref<9x5x5x8xf32, #tpu.memory_space<vmem>>, vector<1x3x3x8xf32>
    %33 = vector.shape_cast %32 : vector<1x3x3x8xf32> to vector<3x3x8xf32>
    %34 = arith.maximumf %31, %33 : vector<3x3x8xf32>
    %c1_45 = arith.constant 1 : index
    %c1_46 = arith.constant 1 : index
    %c1_47 = arith.constant 1 : index
    %c0_48 = arith.constant 0 : index
    %35 = vector.load %arg1[%c1_45, %c1_46, %c1_47, %c0_48] : memref<9x5x5x8xf32, #tpu.memory_space<vmem>>, vector<1x3x3x8xf32>
    %36 = vector.shape_cast %35 : vector<1x3x3x8xf32> to vector<3x3x8xf32>
    %37 = arith.maximumf %34, %36 : vector<3x3x8xf32>
    %c1_49 = arith.constant 1 : index
    %c2_50 = arith.constant 2 : index
    %c0_51 = arith.constant 0 : index
    %c0_52 = arith.constant 0 : index
    %38 = vector.load %arg1[%c1_49, %c2_50, %c0_51, %c0_52] : memref<9x5x5x8xf32, #tpu.memory_space<vmem>>, vector<1x3x3x8xf32>
    %39 = vector.shape_cast %38 : vector<1x3x3x8xf32> to vector<3x3x8xf32>
    %40 = arith.maximumf %37, %39 : vector<3x3x8xf32>
    %c1_53 = arith.constant 1 : index
    %c2_54 = arith.constant 2 : index
    %c1_55 = arith.constant 1 : index
    %c0_56 = arith.constant 0 : index
    %41 = vector.load %arg1[%c1_53, %c2_54, %c1_55, %c0_56] : memref<9x5x5x8xf32, #tpu.memory_space<vmem>>, vector<1x3x3x8xf32>
    %42 = vector.shape_cast %41 : vector<1x3x3x8xf32> to vector<3x3x8xf32>
    %43 = arith.maximumf %40, %42 : vector<3x3x8xf32>
    %c2_57 = arith.constant 2 : index
    %c0_58 = arith.constant 0 : index
    %c0_59 = arith.constant 0 : index
    %c0_60 = arith.constant 0 : index
    %44 = vector.load %arg1[%c2_57, %c0_58, %c0_59, %c0_60] : memref<9x5x5x8xf32, #tpu.memory_space<vmem>>, vector<1x3x3x8xf32>
    %45 = vector.shape_cast %44 : vector<1x3x3x8xf32> to vector<3x3x8xf32>
    %46 = arith.maximumf %43, %45 : vector<3x3x8xf32>
    %c2_61 = arith.constant 2 : index
    %c0_62 = arith.constant 0 : index
    %c1_63 = arith.constant 1 : index
    %c0_64 = arith.constant 0 : index
    %47 = vector.load %arg1[%c2_61, %c0_62, %c1_63, %c0_64] : memref<9x5x5x8xf32, #tpu.memory_space<vmem>>, vector<1x3x3x8xf32>
    %48 = vector.shape_cast %47 : vector<1x3x3x8xf32> to vector<3x3x8xf32>
    %49 = arith.maximumf %46, %48 : vector<3x3x8xf32>
    %c2_65 = arith.constant 2 : index
    %c1_66 = arith.constant 1 : index
    %c0_67 = arith.constant 0 : index
    %c0_68 = arith.constant 0 : index
    %50 = vector.load %arg1[%c2_65, %c1_66, %c0_67, %c0_68] : memref<9x5x5x8xf32, #tpu.memory_space<vmem>>, vector<1x3x3x8xf32>
    %51 = vector.shape_cast %50 : vector<1x3x3x8xf32> to vector<3x3x8xf32>
    %52 = arith.maximumf %49, %51 : vector<3x3x8xf32>
    %c2_69 = arith.constant 2 : index
    %c1_70 = arith.constant 1 : index
    %c1_71 = arith.constant 1 : index
    %c0_72 = arith.constant 0 : index
    %53 = vector.load %arg1[%c2_69, %c1_70, %c1_71, %c0_72] : memref<9x5x5x8xf32, #tpu.memory_space<vmem>>, vector<1x3x3x8xf32>
    %54 = vector.shape_cast %53 : vector<1x3x3x8xf32> to vector<3x3x8xf32>
    %55 = arith.maximumf %52, %54 : vector<3x3x8xf32>
    %c2_73 = arith.constant 2 : index
    %c2_74 = arith.constant 2 : index
    %c0_75 = arith.constant 0 : index
    %c0_76 = arith.constant 0 : index
    %56 = vector.load %arg1[%c2_73, %c2_74, %c0_75, %c0_76] : memref<9x5x5x8xf32, #tpu.memory_space<vmem>>, vector<1x3x3x8xf32>
    %57 = vector.shape_cast %56 : vector<1x3x3x8xf32> to vector<3x3x8xf32>
    %58 = arith.maximumf %55, %57 : vector<3x3x8xf32>
    %c2_77 = arith.constant 2 : index
    %c2_78 = arith.constant 2 : index
    %c1_79 = arith.constant 1 : index
    %c0_80 = arith.constant 0 : index
    %59 = vector.load %arg1[%c2_77, %c2_78, %c1_79, %c0_80] : memref<9x5x5x8xf32, #tpu.memory_space<vmem>>, vector<1x3x3x8xf32>
    %60 = vector.shape_cast %59 : vector<1x3x3x8xf32> to vector<3x3x8xf32>
    %61 = arith.maximumf %58, %60 : vector<3x3x8xf32>
    %c3 = arith.constant 3 : index
    %c0_81 = arith.constant 0 : index
    %c0_82 = arith.constant 0 : index
    %c0_83 = arith.constant 0 : index
    %62 = vector.load %arg1[%c3, %c0_81, %c0_82, %c0_83] : memref<9x5x5x8xf32, #tpu.memory_space<vmem>>, vector<1x3x3x8xf32>
    %63 = vector.shape_cast %62 : vector<1x3x3x8xf32> to vector<3x3x8xf32>
    %64 = arith.maximumf %61, %63 : vector<3x3x8xf32>
    %c3_84 = arith.constant 3 : index
    %c0_85 = arith.constant 0 : index
    %c1_86 = arith.constant 1 : index
    %c0_87 = arith.constant 0 : index
    %65 = vector.load %arg1[%c3_84, %c0_85, %c1_86, %c0_87] : memref<9x5x5x8xf32, #tpu.memory_space<vmem>>, vector<1x3x3x8xf32>
    %66 = vector.shape_cast %65 : vector<1x3x3x8xf32> to vector<3x3x8xf32>
    %67 = arith.maximumf %64, %66 : vector<3x3x8xf32>
    %c3_88 = arith.constant 3 : index
    %c0_89 = arith.constant 0 : index
    %c2_90 = arith.constant 2 : index
    %c0_91 = arith.constant 0 : index
    %68 = vector.load %arg1[%c3_88, %c0_89, %c2_90, %c0_91] : memref<9x5x5x8xf32, #tpu.memory_space<vmem>>, vector<1x3x3x8xf32>
    %69 = vector.shape_cast %68 : vector<1x3x3x8xf32> to vector<3x3x8xf32>
    %70 = arith.maximumf %67, %69 : vector<3x3x8xf32>
    %c3_92 = arith.constant 3 : index
    %c1_93 = arith.constant 1 : index
    %c0_94 = arith.constant 0 : index
    %c0_95 = arith.constant 0 : index
    %71 = vector.load %arg1[%c3_92, %c1_93, %c0_94, %c0_95] : memref<9x5x5x8xf32, #tpu.memory_space<vmem>>, vector<1x3x3x8xf32>
    %72 = vector.shape_cast %71 : vector<1x3x3x8xf32> to vector<3x3x8xf32>
    %73 = arith.maximumf %70, %72 : vector<3x3x8xf32>
    %c3_96 = arith.constant 3 : index
    %c1_97 = arith.constant 1 : index
    %c1_98 = arith.constant 1 : index
    %c0_99 = arith.constant 0 : index
    %74 = vector.load %arg1[%c3_96, %c1_97, %c1_98, %c0_99] : memref<9x5x5x8xf32, #tpu.memory_space<vmem>>, vector<1x3x3x8xf32>
    %75 = vector.shape_cast %74 : vector<1x3x3x8xf32> to vector<3x3x8xf32>
    %76 = arith.maximumf %73, %75 : vector<3x3x8xf32>
    %c3_100 = arith.constant 3 : index
    %c1_101 = arith.constant 1 : index
    %c2_102 = arith.constant 2 : index
    %c0_103 = arith.constant 0 : index
    %77 = vector.load %arg1[%c3_100, %c1_101, %c2_102, %c0_103] : memref<9x5x5x8xf32, #tpu.memory_space<vmem>>, vector<1x3x3x8xf32>
    %78 = vector.shape_cast %77 : vector<1x3x3x8xf32> to vector<3x3x8xf32>
    %79 = arith.maximumf %76, %78 : vector<3x3x8xf32>
    %c4 = arith.constant 4 : index
    %c0_104 = arith.constant 0 : index
    %c0_105 = arith.constant 0 : index
    %c0_106 = arith.constant 0 : index
    %80 = vector.load %arg1[%c4, %c0_104, %c0_105, %c0_106] : memref<9x5x5x8xf32, #tpu.memory_space<vmem>>, vector<1x3x3x8xf32>
    %81 = vector.shape_cast %80 : vector<1x3x3x8xf32> to vector<3x3x8xf32>
    %82 = arith.maximumf %79, %81 : vector<3x3x8xf32>
    %c4_107 = arith.constant 4 : index
    %c0_108 = arith.constant 0 : index
    %c1_109 = arith.constant 1 : index
    %c0_110 = arith.constant 0 : index
    %83 = vector.load %arg1[%c4_107, %c0_108, %c1_109, %c0_110] : memref<9x5x5x8xf32, #tpu.memory_space<vmem>>, vector<1x3x3x8xf32>
    %84 = vector.shape_cast %83 : vector<1x3x3x8xf32> to vector<3x3x8xf32>
    %85 = arith.maximumf %82, %84 : vector<3x3x8xf32>
    %c4_111 = arith.constant 4 : index
    %c1_112 = arith.constant 1 : index
    %c0_113 = arith.constant 0 : index
    %c0_114 = arith.constant 0 : index
    %86 = vector.load %arg1[%c4_111, %c1_112, %c0_113, %c0_114] : memref<9x5x5x8xf32, #tpu.memory_space<vmem>>, vector<1x3x3x8xf32>
    %87 = vector.shape_cast %86 : vector<1x3x3x8xf32> to vector<3x3x8xf32>
    %88 = arith.maximumf %85, %87 : vector<3x3x8xf32>
    %c4_115 = arith.constant 4 : index
    %c1_116 = arith.constant 1 : index
    %c1_117 = arith.constant 1 : index
    %c0_118 = arith.constant 0 : index
    %89 = vector.load %arg1[%c4_115, %c1_116, %c1_117, %c0_118] : memref<9x5x5x8xf32, #tpu.memory_space<vmem>>, vector<1x3x3x8xf32>
    %90 = vector.shape_cast %89 : vector<1x3x3x8xf32> to vector<3x3x8xf32>
    %91 = arith.maximumf %88, %90 : vector<3x3x8xf32>
    %c5 = arith.constant 5 : index
    %c0_119 = arith.constant 0 : index
    %c0_120 = arith.constant 0 : index
    %c0_121 = arith.constant 0 : index
    %92 = vector.load %arg1[%c5, %c0_119, %c0_120, %c0_121] : memref<9x5x5x8xf32, #tpu.memory_space<vmem>>, vector<1x3x3x8xf32>
    %93 = vector.shape_cast %92 : vector<1x3x3x8xf32> to vector<3x3x8xf32>
    %94 = arith.maximumf %91, %93 : vector<3x3x8xf32>
    %c5_122 = arith.constant 5 : index
    %c0_123 = arith.constant 0 : index
    %c1_124 = arith.constant 1 : index
    %c0_125 = arith.constant 0 : index
    %95 = vector.load %arg1[%c5_122, %c0_123, %c1_124, %c0_125] : memref<9x5x5x8xf32, #tpu.memory_space<vmem>>, vector<1x3x3x8xf32>
    %96 = vector.shape_cast %95 : vector<1x3x3x8xf32> to vector<3x3x8xf32>
    %97 = arith.maximumf %94, %96 : vector<3x3x8xf32>
    %c5_126 = arith.constant 5 : index
    %c1_127 = arith.constant 1 : index
    %c0_128 = arith.constant 0 : index
    %c0_129 = arith.constant 0 : index
    %98 = vector.load %arg1[%c5_126, %c1_127, %c0_128, %c0_129] : memref<9x5x5x8xf32, #tpu.memory_space<vmem>>, vector<1x3x3x8xf32>
    %99 = vector.shape_cast %98 : vector<1x3x3x8xf32> to vector<3x3x8xf32>
    %100 = arith.maximumf %97, %99 : vector<3x3x8xf32>
    %c5_130 = arith.constant 5 : index
    %c1_131 = arith.constant 1 : index
    %c1_132 = arith.constant 1 : index
    %c0_133 = arith.constant 0 : index
    %101 = vector.load %arg1[%c5_130, %c1_131, %c1_132, %c0_133] : memref<9x5x5x8xf32, #tpu.memory_space<vmem>>, vector<1x3x3x8xf32>
    %102 = vector.shape_cast %101 : vector<1x3x3x8xf32> to vector<3x3x8xf32>
    %103 = arith.maximumf %100, %102 : vector<3x3x8xf32>
    %c6 = arith.constant 6 : index
    %c0_134 = arith.constant 0 : index
    %c0_135 = arith.constant 0 : index
    %c0_136 = arith.constant 0 : index
    %104 = vector.load %arg1[%c6, %c0_134, %c0_135, %c0_136] : memref<9x5x5x8xf32, #tpu.memory_space<vmem>>, vector<1x3x3x8xf32>
    %105 = vector.shape_cast %104 : vector<1x3x3x8xf32> to vector<3x3x8xf32>
    %106 = arith.maximumf %103, %105 : vector<3x3x8xf32>
    %c6_137 = arith.constant 6 : index
    %c0_138 = arith.constant 0 : index
    %c1_139 = arith.constant 1 : index
    %c0_140 = arith.constant 0 : index
    %107 = vector.load %arg1[%c6_137, %c0_138, %c1_139, %c0_140] : memref<9x5x5x8xf32, #tpu.memory_space<vmem>>, vector<1x3x3x8xf32>
    %108 = vector.shape_cast %107 : vector<1x3x3x8xf32> to vector<3x3x8xf32>
    %109 = arith.maximumf %106, %108 : vector<3x3x8xf32>
    %c6_141 = arith.constant 6 : index
    %c0_142 = arith.constant 0 : index
    %c2_143 = arith.constant 2 : index
    %c0_144 = arith.constant 0 : index
    %110 = vector.load %arg1[%c6_141, %c0_142, %c2_143, %c0_144] : memref<9x5x5x8xf32, #tpu.memory_space<vmem>>, vector<1x3x3x8xf32>
    %111 = vector.shape_cast %110 : vector<1x3x3x8xf32> to vector<3x3x8xf32>
    %112 = arith.maximumf %109, %111 : vector<3x3x8xf32>
    %c6_145 = arith.constant 6 : index
    %c1_146 = arith.constant 1 : index
    %c0_147 = arith.constant 0 : index
    %c0_148 = arith.constant 0 : index
    %113 = vector.load %arg1[%c6_145, %c1_146, %c0_147, %c0_148] : memref<9x5x5x8xf32, #tpu.memory_space<vmem>>, vector<1x3x3x8xf32>
    %114 = vector.shape_cast %113 : vector<1x3x3x8xf32> to vector<3x3x8xf32>
    %115 = arith.maximumf %112, %114 : vector<3x3x8xf32>
    %c6_149 = arith.constant 6 : index
    %c1_150 = arith.constant 1 : index
    %c1_151 = arith.constant 1 : index
    %c0_152 = arith.constant 0 : index
    %116 = vector.load %arg1[%c6_149, %c1_150, %c1_151, %c0_152] : memref<9x5x5x8xf32, #tpu.memory_space<vmem>>, vector<1x3x3x8xf32>
    %117 = vector.shape_cast %116 : vector<1x3x3x8xf32> to vector<3x3x8xf32>
    %118 = arith.maximumf %115, %117 : vector<3x3x8xf32>
    %c6_153 = arith.constant 6 : index
    %c1_154 = arith.constant 1 : index
    %c2_155 = arith.constant 2 : index
    %c0_156 = arith.constant 0 : index
    %119 = vector.load %arg1[%c6_153, %c1_154, %c2_155, %c0_156] : memref<9x5x5x8xf32, #tpu.memory_space<vmem>>, vector<1x3x3x8xf32>
    %120 = vector.shape_cast %119 : vector<1x3x3x8xf32> to vector<3x3x8xf32>
    %121 = arith.maximumf %118, %120 : vector<3x3x8xf32>
    %c7 = arith.constant 7 : index
    %c0_157 = arith.constant 0 : index
    %c0_158 = arith.constant 0 : index
    %c0_159 = arith.constant 0 : index
    %122 = vector.load %arg1[%c7, %c0_157, %c0_158, %c0_159] : memref<9x5x5x8xf32, #tpu.memory_space<vmem>>, vector<1x3x3x8xf32>
    %123 = vector.shape_cast %122 : vector<1x3x3x8xf32> to vector<3x3x8xf32>
    %124 = arith.maximumf %121, %123 : vector<3x3x8xf32>
    %c7_160 = arith.constant 7 : index
    %c0_161 = arith.constant 0 : index
    %c1_162 = arith.constant 1 : index
    %c0_163 = arith.constant 0 : index
    %125 = vector.load %arg1[%c7_160, %c0_161, %c1_162, %c0_163] : memref<9x5x5x8xf32, #tpu.memory_space<vmem>>, vector<1x3x3x8xf32>
    %126 = vector.shape_cast %125 : vector<1x3x3x8xf32> to vector<3x3x8xf32>
    %127 = arith.maximumf %124, %126 : vector<3x3x8xf32>
    %c7_164 = arith.constant 7 : index
    %c1_165 = arith.constant 1 : index
    %c0_166 = arith.constant 0 : index
    %c0_167 = arith.constant 0 : index
    %128 = vector.load %arg1[%c7_164, %c1_165, %c0_166, %c0_167] : memref<9x5x5x8xf32, #tpu.memory_space<vmem>>, vector<1x3x3x8xf32>
    %129 = vector.shape_cast %128 : vector<1x3x3x8xf32> to vector<3x3x8xf32>
    %130 = arith.maximumf %127, %129 : vector<3x3x8xf32>
    %c7_168 = arith.constant 7 : index
    %c1_169 = arith.constant 1 : index
    %c1_170 = arith.constant 1 : index
    %c0_171 = arith.constant 0 : index
    %131 = vector.load %arg1[%c7_168, %c1_169, %c1_170, %c0_171] : memref<9x5x5x8xf32, #tpu.memory_space<vmem>>, vector<1x3x3x8xf32>
    %132 = vector.shape_cast %131 : vector<1x3x3x8xf32> to vector<3x3x8xf32>
    %133 = arith.maximumf %130, %132 : vector<3x3x8xf32>
    %c8 = arith.constant 8 : index
    %c0_172 = arith.constant 0 : index
    %c0_173 = arith.constant 0 : index
    %c0_174 = arith.constant 0 : index
    %134 = vector.load %arg1[%c8, %c0_172, %c0_173, %c0_174] : memref<9x5x5x8xf32, #tpu.memory_space<vmem>>, vector<1x3x3x8xf32>
    %135 = vector.shape_cast %134 : vector<1x3x3x8xf32> to vector<3x3x8xf32>
    %136 = arith.maximumf %133, %135 : vector<3x3x8xf32>
    %c8_175 = arith.constant 8 : index
    %c0_176 = arith.constant 0 : index
    %c1_177 = arith.constant 1 : index
    %c0_178 = arith.constant 0 : index
    %137 = vector.load %arg1[%c8_175, %c0_176, %c1_177, %c0_178] : memref<9x5x5x8xf32, #tpu.memory_space<vmem>>, vector<1x3x3x8xf32>
    %138 = vector.shape_cast %137 : vector<1x3x3x8xf32> to vector<3x3x8xf32>
    %139 = arith.maximumf %136, %138 : vector<3x3x8xf32>
    %c8_179 = arith.constant 8 : index
    %c1_180 = arith.constant 1 : index
    %c0_181 = arith.constant 0 : index
    %c0_182 = arith.constant 0 : index
    %140 = vector.load %arg1[%c8_179, %c1_180, %c0_181, %c0_182] : memref<9x5x5x8xf32, #tpu.memory_space<vmem>>, vector<1x3x3x8xf32>
    %141 = vector.shape_cast %140 : vector<1x3x3x8xf32> to vector<3x3x8xf32>
    %142 = arith.maximumf %139, %141 : vector<3x3x8xf32>
    %c8_183 = arith.constant 8 : index
    %c1_184 = arith.constant 1 : index
    %c1_185 = arith.constant 1 : index
    %c0_186 = arith.constant 0 : index
    %143 = vector.load %arg1[%c8_183, %c1_184, %c1_185, %c0_186] : memref<9x5x5x8xf32, #tpu.memory_space<vmem>>, vector<1x3x3x8xf32>
    %144 = vector.shape_cast %143 : vector<1x3x3x8xf32> to vector<3x3x8xf32>
    %145 = arith.maximumf %142, %144 : vector<3x3x8xf32>
    %c0_187 = arith.constant 0 : index
    %c0_188 = arith.constant 0 : index
    %c0_189 = arith.constant 0 : index
    %c0_190 = arith.constant 0 : index
    %146 = vector.load %arg2[%c0_187, %c0_188, %c0_189, %c0_190] : memref<1x3x3x8xf32, #tpu.memory_space<vmem>>, vector<1x3x3x8xf32>
    %147 = vector.shape_cast %146 : vector<1x3x3x8xf32> to vector<3x3x8xf32>
    %148 = vector.shape_cast %145 : vector<3x3x8xf32> to vector<1x3x3x8xf32>
    tpu.vector_store %arg2[%c0_187, %c0_188, %c0_189, %c0_190], %148 {strides = array<i32>} : memref<1x3x3x8xf32, #tpu.memory_space<vmem>>, vector<1x3x3x8xf32>,
    return
  }
  func.func @transform_0(%arg0: i32) -> (i32, i32, i32, i32) {
    %c0_i32 = arith.constant 0 : i32
    %c0_i32_0 = arith.constant 0 : i32
    %c0_i32_1 = arith.constant 0 : i32
    %c0_i32_2 = arith.constant 0 : i32
    return %arg0, %c0_i32, %c0_i32_0, %c0_i32_1 : i32, i32, i32, i32
  }
  func.func @transform_1(%arg0: i32) -> (i32, i32, i32, i32) {
    %c0_i32 = arith.constant 0 : i32
    %c0_i32_0 = arith.constant 0 : i32
    %c0_i32_1 = arith.constant 0 : i32
    %c0_i32_2 = arith.constant 0 : i32
    return %arg0, %c0_i32, %c0_i32_0, %c0_i32_1 : i32, i32, i32, i32
  }
}

module attributes {stable_mosaic.version = 11 : i64} {
  func.func @_mm_bias_kernel(%arg0: i32, %arg1: memref<24x72xf32, #tpu.memory_space<vmem>>, %arg2: memref<72x8xf32, #tpu.memory_space<vmem>>, %arg3: memref<1x8xf32, #tpu.memory_space<vmem>>, %arg4: memref<24x8xf32, #tpu.memory_space<vmem>>) attributes {dimension_semantics = [#tpu.dimension_semantics<parallel>], iteration_bounds = array<i64: 1>, scalar_prefetch = 0 : i64, scratch_operands = 0 : i64, tpu.core_type = #tpu.core_type<tc>, window_params = [{transform_indices = @transform_0, window_bounds = array<i64: 24, 72>}, {pipeline_mode = #tpu.pipeline_mode<synchronous>, transform_indices = @transform_1, window_bounds = array<i64: 72, 8>}, {pipeline_mode = #tpu.pipeline_mode<synchronous>, transform_indices = @transform_2, window_bounds = array<i64: 1, 8>}, {transform_indices = @transform_3, window_bounds = array<i64: 24, 8>}]} {
    %c0 = arith.constant 0 : index
    %c0_0 = arith.constant 0 : index
    %0 = vector.load %arg1[%c0, %c0_0] : memref<24x72xf32, #tpu.memory_space<vmem>>, vector<24x72xf32>
    %c0_1 = arith.constant 0 : index
    %c0_2 = arith.constant 0 : index
    %1 = vector.load %arg2[%c0_1, %c0_2] : memref<72x8xf32, #tpu.memory_space<vmem>>, vector<72x8xf32>
    %cst = arith.constant dense<0.000000e+00> : vector<24x8xf32>
    %2 = tpu.matmul %0, %1, %cst {dimension_numbers = #tpu.dot_dimension_numbers<[1], [0], [0], [1], [0, 0, 1, 1], [], []>} : vector<24x72xf32>, vector<72x8xf32>, vector<24x8xf32> -> vector<24x8xf32>
    %c0_3 = arith.constant 0 : index
    %c0_4 = arith.constant 0 : index
    %3 = vector.load %arg3[%c0_3, %c0_4] : memref<1x8xf32, #tpu.memory_space<vmem>>, vector<1x8xf32>
    %4 = vector.broadcast %3 : vector<1x8xf32> to vector<24x8xf32>
    %5 = arith.addf %2, %4 : vector<24x8xf32>
    %c0_5 = arith.constant 0 : index
    %c0_6 = arith.constant 0 : index
    %6 = vector.load %arg4[%c0_5, %c0_6] : memref<24x8xf32, #tpu.memory_space<vmem>>, vector<24x8xf32>
    tpu.vector_store %arg4[%c0_5, %c0_6], %5 {strides = array<i32>} : memref<24x8xf32, #tpu.memory_space<vmem>>, vector<24x8xf32>,
    return
  }
  func.func @transform_0(%arg0: i32) -> (i32, i32) {
    %c0_i32 = arith.constant 0 : i32
    %c0_i32_0 = arith.constant 0 : i32
    return %arg0, %c0_i32 : i32, i32
  }
  func.func @transform_1(%arg0: i32) -> (i32, i32) {
    %c0_i32 = arith.constant 0 : i32
    %c0_i32_0 = arith.constant 0 : i32
    %c0_i32_1 = arith.constant 0 : i32
    return %c0_i32, %c0_i32_0 : i32, i32
  }
  func.func @transform_2(%arg0: i32) -> (i32, i32) {
    %c0_i32 = arith.constant 0 : i32
    %c0_i32_0 = arith.constant 0 : i32
    %c0_i32_1 = arith.constant 0 : i32
    return %c0_i32, %c0_i32_0 : i32, i32
  }
  func.func @transform_3(%arg0: i32) -> (i32, i32) {
    %c0_i32 = arith.constant 0 : i32
    %c0_i32_0 = arith.constant 0 : i32
    return %arg0, %c0_i32 : i32, i32
  }
}

module attributes {stable_mosaic.version = 11 : i64} {
  func.func @_mm_kernel(%arg0: i32, %arg1: memref<32x3xf32, #tpu.memory_space<vmem>>, %arg2: memref<3x48xf32, #tpu.memory_space<vmem>>, %arg3: memref<32x48xf32, #tpu.memory_space<vmem>>) attributes {dimension_semantics = [#tpu.dimension_semantics<parallel>], iteration_bounds = array<i64: 1>, scalar_prefetch = 0 : i64, scratch_operands = 0 : i64, tpu.core_type = #tpu.core_type<tc>, window_params = [{transform_indices = @transform_0, window_bounds = array<i64: 32, 3>}, {pipeline_mode = #tpu.pipeline_mode<synchronous>, transform_indices = @transform_1, window_bounds = array<i64: 3, 48>}, {transform_indices = @transform_2, window_bounds = array<i64: 32, 48>}]} {
    %c0 = arith.constant 0 : index
    %c0_0 = arith.constant 0 : index
    %0 = vector.load %arg1[%c0, %c0_0] : memref<32x3xf32, #tpu.memory_space<vmem>>, vector<32x3xf32>
    %c0_1 = arith.constant 0 : index
    %c0_2 = arith.constant 0 : index
    %1 = vector.load %arg2[%c0_1, %c0_2] : memref<3x48xf32, #tpu.memory_space<vmem>>, vector<3x48xf32>
    %cst = arith.constant dense<0.000000e+00> : vector<32x48xf32>
    %2 = tpu.matmul %0, %1, %cst {dimension_numbers = #tpu.dot_dimension_numbers<[1], [0], [0], [1], [0, 0, 1, 1], [], []>} : vector<32x3xf32>, vector<3x48xf32>, vector<32x48xf32> -> vector<32x48xf32>
    %c0_3 = arith.constant 0 : index
    %c0_4 = arith.constant 0 : index
    %3 = vector.load %arg3[%c0_3, %c0_4] : memref<32x48xf32, #tpu.memory_space<vmem>>, vector<32x48xf32>
    tpu.vector_store %arg3[%c0_3, %c0_4], %2 {strides = array<i32>} : memref<32x48xf32, #tpu.memory_space<vmem>>, vector<32x48xf32>,
    return
  }
  func.func @transform_0(%arg0: i32) -> (i32, i32) {
    %c0_i32 = arith.constant 0 : i32
    %c0_i32_0 = arith.constant 0 : i32
    return %arg0, %c0_i32 : i32, i32
  }
  func.func @transform_1(%arg0: i32) -> (i32, i32) {
    %c0_i32 = arith.constant 0 : i32
    %c0_i32_0 = arith.constant 0 : i32
    %c0_i32_1 = arith.constant 0 : i32
    return %c0_i32, %c0_i32_0 : i32, i32
  }
  func.func @transform_2(%arg0: i32) -> (i32, i32) {
    %c0_i32 = arith.constant 0 : i32
    %c0_i32_0 = arith.constant 0 : i32
    return %arg0, %c0_i32 : i32, i32
  }
}

module attributes {stable_mosaic.version = 11 : i64} {
  func.func @_mm_kernel(%arg0: i32, %arg1: memref<32x3xf32, #tpu.memory_space<vmem>>, %arg2: memref<3x512xf32, #tpu.memory_space<vmem>>, %arg3: memref<32x512xf32, #tpu.memory_space<vmem>>) attributes {dimension_semantics = [#tpu.dimension_semantics<parallel>], iteration_bounds = array<i64: 1>, scalar_prefetch = 0 : i64, scratch_operands = 0 : i64, tpu.core_type = #tpu.core_type<tc>, window_params = [{transform_indices = @transform_0, window_bounds = array<i64: 32, 3>}, {pipeline_mode = #tpu.pipeline_mode<synchronous>, transform_indices = @transform_1, window_bounds = array<i64: 3, 512>}, {transform_indices = @transform_2, window_bounds = array<i64: 32, 512>}]} {
    %c0 = arith.constant 0 : index
    %c0_0 = arith.constant 0 : index
    %0 = vector.load %arg1[%c0, %c0_0] : memref<32x3xf32, #tpu.memory_space<vmem>>, vector<32x3xf32>
    %c0_1 = arith.constant 0 : index
    %c0_2 = arith.constant 0 : index
    %1 = vector.load %arg2[%c0_1, %c0_2] : memref<3x512xf32, #tpu.memory_space<vmem>>, vector<3x512xf32>
    %cst = arith.constant dense<0.000000e+00> : vector<32x512xf32>
    %2 = tpu.matmul %0, %1, %cst {dimension_numbers = #tpu.dot_dimension_numbers<[1], [0], [0], [1], [0, 0, 1, 1], [], []>} : vector<32x3xf32>, vector<3x512xf32>, vector<32x512xf32> -> vector<32x512xf32>
    %c0_3 = arith.constant 0 : index
    %c0_4 = arith.constant 0 : index
    %3 = vector.load %arg3[%c0_3, %c0_4] : memref<32x512xf32, #tpu.memory_space<vmem>>, vector<32x512xf32>
    tpu.vector_store %arg3[%c0_3, %c0_4], %2 {strides = array<i32>} : memref<32x512xf32, #tpu.memory_space<vmem>>, vector<32x512xf32>,
    return
  }
  func.func @transform_0(%arg0: i32) -> (i32, i32) {
    %c0_i32 = arith.constant 0 : i32
    %c0_i32_0 = arith.constant 0 : i32
    return %arg0, %c0_i32 : i32, i32
  }
  func.func @transform_1(%arg0: i32) -> (i32, i32) {
    %c0_i32 = arith.constant 0 : i32
    %c0_i32_0 = arith.constant 0 : i32
    %c0_i32_1 = arith.constant 0 : i32
    return %c0_i32, %c0_i32_0 : i32, i32
  }
  func.func @transform_2(%arg0: i32) -> (i32, i32) {
    %c0_i32 = arith.constant 0 : i32
    %c0_i32_0 = arith.constant 0 : i32
    return %arg0, %c0_i32 : i32, i32
  }
}

module attributes {stable_mosaic.version = 11 : i64} {
  func.func @_esa_tail_kernel(%arg0: i32, %arg1: memref<1024x16xf32, #tpu.memory_space<vmem>>, %arg2: memref<1024x8xf32, #tpu.memory_space<vmem>>, %arg3: memref<1024x8xf32, #tpu.memory_space<vmem>>, %arg4: memref<8x8xf32, #tpu.memory_space<vmem>>, %arg5: memref<1x8xf32, #tpu.memory_space<vmem>>, %arg6: memref<8x16xf32, #tpu.memory_space<vmem>>, %arg7: memref<1x16xf32, #tpu.memory_space<vmem>>, %arg8: memref<1024x16xf32, #tpu.memory_space<vmem>>) attributes {dimension_semantics = [#tpu.dimension_semantics<parallel>], iteration_bounds = array<i64: 2>, scalar_prefetch = 0 : i64, scratch_operands = 0 : i64, tpu.core_type = #tpu.core_type<tc>, window_params = [{transform_indices = @transform_0, window_bounds = array<i64: 1024, 16>}, {transform_indices = @transform_1, window_bounds = array<i64: 1024, 8>}, {transform_indices = @transform_2, window_bounds = array<i64: 1024, 8>}, {pipeline_mode = #tpu.pipeline_mode<synchronous>, transform_indices = @transform_3, window_bounds = array<i64: 8, 8>}, {pipeline_mode = #tpu.pipeline_mode<synchronous>, transform_indices = @transform_4, window_bounds = array<i64: 1, 8>}, {pipeline_mode = #tpu.pipeline_mode<synchronous>, transform_indices = @transform_5, window_bounds = array<i64: 8, 16>}, {pipeline_mode = #tpu.pipeline_mode<synchronous>, transform_indices = @transform_6, window_bounds = array<i64: 1, 16>}, {transform_indices = @transform_7, window_bounds = array<i64: 1024, 16>}]} {
    %c0 = arith.constant 0 : index
    %c0_0 = arith.constant 0 : index
    %0 = vector.load %arg2[%c0, %c0_0] : memref<1024x8xf32, #tpu.memory_space<vmem>>, vector<1024x8xf32>
    %c0_1 = arith.constant 0 : index
    %c0_2 = arith.constant 0 : index
    %1 = vector.load %arg4[%c0_1, %c0_2] : memref<8x8xf32, #tpu.memory_space<vmem>>, vector<8x8xf32>
    %cst = arith.constant dense<0.000000e+00> : vector<1024x8xf32>
    %2 = tpu.matmul %0, %1, %cst {dimension_numbers = #tpu.dot_dimension_numbers<[1], [0], [0], [1], [0, 0, 1, 1], [], []>} : vector<1024x8xf32>, vector<8x8xf32>, vector<1024x8xf32> -> vector<1024x8xf32>
    %c0_3 = arith.constant 0 : index
    %c0_4 = arith.constant 0 : index
    %3 = vector.load %arg5[%c0_3, %c0_4] : memref<1x8xf32, #tpu.memory_space<vmem>>, vector<1x8xf32>
    %4 = vector.broadcast %3 : vector<1x8xf32> to vector<1024x8xf32>
    %5 = arith.addf %2, %4 : vector<1024x8xf32>
    %c0_5 = arith.constant 0 : index
    %c0_6 = arith.constant 0 : index
    %6 = vector.load %arg3[%c0_5, %c0_6] : memref<1024x8xf32, #tpu.memory_space<vmem>>, vector<1024x8xf32>
    %7 = arith.addf %6, %5 : vector<1024x8xf32>
    %c0_7 = arith.constant 0 : index
    %c0_8 = arith.constant 0 : index
    %8 = vector.load %arg6[%c0_7, %c0_8] : memref<8x16xf32, #tpu.memory_space<vmem>>, vector<8x16xf32>
    %cst_9 = arith.constant dense<0.000000e+00> : vector<1024x16xf32>
    %9 = tpu.matmul %7, %8, %cst_9 {dimension_numbers = #tpu.dot_dimension_numbers<[1], [0], [0], [1], [0, 0, 1, 1], [], []>} : vector<1024x8xf32>, vector<8x16xf32>, vector<1024x16xf32> -> vector<1024x16xf32>
    %c0_10 = arith.constant 0 : index
    %c0_11 = arith.constant 0 : index
    %10 = vector.load %arg7[%c0_10, %c0_11] : memref<1x16xf32, #tpu.memory_space<vmem>>, vector<1x16xf32>
    %11 = vector.broadcast %10 : vector<1x16xf32> to vector<1024x16xf32>
    %12 = arith.addf %9, %11 : vector<1024x16xf32>
    %c0_12 = arith.constant 0 : index
    %c0_13 = arith.constant 0 : index
    %13 = vector.load %arg1[%c0_12, %c0_13] : memref<1024x16xf32, #tpu.memory_space<vmem>>, vector<1024x16xf32>
    %14 = arith.negf %12 : vector<1024x16xf32>
    %15 = math.exp %14 : vector<1024x16xf32>
    %cst_14 = arith.constant 1.000000e+00 : f32
    %16 = vector.broadcast %cst_14 : f32 to vector<1024x16xf32>
    %17 = arith.addf %16, %15 : vector<1024x16xf32>
    %18 = arith.divf %16, %17 : vector<1024x16xf32>
    %19 = arith.mulf %13, %18 : vector<1024x16xf32>
    %c0_15 = arith.constant 0 : index
    %c0_16 = arith.constant 0 : index
    %20 = vector.load %arg8[%c0_15, %c0_16] : memref<1024x16xf32, #tpu.memory_space<vmem>>, vector<1024x16xf32>
    tpu.vector_store %arg8[%c0_15, %c0_16], %19 {strides = array<i32>} : memref<1024x16xf32, #tpu.memory_space<vmem>>, vector<1024x16xf32>,
    return
  }
  func.func @transform_0(%arg0: i32) -> (i32, i32) {
    %c0_i32 = arith.constant 0 : i32
    %c0_i32_0 = arith.constant 0 : i32
    return %arg0, %c0_i32 : i32, i32
  }
  func.func @transform_1(%arg0: i32) -> (i32, i32) {
    %c0_i32 = arith.constant 0 : i32
    %c0_i32_0 = arith.constant 0 : i32
    return %arg0, %c0_i32 : i32, i32
  }
  func.func @transform_2(%arg0: i32) -> (i32, i32) {
    %c0_i32 = arith.constant 0 : i32
    %c0_i32_0 = arith.constant 0 : i32
    return %arg0, %c0_i32 : i32, i32
  }
  func.func @transform_3(%arg0: i32) -> (i32, i32) {
    %c0_i32 = arith.constant 0 : i32
    %c0_i32_0 = arith.constant 0 : i32
    %c0_i32_1 = arith.constant 0 : i32
    return %c0_i32, %c0_i32_0 : i32, i32
  }
  func.func @transform_4(%arg0: i32) -> (i32, i32) {
    %c0_i32 = arith.constant 0 : i32
    %c0_i32_0 = arith.constant 0 : i32
    %c0_i32_1 = arith.constant 0 : i32
    return %c0_i32, %c0_i32_0 : i32, i32
  }
  func.func @transform_5(%arg0: i32) -> (i32, i32) {
    %c0_i32 = arith.constant 0 : i32
    %c0_i32_0 = arith.constant 0 : i32
    %c0_i32_1 = arith.constant 0 : i32
    return %c0_i32, %c0_i32_0 : i32, i32
  }
  func.func @transform_6(%arg0: i32) -> (i32, i32) {
    %c0_i32 = arith.constant 0 : i32
    %c0_i32_0 = arith.constant 0 : i32
    %c0_i32_1 = arith.constant 0 : i32
    return %c0_i32, %c0_i32_0 : i32, i32
  }
  func.func @transform_7(%arg0: i32) -> (i32, i32) {
    %c0_i32 = arith.constant 0 : i32
    %c0_i32_0 = arith.constant 0 : i32
    return %arg0, %c0_i32 : i32, i32
  }
}

</mosaic_0001>

<llo_original>
// kernel: esa_forward.7
$region0: #{esa_forward.7}
  #allocation0 [shape = 'u32[]', space=smem, size = 0x4, offset = 0x4, fixed_abs, tag = 'smem constant byte address 0x4 - core index']
  #allocation1 [shape = 'u32[144,128]{1,0:T(1,128)}', space=vmem, size = 0x12000, scoped, tag = 'internal scratch']
  %s0 = inlined_call_operand.vmem [shape: f32[2048,16], index: 0, kind: input, shape index: {}]
  %s1 = inlined_call_operand.vmem [shape: f32[16,8], index: 1, kind: input, shape index: {}]
  %s2 = inlined_call_operand.vmem [shape: f32[1,8], index: 2, kind: input, shape index: {}]
  %s3 = inlined_call_operand.vmem [shape: f32[2048,8], index: 3, kind: output, shape index: {}]
  %s4 = sld [smem:[#allocation0]]
  $region45: #{esa_forward.7} parent=0
    _
  %s6 = ssub.s32 1, %s4
  %s7 = scalar_select 0, %s6, %s4
  loop: start=0, step=1, limit=4
  $region2: #{esa_forward.7} parent=0 // loop_pre_header
    _
  $region3: #{esa_forward.7} parent=0 // loop_header
    %s9 = sphi 0, %s13
    %p10 = scmp.ge.s32.totalorder %s9, 4
    %s19 = sphi 0, %s21
    %s22 = sphi 0, %s19
    %s23 = sphi 0, %s22
    %s39 = sphi 0, %s23
    %s43 = sphi 0, %s43
    %s45 = sphi 0, %s43
    %s46 = sphi 0, %s45
    %s60 = sphi 0, %s46
    %s64 = sphi 0, %s64
    %s66 = sphi 0, %s64
    %s67 = sphi 0, %s66
    %s81 = sphi 0, %s67
    %s87 = sphi 0, %s89
    %s90 = sphi 0, %s87
    %s91 = sphi 0, %s90
    %s107 = sphi 0, %s91
  $region4: #{esa_forward.7} parent=0 // loop_header_branch
    %12 = sbr.rel (%p10) target = $region8
  $region5: #{esa_forward.7} parent=0 // loop_body
    %s14 = ssub.s32 %s9, 1
    %s15 = ssub.s32 %s9, 2
    %s16 = sadd.s32 %s9, 1
    %s17 = ssub.s32 %s9, %s16
    %p18 = scmp.eq.s32.totalorder %s17, 0
    %s20 = sadd.s32 %s19, 1
    %s21 = scalar_select %p18, %s19, %s20
    %p24 = pneg %p18
    %p25 = scmp.eq.s32.totalorder %s9, 1
    %p26 = por %p24, %p25
    %p27 = scmp.ne.s32.totalorder %s19, %s22
    %p28 = scmp.eq.s32.totalorder %s9, 0
    %p29 = por %p27, %p28
    %p30 = scmp.ne.s32.totalorder %s19, %s22
    %p31 = scmp.eq.s32.totalorder %s14, 1
    %p32 = por %p30, %p31
    %p33 = scmp.ne.s32.totalorder %s22, %s23
    %p34 = scmp.eq.s32.totalorder %s14, 0
    %p35 = por %p33, %p34
    %p36 = scmp.ne.s32.totalorder %s22, %s23
    %p37 = scmp.eq.s32.totalorder %s15, 1
    %p38 = por %p36, %p37
    %p40 = scmp.ne.s32.totalorder %s23, %s39
    %p41 = scmp.eq.s32.totalorder %s15, 0
    %p42 = por %p40, %p41
    %s44 = sadd.s32 %s43, 1
    %p47 = scmp.eq.s32.totalorder %s9, 1
    %p48 = scmp.ne.s32.totalorder %s43, %s45
    %p49 = scmp.eq.s32.totalorder %s9, 0
    %p50 = por %p48, %p49
    %p51 = scmp.ne.s32.totalorder %s43, %s45
    %p52 = scmp.eq.s32.totalorder %s14, 1
    %p53 = por %p51, %p52
    %p54 = scmp.ne.s32.totalorder %s45, %s46
    %p55 = scmp.eq.s32.totalorder %s14, 0
    %p56 = por %p54, %p55
    %p57 = scmp.ne.s32.totalorder %s45, %s46
    %p58 = scmp.eq.s32.totalorder %s15, 1
    %p59 = por %p57, %p58
    %p61 = scmp.ne.s32.totalorder %s46, %s60
    %p62 = scmp.eq.s32.totalorder %s15, 0
    %p63 = por %p61, %p62
    %s65 = sadd.s32 %s64, 1
    %p68 = scmp.eq.s32.totalorder %s9, 1
    %p69 = scmp.ne.s32.totalorder %s64, %s66
    %p70 = scmp.eq.s32.totalorder %s9, 0
    %p71 = por %p69, %p70
    %p72 = scmp.ne.s32.totalorder %s64, %s66
    %p73 = scmp.eq.s32.totalorder %s14, 1
    %p74 = por %p72, %p73
    %p75 = scmp.ne.s32.totalorder %s66, %s67
    %p76 = scmp.eq.s32.totalorder %s14, 0
    %p77 = por %p75, %p76
    %p78 = scmp.ne.s32.totalorder %s66, %s67
    %p79 = scmp.eq.s32.totalorder %s15, 1
    %p80 = por %p78, %p79
    %p82 = scmp.ne.s32.totalorder %s67, %s81
    %p83 = scmp.eq.s32.totalorder %s15, 0
    %p84 = por %p82, %p83
    %s85 = ssub.s32 %s9, %s16
    %p86 = scmp.eq.s32.totalorder %s85, 0
    %s88 = sadd.s32 %s87, 1
    %s89 = scalar_select %p86, %s87, %s88
    %p92 = pneg %p86
    %p93 = scmp.eq.s32.totalorder %s9, 1
    %p94 = por %p92, %p93
    %p95 = scmp.ne.s32.totalorder %s87, %s90
    %p96 = scmp.eq.s32.totalorder %s9, 0
    %p97 = por %p95, %p96
    %p98 = scmp.ne.s32.totalorder %s87, %s90
    %p99 = scmp.eq.s32.totalorder %s14, 1
    %p100 = por %p98, %p99
    %p101 = scmp.ne.s32.totalorder %s90, %s91
    %p102 = scmp.eq.s32.totalorder %s14, 0
    %p103 = por %p101, %p102
    %p104 = scmp.ne.s32.totalorder %s90, %s91
    %p105 = scmp.eq.s32.totalorder %s15, 1
    %p106 = por %p104, %p105
    %p108 = scmp.ne.s32.totalorder %s91, %s107
    %p109 = scmp.eq.s32.totalorder %s15, 0
    %p110 = por %p108, %p109
    %p111 = scmp.le.s32.totalorder 1, %s9
    %p112 = scmp.lt.s32.totalorder %s9, 3
    %p113 = pnand %p111, %p112
    %p114 = pneg %p113
    // Predicated region
    $region9: #{esa_forward.7} parent=5 // pred_check
      _
    $region10: #{esa_forward.7} parent=5 // pred_check_branch
      %116 = sbr.rel (%p113) target = $region12
    $region11: #{esa_forward.7} parent=5 // pred_region
      %s117 = ssub.s32 %s9, 1
      // Predicated region
      $region13: #{esa_forward.7} parent=11 // pred_check
        %p118 = pneg %p56
      $region14: #{esa_forward.7} parent=11 // pred_check_branch
        %120 = sbr.rel (%p118) target = $region16
      $region15: #{esa_forward.7} parent=11 // pred_region
        _
      $region16: #{esa_forward.7} parent=11 // pred_fallthru
        _
      // Predicated region
      $region17: #{esa_forward.7} parent=11 // pred_check
        %p121 = pneg %p77
      $region18: #{esa_forward.7} parent=11 // pred_check_branch
        %123 = sbr.rel (%p121) target = $region20
      $region19: #{esa_forward.7} parent=11 // pred_region
        _
      $region20: #{esa_forward.7} parent=11 // pred_fallthru
        _
    $region12: #{esa_forward.7} parent=5 // pred_fallthru
      _
    %p124 = scmp.lt.s32.totalorder %s9, 2
    // Predicated region
    $region21: #{esa_forward.7} parent=5 // pred_check
      %p125 = pneg %p124
    $region22: #{esa_forward.7} parent=5 // pred_check_branch
      %127 = sbr.rel (%p125) target = $region24
    $region23: #{esa_forward.7} parent=5 // pred_region
      // Predicated region
      $region25: #{esa_forward.7} parent=23 // pred_check
        %p128 = pneg %p29
      $region26: #{esa_forward.7} parent=23 // pred_check_branch
        %130 = sbr.rel (%p128) target = $region28
      $region27: #{esa_forward.7} parent=23 // pred_region
        %s131 = smul.u32 128, %s9
        %p132 = scmp.lt.s32.totalorder %s131, 255
        %s133 = scalar_select %p132, %s131, 255
        %s134 = smul.addr %s133, 8
        %s135 = scalar_lea.vmem %s0, %s134
        %s136 = smul.u32 128, %s9
      $region28: #{esa_forward.7} parent=23 // pred_fallthru
        _
    $region24: #{esa_forward.7} parent=5 // pred_fallthru
      _
    %p137 = scmp.le.s32.totalorder 1, %s9
    %p138 = scmp.lt.s32.totalorder %s9, 3
    %p139 = pnand %p137, %p138
    %p140 = pneg %p139
    // Predicated region
    $region29: #{esa_forward.7} parent=5 // pred_check
      _
    $region30: #{esa_forward.7} parent=5 // pred_check_branch
      %142 = sbr.rel (%p139) target = $region32
    $region31: #{esa_forward.7} parent=5 // pred_region
      %s143 = ssub.s32 %s9, 1
      %s144 = smul.u32 128, %s14
      %p145 = scmp.lt.s32.totalorder %s144, 255
      %s146 = scalar_select %p145, %s144, 255
      %s147 = smul.addr %s146, 8
      %s148 = scalar_lea.vmem %s0, %s147
      %p149 = pneg %p35
      %p150 = pneg %p32
      %p151 = pneg %p56
      %p152 = pneg %p53
      %p153 = pneg %p77
      %p154 = pneg %p74
      %p155 = pneg %p103
      %p156 = pneg %p100
      %s157 = smul.u32 128, %s14
      %p158 = scmp.lt.s32.totalorder %s157, 255
      %s159 = scalar_select %p158, %s157, 255
      %s160 = smul.addr %s159, 8
      %s161 = scalar_lea.vmem %s3, %s160
      %s162 = smul.u32 128, %s14
      %p163 = scmp.lt.s32.totalorder %s162, 255
      %s164 = scalar_select %p163, %s162, 255
      %s165 = smul.addr %s164, 8
      %s166 = scalar_lea.vmem %s0, %s165
      %s167 = smul.u32 128, %s14
      %s168 = smul.u32 128, %s14
      %p169 = scmp.lt.s32.totalorder %s168, 255
      %s170 = scalar_select %p169, %s168, 255
      %s171 = smul.addr %s170, 8
      %s172 = scalar_lea.vmem %s3, %s171
      %s173 = smul.u32 128, %s14
      %v174 = vld [vmem:[%s166] sm:$0xff]
      %v175 = vld [vmem:[%s166 + $0x8] sm:$0xff]
      %v176 = vld [vmem:[%s166 + $0x10] sm:$0xff]
      %v177 = vld [vmem:[%s166 + $0x18] sm:$0xff]
      %v178 = vld [vmem:[%s166 + $0x20] sm:$0xff]
      %v179 = vld [vmem:[%s166 + $0x28] sm:$0xff]
      %v180 = vld [vmem:[%s166 + $0x30] sm:$0xff]
      %v181 = vld [vmem:[%s166 + $0x38] sm:$0xff]
      %v182 = vld [vmem:[%s166 + $0x40] sm:$0xff]
      %v183 = vld [vmem:[%s166 + $0x48] sm:$0xff]
      %v184 = vld [vmem:[%s166 + $0x50] sm:$0xff]
      %v185 = vld [vmem:[%s166 + $0x58] sm:$0xff]
      %v186 = vld [vmem:[%s166 + $0x60] sm:$0xff]
      %v187 = vld [vmem:[%s166 + $0x68] sm:$0xff]
      %v188 = vld [vmem:[%s166 + $0x70] sm:$0xff]
      %v189 = vld [vmem:[%s166 + $0x78] sm:$0xff]
      %v190 = vld [vmem:[%s166 + $0x80] sm:$0xff]
      %v191 = vld [vmem:[%s166 + $0x88] sm:$0xff]
      %v192 = vld [vmem:[%s166 + $0x90] sm:$0xff]
      %v193 = vld [vmem:[%s166 + $0x98] sm:$0xff]
      %v194 = vld [vmem:[%s166 + $0xa0] sm:$0xff]
      %v195 = vld [vmem:[%s166 + $0xa8] sm:$0xff]
      %v196 = vld [vmem:[%s166 + $0xb0] sm:$0xff]
      %v197 = vld [vmem:[%s166 + $0xb8] sm:$0xff]
      %v198 = vld [vmem:[%s166 + $0xc0] sm:$0xff]
      %v199 = vld [vmem:[%s166 + $0xc8] sm:$0xff]
      %v200 = vld [vmem:[%s166 + $0xd0] sm:$0xff]
      %v201 = vld [vmem:[%s166 + $0xd8] sm:$0xff]
      %v202 = vld [vmem:[%s166 + $0xe0] sm:$0xff]
      %v203 = vld [vmem:[%s166 + $0xe8] sm:$0xff]
      %v204 = vld [vmem:[%s166 + $0xf0] sm:$0xff]
      %v205 = vld [vmem:[%s166 + $0xf8] sm:$0xff]
      %v206 = vld [vmem:[%s166 + $0x100] sm:$0xff]
      %v207 = vld [vmem:[%s166 + $0x108] sm:$0xff]
      %v208 = vld [vmem:[%s166 + $0x110] sm:$0xff]
      %v209 = vld [vmem:[%s166 + $0x118] sm:$0xff]
      %v210 = vld [vmem:[%s166 + $0x120] sm:$0xff]
      %v211 = vld [vmem:[%s166 + $0x128] sm:$0xff]
      %v212 = vld [vmem:[%s166 + $0x130] sm:$0xff]
      %v213 = vld [vmem:[%s166 + $0x138] sm:$0xff]
      %v214 = vld [vmem:[%s166 + $0x140] sm:$0xff]
      %v215 = vld [vmem:[%s166 + $0x148] sm:$0xff]
      %v216 = vld [vmem:[%s166 + $0x150] sm:$0xff]
      %v217 = vld [vmem:[%s166 + $0x158] sm:$0xff]
      %v218 = vld [vmem:[%s166 + $0x160] sm:$0xff]
      %v219 = vld [vmem:[%s166 + $0x168] sm:$0xff]
      %v220 = vld [vmem:[%s166 + $0x170] sm:$0xff]
      %v221 = vld [vmem:[%s166 + $0x178] sm:$0xff]
      %v222 = vld [vmem:[%s166 + $0x180] sm:$0xff]
      %v223 = vld [vmem:[%s166 + $0x188] sm:$0xff]
      %v224 = vld [vmem:[%s166 + $0x190] sm:$0xff]
      %v225 = vld [vmem:[%s166 + $0x198] sm:$0xff]
      %v226 = vld [vmem:[%s166 + $0x1a0] sm:$0xff]
      %v227 = vld [vmem:[%s166 + $0x1a8] sm:$0xff]
      %v228 = vld [vmem:[%s166 + $0x1b0] sm:$0xff]
      %v229 = vld [vmem:[%s166 + $0x1b8] sm:$0xff]
      %v230 = vld [vmem:[%s166 + $0x1c0] sm:$0xff]
      %v231 = vld [vmem:[%s166 + $0x1c8] sm:$0xff]
      %v232 = vld [vmem:[%s166 + $0x1d0] sm:$0xff]
      %v233 = vld [vmem:[%s166 + $0x1d8] sm:$0xff]
      %v234 = vld [vmem:[%s166 + $0x1e0] sm:$0xff]
      %v235 = vld [vmem:[%s166 + $0x1e8] sm:$0xff]
      %v236 = vld [vmem:[%s166 + $0x1f0] sm:$0xff]
      %v237 = vld [vmem:[%s166 + $0x1f8] sm:$0xff]
      %v238 = vld [vmem:[%s166 + $0x200] sm:$0xff]
      %v239 = vld [vmem:[%s166 + $0x208] sm:$0xff]
      %v240 = vld [vmem:[%s166 + $0x210] sm:$0xff]
      %v241 = vld [vmem:[%s166 + $0x218] sm:$0xff]
      %v242 = vld [vmem:[%s166 + $0x220] sm:$0xff]
      %v243 = vld [vmem:[%s166 + $0x228] sm:$0xff]
      %v244 = vld [vmem:[%s166 + $0x230] sm:$0xff]
      %v245 = vld [vmem:[%s166 + $0x238] sm:$0xff]
      %v246 = vld [vmem:[%s166 + $0x240] sm:$0xff]
      %v247 = vld [vmem:[%s166 + $0x248] sm:$0xff]
      %v248 = vld [vmem:[%s166 + $0x250] sm:$0xff]
      %v249 = vld [vmem:[%s166 + $0x258] sm:$0xff]
      %v250 = vld [vmem:[%s166 + $0x260] sm:$0xff]
      %v251 = vld [vmem:[%s166 + $0x268] sm:$0xff]
      %v252 = vld [vmem:[%s166 + $0x270] sm:$0xff]
      %v253 = vld [vmem:[%s166 + $0x278] sm:$0xff]
      %v254 = vld [vmem:[%s166 + $0x280] sm:$0xff]
      %v255 = vld [vmem:[%s166 + $0x288] sm:$0xff]
      %v256 = vld [vmem:[%s166 + $0x290] sm:$0xff]
      %v257 = vld [vmem:[%s166 + $0x298] sm:$0xff]
      %v258 = vld [vmem:[%s166 + $0x2a0] sm:$0xff]
      %v259 = vld [vmem:[%s166 + $0x2a8] sm:$0xff]
      %v260 = vld [vmem:[%s166 + $0x2b0] sm:$0xff]
      %v261 = vld [vmem:[%s166 + $0x2b8] sm:$0xff]
      %v262 = vld [vmem:[%s166 + $0x2c0] sm:$0xff]
      %v263 = vld [vmem:[%s166 + $0x2c8] sm:$0xff]
      %v264 = vld [vmem:[%s166 + $0x2d0] sm:$0xff]
      %v265 = vld [vmem:[%s166 + $0x2d8] sm:$0xff]
      %v266 = vld [vmem:[%s166 + $0x2e0] sm:$0xff]
      %v267 = vld [vmem:[%s166 + $0x2e8] sm:$0xff]
      %v268 = vld [vmem:[%s166 + $0x2f0] sm:$0xff]
      %v269 = vld [vmem:[%s166 + $0x2f8] sm:$0xff]
      %v270 = vld [vmem:[%s166 + $0x300] sm:$0xff]
      %v271 = vld [vmem:[%s166 + $0x308] sm:$0xff]
      %v272 = vld [vmem:[%s166 + $0x310] sm:$0xff]
      %v273 = vld [vmem:[%s166 + $0x318] sm:$0xff]
      %v274 = vld [vmem:[%s166 + $0x320] sm:$0xff]
      %v275 = vld [vmem:[%s166 + $0x328] sm:$0xff]
      %v276 = vld [vmem:[%s166 + $0x330] sm:$0xff]
      %v277 = vld [vmem:[%s166 + $0x338] sm:$0xff]
      %v278 = vld [vmem:[%s166 + $0x340] sm:$0xff]
      %v279 = vld [vmem:[%s166 + $0x348] sm:$0xff]
      %v280 = vld [vmem:[%s166 + $0x350] sm:$0xff]
      %v281 = vld [vmem:[%s166 + $0x358] sm:$0xff]
      %v282 = vld [vmem:[%s166 + $0x360] sm:$0xff]
      %v283 = vld [vmem:[%s166 + $0x368] sm:$0xff]
      %v284 = vld [vmem:[%s166 + $0x370] sm:$0xff]
      %v285 = vld [vmem:[%s166 + $0x378] sm:$0xff]
      %v286 = vld [vmem:[%s166 + $0x380] sm:$0xff]
      %v287 = vld [vmem:[%s166 + $0x388] sm:$0xff]
      %v288 = vld [vmem:[%s166 + $0x390] sm:$0xff]
      %v289 = vld [vmem:[%s166 + $0x398] sm:$0xff]
      %v290 = vld [vmem:[%s166 + $0x3a0] sm:$0xff]
      %v291 = vld [vmem:[%s166 + $0x3a8] sm:$0xff]
      %v292 = vld [vmem:[%s166 + $0x3b0] sm:$0xff]
      %v293 = vld [vmem:[%s166 + $0x3b8] sm:$0xff]
      %v294 = vld [vmem:[%s166 + $0x3c0] sm:$0xff]
      %v295 = vld [vmem:[%s166 + $0x3c8] sm:$0xff]
      %v296 = vld [vmem:[%s166 + $0x3d0] sm:$0xff]
      %v297 = vld [vmem:[%s166 + $0x3d8] sm:$0xff]
      %v298 = vld [vmem:[%s166 + $0x3e0] sm:$0xff]
      %v299 = vld [vmem:[%s166 + $0x3e8] sm:$0xff]
      %v300 = vld [vmem:[%s166 + $0x3f0] sm:$0xff]
      %v301 = vld [vmem:[%s166 + $0x3f8] sm:$0xff]
      %v302 = vld [vmem:[%s1] sm:$0xff]
      %v303 = vld [vmem:[%s1 + $0x8] sm:$0xff]
      %v304 = vld [vmem:[%s2] sm:$0x1]
      %v306 = vlaneseq
      %v307 = vshrl.u32 %v306, 7
      %v308 = vsub.s32 0, %v307
      %v309 = vrot.slane %v304, %v308
      %vm311 = vcmask 130048
      %v313 = vsel %vm311, %v174, 0
      %v316 = vsel %vm311, %v175, 0
      %v319 = vsel %vm311, %v176, 0
      %v322 = vsel %vm311, %v177, 0
      %v325 = vsel %vm311, %v178, 0
      %v328 = vsel %vm311, %v179, 0
      %v331 = vsel %vm311, %v180, 0
      %v334 = vsel %vm311, %v181, 0
      %v337 = vsel %vm311, %v182, 0
      %v340 = vsel %vm311, %v183, 0
      %v343 = vsel %vm311, %v184, 0
      %v346 = vsel %vm311, %v185, 0
      %v349 = vsel %vm311, %v186, 0
      %v352 = vsel %vm311, %v187, 0
      %v355 = vsel %vm311, %v188, 0
      %v358 = vsel %vm311, %v189, 0
      %v361 = vsel %vm311, %v190, 0
      %v364 = vsel %vm311, %v191, 0
      %v367 = vsel %vm311, %v192, 0
      %v370 = vsel %vm311, %v193, 0
      %v373 = vsel %vm311, %v194, 0
      %v376 = vsel %vm311, %v195, 0
      %v379 = vsel %vm311, %v196, 0
      %v382 = vsel %vm311, %v197, 0
      %v385 = vsel %vm311, %v198, 0
      %v388 = vsel %vm311, %v199, 0
      %v391 = vsel %vm311, %v200, 0
      %v394 = vsel %vm311, %v201, 0
      %v397 = vsel %vm311, %v202, 0
      %v400 = vsel %vm311, %v203, 0
      %v403 = vsel %vm311, %v204, 0
      %v406 = vsel %vm311, %v205, 0
      %v409 = vsel %vm311, %v206, 0
      %v412 = vsel %vm311, %v207, 0
      %v415 = vsel %vm311, %v208, 0
      %v418 = vsel %vm311, %v209, 0
      %v421 = vsel %vm311, %v210, 0
      %v424 = vsel %vm311, %v211, 0
      %v427 = vsel %vm311, %v212, 0
      %v430 = vsel %vm311, %v213, 0
      %v433 = vsel %vm311, %v214, 0
      %v436 = vsel %vm311, %v215, 0
      %v439 = vsel %vm311, %v216, 0
      %v442 = vsel %vm311, %v217, 0
      %v445 = vsel %vm311, %v218, 0
      %v448 = vsel %vm311, %v219, 0
      %v451 = vsel %vm311, %v220, 0
      %v454 = vsel %vm311, %v221, 0
      %v457 = vsel %vm311, %v222, 0
      %v460 = vsel %vm311, %v223, 0
      %v463 = vsel %vm311, %v224, 0
      %v466 = vsel %vm311, %v225, 0
      %v469 = vsel %vm311, %v226, 0
      %v472 = vsel %vm311, %v227, 0
      %v475 = vsel %vm311, %v228, 0
      %v478 = vsel %vm311, %v229, 0
      %v481 = vsel %vm311, %v230, 0
      %v484 = vsel %vm311, %v231, 0
      %v487 = vsel %vm311, %v232, 0
      %v490 = vsel %vm311, %v233, 0
      %v493 = vsel %vm311, %v234, 0
      %v496 = vsel %vm311, %v235, 0
      %v499 = vsel %vm311, %v236, 0
      %v502 = vsel %vm311, %v237, 0
      %v505 = vsel %vm311, %v238, 0
      %v508 = vsel %vm311, %v239, 0
      %v511 = vsel %vm311, %v240, 0
      %v514 = vsel %vm311, %v241, 0
      %v517 = vsel %vm311, %v242, 0
      %v520 = vsel %vm311, %v243, 0
      %v523 = vsel %vm311, %v244, 0
      %v526 = vsel %vm311, %v245, 0
      %v529 = vsel %vm311, %v246, 0
      %v532 = vsel %vm311, %v247, 0
      %v535 = vsel %vm311, %v248, 0
      %v538 = vsel %vm311, %v249, 0
      %v541 = vsel %vm311, %v250, 0
      %v544 = vsel %vm311, %v251, 0
      %v547 = vsel %vm311, %v252, 0
      %v550 = vsel %vm311, %v253, 0
      %v553 = vsel %vm311, %v254, 0
      %v556 = vsel %vm311, %v255, 0
      %v559 = vsel %vm311, %v256, 0
      %v562 = vsel %vm311, %v257, 0
      %v565 = vsel %vm311, %v258, 0
      %v568 = vsel %vm311, %v259, 0
      %v571 = vsel %vm311, %v260, 0
      %v574 = vsel %vm311, %v261, 0
      %v577 = vsel %vm311, %v262, 0
      %v580 = vsel %vm311, %v263, 0
      %v583 = vsel %vm311, %v264, 0
      %v586 = vsel %vm311, %v265, 0
      %v589 = vsel %vm311, %v266, 0
      %v592 = vsel %vm311, %v267, 0
      %v595 = vsel %vm311, %v268, 0
      %v598 = vsel %vm311, %v269, 0
      %v601 = vsel %vm311, %v270, 0
      %v604 = vsel %vm311, %v271, 0
      %v607 = vsel %vm311, %v272, 0
      %v610 = vsel %vm311, %v273, 0
      %v613 = vsel %vm311, %v274, 0
      %v616 = vsel %vm311, %v275, 0
      %v619 = vsel %vm311, %v276, 0
      %v622 = vsel %vm311, %v277, 0
      %v625 = vsel %vm311, %v278, 0
      %v628 = vsel %vm311, %v279, 0
      %v631 = vsel %vm311, %v280, 0
      %v634 = vsel %vm311, %v281, 0
      %v637 = vsel %vm311, %v282, 0
      %v640 = vsel %vm311, %v283, 0
      %v643 = vsel %vm311, %v284, 0
      %v646 = vsel %vm311, %v285, 0
      %v649 = vsel %vm311, %v286, 0
      %v652 = vsel %vm311, %v287, 0
      %v655 = vsel %vm311, %v288, 0
      %v658 = vsel %vm311, %v289, 0
      %v661 = vsel %vm311, %v290, 0
      %v664 = vsel %vm311, %v291, 0
      %v667 = vsel %vm311, %v292, 0
      %v670 = vsel %vm311, %v293, 0
      %v673 = vsel %vm311, %v294, 0
      %v676 = vsel %vm311, %v295, 0
      %v679 = vsel %vm311, %v296, 0
      %v682 = vsel %vm311, %v297, 0
      %v685 = vsel %vm311, %v298, 0
      %v688 = vsel %vm311, %v299, 0
      %v691 = vsel %vm311, %v300, 0
      %v694 = vsel %vm311, %v301, 0
      %696 = vmatprep.subr.mxu0 0.0
      %697 = vmatpush1.msra.mxu0 0.0
      %698 = vmatprep.subr.mxu0 0.0
      %699 = vmatpush1.msra.mxu0 0.0
      %700 = vmatprep.subr.mxu0 0.0
      %701 = vmatpush1.msra.mxu0 0.0
      %702 = vmatprep.subr.mxu0 0.0
      %703 = vmatpush1.msra.mxu0 0.0
      %704 = vmatprep.subr.mxu0 0.0
      %705 = vmatpush1.msra.mxu0 0.0
      %706 = vmatprep.subr.mxu0 0.0
      %707 = vmatpush1.msra.mxu0 0.0
      %708 = vmatprep.subr.mxu0 0.0
      %709 = vmatpush1.msra.mxu0 0.0
      %710 = vmatprep.subr.mxu0 0.0
      %711 = vmatpush1.msra.mxu0 0.0
      %712 = vmatprep.subr.mxu0 0.0
      %713 = vmatpush1.msra.mxu0 0.0
      %714 = vmatprep.subr.mxu0 0.0
      %715 = vmatpush1.msra.mxu0 0.0
      %716 = vmatprep.subr.mxu0 0.0
      %717 = vmatpush1.msra.mxu0 0.0
      %718 = vmatprep.subr.mxu0 0.0
      %719 = vmatpush1.msra.mxu0 0.0
      %720 = vmatprep.subr.mxu0 0.0
      %721 = vmatpush1.msra.mxu0 0.0
      %722 = vmatprep.subr.mxu0 0.0
      %723 = vmatpush1.msra.mxu0 0.0
      %724 = vmatprep.subr.mxu0 0.0
      %725 = vmatpush1.msra.mxu0 %v303
      %726 = vmatprep.subr.mxu0 0.0
      %727 = vmatpush1.msra.mxu0 %v302
      %728 = vmatprep.subr.mxu0 0.0
      %729 = vmatpush2.msra.mxu0 0.0
      %730 = vmatprep.subr.mxu0 0.0
      %731 = vmatpush2.msra.mxu0 0.0
      %732 = vmatprep.subr.mxu0 0.0
      %733 = vmatpush2.msra.mxu0 0.0
      %734 = vmatprep.subr.mxu0 0.0
      %735 = vmatpush2.msra.mxu0 0.0
      %736 = vmatprep.subr.mxu0 0.0
      %737 = vmatpush2.msra.mxu0 0.0
      %738 = vmatprep.subr.mxu0 0.0
      %739 = vmatpush2.msra.mxu0 0.0
      %740 = vmatprep.subr.mxu0 0.0
      %741 = vmatpush2.msra.mxu0 0.0
      %742 = vmatprep.subr.mxu0 0.0
      %743 = vmatpush2.msra.mxu0 0.0
      %744 = vmatprep.subr.mxu0 0.0
      %745 = vmatpush2.msra.mxu0 0.0
      %746 = vmatprep.subr.mxu0 0.0
      %747 = vmatpush2.msra.mxu0 0.0
      %748 = vmatprep.subr.mxu0 0.0
      %749 = vmatpush2.msra.mxu0 0.0
      %750 = vmatprep.subr.mxu0 0.0
      %751 = vmatpush2.msra.mxu0 0.0
      %752 = vmatprep.subr.mxu0 0.0
      %753 = vmatpush2.msra.mxu0 0.0
      %754 = vmatprep.subr.mxu0 0.0
      %755 = vmatpush2.msra.mxu0 0.0
      %756 = vmatprep.subr.mxu0 0.0
      %757 = vmatpush2.msra.mxu0 0.0
      %758 = vmatprep.subr.mxu0 0.0
      %759 = vmatpush2.msra.mxu0 0.0
      %760 = vmatprep.mubr.f32.mxu0 0.0
      %761 = vmatmul.mubr.f32.gmra.mxu0 %v313
      %v762 = vpop.f32.mrf.mxu0
      %v763 = vadd.f32 %v309, %v762
      %v764 = vpop.f32.mrf.mxu0
      %765 = vmatprep.mubr.f32.mxu0 0.0
      %766 = vmatmul.mubr.f32.gmra.mxu0 %v316
      %v767 = vpop.f32.mrf.mxu0
      %v768 = vadd.f32 %v309, %v767
      %v769 = vpop.f32.mrf.mxu0
      %770 = vmatprep.mubr.f32.mxu0 0.0
      %771 = vmatmul.mubr.f32.gmra.mxu0 %v319
      %v772 = vpop.f32.mrf.mxu0
      %v773 = vadd.f32 %v309, %v772
      %v774 = vpop.f32.mrf.mxu0
      %775 = vmatprep.mubr.f32.mxu0 0.0
      %776 = vmatmul.mubr.f32.gmra.mxu0 %v322
      %v777 = vpop.f32.mrf.mxu0
      %v778 = vadd.f32 %v309, %v777
      %v779 = vpop.f32.mrf.mxu0
      %780 = vmatprep.mubr.f32.mxu0 0.0
      %781 = vmatmul.mubr.f32.gmra.mxu0 %v325
      %v782 = vpop.f32.mrf.mxu0
      %v783 = vadd.f32 %v309, %v782
      %v784 = vpop.f32.mrf.mxu0
      %785 = vmatprep.mubr.f32.mxu0 0.0
      %786 = vmatmul.mubr.f32.gmra.mxu0 %v328
      %v787 = vpop.f32.mrf.mxu0
      %v788 = vadd.f32 %v309, %v787
      %v789 = vpop.f32.mrf.mxu0
      %790 = vmatprep.mubr.f32.mxu0 0.0
      %791 = vmatmul.mubr.f32.gmra.mxu0 %v331
      %v792 = vpop.f32.mrf.mxu0
      %v793 = vadd.f32 %v309, %v792
      %v794 = vpop.f32.mrf.mxu0
      %795 = vmatprep.mubr.f32.mxu0 0.0
      %796 = vmatmul.mubr.f32.gmra.mxu0 %v334
      %v797 = vpop.f32.mrf.mxu0
      %v798 = vadd.f32 %v309, %v797
      %v799 = vpop.f32.mrf.mxu0
      %800 = vmatprep.mubr.f32.mxu0 0.0
      %801 = vmatmul.mubr.f32.gmra.mxu0 %v337
      %v802 = vpop.f32.mrf.mxu0
      %v803 = vadd.f32 %v309, %v802
      %v804 = vpop.f32.mrf.mxu0
      %805 = vmatprep.mubr.f32.mxu0 0.0
      %806 = vmatmul.mubr.f32.gmra.mxu0 %v340
      %v807 = vpop.f32.mrf.mxu0
      %v808 = vadd.f32 %v309, %v807
      %v809 = vpop.f32.mrf.mxu0
      %810 = vmatprep.mubr.f32.mxu0 0.0
      %811 = vmatmul.mubr.f32.gmra.mxu0 %v343
      %v812 = vpop.f32.mrf.mxu0
      %v813 = vadd.f32 %v309, %v812
      %v814 = vpop.f32.mrf.mxu0
      %815 = vmatprep.mubr.f32.mxu0 0.0
      %816 = vmatmul.mubr.f32.gmra.mxu0 %v346
      %v817 = vpop.f32.mrf.mxu0
      %v818 = vadd.f32 %v309, %v817
      %v819 = vpop.f32.mrf.mxu0
      %820 = vmatprep.mubr.f32.mxu0 0.0
      %821 = vmatmul.mubr.f32.gmra.mxu0 %v349
      %v822 = vpop.f32.mrf.mxu0
      %v823 = vadd.f32 %v309, %v822
      %v824 = vpop.f32.mrf.mxu0
      %825 = vmatprep.mubr.f32.mxu0 0.0
      %826 = vmatmul.mubr.f32.gmra.mxu0 %v352
      %v827 = vpop.f32.mrf.mxu0
      %v828 = vadd.f32 %v309, %v827
      %v829 = vpop.f32.mrf.mxu0
      %830 = vmatprep.mubr.f32.mxu0 0.0
      %831 = vmatmul.mubr.f32.gmra.mxu0 %v355
      %v832 = vpop.f32.mrf.mxu0
      %v833 = vadd.f32 %v309, %v832
      %v834 = vpop.f32.mrf.mxu0
      %835 = vmatprep.mubr.f32.mxu0 0.0
      %836 = vmatmul.mubr.f32.gmra.mxu0 %v358
      %v837 = vpop.f32.mrf.mxu0
      %v838 = vadd.f32 %v309, %v837
      %v839 = vpop.f32.mrf.mxu0
      %840 = vmatprep.mubr.f32.mxu0 0.0
      %841 = vmatmul.mubr.f32.gmra.mxu0 %v361
      %v842 = vpop.f32.mrf.mxu0
      %v843 = vadd.f32 %v309, %v842
      %v844 = vpop.f32.mrf.mxu0
      %845 = vmatprep.mubr.f32.mxu0 0.0
      %846 = vmatmul.mubr.f32.gmra.mxu0 %v364
      %v847 = vpop.f32.mrf.mxu0
      %v848 = vadd.f32 %v309, %v847
      %v849 = vpop.f32.mrf.mxu0
      %850 = vmatprep.mubr.f32.mxu0 0.0
      %851 = vmatmul.mubr.f32.gmra.mxu0 %v367
      %v852 = vpop.f32.mrf.mxu0
      %v853 = vadd.f32 %v309, %v852
      %v854 = vpop.f32.mrf.mxu0
      %855 = vmatprep.mubr.f32.mxu0 0.0
      %856 = vmatmul.mubr.f32.gmra.mxu0 %v370
      %v857 = vpop.f32.mrf.mxu0
      %v858 = vadd.f32 %v309, %v857
      %v859 = vpop.f32.mrf.mxu0
      %860 = vmatprep.mubr.f32.mxu0 0.0
      %861 = vmatmul.mubr.f32.gmra.mxu0 %v373
      %v862 = vpop.f32.mrf.mxu0
      %v863 = vadd.f32 %v309, %v862
      %v864 = vpop.f32.mrf.mxu0
      %865 = vmatprep.mubr.f32.mxu0 0.0
      %866 = vmatmul.mubr.f32.gmra.mxu0 %v376
      %v867 = vpop.f32.mrf.mxu0
      %v868 = vadd.f32 %v309, %v867
      %v869 = vpop.f32.mrf.mxu0
      %870 = vmatprep.mubr.f32.mxu0 0.0
      %871 = vmatmul.mubr.f32.gmra.mxu0 %v379
      %v872 = vpop.f32.mrf.mxu0
      %v873 = vadd.f32 %v309, %v872
      %v874 = vpop.f32.mrf.mxu0
      %875 = vmatprep.mubr.f32.mxu0 0.0
      %876 = vmatmul.mubr.f32.gmra.mxu0 %v382
      %v877 = vpop.f32.mrf.mxu0
      %v878 = vadd.f32 %v309, %v877
      %v879 = vpop.f32.mrf.mxu0
      %880 = vmatprep.mubr.f32.mxu0 0.0
      %881 = vmatmul.mubr.f32.gmra.mxu0 %v385
      %v882 = vpop.f32.mrf.mxu0
      %v883 = vadd.f32 %v309, %v882
      %v884 = vpop.f32.mrf.mxu0
      %885 = vmatprep.mubr.f32.mxu0 0.0
      %886 = vmatmul.mubr.f32.gmra.mxu0 %v388
      %v887 = vpop.f32.mrf.mxu0
      %v888 = vadd.f32 %v309, %v887
      %v889 = vpop.f32.mrf.mxu0
      %890 = vmatprep.mubr.f32.mxu0 0.0
      %891 = vmatmul.mubr.f32.gmra.mxu0 %v391
      %v892 = vpop.f32.mrf.mxu0
      %v893 = vadd.f32 %v309, %v892
      %v894 = vpop.f32.mrf.mxu0
      %895 = vmatprep.mubr.f32.mxu0 0.0
      %896 = vmatmul.mubr.f32.gmra.mxu0 %v394
      %v897 = vpop.f32.mrf.mxu0
      %v898 = vadd.f32 %v309, %v897
      %v899 = vpop.f32.mrf.mxu0
      %900 = vmatprep.mubr.f32.mxu0 0.0
      %901 = vmatmul.mubr.f32.gmra.mxu0 %v397
      %v902 = vpop.f32.mrf.mxu0
      %v903 = vadd.f32 %v309, %v902
      %v904 = vpop.f32.mrf.mxu0
      %905 = vmatprep.mubr.f32.mxu0 0.0
      %906 = vmatmul.mubr.f32.gmra.mxu0 %v400
      %v907 = vpop.f32.mrf.mxu0
      %v908 = vadd.f32 %v309, %v907
      %v909 = vpop.f32.mrf.mxu0
      %910 = vmatprep.mubr.f32.mxu0 0.0
      %911 = vmatmul.mubr.f32.gmra.mxu0 %v403
      %v912 = vpop.f32.mrf.mxu0
      %v913 = vadd.f32 %v309, %v912
      %v914 = vpop.f32.mrf.mxu0
      %915 = vmatprep.mubr.f32.mxu0 0.0
      %916 = vmatmul.mubr.f32.gmra.mxu0 %v406
      %v917 = vpop.f32.mrf.mxu0
      %v918 = vadd.f32 %v309, %v917
      %v919 = vpop.f32.mrf.mxu0
      %920 = vmatprep.mubr.f32.mxu0 0.0
      %921 = vmatmul.mubr.f32.gmra.mxu0 %v409
      %v922 = vpop.f32.mrf.mxu0
      %v923 = vadd.f32 %v309, %v922
      %v924 = vpop.f32.mrf.mxu0
      %925 = vmatprep.mubr.f32.mxu0 0.0
      %926 = vmatmul.mubr.f32.gmra.mxu0 %v412
      %v927 = vpop.f32.mrf.mxu0
      %v928 = vadd.f32 %v309, %v927
      %v929 = vpop.f32.mrf.mxu0
      %930 = vmatprep.mubr.f32.mxu0 0.0
      %931 = vmatmul.mubr.f32.gmra.mxu0 %v415
      %v932 = vpop.f32.mrf.mxu0
      %v933 = vadd.f32 %v309, %v932
      %v934 = vpop.f32.mrf.mxu0
      %935 = vmatprep.mubr.f32.mxu0 0.0
      %936 = vmatmul.mubr.f32.gmra.mxu0 %v418
      %v937 = vpop.f32.mrf.mxu0
      %v938 = vadd.f32 %v309, %v937
      %v939 = vpop.f32.mrf.mxu0
      %940 = vmatprep.mubr.f32.mxu0 0.0
      %941 = vmatmul.mubr.f32.gmra.mxu0 %v421
      %v942 = vpop.f32.mrf.mxu0
      %v943 = vadd.f32 %v309, %v942
      %v944 = vpop.f32.mrf.mxu0
      %945 = vmatprep.mubr.f32.mxu0 0.0
      %946 = vmatmul.mubr.f32.gmra.mxu0 %v424
      %v947 = vpop.f32.mrf.mxu0
      %v948 = vadd.f32 %v309, %v947
      %v949 = vpop.f32.mrf.mxu0
      %950 = vmatprep.mubr.f32.mxu0 0.0
      %951 = vmatmul.mubr.f32.gmra.mxu0 %v427
      %v952 = vpop.f32.mrf.mxu0
      %v953 = vadd.f32 %v309, %v952
      %v954 = vpop.f32.mrf.mxu0
      %955 = vmatprep.mubr.f32.mxu0 0.0
      %956 = vmatmul.mubr.f32.gmra.mxu0 %v430
      %v957 = vpop.f32.mrf.mxu0
      %v958 = vadd.f32 %v309, %v957
      %v959 = vpop.f32.mrf.mxu0
      %960 = vmatprep.mubr.f32.mxu0 0.0
      %961 = vmatmul.mubr.f32.gmra.mxu0 %v433
      %v962 = vpop.f32.mrf.mxu0
      %v963 = vadd.f32 %v309, %v962
      %v964 = vpop.f32.mrf.mxu0
      %965 = vmatprep.mubr.f32.mxu0 0.0
      %966 = vmatmul.mubr.f32.gmra.mxu0 %v436
      %v967 = vpop.f32.mrf.mxu0
      %v968 = vadd.f32 %v309, %v967
      %v969 = vpop.f32.mrf.mxu0
      %970 = vmatprep.mubr.f32.mxu0 0.0
      %971 = vmatmul.mubr.f32.gmra.mxu0 %v439
      %v972 = vpop.f32.mrf.mxu0
      %v973 = vadd.f32 %v309, %v972
      %v974 = vpop.f32.mrf.mxu0
      %975 = vmatprep.mubr.f32.mxu0 0.0
      %976 = vmatmul.mubr.f32.gmra.mxu0 %v442
      %v977 = vpop.f32.mrf.mxu0
      %v978 = vadd.f32 %v309, %v977
      %v979 = vpop.f32.mrf.mxu0
      %980 = vmatprep.mubr.f32.mxu0 0.0
      %981 = vmatmul.mubr.f32.gmra.mxu0 %v445
      %v982 = vpop.f32.mrf.mxu0
      %v983 = vadd.f32 %v309, %v982
      %v984 = vpop.f32.mrf.mxu0
      %985 = vmatprep.mubr.f32.mxu0 0.0
      %986 = vmatmul.mubr.f32.gmra.mxu0 %v448
      %v987 = vpop.f32.mrf.mxu0
      %v988 = vadd.f32 %v309, %v987
      %v989 = vpop.f32.mrf.mxu0
      %990 = vmatprep.mubr.f32.mxu0 0.0
      %991 = vmatmul.mubr.f32.gmra.mxu0 %v451
      %v992 = vpop.f32.mrf.mxu0
      %v993 = vadd.f32 %v309, %v992
      %v994 = vpop.f32.mrf.mxu0
      %995 = vmatprep.mubr.f32.mxu0 0.0
      %996 = vmatmul.mubr.f32.gmra.mxu0 %v454
      %v997 = vpop.f32.mrf.mxu0
      %v998 = vadd.f32 %v309, %v997
      %v999 = vpop.f32.mrf.mxu0
      %1000 = vmatprep.mubr.f32.mxu0 0.0
      %1001 = vmatmul.mubr.f32.gmra.mxu0 %v457
      %v1002 = vpop.f32.mrf.mxu0
      %v1003 = vadd.f32 %v309, %v1002
      %v1004 = vpop.f32.mrf.mxu0
      %1005 = vmatprep.mubr.f32.mxu0 0.0
      %1006 = vmatmul.mubr.f32.gmra.mxu0 %v460
      %v1007 = vpop.f32.mrf.mxu0
      %v1008 = vadd.f32 %v309, %v1007
      %v1009 = vpop.f32.mrf.mxu0
      %1010 = vmatprep.mubr.f32.mxu0 0.0
      %1011 = vmatmul.mubr.f32.gmra.mxu0 %v463
      %v1012 = vpop.f32.mrf.mxu0
      %v1013 = vadd.f32 %v309, %v1012
      %v1014 = vpop.f32.mrf.mxu0
      %1015 = vmatprep.mubr.f32.mxu0 0.0
      %1016 = vmatmul.mubr.f32.gmra.mxu0 %v466
      %v1017 = vpop.f32.mrf.mxu0
      %v1018 = vadd.f32 %v309, %v1017
      %v1019 = vpop.f32.mrf.mxu0
      %1020 = vmatprep.mubr.f32.mxu0 0.0
      %1021 = vmatmul.mubr.f32.gmra.mxu0 %v469
      %v1022 = vpop.f32.mrf.mxu0
      %v1023 = vadd.f32 %v309, %v1022
      %v1024 = vpop.f32.mrf.mxu0
      %1025 = vmatprep.mubr.f32.mxu0 0.0
      %1026 = vmatmul.mubr.f32.gmra.mxu0 %v472
      %v1027 = vpop.f32.mrf.mxu0
      %v1028 = vadd.f32 %v309, %v1027
      %v1029 = vpop.f32.mrf.mxu0
      %1030 = vmatprep.mubr.f32.mxu0 0.0
      %1031 = vmatmul.mubr.f32.gmra.mxu0 %v475
      %v1032 = vpop.f32.mrf.mxu0
      %v1033 = vadd.f32 %v309, %v1032
      %v1034 = vpop.f32.mrf.mxu0
      %1035 = vmatprep.mubr.f32.mxu0 0.0
      %1036 = vmatmul.mubr.f32.gmra.mxu0 %v478
      %v1037 = vpop.f32.mrf.mxu0
      %v1038 = vadd.f32 %v309, %v1037
      %v1039 = vpop.f32.mrf.mxu0
      %1040 = vmatprep.mubr.f32.mxu0 0.0
      %1041 = vmatmul.mubr.f32.gmra.mxu0 %v481
      %v1042 = vpop.f32.mrf.mxu0
      %v1043 = vadd.f32 %v309, %v1042
      %v1044 = vpop.f32.mrf.mxu0
      %1045 = vmatprep.mubr.f32.mxu0 0.0
      %1046 = vmatmul.mubr.f32.gmra.mxu0 %v484
      %v1047 = vpop.f32.mrf.mxu0
      %v1048 = vadd.f32 %v309, %v1047
      %v1049 = vpop.f32.mrf.mxu0
      %1050 = vmatprep.mubr.f32.mxu0 0.0
      %1051 = vmatmul.mubr.f32.gmra.mxu0 %v487
      %v1052 = vpop.f32.mrf.mxu0
      %v1053 = vadd.f32 %v309, %v1052
      %v1054 = vpop.f32.mrf.mxu0
      %1055 = vmatprep.mubr.f32.mxu0 0.0
      %1056 = vmatmul.mubr.f32.gmra.mxu0 %v490
      %v1057 = vpop.f32.mrf.mxu0
      %v1058 = vadd.f32 %v309, %v1057
      %v1059 = vpop.f32.mrf.mxu0
      %1060 = vmatprep.mubr.f32.mxu0 0.0
      %1061 = vmatmul.mubr.f32.gmra.mxu0 %v493
      %v1062 = vpop.f32.mrf.mxu0
      %v1063 = vadd.f32 %v309, %v1062
      %v1064 = vpop.f32.mrf.mxu0
      %1065 = vmatprep.mubr.f32.mxu0 0.0
      %1066 = vmatmul.mubr.f32.gmra.mxu0 %v496
      %v1067 = vpop.f32.mrf.mxu0
      %v1068 = vadd.f32 %v309, %v1067
      %v1069 = vpop.f32.mrf.mxu0
      %1070 = vmatprep.mubr.f32.mxu0 0.0
      %1071 = vmatmul.mubr.f32.gmra.mxu0 %v499
      %v1072 = vpop.f32.mrf.mxu0
      %v1073 = vadd.f32 %v309, %v1072
      %v1074 = vpop.f32.mrf.mxu0
      %1075 = vmatprep.mubr.f32.mxu0 0.0
      %1076 = vmatmul.mubr.f32.gmra.mxu0 %v502
      %v1077 = vpop.f32.mrf.mxu0
      %v1078 = vadd.f32 %v309, %v1077
      %v1079 = vpop.f32.mrf.mxu0
      %1080 = vmatprep.mubr.f32.mxu0 0.0
      %1081 = vmatmul.mubr.f32.gmra.mxu0 %v505
      %v1082 = vpop.f32.mrf.mxu0
      %v1083 = vadd.f32 %v309, %v1082
      %v1084 = vpop.f32.mrf.mxu0
      %1085 = vmatprep.mubr.f32.mxu0 0.0
      %1086 = vmatmul.mubr.f32.gmra.mxu0 %v508
      %v1087 = vpop.f32.mrf.mxu0
      %v1088 = vadd.f32 %v309, %v1087
      %v1089 = vpop.f32.mrf.mxu0
      %1090 = vmatprep.mubr.f32.mxu0 0.0
      %1091 = vmatmul.mubr.f32.gmra.mxu0 %v511
      %v1092 = vpop.f32.mrf.mxu0
      %v1093 = vadd.f32 %v309, %v1092
      %v1094 = vpop.f32.mrf.mxu0
      %1095 = vmatprep.mubr.f32.mxu0 0.0
      %1096 = vmatmul.mubr.f32.gmra.mxu0 %v514
      %v1097 = vpop.f32.mrf.mxu0
      %v1098 = vadd.f32 %v309, %v1097
      %v1099 = vpop.f32.mrf.mxu0
      %1100 = vmatprep.mubr.f32.mxu0 0.0
      %1101 = vmatmul.mubr.f32.gmra.mxu0 %v517
      %v1102 = vpop.f32.mrf.mxu0
      %v1103 = vadd.f32 %v309, %v1102
      %v1104 = vpop.f32.mrf.mxu0
      %1105 = vmatprep.mubr.f32.mxu0 0.0
      %1106 = vmatmul.mubr.f32.gmra.mxu0 %v520
      %v1107 = vpop.f32.mrf.mxu0
      %v1108 = vadd.f32 %v309, %v1107
      %v1109 = vpop.f32.mrf.mxu0
      %1110 = vmatprep.mubr.f32.mxu0 0.0
      %1111 = vmatmul.mubr.f32.gmra.mxu0 %v523
      %v1112 = vpop.f32.mrf.mxu0
      %v1113 = vadd.f32 %v309, %v1112
      %v1114 = vpop.f32.mrf.mxu0
      %1115 = vmatprep.mubr.f32.mxu0 0.0
      %1116 = vmatmul.mubr.f32.gmra.mxu0 %v526
      %v1117 = vpop.f32.mrf.mxu0
      %v1118 = vadd.f32 %v309, %v1117
      %v1119 = vpop.f32.mrf.mxu0
      %1120 = vmatprep.mubr.f32.mxu0 0.0
      %1121 = vmatmul.mubr.f32.gmra.mxu0 %v529
      %v1122 = vpop.f32.mrf.mxu0
      %v1123 = vadd.f32 %v309, %v1122
      %v1124 = vpop.f32.mrf.mxu0
      %1125 = vmatprep.mubr.f32.mxu0 0.0
      %1126 = vmatmul.mubr.f32.gmra.mxu0 %v532
      %v1127 = vpop.f32.mrf.mxu0
      %v1128 = vadd.f32 %v309, %v1127
      %v1129 = vpop.f32.mrf.mxu0
      %1130 = vmatprep.mubr.f32.mxu0 0.0
      %1131 = vmatmul.mubr.f32.gmra.mxu0 %v535
      %v1132 = vpop.f32.mrf.mxu0
      %v1133 = vadd.f32 %v309, %v1132
      %v1134 = vpop.f32.mrf.mxu0
      %1135 = vmatprep.mubr.f32.mxu0 0.0
      %1136 = vmatmul.mubr.f32.gmra.mxu0 %v538
      %v1137 = vpop.f32.mrf.mxu0
      %v1138 = vadd.f32 %v309, %v1137
      %v1139 = vpop.f32.mrf.mxu0
      %1140 = vmatprep.mubr.f32.mxu0 0.0
      %1141 = vmatmul.mubr.f32.gmra.mxu0 %v541
      %v1142 = vpop.f32.mrf.mxu0
      %v1143 = vadd.f32 %v309, %v1142
      %v1144 = vpop.f32.mrf.mxu0
      %1145 = vmatprep.mubr.f32.mxu0 0.0
      %1146 = vmatmul.mubr.f32.gmra.mxu0 %v544
      %v1147 = vpop.f32.mrf.mxu0
      %v1148 = vadd.f32 %v309, %v1147
      %v1149 = vpop.f32.mrf.mxu0
      %1150 = vmatprep.mubr.f32.mxu0 0.0
      %1151 = vmatmul.mubr.f32.gmra.mxu0 %v547
      %v1152 = vpop.f32.mrf.mxu0
      %v1153 = vadd.f32 %v309, %v1152
      %v1154 = vpop.f32.mrf.mxu0
      %1155 = vmatprep.mubr.f32.mxu0 0.0
      %1156 = vmatmul.mubr.f32.gmra.mxu0 %v550
      %v1157 = vpop.f32.mrf.mxu0
      %v1158 = vadd.f32 %v309, %v1157
      %v1159 = vpop.f32.mrf.mxu0
      %1160 = vmatprep.mubr.f32.mxu0 0.0
      %1161 = vmatmul.mubr.f32.gmra.mxu0 %v553
      %v1162 = vpop.f32.mrf.mxu0
      %v1163 = vadd.f32 %v309, %v1162
      %v1164 = vpop.f32.mrf.mxu0
      %1165 = vmatprep.mubr.f32.mxu0 0.0
      %1166 = vmatmul.mubr.f32.gmra.mxu0 %v556
      %v1167 = vpop.f32.mrf.mxu0
      %v1168 = vadd.f32 %v309, %v1167
      %v1169 = vpop.f32.mrf.mxu0
      %1170 = vmatprep.mubr.f32.mxu0 0.0
      %1171 = vmatmul.mubr.f32.gmra.mxu0 %v559
      %v1172 = vpop.f32.mrf.mxu0
      %v1173 = vadd.f32 %v309, %v1172
      %v1174 = vpop.f32.mrf.mxu0
      %1175 = vmatprep.mubr.f32.mxu0 0.0
      %1176 = vmatmul.mubr.f32.gmra.mxu0 %v562
      %v1177 = vpop.f32.mrf.mxu0
      %v1178 = vadd.f32 %v309, %v1177
      %v1179 = vpop.f32.mrf.mxu0
      %1180 = vmatprep.mubr.f32.mxu0 0.0
      %1181 = vmatmul.mubr.f32.gmra.mxu0 %v565
      %v1182 = vpop.f32.mrf.mxu0
      %v1183 = vadd.f32 %v309, %v1182
      %v1184 = vpop.f32.mrf.mxu0
      %1185 = vmatprep.mubr.f32.mxu0 0.0
      %1186 = vmatmul.mubr.f32.gmra.mxu0 %v568
      %v1187 = vpop.f32.mrf.mxu0
      %v1188 = vadd.f32 %v309, %v1187
      %v1189 = vpop.f32.mrf.mxu0
      %1190 = vmatprep.mubr.f32.mxu0 0.0
      %1191 = vmatmul.mubr.f32.gmra.mxu0 %v571
      %v1192 = vpop.f32.mrf.mxu0
      %v1193 = vadd.f32 %v309, %v1192
      %v1194 = vpop.f32.mrf.mxu0
      %1195 = vmatprep.mubr.f32.mxu0 0.0
      %1196 = vmatmul.mubr.f32.gmra.mxu0 %v574
      %v1197 = vpop.f32.mrf.mxu0
      %v1198 = vadd.f32 %v309, %v1197
      %v1199 = vpop.f32.mrf.mxu0
      %1200 = vmatprep.mubr.f32.mxu0 0.0
      %1201 = vmatmul.mubr.f32.gmra.mxu0 %v577
      %v1202 = vpop.f32.mrf.mxu0
      %v1203 = vadd.f32 %v309, %v1202
      %v1204 = vpop.f32.mrf.mxu0
      %1205 = vmatprep.mubr.f32.mxu0 0.0
      %1206 = vmatmul.mubr.f32.gmra.mxu0 %v580
      %v1207 = vpop.f32.mrf.mxu0
      %v1208 = vadd.f32 %v309, %v1207
      %v1209 = vpop.f32.mrf.mxu0
      %1210 = vmatprep.mubr.f32.mxu0 0.0
      %1211 = vmatmul.mubr.f32.gmra.mxu0 %v583
      %v1212 = vpop.f32.mrf.mxu0
      %v1213 = vadd.f32 %v309, %v1212
      %v1214 = vpop.f32.mrf.mxu0
      %1215 = vmatprep.mubr.f32.mxu0 0.0
      %1216 = vmatmul.mubr.f32.gmra.mxu0 %v586
      %v1217 = vpop.f32.mrf.mxu0
      %v1218 = vadd.f32 %v309, %v1217
      %v1219 = vpop.f32.mrf.mxu0
      %1220 = vmatprep.mubr.f32.mxu0 0.0
      %1221 = vmatmul.mubr.f32.gmra.mxu0 %v589
      %v1222 = vpop.f32.mrf.mxu0
      %v1223 = vadd.f32 %v309, %v1222
      %v1224 = vpop.f32.mrf.mxu0
      %1225 = vmatprep.mubr.f32.mxu0 0.0
      %1226 = vmatmul.mubr.f32.gmra.mxu0 %v592
      %v1227 = vpop.f32.mrf.mxu0
      %v1228 = vadd.f32 %v309, %v1227
      %v1229 = vpop.f32.mrf.mxu0
      %1230 = vmatprep.mubr.f32.mxu0 0.0
      %1231 = vmatmul.mubr.f32.gmra.mxu0 %v595
      %v1232 = vpop.f32.mrf.mxu0
      %v1233 = vadd.f32 %v309, %v1232
      %v1234 = vpop.f32.mrf.mxu0
      %1235 = vmatprep.mubr.f32.mxu0 0.0
      %1236 = vmatmul.mubr.f32.gmra.mxu0 %v598
      %v1237 = vpop.f32.mrf.mxu0
      %v1238 = vadd.f32 %v309, %v1237
      %v1239 = vpop.f32.mrf.mxu0
      %1240 = vmatprep.mubr.f32.mxu0 0.0
      %1241 = vmatmul.mubr.f32.gmra.mxu0 %v601
      %v1242 = vpop.f32.mrf.mxu0
      %v1243 = vadd.f32 %v309, %v1242
      %v1244 = vpop.f32.mrf.mxu0
      %1245 = vmatprep.mubr.f32.mxu0 0.0
      %1246 = vmatmul.mubr.f32.gmra.mxu0 %v604
      %v1247 = vpop.f32.mrf.mxu0
      %v1248 = vadd.f32 %v309, %v1247
      %v1249 = vpop.f32.mrf.mxu0
      %1250 = vmatprep.mubr.f32.mxu0 0.0
      %1251 = vmatmul.mubr.f32.gmra.mxu0 %v607
      %v1252 = vpop.f32.mrf.mxu0
      %v1253 = vadd.f32 %v309, %v1252
      %v1254 = vpop.f32.mrf.mxu0
      %1255 = vmatprep.mubr.f32.mxu0 0.0
      %1256 = vmatmul.mubr.f32.gmra.mxu0 %v610
      %v1257 = vpop.f32.mrf.mxu0
      %v1258 = vadd.f32 %v309, %v1257
      %v1259 = vpop.f32.mrf.mxu0
      %1260 = vmatprep.mubr.f32.mxu0 0.0
      %1261 = vmatmul.mubr.f32.gmra.mxu0 %v613
      %v1262 = vpop.f32.mrf.mxu0
      %v1263 = vadd.f32 %v309, %v1262
      %v1264 = vpop.f32.mrf.mxu0
      %1265 = vmatprep.mubr.f32.mxu0 0.0
      %1266 = vmatmul.mubr.f32.gmra.mxu0 %v616
      %v1267 = vpop.f32.mrf.mxu0
      %v1268 = vadd.f32 %v309, %v1267
      %v1269 = vpop.f32.mrf.mxu0
      %1270 = vmatprep.mubr.f32.mxu0 0.0
      %1271 = vmatmul.mubr.f32.gmra.mxu0 %v619
      %v1272 = vpop.f32.mrf.mxu0
      %v1273 = vadd.f32 %v309, %v1272
      %v1274 = vpop.f32.mrf.mxu0
      %1275 = vmatprep.mubr.f32.mxu0 0.0
      %1276 = vmatmul.mubr.f32.gmra.mxu0 %v622
      %v1277 = vpop.f32.mrf.mxu0
      %v1278 = vadd.f32 %v309, %v1277
      %v1279 = vpop.f32.mrf.mxu0
      %1280 = vmatprep.mubr.f32.mxu0 0.0
      %1281 = vmatmul.mubr.f32.gmra.mxu0 %v625
      %v1282 = vpop.f32.mrf.mxu0
      %v1283 = vadd.f32 %v309, %v1282
      %v1284 = vpop.f32.mrf.mxu0
      %1285 = vmatprep.mubr.f32.mxu0 0.0
      %1286 = vmatmul.mubr.f32.gmra.mxu0 %v628
      %v1287 = vpop.f32.mrf.mxu0
      %v1288 = vadd.f32 %v309, %v1287
      %v1289 = vpop.f32.mrf.mxu0
      %1290 = vmatprep.mubr.f32.mxu0 0.0
      %1291 = vmatmul.mubr.f32.gmra.mxu0 %v631
      %v1292 = vpop.f32.mrf.mxu0
      %v1293 = vadd.f32 %v309, %v1292
      %v1294 = vpop.f32.mrf.mxu0
      %1295 = vmatprep.mubr.f32.mxu0 0.0
      %1296 = vmatmul.mubr.f32.gmra.mxu0 %v634
      %v1297 = vpop.f32.mrf.mxu0
      %v1298 = vadd.f32 %v309, %v1297
      %v1299 = vpop.f32.mrf.mxu0
      %1300 = vmatprep.mubr.f32.mxu0 0.0
      %1301 = vmatmul.mubr.f32.gmra.mxu0 %v637
      %v1302 = vpop.f32.mrf.mxu0
      %v1303 = vadd.f32 %v309, %v1302
      %v1304 = vpop.f32.mrf.mxu0
      %1305 = vmatprep.mubr.f32.mxu0 0.0
      %1306 = vmatmul.mubr.f32.gmra.mxu0 %v640
      %v1307 = vpop.f32.mrf.mxu0
      %v1308 = vadd.f32 %v309, %v1307
      %v1309 = vpop.f32.mrf.mxu0
      %1310 = vmatprep.mubr.f32.mxu0 0.0
      %1311 = vmatmul.mubr.f32.gmra.mxu0 %v643
      %v1312 = vpop.f32.mrf.mxu0
      %v1313 = vadd.f32 %v309, %v1312
      %v1314 = vpop.f32.mrf.mxu0
      %1315 = vmatprep.mubr.f32.mxu0 0.0
      %1316 = vmatmul.mubr.f32.gmra.mxu0 %v646
      %v1317 = vpop.f32.mrf.mxu0
      %v1318 = vadd.f32 %v309, %v1317
      %v1319 = vpop.f32.mrf.mxu0
      %1320 = vmatprep.mubr.f32.mxu0 0.0
      %1321 = vmatmul.mubr.f32.gmra.mxu0 %v649
      %v1322 = vpop.f32.mrf.mxu0
      %v1323 = vadd.f32 %v309, %v1322
      %v1324 = vpop.f32.mrf.mxu0
      %1325 = vmatprep.mubr.f32.mxu0 0.0
      %1326 = vmatmul.mubr.f32.gmra.mxu0 %v652
      %v1327 = vpop.f32.mrf.mxu0
      %v1328 = vadd.f32 %v309, %v1327
      %v1329 = vpop.f32.mrf.mxu0
      %1330 = vmatprep.mubr.f32.mxu0 0.0
      %1331 = vmatmul.mubr.f32.gmra.mxu0 %v655
      %v1332 = vpop.f32.mrf.mxu0
      %v1333 = vadd.f32 %v309, %v1332
      %v1334 = vpop.f32.mrf.mxu0
      %1335 = vmatprep.mubr.f32.mxu0 0.0
      %1336 = vmatmul.mubr.f32.gmra.mxu0 %v658
      %v1337 = vpop.f32.mrf.mxu0
      %v1338 = vadd.f32 %v309, %v1337
      %v1339 = vpop.f32.mrf.mxu0
      %1340 = vmatprep.mubr.f32.mxu0 0.0
      %1341 = vmatmul.mubr.f32.gmra.mxu0 %v661
      %v1342 = vpop.f32.mrf.mxu0
      %v1343 = vadd.f32 %v309, %v1342
      %v1344 = vpop.f32.mrf.mxu0
      %1345 = vmatprep.mubr.f32.mxu0 0.0
      %1346 = vmatmul.mubr.f32.gmra.mxu0 %v664
      %v1347 = vpop.f32.mrf.mxu0
      %v1348 = vadd.f32 %v309, %v1347
      %v1349 = vpop.f32.mrf.mxu0
      %1350 = vmatprep.mubr.f32.mxu0 0.0
      %1351 = vmatmul.mubr.f32.gmra.mxu0 %v667
      %v1352 = vpop.f32.mrf.mxu0
      %v1353 = vadd.f32 %v309, %v1352
      %v1354 = vpop.f32.mrf.mxu0
      %1355 = vmatprep.mubr.f32.mxu0 0.0
      %1356 = vmatmul.mubr.f32.gmra.mxu0 %v670
      %v1357 = vpop.f32.mrf.mxu0
      %v1358 = vadd.f32 %v309, %v1357
      %v1359 = vpop.f32.mrf.mxu0
      %1360 = vmatprep.mubr.f32.mxu0 0.0
      %1361 = vmatmul.mubr.f32.gmra.mxu0 %v673
      %v1362 = vpop.f32.mrf.mxu0
      %v1363 = vadd.f32 %v309, %v1362
      %v1364 = vpop.f32.mrf.mxu0
      %1365 = vmatprep.mubr.f32.mxu0 0.0
      %1366 = vmatmul.mubr.f32.gmra.mxu0 %v676
      %v1367 = vpop.f32.mrf.mxu0
      %v1368 = vadd.f32 %v309, %v1367
      %v1369 = vpop.f32.mrf.mxu0
      %1370 = vmatprep.mubr.f32.mxu0 0.0
      %1371 = vmatmul.mubr.f32.gmra.mxu0 %v679
      %v1372 = vpop.f32.mrf.mxu0
      %v1373 = vadd.f32 %v309, %v1372
      %v1374 = vpop.f32.mrf.mxu0
      %1375 = vmatprep.mubr.f32.mxu0 0.0
      %1376 = vmatmul.mubr.f32.gmra.mxu0 %v682
      %v1377 = vpop.f32.mrf.mxu0
      %v1378 = vadd.f32 %v309, %v1377
      %v1379 = vpop.f32.mrf.mxu0
      %1380 = vmatprep.mubr.f32.mxu0 0.0
      %1381 = vmatmul.mubr.f32.gmra.mxu0 %v685
      %v1382 = vpop.f32.mrf.mxu0
      %v1383 = vadd.f32 %v309, %v1382
      %v1384 = vpop.f32.mrf.mxu0
      %1385 = vmatprep.mubr.f32.mxu0 0.0
      %1386 = vmatmul.mubr.f32.gmra.mxu0 %v688
      %v1387 = vpop.f32.mrf.mxu0
      %v1388 = vadd.f32 %v309, %v1387
      %v1389 = vpop.f32.mrf.mxu0
      %1390 = vmatprep.mubr.f32.mxu0 0.0
      %1391 = vmatmul.mubr.f32.gmra.mxu0 %v691
      %v1392 = vpop.f32.mrf.mxu0
      %v1393 = vadd.f32 %v309, %v1392
      %v1394 = vpop.f32.mrf.mxu0
      %1395 = vmatprep.mubr.f32.mxu0 0.0
      %1396 = vmatmul.mubr.f32.gmra.mxu0 %v694
      %v1397 = vpop.f32.mrf.mxu0
      %v1398 = vadd.f32 %v309, %v1397
      %v1399 = vpop.f32.mrf.mxu0
      %1400 = vdwg.mxu0
      %vm1401 = vcmask 64512
      %1402 = vst.msk [vmem:[%s172] sm:$0xff] %vm1401, %v763
      %1403 = vst.msk [vmem:[%s172 + $0x8] sm:$0xff] %vm1401, %v768
      %1404 = vst.msk [vmem:[%s172 + $0x10] sm:$0xff] %vm1401, %v773
      %1405 = vst.msk [vmem:[%s172 + $0x18] sm:$0xff] %vm1401, %v778
      %1406 = vst.msk [vmem:[%s172 + $0x20] sm:$0xff] %vm1401, %v783
      %1407 = vst.msk [vmem:[%s172 + $0x28] sm:$0xff] %vm1401, %v788
      %1408 = vst.msk [vmem:[%s172 + $0x30] sm:$0xff] %vm1401, %v793
      %1409 = vst.msk [vmem:[%s172 + $0x38] sm:$0xff] %vm1401, %v798
      %1410 = vst.msk [vmem:[%s172 + $0x40] sm:$0xff] %vm1401, %v803
      %1411 = vst.msk [vmem:[%s172 + $0x48] sm:$0xff] %vm1401, %v808
      %1412 = vst.msk [vmem:[%s172 + $0x50] sm:$0xff] %vm1401, %v813
      %1413 = vst.msk [vmem:[%s172 + $0x58] sm:$0xff] %vm1401, %v818
      %1414 = vst.msk [vmem:[%s172 + $0x60] sm:$0xff] %vm1401, %v823
      %1415 = vst.msk [vmem:[%s172 + $0x68] sm:$0xff] %vm1401, %v828
      %1416 = vst.msk [vmem:[%s172 + $0x70] sm:$0xff] %vm1401, %v833
      %1417 = vst.msk [vmem:[%s172 + $0x78] sm:$0xff] %vm1401, %v838
      %1418 = vst.msk [vmem:[%s172 + $0x80] sm:$0xff] %vm1401, %v843
      %1419 = vst.msk [vmem:[%s172 + $0x88] sm:$0xff] %vm1401, %v848
      %1420 = vst.msk [vmem:[%s172 + $0x90] sm:$0xff] %vm1401, %v853
      %1421 = vst.msk [vmem:[%s172 + $0x98] sm:$0xff] %vm1401, %v858
      %1422 = vst.msk [vmem:[%s172 + $0xa0] sm:$0xff] %vm1401, %v863
      %1423 = vst.msk [vmem:[%s172 + $0xa8] sm:$0xff] %vm1401, %v868
      %1424 = vst.msk [vmem:[%s172 + $0xb0] sm:$0xff] %vm1401, %v873
      %1425 = vst.msk [vmem:[%s172 + $0xb8] sm:$0xff] %vm1401, %v878
      %1426 = vst.msk [vmem:[%s172 + $0xc0] sm:$0xff] %vm1401, %v883
      %1427 = vst.msk [vmem:[%s172 + $0xc8] sm:$0xff] %vm1401, %v888
      %1428 = vst.msk [vmem:[%s172 + $0xd0] sm:$0xff] %vm1401, %v893
      %1429 = vst.msk [vmem:[%s172 + $0xd8] sm:$0xff] %vm1401, %v898
      %1430 = vst.msk [vmem:[%s172 + $0xe0] sm:$0xff] %vm1401, %v903
      %1431 = vst.msk [vmem:[%s172 + $0xe8] sm:$0xff] %vm1401, %v908
      %1432 = vst.msk [vmem:[%s172 + $0xf0] sm:$0xff] %vm1401, %v913
      %1433 = vst.msk [vmem:[%s172 + $0xf8] sm:$0xff] %vm1401, %v918
      %1434 = vst.msk [vmem:[%s172 + $0x100] sm:$0xff] %vm1401, %v923
      %1435 = vst.msk [vmem:[%s172 + $0x108] sm:$0xff] %vm1401, %v928
      %1436 = vst.msk [vmem:[%s172 + $0x110] sm:$0xff] %vm1401, %v933
      %1437 = vst.msk [vmem:[%s172 + $0x118] sm:$0xff] %vm1401, %v938
      %1438 = vst.msk [vmem:[%s172 + $0x120] sm:$0xff] %vm1401, %v943
      %1439 = vst.msk [vmem:[%s172 + $0x128] sm:$0xff] %vm1401, %v948
      %1440 = vst.msk [vmem:[%s172 + $0x130] sm:$0xff] %vm1401, %v953
      %1441 = vst.msk [vmem:[%s172 + $0x138] sm:$0xff] %vm1401, %v958
      %1442 = vst.msk [vmem:[%s172 + $0x140] sm:$0xff] %vm1401, %v963
      %1443 = vst.msk [vmem:[%s172 + $0x148] sm:$0xff] %vm1401, %v968
      %1444 = vst.msk [vmem:[%s172 + $0x150] sm:$0xff] %vm1401, %v973
      %1445 = vst.msk [vmem:[%s172 + $0x158] sm:$0xff] %vm1401, %v978
      %1446 = vst.msk [vmem:[%s172 + $0x160] sm:$0xff] %vm1401, %v983
      %1447 = vst.msk [vmem:[%s172 + $0x168] sm:$0xff] %vm1401, %v988
      %1448 = vst.msk [vmem:[%s172 + $0x170] sm:$0xff] %vm1401, %v993
      %1449 = vst.msk [vmem:[%s172 + $0x178] sm:$0xff] %vm1401, %v998
      %1450 = vst.msk [vmem:[%s172 + $0x180] sm:$0xff] %vm1401, %v1003
      %1451 = vst.msk [vmem:[%s172 + $0x188] sm:$0xff] %vm1401, %v1008
      %1452 = vst.msk [vmem:[%s172 + $0x190] sm:$0xff] %vm1401, %v1013
      %1453 = vst.msk [vmem:[%s172 + $0x198] sm:$0xff] %vm1401, %v1018
      %1454 = vst.msk [vmem:[%s172 + $0x1a0] sm:$0xff] %vm1401, %v1023
      %1455 = vst.msk [vmem:[%s172 + $0x1a8] sm:$0xff] %vm1401, %v1028
      %1456 = vst.msk [vmem:[%s172 + $0x1b0] sm:$0xff] %vm1401, %v1033
      %1457 = vst.msk [vmem:[%s172 + $0x1b8] sm:$0xff] %vm1401, %v1038
      %1458 = vst.msk [vmem:[%s172 + $0x1c0] sm:$0xff] %vm1401, %v1043
      %1459 = vst.msk [vmem:[%s172 + $0x1c8] sm:$0xff] %vm1401, %v1048
      %1460 = vst.msk [vmem:[%s172 + $0x1d0] sm:$0xff] %vm1401, %v1053
      %1461 = vst.msk [vmem:[%s172 + $0x1d8] sm:$0xff] %vm1401, %v1058
      %1462 = vst.msk [vmem:[%s172 + $0x1e0] sm:$0xff] %vm1401, %v1063
      %1463 = vst.msk [vmem:[%s172 + $0x1e8] sm:$0xff] %vm1401, %v1068
      %1464 = vst.msk [vmem:[%s172 + $0x1f0] sm:$0xff] %vm1401, %v1073
      %1465 = vst.msk [vmem:[%s172 + $0x1f8] sm:$0xff] %vm1401, %v1078
      %1466 = vst.msk [vmem:[%s172 + $0x200] sm:$0xff] %vm1401, %v1083
      %1467 = vst.msk [vmem:[%s172 + $0x208] sm:$0xff] %vm1401, %v1088
      %1468 = vst.msk [vmem:[%s172 + $0x210] sm:$0xff] %vm1401, %v1093
      %1469 = vst.msk [vmem:[%s172 + $0x218] sm:$0xff] %vm1401, %v1098
      %1470 = vst.msk [vmem:[%s172 + $0x220] sm:$0xff] %vm1401, %v1103
      %1471 = vst.msk [vmem:[%s172 + $0x228] sm:$0xff] %vm1401, %v1108
      %1472 = vst.msk [vmem:[%s172 + $0x230] sm:$0xff] %vm1401, %v1113
      %1473 = vst.msk [vmem:[%s172 + $0x238] sm:$0xff] %vm1401, %v1118
      %1474 = vst.msk [vmem:[%s172 + $0x240] sm:$0xff] %vm1401, %v1123
      %1475 = vst.msk [vmem:[%s172 + $0x248] sm:$0xff] %vm1401, %v1128
      %1476 = vst.msk [vmem:[%s172 + $0x250] sm:$0xff] %vm1401, %v1133
      %1477 = vst.msk [vmem:[%s172 + $0x258] sm:$0xff] %vm1401, %v1138
      %1478 = vst.msk [vmem:[%s172 + $0x260] sm:$0xff] %vm1401, %v1143
      %1479 = vst.msk [vmem:[%s172 + $0x268] sm:$0xff] %vm1401, %v1148
      %1480 = vst.msk [vmem:[%s172 + $0x270] sm:$0xff] %vm1401, %v1153
      %1481 = vst.msk [vmem:[%s172 + $0x278] sm:$0xff] %vm1401, %v1158
      %1482 = vst.msk [vmem:[%s172 + $0x280] sm:$0xff] %vm1401, %v1163
      %1483 = vst.msk [vmem:[%s172 + $0x288] sm:$0xff] %vm1401, %v1168
      %1484 = vst.msk [vmem:[%s172 + $0x290] sm:$0xff] %vm1401, %v1173
      %1485 = vst.msk [vmem:[%s172 + $0x298] sm:$0xff] %vm1401, %v1178
      %1486 = vst.msk [vmem:[%s172 + $0x2a0] sm:$0xff] %vm1401, %v1183
      %1487 = vst.msk [vmem:[%s172 + $0x2a8] sm:$0xff] %vm1401, %v1188
      %1488 = vst.msk [vmem:[%s172 + $0x2b0] sm:$0xff] %vm1401, %v1193
      %1489 = vst.msk [vmem:[%s172 + $0x2b8] sm:$0xff] %vm1401, %v1198
      %1490 = vst.msk [vmem:[%s172 + $0x2c0] sm:$0xff] %vm1401, %v1203
      %1491 = vst.msk [vmem:[%s172 + $0x2c8] sm:$0xff] %vm1401, %v1208
      %1492 = vst.msk [vmem:[%s172 + $0x2d0] sm:$0xff] %vm1401, %v1213
      %1493 = vst.msk [vmem:[%s172 + $0x2d8] sm:$0xff] %vm1401, %v1218
      %1494 = vst.msk [vmem:[%s172 + $0x2e0] sm:$0xff] %vm1401, %v1223
      %1495 = vst.msk [vmem:[%s172 + $0x2e8] sm:$0xff] %vm1401, %v1228
      %1496 = vst.msk [vmem:[%s172 + $0x2f0] sm:$0xff] %vm1401, %v1233
      %1497 = vst.msk [vmem:[%s172 + $0x2f8] sm:$0xff] %vm1401, %v1238
      %1498 = vst.msk [vmem:[%s172 + $0x300] sm:$0xff] %vm1401, %v1243
      %1499 = vst.msk [vmem:[%s172 + $0x308] sm:$0xff] %vm1401, %v1248
      %1500 = vst.msk [vmem:[%s172 + $0x310] sm:$0xff] %vm1401, %v1253
      %1501 = vst.msk [vmem:[%s172 + $0x318] sm:$0xff] %vm1401, %v1258
      %1502 = vst.msk [vmem:[%s172 + $0x320] sm:$0xff] %vm1401, %v1263
      %1503 = vst.msk [vmem:[%s172 + $0x328] sm:$0xff] %vm1401, %v1268
      %1504 = vst.msk [vmem:[%s172 + $0x330] sm:$0xff] %vm1401, %v1273
      %1505 = vst.msk [vmem:[%s172 + $0x338] sm:$0xff] %vm1401, %v1278
      %1506 = vst.msk [vmem:[%s172 + $0x340] sm:$0xff] %vm1401, %v1283
      %1507 = vst.msk [vmem:[%s172 + $0x348] sm:$0xff] %vm1401, %v1288
      %1508 = vst.msk [vmem:[%s172 + $0x350] sm:$0xff] %vm1401, %v1293
      %1509 = vst.msk [vmem:[%s172 + $0x358] sm:$0xff] %vm1401, %v1298
      %1510 = vst.msk [vmem:[%s172 + $0x360] sm:$0xff] %vm1401, %v1303
      %1511 = vst.msk [vmem:[%s172 + $0x368] sm:$0xff] %vm1401, %v1308
      %1512 = vst.msk [vmem:[%s172 + $0x370] sm:$0xff] %vm1401, %v1313
      %1513 = vst.msk [vmem:[%s172 + $0x378] sm:$0xff] %vm1401, %v1318
      %1514 = vst.msk [vmem:[%s172 + $0x380] sm:$0xff] %vm1401, %v1323
      %1515 = vst.msk [vmem:[%s172 + $0x388] sm:$0xff] %vm1401, %v1328
      %1516 = vst.msk [vmem:[%s172 + $0x390] sm:$0xff] %vm1401, %v1333
      %1517 = vst.msk [vmem:[%s172 + $0x398] sm:$0xff] %vm1401, %v1338
      %1518 = vst.msk [vmem:[%s172 + $0x3a0] sm:$0xff] %vm1401, %v1343
      %1519 = vst.msk [vmem:[%s172 + $0x3a8] sm:$0xff] %vm1401, %v1348
      %1520 = vst.msk [vmem:[%s172 + $0x3b0] sm:$0xff] %vm1401, %v1353
      %1521 = vst.msk [vmem:[%s172 + $0x3b8] sm:$0xff] %vm1401, %v1358
      %1522 = vst.msk [vmem:[%s172 + $0x3c0] sm:$0xff] %vm1401, %v1363
      %1523 = vst.msk [vmem:[%s172 + $0x3c8] sm:$0xff] %vm1401, %v1368
      %1524 = vst.msk [vmem:[%s172 + $0x3d0] sm:$0xff] %vm1401, %v1373
      %1525 = vst.msk [vmem:[%s172 + $0x3d8] sm:$0xff] %vm1401, %v1378
      %1526 = vst.msk [vmem:[%s172 + $0x3e0] sm:$0xff] %vm1401, %v1383
      %1527 = vst.msk [vmem:[%s172 + $0x3e8] sm:$0xff] %vm1401, %v1388
      %1528 = vst.msk [vmem:[%s172 + $0x3f0] sm:$0xff] %vm1401, %v1393
      %1529 = vst.msk [vmem:[%s172 + $0x3f8] sm:$0xff] %vm1401, %v1398
      %s1530 = smul.u32 128, %s14
      %p1531 = scmp.lt.s32.totalorder %s1530, 255
      %s1532 = scalar_select %p1531, %s1530, 255
      %s1533 = smul.addr %s1532, 8
      %s1534 = scalar_lea.vmem %s3, %s1533
      // Predicated region
      $region33: #{esa_forward.7} parent=31 // pred_check
        %p1535 = pneg %p100
      $region34: #{esa_forward.7} parent=31 // pred_check_branch
        %1537 = sbr.rel (%p1535) target = $region36
      $region35: #{esa_forward.7} parent=31 // pred_region
        %s1538 = smul.u32 128, %s14
      $region36: #{esa_forward.7} parent=31 // pred_fallthru
        _
    $region32: #{esa_forward.7} parent=5 // pred_fallthru
      _
    %p1539 = scmp.le.s32.totalorder 2, %s9
    // Predicated region
    $region37: #{esa_forward.7} parent=5 // pred_check
      %p1540 = pneg %p1539
    $region38: #{esa_forward.7} parent=5 // pred_check_branch
      %1542 = sbr.rel (%p1540) target = $region40
    $region39: #{esa_forward.7} parent=5 // pred_region
      %s1543 = ssub.s32 %s9, 2
      // Predicated region
      $region41: #{esa_forward.7} parent=39 // pred_check
        %p1544 = pneg %p106
      $region42: #{esa_forward.7} parent=39 // pred_check_branch
        %1546 = sbr.rel (%p1544) target = $region44
      $region43: #{esa_forward.7} parent=39 // pred_region
        %s1547 = smul.u32 128, %s15
        %p1548 = scmp.lt.s32.totalorder %s1547, 255
        %s1549 = scalar_select %p1548, %s1547, 255
        %s1550 = smul.addr %s1549, 8
        %s1551 = scalar_lea.vmem %s3, %s1550
      $region44: #{esa_forward.7} parent=39 // pred_fallthru
        _
    $region40: #{esa_forward.7} parent=5 // pred_fallthru
      _
  $region6: #{esa_forward.7} parent=0 // loop_footer
    %s13 = sadd.s32 1, %s9
  $region7: #{esa_forward.7} parent=0 // loop_footer_branch
    %8 = sbr.rel target = $region3
  $region8: #{esa_forward.7} parent=0 // loop_exit
    _

// kernel: esa_forward.8
$region0: #{esa_forward.8}
  #allocation0 [shape = 'u32[]', space=smem, size = 0x4, offset = 0x4, fixed_abs, tag = 'smem constant byte address 0x4 - core index']
  #allocation1 [shape = 'u32[144,128]{1,0:T(1,128)}', space=vmem, size = 0x12000, scoped, tag = 'internal scratch']
  %s0 = inlined_call_operand.vmem [shape: f32[464,72], index: 0, kind: input, shape index: {}]
  %s1 = inlined_call_operand.vmem [shape: f32[72,8], index: 1, kind: input, shape index: {}]
  %s2 = inlined_call_operand.vmem [shape: f32[1,8], index: 2, kind: input, shape index: {}]
  %s3 = inlined_call_operand.vmem [shape: f32[464,8], index: 3, kind: output, shape index: {}]
  %s4 = sld [smem:[#allocation0]]
  $region45: #{esa_forward.8} parent=0
    _
  %s6 = ssub.s32 1, %s4
  %s7 = scalar_select 0, %s6, %s4
  loop: start=0, step=1, limit=4
  $region2: #{esa_forward.8} parent=0 // loop_pre_header
    _
  $region3: #{esa_forward.8} parent=0 // loop_header
    %s9 = sphi 0, %s13
    %p10 = scmp.ge.s32.totalorder %s9, 4
    %s19 = sphi 0, %s21
    %s22 = sphi 0, %s19
    %s23 = sphi 0, %s22
    %s39 = sphi 0, %s23
    %s43 = sphi 0, %s43
    %s45 = sphi 0, %s43
    %s46 = sphi 0, %s45
    %s60 = sphi 0, %s46
    %s64 = sphi 0, %s64
    %s66 = sphi 0, %s64
    %s67 = sphi 0, %s66
    %s81 = sphi 0, %s67
    %s87 = sphi 0, %s89
    %s90 = sphi 0, %s87
    %s91 = sphi 0, %s90
    %s107 = sphi 0, %s91
  $region4: #{esa_forward.8} parent=0 // loop_header_branch
    %12 = sbr.rel (%p10) target = $region8
  $region5: #{esa_forward.8} parent=0 // loop_body
    %s14 = ssub.s32 %s9, 1
    %s15 = ssub.s32 %s9, 2
    %s16 = sadd.s32 %s9, 1
    %s17 = ssub.s32 %s9, %s16
    %p18 = scmp.eq.s32.totalorder %s17, 0
    %s20 = sadd.s32 %s19, 1
    %s21 = scalar_select %p18, %s19, %s20
    %p24 = pneg %p18
    %p25 = scmp.eq.s32.totalorder %s9, 1
    %p26 = por %p24, %p25
    %p27 = scmp.ne.s32.totalorder %s19, %s22
    %p28 = scmp.eq.s32.totalorder %s9, 0
    %p29 = por %p27, %p28
    %p30 = scmp.ne.s32.totalorder %s19, %s22
    %p31 = scmp.eq.s32.totalorder %s14, 1
    %p32 = por %p30, %p31
    %p33 = scmp.ne.s32.totalorder %s22, %s23
    %p34 = scmp.eq.s32.totalorder %s14, 0
    %p35 = por %p33, %p34
    %p36 = scmp.ne.s32.totalorder %s22, %s23
    %p37 = scmp.eq.s32.totalorder %s15, 1
    %p38 = por %p36, %p37
    %p40 = scmp.ne.s32.totalorder %s23, %s39
    %p41 = scmp.eq.s32.totalorder %s15, 0
    %p42 = por %p40, %p41
    %s44 = sadd.s32 %s43, 1
    %p47 = scmp.eq.s32.totalorder %s9, 1
    %p48 = scmp.ne.s32.totalorder %s43, %s45
    %p49 = scmp.eq.s32.totalorder %s9, 0
    %p50 = por %p48, %p49
    %p51 = scmp.ne.s32.totalorder %s43, %s45
    %p52 = scmp.eq.s32.totalorder %s14, 1
    %p53 = por %p51, %p52
    %p54 = scmp.ne.s32.totalorder %s45, %s46
    %p55 = scmp.eq.s32.totalorder %s14, 0
    %p56 = por %p54, %p55
    %p57 = scmp.ne.s32.totalorder %s45, %s46
    %p58 = scmp.eq.s32.totalorder %s15, 1
    %p59 = por %p57, %p58
    %p61 = scmp.ne.s32.totalorder %s46, %s60
    %p62 = scmp.eq.s32.totalorder %s15, 0
    %p63 = por %p61, %p62
    %s65 = sadd.s32 %s64, 1
    %p68 = scmp.eq.s32.totalorder %s9, 1
    %p69 = scmp.ne.s32.totalorder %s64, %s66
    %p70 = scmp.eq.s32.totalorder %s9, 0
    %p71 = por %p69, %p70
    %p72 = scmp.ne.s32.totalorder %s64, %s66
    %p73 = scmp.eq.s32.totalorder %s14, 1
    %p74 = por %p72, %p73
    %p75 = scmp.ne.s32.totalorder %s66, %s67
    %p76 = scmp.eq.s32.totalorder %s14, 0
    %p77 = por %p75, %p76
    %p78 = scmp.ne.s32.totalorder %s66, %s67
    %p79 = scmp.eq.s32.totalorder %s15, 1
    %p80 = por %p78, %p79
    %p82 = scmp.ne.s32.totalorder %s67, %s81
    %p83 = scmp.eq.s32.totalorder %s15, 0
    %p84 = por %p82, %p83
    %s85 = ssub.s32 %s9, %s16
    %p86 = scmp.eq.s32.totalorder %s85, 0
    %s88 = sadd.s32 %s87, 1
    %s89 = scalar_select %p86, %s87, %s88
    %p92 = pneg %p86
    %p93 = scmp.eq.s32.totalorder %s9, 1
    %p94 = por %p92, %p93
    %p95 = scmp.ne.s32.totalorder %s87, %s90
    %p96 = scmp.eq.s32.totalorder %s9, 0
    %p97 = por %p95, %p96
    %p98 = scmp.ne.s32.totalorder %s87, %s90
    %p99 = scmp.eq.s32.totalorder %s14, 1
    %p100 = por %p98, %p99
    %p101 = scmp.ne.s32.totalorder %s90, %s91
    %p102 = scmp.eq.s32.totalorder %s14, 0
    %p103 = por %p101, %p102
    %p104 = scmp.ne.s32.totalorder %s90, %s91
    %p105 = scmp.eq.s32.totalorder %s15, 1
    %p106 = por %p104, %p105
    %p108 = scmp.ne.s32.totalorder %s91, %s107
    %p109 = scmp.eq.s32.totalorder %s15, 0
    %p110 = por %p108, %p109
    %p111 = scmp.le.s32.totalorder 1, %s9
    %p112 = scmp.lt.s32.totalorder %s9, 3
    %p113 = pnand %p111, %p112
    %p114 = pneg %p113
    // Predicated region
    $region9: #{esa_forward.8} parent=5 // pred_check
      _
    $region10: #{esa_forward.8} parent=5 // pred_check_branch
      %116 = sbr.rel (%p113) target = $region12
    $region11: #{esa_forward.8} parent=5 // pred_region
      %s117 = ssub.s32 %s9, 1
      // Predicated region
      $region13: #{esa_forward.8} parent=11 // pred_check
        %p118 = pneg %p56
      $region14: #{esa_forward.8} parent=11 // pred_check_branch
        %120 = sbr.rel (%p118) target = $region16
      $region15: #{esa_forward.8} parent=11 // pred_region
        _
      $region16: #{esa_forward.8} parent=11 // pred_fallthru
        _
      // Predicated region
      $region17: #{esa_forward.8} parent=11 // pred_check
        %p121 = pneg %p77
      $region18: #{esa_forward.8} parent=11 // pred_check_branch
        %123 = sbr.rel (%p121) target = $region20
      $region19: #{esa_forward.8} parent=11 // pred_region
        _
      $region20: #{esa_forward.8} parent=11 // pred_fallthru
        _
    $region12: #{esa_forward.8} parent=5 // pred_fallthru
      _
    %p124 = scmp.lt.s32.totalorder %s9, 2
    // Predicated region
    $region21: #{esa_forward.8} parent=5 // pred_check
      %p125 = pneg %p124
    $region22: #{esa_forward.8} parent=5 // pred_check_branch
      %127 = sbr.rel (%p125) target = $region24
    $region23: #{esa_forward.8} parent=5 // pred_region
      // Predicated region
      $region25: #{esa_forward.8} parent=23 // pred_check
        %p128 = pneg %p29
      $region26: #{esa_forward.8} parent=23 // pred_check_branch
        %130 = sbr.rel (%p128) target = $region28
      $region27: #{esa_forward.8} parent=23 // pred_region
        %s131 = smul.u32 29, %s9
        %p132 = scmp.lt.s32.totalorder %s131, 57
        %s133 = scalar_select %p132, %s131, 57
        %s134 = smul.addr %s133, 8
        %s135 = scalar_lea.vmem %s0, %s134
        %s136 = smul.u32 29, %s9
      $region28: #{esa_forward.8} parent=23 // pred_fallthru
        _
    $region24: #{esa_forward.8} parent=5 // pred_fallthru
      _
    %p137 = scmp.le.s32.totalorder 1, %s9
    %p138 = scmp.lt.s32.totalorder %s9, 3
    %p139 = pnand %p137, %p138
    %p140 = pneg %p139
    // Predicated region
    $region29: #{esa_forward.8} parent=5 // pred_check
      _
    $region30: #{esa_forward.8} parent=5 // pred_check_branch
      %142 = sbr.rel (%p139) target = $region32
    $region31: #{esa_forward.8} parent=5 // pred_region
      %s143 = ssub.s32 %s9, 1
      %s144 = smul.u32 29, %s14
      %p145 = scmp.lt.s32.totalorder %s144, 57
      %s146 = scalar_select %p145, %s144, 57
      %s147 = smul.addr %s146, 8
      %s148 = scalar_lea.vmem %s0, %s147
      %p149 = pneg %p35
      %p150 = pneg %p32
      %p151 = pneg %p56
      %p152 = pneg %p53
      %p153 = pneg %p77
      %p154 = pneg %p74
      %p155 = pneg %p103
      %p156 = pneg %p100
      %s157 = smul.u32 29, %s14
      %p158 = scmp.lt.s32.totalorder %s157, 57
      %s159 = scalar_select %p158, %s157, 57
      %s160 = smul.addr %s159, 8
      %s161 = scalar_lea.vmem %s3, %s160
      %s162 = smul.u32 29, %s14
      %p163 = scmp.lt.s32.totalorder %s162, 57
      %s164 = scalar_select %p163, %s162, 57
      %s165 = smul.addr %s164, 8
      %s166 = scalar_lea.vmem %s0, %s165
      %s167 = smul.u32 29, %s14
      %s168 = smul.u32 29, %s14
      %p169 = scmp.lt.s32.totalorder %s168, 57
      %s170 = scalar_select %p169, %s168, 57
      %s171 = smul.addr %s170, 8
      %s172 = scalar_lea.vmem %s3, %s171
      %s173 = smul.u32 29, %s14
      %v174 = vld [vmem:[%s166] sm:$0xff]
      %v175 = vld [vmem:[%s166 + $0x8] sm:$0xff]
      %v176 = vld [vmem:[%s166 + $0x10] sm:$0xff]
      %v177 = vld [vmem:[%s166 + $0x18] sm:$0xff]
      %v178 = vld [vmem:[%s166 + $0x20] sm:$0xff]
      %v179 = vld [vmem:[%s166 + $0x28] sm:$0xff]
      %v180 = vld [vmem:[%s166 + $0x30] sm:$0xff]
      %v181 = vld [vmem:[%s166 + $0x38] sm:$0xff]
      %v182 = vld [vmem:[%s166 + $0x40] sm:$0xff]
      %v183 = vld [vmem:[%s166 + $0x48] sm:$0xff]
      %v184 = vld [vmem:[%s166 + $0x50] sm:$0xff]
      %v185 = vld [vmem:[%s166 + $0x58] sm:$0xff]
      %v186 = vld [vmem:[%s166 + $0x60] sm:$0xff]
      %v187 = vld [vmem:[%s166 + $0x68] sm:$0xff]
      %v188 = vld [vmem:[%s166 + $0x70] sm:$0xff]
      %v189 = vld [vmem:[%s166 + $0x78] sm:$0xff]
      %v190 = vld [vmem:[%s166 + $0x80] sm:$0xff]
      %v191 = vld [vmem:[%s166 + $0x88] sm:$0xff]
      %v192 = vld [vmem:[%s166 + $0x90] sm:$0xff]
      %v193 = vld [vmem:[%s166 + $0x98] sm:$0xff]
      %v194 = vld [vmem:[%s166 + $0xa0] sm:$0xff]
      %v195 = vld [vmem:[%s166 + $0xa8] sm:$0xff]
      %v196 = vld [vmem:[%s166 + $0xb0] sm:$0xff]
      %v197 = vld [vmem:[%s166 + $0xb8] sm:$0xff]
      %v198 = vld [vmem:[%s166 + $0xc0] sm:$0xff]
      %v199 = vld [vmem:[%s166 + $0xc8] sm:$0xff]
      %v200 = vld [vmem:[%s166 + $0xd0] sm:$0xff]
      %v201 = vld [vmem:[%s166 + $0xd8] sm:$0xff]
      %v202 = vld [vmem:[%s166 + $0xe0] sm:$0xff]
      %v203 = vld [vmem:[%s1] sm:$0xff]
      %v204 = vld [vmem:[%s1 + $0x8] sm:$0xff]
      %v205 = vld [vmem:[%s1 + $0x10] sm:$0xff]
      %v206 = vld [vmem:[%s1 + $0x18] sm:$0xff]
      %v207 = vld [vmem:[%s1 + $0x20] sm:$0xff]
      %v208 = vld [vmem:[%s1 + $0x28] sm:$0xff]
      %v209 = vld [vmem:[%s1 + $0x30] sm:$0xff]
      %v210 = vld [vmem:[%s1 + $0x38] sm:$0xff]
      %v211 = vld [vmem:[%s1 + $0x40] sm:$0xff]
      %v212 = vld [vmem:[%s2] sm:$0x1]
      %v214 = vlaneseq
      %v215 = vshrl.u32 %v214, 7
      %v216 = vsub.s32 0, %v215
      %v217 = vrot.slane %v212, %v216
      %vm219 = vcmask 588800
      %v221 = vsel %vm219, %v174, 0
      %v224 = vsel %vm219, %v175, 0
      %v227 = vsel %vm219, %v176, 0
      %v230 = vsel %vm219, %v177, 0
      %v233 = vsel %vm219, %v178, 0
      %v236 = vsel %vm219, %v179, 0
      %v239 = vsel %vm219, %v180, 0
      %v242 = vsel %vm219, %v181, 0
      %v245 = vsel %vm219, %v182, 0
      %v248 = vsel %vm219, %v183, 0
      %v251 = vsel %vm219, %v184, 0
      %v254 = vsel %vm219, %v185, 0
      %v257 = vsel %vm219, %v186, 0
      %v260 = vsel %vm219, %v187, 0
      %v263 = vsel %vm219, %v188, 0
      %v266 = vsel %vm219, %v189, 0
      %v269 = vsel %vm219, %v190, 0
      %v272 = vsel %vm219, %v191, 0
      %v275 = vsel %vm219, %v192, 0
      %v278 = vsel %vm219, %v193, 0
      %v281 = vsel %vm219, %v194, 0
      %v284 = vsel %vm219, %v195, 0
      %v287 = vsel %vm219, %v196, 0
      %v290 = vsel %vm219, %v197, 0
      %v293 = vsel %vm219, %v198, 0
      %v296 = vsel %vm219, %v199, 0
      %v299 = vsel %vm219, %v200, 0
      %v302 = vsel %vm219, %v201, 0
      %v305 = vsel %vm219, %v202, 0
      %307 = vmatprep.subr.mxu0 0.0
      %308 = vmatpush1.msra.mxu0 0.0
      %309 = vmatprep.subr.mxu0 0.0
      %310 = vmatpush1.msra.mxu0 0.0
      %311 = vmatprep.subr.mxu0 0.0
      %312 = vmatpush1.msra.mxu0 0.0
      %313 = vmatprep.subr.mxu0 0.0
      %314 = vmatpush1.msra.mxu0 0.0
      %315 = vmatprep.subr.mxu0 0.0
      %316 = vmatpush1.msra.mxu0 0.0
      %317 = vmatprep.subr.mxu0 0.0
      %318 = vmatpush1.msra.mxu0 0.0
      %319 = vmatprep.subr.mxu0 0.0
      %320 = vmatpush1.msra.mxu0 0.0
      %321 = vmatprep.subr.mxu0 0.0
      %322 = vmatpush1.msra.mxu0 %v211
      %323 = vmatprep.subr.mxu0 0.0
      %324 = vmatpush1.msra.mxu0 %v210
      %325 = vmatprep.subr.mxu0 0.0
      %326 = vmatpush1.msra.mxu0 %v209
      %327 = vmatprep.subr.mxu0 0.0
      %328 = vmatpush1.msra.mxu0 %v208
      %329 = vmatprep.subr.mxu0 0.0
      %330 = vmatpush1.msra.mxu0 %v207
      %331 = vmatprep.subr.mxu0 0.0
      %332 = vmatpush1.msra.mxu0 %v206
      %333 = vmatprep.subr.mxu0 0.0
      %334 = vmatpush1.msra.mxu0 %v205
      %335 = vmatprep.subr.mxu0 0.0
      %336 = vmatpush1.msra.mxu0 %v204
      %337 = vmatprep.subr.mxu0 0.0
      %338 = vmatpush1.msra.mxu0 %v203
      %339 = vmatprep.subr.mxu0 0.0
      %340 = vmatpush2.msra.mxu0 0.0
      %341 = vmatprep.subr.mxu0 0.0
      %342 = vmatpush2.msra.mxu0 0.0
      %343 = vmatprep.subr.mxu0 0.0
      %344 = vmatpush2.msra.mxu0 0.0
      %345 = vmatprep.subr.mxu0 0.0
      %346 = vmatpush2.msra.mxu0 0.0
      %347 = vmatprep.subr.mxu0 0.0
      %348 = vmatpush2.msra.mxu0 0.0
      %349 = vmatprep.subr.mxu0 0.0
      %350 = vmatpush2.msra.mxu0 0.0
      %351 = vmatprep.subr.mxu0 0.0
      %352 = vmatpush2.msra.mxu0 0.0
      %353 = vmatprep.subr.mxu0 0.0
      %354 = vmatpush2.msra.mxu0 0.0
      %355 = vmatprep.subr.mxu0 0.0
      %356 = vmatpush2.msra.mxu0 0.0
      %357 = vmatprep.subr.mxu0 0.0
      %358 = vmatpush2.msra.mxu0 0.0
      %359 = vmatprep.subr.mxu0 0.0
      %360 = vmatpush2.msra.mxu0 0.0
      %361 = vmatprep.subr.mxu0 0.0
      %362 = vmatpush2.msra.mxu0 0.0
      %363 = vmatprep.subr.mxu0 0.0
      %364 = vmatpush2.msra.mxu0 0.0
      %365 = vmatprep.subr.mxu0 0.0
      %366 = vmatpush2.msra.mxu0 0.0
      %367 = vmatprep.subr.mxu0 0.0
      %368 = vmatpush2.msra.mxu0 0.0
      %369 = vmatprep.subr.mxu0 0.0
      %370 = vmatpush2.msra.mxu0 0.0
      %371 = vmatprep.mubr.f32.mxu0 0.0
      %372 = vmatmul.mubr.f32.gmra.mxu0 %v221
      %v373 = vpop.f32.mrf.mxu0
      %v374 = vadd.f32 %v217, %v373
      %v375 = vpop.f32.mrf.mxu0
      %376 = vmatprep.mubr.f32.mxu0 0.0
      %377 = vmatmul.mubr.f32.gmra.mxu0 %v224
      %v378 = vpop.f32.mrf.mxu0
      %v379 = vadd.f32 %v217, %v378
      %v380 = vpop.f32.mrf.mxu0
      %381 = vmatprep.mubr.f32.mxu0 0.0
      %382 = vmatmul.mubr.f32.gmra.mxu0 %v227
      %v383 = vpop.f32.mrf.mxu0
      %v384 = vadd.f32 %v217, %v383
      %v385 = vpop.f32.mrf.mxu0
      %386 = vmatprep.mubr.f32.mxu0 0.0
      %387 = vmatmul.mubr.f32.gmra.mxu0 %v230
      %v388 = vpop.f32.mrf.mxu0
      %v389 = vadd.f32 %v217, %v388
      %v390 = vpop.f32.mrf.mxu0
      %391 = vmatprep.mubr.f32.mxu0 0.0
      %392 = vmatmul.mubr.f32.gmra.mxu0 %v233
      %v393 = vpop.f32.mrf.mxu0
      %v394 = vadd.f32 %v217, %v393
      %v395 = vpop.f32.mrf.mxu0
      %396 = vmatprep.mubr.f32.mxu0 0.0
      %397 = vmatmul.mubr.f32.gmra.mxu0 %v236
      %v398 = vpop.f32.mrf.mxu0
      %v399 = vadd.f32 %v217, %v398
      %v400 = vpop.f32.mrf.mxu0
      %401 = vmatprep.mubr.f32.mxu0 0.0
      %402 = vmatmul.mubr.f32.gmra.mxu0 %v239
      %v403 = vpop.f32.mrf.mxu0
      %v404 = vadd.f32 %v217, %v403
      %v405 = vpop.f32.mrf.mxu0
      %406 = vmatprep.mubr.f32.mxu0 0.0
      %407 = vmatmul.mubr.f32.gmra.mxu0 %v242
      %v408 = vpop.f32.mrf.mxu0
      %v409 = vadd.f32 %v217, %v408
      %v410 = vpop.f32.mrf.mxu0
      %411 = vmatprep.mubr.f32.mxu0 0.0
      %412 = vmatmul.mubr.f32.gmra.mxu0 %v245
      %v413 = vpop.f32.mrf.mxu0
      %v414 = vadd.f32 %v217, %v413
      %v415 = vpop.f32.mrf.mxu0
      %416 = vmatprep.mubr.f32.mxu0 0.0
      %417 = vmatmul.mubr.f32.gmra.mxu0 %v248
      %v418 = vpop.f32.mrf.mxu0
      %v419 = vadd.f32 %v217, %v418
      %v420 = vpop.f32.mrf.mxu0
      %421 = vmatprep.mubr.f32.mxu0 0.0
      %422 = vmatmul.mubr.f32.gmra.mxu0 %v251
      %v423 = vpop.f32.mrf.mxu0
      %v424 = vadd.f32 %v217, %v423
      %v425 = vpop.f32.mrf.mxu0
      %426 = vmatprep.mubr.f32.mxu0 0.0
      %427 = vmatmul.mubr.f32.gmra.mxu0 %v254
      %v428 = vpop.f32.mrf.mxu0
      %v429 = vadd.f32 %v217, %v428
      %v430 = vpop.f32.mrf.mxu0
      %431 = vmatprep.mubr.f32.mxu0 0.0
      %432 = vmatmul.mubr.f32.gmra.mxu0 %v257
      %v433 = vpop.f32.mrf.mxu0
      %v434 = vadd.f32 %v217, %v433
      %v435 = vpop.f32.mrf.mxu0
      %436 = vmatprep.mubr.f32.mxu0 0.0
      %437 = vmatmul.mubr.f32.gmra.mxu0 %v260
      %v438 = vpop.f32.mrf.mxu0
      %v439 = vadd.f32 %v217, %v438
      %v440 = vpop.f32.mrf.mxu0
      %441 = vmatprep.mubr.f32.mxu0 0.0
      %442 = vmatmul.mubr.f32.gmra.mxu0 %v263
      %v443 = vpop.f32.mrf.mxu0
      %v444 = vadd.f32 %v217, %v443
      %v445 = vpop.f32.mrf.mxu0
      %446 = vmatprep.mubr.f32.mxu0 0.0
      %447 = vmatmul.mubr.f32.gmra.mxu0 %v266
      %v448 = vpop.f32.mrf.mxu0
      %v449 = vadd.f32 %v217, %v448
      %v450 = vpop.f32.mrf.mxu0
      %451 = vmatprep.mubr.f32.mxu0 0.0
      %452 = vmatmul.mubr.f32.gmra.mxu0 %v269
      %v453 = vpop.f32.mrf.mxu0
      %v454 = vadd.f32 %v217, %v453
      %v455 = vpop.f32.mrf.mxu0
      %456 = vmatprep.mubr.f32.mxu0 0.0
      %457 = vmatmul.mubr.f32.gmra.mxu0 %v272
      %v458 = vpop.f32.mrf.mxu0
      %v459 = vadd.f32 %v217, %v458
      %v460 = vpop.f32.mrf.mxu0
      %461 = vmatprep.mubr.f32.mxu0 0.0
      %462 = vmatmul.mubr.f32.gmra.mxu0 %v275
      %v463 = vpop.f32.mrf.mxu0
      %v464 = vadd.f32 %v217, %v463
      %v465 = vpop.f32.mrf.mxu0
      %466 = vmatprep.mubr.f32.mxu0 0.0
      %467 = vmatmul.mubr.f32.gmra.mxu0 %v278
      %v468 = vpop.f32.mrf.mxu0
      %v469 = vadd.f32 %v217, %v468
      %v470 = vpop.f32.mrf.mxu0
      %471 = vmatprep.mubr.f32.mxu0 0.0
      %472 = vmatmul.mubr.f32.gmra.mxu0 %v281
      %v473 = vpop.f32.mrf.mxu0
      %v474 = vadd.f32 %v217, %v473
      %v475 = vpop.f32.mrf.mxu0
      %476 = vmatprep.mubr.f32.mxu0 0.0
      %477 = vmatmul.mubr.f32.gmra.mxu0 %v284
      %v478 = vpop.f32.mrf.mxu0
      %v479 = vadd.f32 %v217, %v478
      %v480 = vpop.f32.mrf.mxu0
      %481 = vmatprep.mubr.f32.mxu0 0.0
      %482 = vmatmul.mubr.f32.gmra.mxu0 %v287
      %v483 = vpop.f32.mrf.mxu0
      %v484 = vadd.f32 %v217, %v483
      %v485 = vpop.f32.mrf.mxu0
      %486 = vmatprep.mubr.f32.mxu0 0.0
      %487 = vmatmul.mubr.f32.gmra.mxu0 %v290
      %v488 = vpop.f32.mrf.mxu0
      %v489 = vadd.f32 %v217, %v488
      %v490 = vpop.f32.mrf.mxu0
      %491 = vmatprep.mubr.f32.mxu0 0.0
      %492 = vmatmul.mubr.f32.gmra.mxu0 %v293
      %v493 = vpop.f32.mrf.mxu0
      %v494 = vadd.f32 %v217, %v493
      %v495 = vpop.f32.mrf.mxu0
      %496 = vmatprep.mubr.f32.mxu0 0.0
      %497 = vmatmul.mubr.f32.gmra.mxu0 %v296
      %v498 = vpop.f32.mrf.mxu0
      %v499 = vadd.f32 %v217, %v498
      %v500 = vpop.f32.mrf.mxu0
      %501 = vmatprep.mubr.f32.mxu0 0.0
      %502 = vmatmul.mubr.f32.gmra.mxu0 %v299
      %v503 = vpop.f32.mrf.mxu0
      %v504 = vadd.f32 %v217, %v503
      %v505 = vpop.f32.mrf.mxu0
      %506 = vmatprep.mubr.f32.mxu0 0.0
      %507 = vmatmul.mubr.f32.gmra.mxu0 %v302
      %v508 = vpop.f32.mrf.mxu0
      %v509 = vadd.f32 %v217, %v508
      %v510 = vpop.f32.mrf.mxu0
      %511 = vmatprep.mubr.f32.mxu0 0.0
      %512 = vmatmul.mubr.f32.gmra.mxu0 %v305
      %v513 = vpop.f32.mrf.mxu0
      %v514 = vadd.f32 %v217, %v513
      %v515 = vpop.f32.mrf.mxu0
      %516 = vdwg.mxu0
      %vm517 = vcmask 64512
      %518 = vst.msk [vmem:[%s172] sm:$0xff] %vm517, %v374
      %519 = vst.msk [vmem:[%s172 + $0x8] sm:$0xff] %vm517, %v379
      %520 = vst.msk [vmem:[%s172 + $0x10] sm:$0xff] %vm517, %v384
      %521 = vst.msk [vmem:[%s172 + $0x18] sm:$0xff] %vm517, %v389
      %522 = vst.msk [vmem:[%s172 + $0x20] sm:$0xff] %vm517, %v394
      %523 = vst.msk [vmem:[%s172 + $0x28] sm:$0xff] %vm517, %v399
      %524 = vst.msk [vmem:[%s172 + $0x30] sm:$0xff] %vm517, %v404
      %525 = vst.msk [vmem:[%s172 + $0x38] sm:$0xff] %vm517, %v409
      %526 = vst.msk [vmem:[%s172 + $0x40] sm:$0xff] %vm517, %v414
      %527 = vst.msk [vmem:[%s172 + $0x48] sm:$0xff] %vm517, %v419
      %528 = vst.msk [vmem:[%s172 + $0x50] sm:$0xff] %vm517, %v424
      %529 = vst.msk [vmem:[%s172 + $0x58] sm:$0xff] %vm517, %v429
      %530 = vst.msk [vmem:[%s172 + $0x60] sm:$0xff] %vm517, %v434
      %531 = vst.msk [vmem:[%s172 + $0x68] sm:$0xff] %vm517, %v439
      %532 = vst.msk [vmem:[%s172 + $0x70] sm:$0xff] %vm517, %v444
      %533 = vst.msk [vmem:[%s172 + $0x78] sm:$0xff] %vm517, %v449
      %534 = vst.msk [vmem:[%s172 + $0x80] sm:$0xff] %vm517, %v454
      %535 = vst.msk [vmem:[%s172 + $0x88] sm:$0xff] %vm517, %v459
      %536 = vst.msk [vmem:[%s172 + $0x90] sm:$0xff] %vm517, %v464
      %537 = vst.msk [vmem:[%s172 + $0x98] sm:$0xff] %vm517, %v469
      %538 = vst.msk [vmem:[%s172 + $0xa0] sm:$0xff] %vm517, %v474
      %539 = vst.msk [vmem:[%s172 + $0xa8] sm:$0xff] %vm517, %v479
      %540 = vst.msk [vmem:[%s172 + $0xb0] sm:$0xff] %vm517, %v484
      %541 = vst.msk [vmem:[%s172 + $0xb8] sm:$0xff] %vm517, %v489
      %542 = vst.msk [vmem:[%s172 + $0xc0] sm:$0xff] %vm517, %v494
      %543 = vst.msk [vmem:[%s172 + $0xc8] sm:$0xff] %vm517, %v499
      %544 = vst.msk [vmem:[%s172 + $0xd0] sm:$0xff] %vm517, %v504
      %545 = vst.msk [vmem:[%s172 + $0xd8] sm:$0xff] %vm517, %v509
      %546 = vst.msk [vmem:[%s172 + $0xe0] sm:$0xff] %vm517, %v514
      %s547 = smul.u32 29, %s14
      %p548 = scmp.lt.s32.totalorder %s547, 57
      %s549 = scalar_select %p548, %s547, 57
      %s550 = smul.addr %s549, 8
      %s551 = scalar_lea.vmem %s3, %s550
      // Predicated region
      $region33: #{esa_forward.8} parent=31 // pred_check
        %p552 = pneg %p100
      $region34: #{esa_forward.8} parent=31 // pred_check_branch
        %554 = sbr.rel (%p552) target = $region36
      $region35: #{esa_forward.8} parent=31 // pred_region
        %s555 = smul.u32 29, %s14
      $region36: #{esa_forward.8} parent=31 // pred_fallthru
        _
    $region32: #{esa_forward.8} parent=5 // pred_fallthru
      _
    %p556 = scmp.le.s32.totalorder 2, %s9
    // Predicated region
    $region37: #{esa_forward.8} parent=5 // pred_check
      %p557 = pneg %p556
    $region38: #{esa_forward.8} parent=5 // pred_check_branch
      %559 = sbr.rel (%p557) target = $region40
    $region39: #{esa_forward.8} parent=5 // pred_region
      %s560 = ssub.s32 %s9, 2
      // Predicated region
      $region41: #{esa_forward.8} parent=39 // pred_check
        %p561 = pneg %p106
      $region42: #{esa_forward.8} parent=39 // pred_check_branch
        %563 = sbr.rel (%p561) target = $region44
      $region43: #{esa_forward.8} parent=39 // pred_region
        %s564 = smul.u32 29, %s15
        %p565 = scmp.lt.s32.totalorder %s564, 57
        %s566 = scalar_select %p565, %s564, 57
        %s567 = smul.addr %s566, 8
        %s568 = scalar_lea.vmem %s3, %s567
      $region44: #{esa_forward.8} parent=39 // pred_fallthru
        _
    $region40: #{esa_forward.8} parent=5 // pred_fallthru
      _
  $region6: #{esa_forward.8} parent=0 // loop_footer
    %s13 = sadd.s32 1, %s9
  $region7: #{esa_forward.8} parent=0 // loop_footer_branch
    %8 = sbr.rel target = $region3
  $region8: #{esa_forward.8} parent=0 // loop_exit
    _

// kernel: esa_forward.10
$region0: #{esa_forward.10}
  #allocation0 [shape = 'u32[]', space=smem, size = 0x4, offset = 0x4, fixed_abs, tag = 'smem constant byte address 0x4 - core index']
  #allocation1 [shape = 'u32[144,128]{1,0:T(1,128)}', space=vmem, size = 0x12000, scoped, tag = 'internal scratch']
  %s0 = inlined_call_operand.vmem [shape: f32[24,72], index: 0, kind: input, shape index: {}]
  %s1 = inlined_call_operand.vmem [shape: f32[72,8], index: 1, kind: input, shape index: {}]
  %s2 = inlined_call_operand.vmem [shape: f32[1,8], index: 2, kind: input, shape index: {}]
  %s3 = inlined_call_operand.vmem [shape: f32[24,8], index: 3, kind: output, shape index: {}]
  %s4 = sld [smem:[#allocation0]]
  $region22: #{esa_forward.10} parent=0
    _
  %s6 = ssub.s32 1, %s4
  %s7 = scalar_select 0, %s6, %s4
  // Predicated region
  $region2: #{esa_forward.10} parent=0 // pred_check
    _
  $region3: #{esa_forward.10} parent=0 // pred_check_branch
    %9 = sbr.rel (0) target = $region5
  $region4: #{esa_forward.10} parent=0 // pred_region
    _
  $region5: #{esa_forward.10} parent=0 // pred_fallthru
    _
  // Predicated region
  $region6: #{esa_forward.10} parent=0 // pred_check
    _
  $region7: #{esa_forward.10} parent=0 // pred_check_branch
    %11 = sbr.rel (0) target = $region9
  $region8: #{esa_forward.10} parent=0 // pred_region
    _
  $region9: #{esa_forward.10} parent=0 // pred_fallthru
    _
  // Predicated region
  $region10: #{esa_forward.10} parent=0 // pred_check
    _
  $region11: #{esa_forward.10} parent=0 // pred_check_branch
    %13 = sbr.rel (0) target = $region13
  $region12: #{esa_forward.10} parent=0 // pred_region
    _
  $region13: #{esa_forward.10} parent=0 // pred_fallthru
    _
  %v14 = vld [vmem:[%s0] sm:$0xff]
  %v15 = vld [vmem:[%s0 + $0x8] sm:$0xff]
  %v16 = vld [vmem:[%s0 + $0x10] sm:$0xff]
  %v17 = vld [vmem:[%s1] sm:$0xff]
  %v18 = vld [vmem:[%s1 + $0x8] sm:$0xff]
  %v19 = vld [vmem:[%s1 + $0x10] sm:$0xff]
  %v20 = vld [vmem:[%s1 + $0x18] sm:$0xff]
  %v21 = vld [vmem:[%s1 + $0x20] sm:$0xff]
  %v22 = vld [vmem:[%s1 + $0x28] sm:$0xff]
  %v23 = vld [vmem:[%s1 + $0x30] sm:$0xff]
  %v24 = vld [vmem:[%s1 + $0x38] sm:$0xff]
  %v25 = vld [vmem:[%s1 + $0x40] sm:$0xff]
  %v26 = vld [vmem:[%s2] sm:$0x1]
  %v28 = vlaneseq
  %v29 = vshrl.u32 %v28, 7
  %v30 = vsub.s32 0, %v29
  %v31 = vrot.slane %v26, %v30
  %vm33 = vcmask 588800
  %v35 = vsel %vm33, %v14, 0
  %v38 = vsel %vm33, %v15, 0
  %v41 = vsel %vm33, %v16, 0
  %43 = vmatprep.subr.mxu0 0.0
  %44 = vmatpush1.msra.mxu0 0.0
  %45 = vmatprep.subr.mxu0 0.0
  %46 = vmatpush1.msra.mxu0 0.0
  %47 = vmatprep.subr.mxu0 0.0
  %48 = vmatpush1.msra.mxu0 0.0
  %49 = vmatprep.subr.mxu0 0.0
  %50 = vmatpush1.msra.mxu0 0.0
  %51 = vmatprep.subr.mxu0 0.0
  %52 = vmatpush1.msra.mxu0 0.0
  %53 = vmatprep.subr.mxu0 0.0
  %54 = vmatpush1.msra.mxu0 0.0
  %55 = vmatprep.subr.mxu0 0.0
  %56 = vmatpush1.msra.mxu0 0.0
  %57 = vmatprep.subr.mxu0 0.0
  %58 = vmatpush1.msra.mxu0 %v25
  %59 = vmatprep.subr.mxu0 0.0
  %60 = vmatpush1.msra.mxu0 %v24
  %61 = vmatprep.subr.mxu0 0.0
  %62 = vmatpush1.msra.mxu0 %v23
  %63 = vmatprep.subr.mxu0 0.0
  %64 = vmatpush1.msra.mxu0 %v22
  %65 = vmatprep.subr.mxu0 0.0
  %66 = vmatpush1.msra.mxu0 %v21
  %67 = vmatprep.subr.mxu0 0.0
  %68 = vmatpush1.msra.mxu0 %v20
  %69 = vmatprep.subr.mxu0 0.0
  %70 = vmatpush1.msra.mxu0 %v19
  %71 = vmatprep.subr.mxu0 0.0
  %72 = vmatpush1.msra.mxu0 %v18
  %73 = vmatprep.subr.mxu0 0.0
  %74 = vmatpush1.msra.mxu0 %v17
  %75 = vmatprep.subr.mxu0 0.0
  %76 = vmatpush2.msra.mxu0 0.0
  %77 = vmatprep.subr.mxu0 0.0
  %78 = vmatpush2.msra.mxu0 0.0
  %79 = vmatprep.subr.mxu0 0.0
  %80 = vmatpush2.msra.mxu0 0.0
  %81 = vmatprep.subr.mxu0 0.0
  %82 = vmatpush2.msra.mxu0 0.0
  %83 = vmatprep.subr.mxu0 0.0
  %84 = vmatpush2.msra.mxu0 0.0
  %85 = vmatprep.subr.mxu0 0.0
  %86 = vmatpush2.msra.mxu0 0.0
  %87 = vmatprep.subr.mxu0 0.0
  %88 = vmatpush2.msra.mxu0 0.0
  %89 = vmatprep.subr.mxu0 0.0
  %90 = vmatpush2.msra.mxu0 0.0
  %91 = vmatprep.subr.mxu0 0.0
  %92 = vmatpush2.msra.mxu0 0.0
  %93 = vmatprep.subr.mxu0 0.0
  %94 = vmatpush2.msra.mxu0 0.0
  %95 = vmatprep.subr.mxu0 0.0
  %96 = vmatpush2.msra.mxu0 0.0
  %97 = vmatprep.subr.mxu0 0.0
  %98 = vmatpush2.msra.mxu0 0.0
  %99 = vmatprep.subr.mxu0 0.0
  %100 = vmatpush2.msra.mxu0 0.0
  %101 = vmatprep.subr.mxu0 0.0
  %102 = vmatpush2.msra.mxu0 0.0
  %103 = vmatprep.subr.mxu0 0.0
  %104 = vmatpush2.msra.mxu0 0.0
  %105 = vmatprep.subr.mxu0 0.0
  %106 = vmatpush2.msra.mxu0 0.0
  %107 = vmatprep.mubr.f32.mxu0 0.0
  %108 = vmatmul.mubr.f32.gmra.mxu0 %v35
  %v109 = vpop.f32.mrf.mxu0
  %v110 = vadd.f32 %v31, %v109
  %v111 = vpop.f32.mrf.mxu0
  %112 = vmatprep.mubr.f32.mxu0 0.0
  %113 = vmatmul.mubr.f32.gmra.mxu0 %v38
  %v114 = vpop.f32.mrf.mxu0
  %v115 = vadd.f32 %v31, %v114
  %v116 = vpop.f32.mrf.mxu0
  %117 = vmatprep.mubr.f32.mxu0 0.0
  %118 = vmatmul.mubr.f32.gmra.mxu0 %v41
  %v119 = vpop.f32.mrf.mxu0
  %v120 = vadd.f32 %v31, %v119
  %v121 = vpop.f32.mrf.mxu0
  %122 = vdwg.mxu0
  %vm123 = vcmask 64512
  %124 = vst.msk [vmem:[%s3] sm:$0xff] %vm123, %v110
  %125 = vst.msk [vmem:[%s3 + $0x8] sm:$0xff] %vm123, %v115
  %126 = vst.msk [vmem:[%s3 + $0x10] sm:$0xff] %vm123, %v120
  // Predicated region
  $region14: #{esa_forward.10} parent=0 // pred_check
    _
  $region15: #{esa_forward.10} parent=0 // pred_check_branch
    %128 = sbr.rel (0) target = $region17
  $region16: #{esa_forward.10} parent=0 // pred_region
    _
  $region17: #{esa_forward.10} parent=0 // pred_fallthru
    _
  // Predicated region
  $region18: #{esa_forward.10} parent=0 // pred_check
    _
  $region19: #{esa_forward.10} parent=0 // pred_check_branch
    %130 = sbr.rel (0) target = $region21
  $region20: #{esa_forward.10} parent=0 // pred_region
    _
  $region21: #{esa_forward.10} parent=0 // pred_fallthru
    _

// kernel: esa_forward.9
$region0: #{esa_forward.9}
  #allocation0 [shape = 'u32[]', space=smem, size = 0x4, offset = 0x4, fixed_abs, tag = 'smem constant byte address 0x4 - core index']
  #allocation1 [shape = 'u32[144,128]{1,0:T(1,128)}', space=vmem, size = 0x12000, scoped, tag = 'internal scratch']
  %s0 = inlined_call_operand.vmem [shape: f32[18,5,5,8], index: 0, kind: input, shape index: {}]
  %s1 = inlined_call_operand.vmem [shape: f32[2,3,3,8], index: 1, kind: output, shape index: {}]
  %s2 = sld [smem:[#allocation0]]
  $region37: #{esa_forward.9} parent=0
    _
  %s4 = ssub.s32 1, %s2
  %s5 = scalar_select 0, %s4, %s2
  loop: start=0, step=1, limit=4
  $region2: #{esa_forward.9} parent=0 // loop_pre_header
    _
  $region3: #{esa_forward.9} parent=0 // loop_header
    %s7 = sphi 0, %s11
    %p8 = scmp.ge.s32.totalorder %s7, 4
    %s17 = sphi 0, %s19
    %s20 = sphi 0, %s17
    %s21 = sphi 0, %s20
    %s37 = sphi 0, %s21
    %s43 = sphi 0, %s45
    %s46 = sphi 0, %s43
    %s47 = sphi 0, %s46
    %s63 = sphi 0, %s47
  $region4: #{esa_forward.9} parent=0 // loop_header_branch
    %10 = sbr.rel (%p8) target = $region8
  $region5: #{esa_forward.9} parent=0 // loop_body
    %s12 = ssub.s32 %s7, 1
    %s13 = ssub.s32 %s7, 2
    %s14 = sadd.s32 %s7, 1
    %s15 = ssub.s32 %s7, %s14
    %p16 = scmp.eq.s32.totalorder %s15, 0
    %s18 = sadd.s32 %s17, 1
    %s19 = scalar_select %p16, %s17, %s18
    %p22 = pneg %p16
    %p23 = scmp.eq.s32.totalorder %s7, 1
    %p24 = por %p22, %p23
    %p25 = scmp.ne.s32.totalorder %s17, %s20
    %p26 = scmp.eq.s32.totalorder %s7, 0
    %p27 = por %p25, %p26
    %p28 = scmp.ne.s32.totalorder %s17, %s20
    %p29 = scmp.eq.s32.totalorder %s12, 1
    %p30 = por %p28, %p29
    %p31 = scmp.ne.s32.totalorder %s20, %s21
    %p32 = scmp.eq.s32.totalorder %s12, 0
    %p33 = por %p31, %p32
    %p34 = scmp.ne.s32.totalorder %s20, %s21
    %p35 = scmp.eq.s32.totalorder %s13, 1
    %p36 = por %p34, %p35
    %p38 = scmp.ne.s32.totalorder %s21, %s37
    %p39 = scmp.eq.s32.totalorder %s13, 0
    %p40 = por %p38, %p39
    %s41 = ssub.s32 %s7, %s14
    %p42 = scmp.eq.s32.totalorder %s41, 0
    %s44 = sadd.s32 %s43, 1
    %s45 = scalar_select %p42, %s43, %s44
    %p48 = pneg %p42
    %p49 = scmp.eq.s32.totalorder %s7, 1
    %p50 = por %p48, %p49
    %p51 = scmp.ne.s32.totalorder %s43, %s46
    %p52 = scmp.eq.s32.totalorder %s7, 0
    %p53 = por %p51, %p52
    %p54 = scmp.ne.s32.totalorder %s43, %s46
    %p55 = scmp.eq.s32.totalorder %s12, 1
    %p56 = por %p54, %p55
    %p57 = scmp.ne.s32.totalorder %s46, %s47
    %p58 = scmp.eq.s32.totalorder %s12, 0
    %p59 = por %p57, %p58
    %p60 = scmp.ne.s32.totalorder %s46, %s47
    %p61 = scmp.eq.s32.totalorder %s13, 1
    %p62 = por %p60, %p61
    %p64 = scmp.ne.s32.totalorder %s47, %s63
    %p65 = scmp.eq.s32.totalorder %s13, 0
    %p66 = por %p64, %p65
    %p67 = scmp.le.s32.totalorder 1, %s7
    %p68 = scmp.lt.s32.totalorder %s7, 3
    %p69 = pnand %p67, %p68
    %p70 = pneg %p69
    // Predicated region
    $region9: #{esa_forward.9} parent=5 // pred_check
      _
    $region10: #{esa_forward.9} parent=5 // pred_check_branch
      %72 = sbr.rel (%p69) target = $region12
    $region11: #{esa_forward.9} parent=5 // pred_region
      %s73 = ssub.s32 %s7, 1
    $region12: #{esa_forward.9} parent=5 // pred_fallthru
      _
    %p74 = scmp.lt.s32.totalorder %s7, 2
    // Predicated region
    $region13: #{esa_forward.9} parent=5 // pred_check
      %p75 = pneg %p74
    $region14: #{esa_forward.9} parent=5 // pred_check_branch
      %77 = sbr.rel (%p75) target = $region16
    $region15: #{esa_forward.9} parent=5 // pred_region
      // Predicated region
      $region17: #{esa_forward.9} parent=15 // pred_check
        %p78 = pneg %p27
      $region18: #{esa_forward.9} parent=15 // pred_check_branch
        %80 = sbr.rel (%p78) target = $region20
      $region19: #{esa_forward.9} parent=15 // pred_region
        %s81 = smul.u32 9, %s7
        %p82 = scmp.lt.s32.totalorder %s81, 17
        %s83 = scalar_select %p82, %s81, 17
        %s84 = smul.addr %s83, 5
        %s85 = smul.addr %s84, 8
        %s86 = scalar_lea.vmem %s0, %s85
        %s87 = smul.u32 9, %s7
      $region20: #{esa_forward.9} parent=15 // pred_fallthru
        _
    $region16: #{esa_forward.9} parent=5 // pred_fallthru
      _
    %p88 = scmp.le.s32.totalorder 1, %s7
    %p89 = scmp.lt.s32.totalorder %s7, 3
    %p90 = pnand %p88, %p89
    %p91 = pneg %p90
    // Predicated region
    $region21: #{esa_forward.9} parent=5 // pred_check
      _
    $region22: #{esa_forward.9} parent=5 // pred_check_branch
      %93 = sbr.rel (%p90) target = $region24
    $region23: #{esa_forward.9} parent=5 // pred_region
      %s94 = ssub.s32 %s7, 1
      %s95 = smul.u32 9, %s12
      %p96 = scmp.lt.s32.totalorder %s95, 17
      %s97 = scalar_select %p96, %s95, 17
      %s98 = smul.addr %s97, 5
      %s99 = smul.addr %s98, 8
      %s100 = scalar_lea.vmem %s0, %s99
      %p101 = pneg %p33
      %p102 = pneg %p30
      %p103 = pneg %p59
      %p104 = pneg %p56
      %p105 = scmp.lt.s32.totalorder %s12, 1
      %s106 = scalar_select %p105, %s12, 1
      %s107 = smul.addr %s106, 3
      %s108 = smul.addr %s107, 4
      %s109 = scalar_lea.vmem %s1, %s108
      %s110 = smul.u32 9, %s12
      %p111 = scmp.lt.s32.totalorder %s110, 17
      %s112 = scalar_select %p111, %s110, 17
      %s113 = smul.addr %s112, 5
      %s114 = smul.addr %s113, 8
      %s115 = scalar_lea.vmem %s0, %s114
      %s116 = smul.u32 9, %s12
      %p117 = scmp.lt.s32.totalorder %s12, 1
      %s118 = scalar_select %p117, %s12, 1
      %s119 = smul.addr %s118, 3
      %s120 = smul.addr %s119, 4
      %s121 = scalar_lea.vmem %s1, %s120
      %v122 = vld [vmem:[%s115] sm:$0x7]
      %v123 = vld [vmem:[%s115 + $0x8] sm:$0x7]
      %v124 = vld [vmem:[%s115 + $0x10] sm:$0x7]
      %v125 = vld [vmem:[%s115 + $0x1] sm:$0x7]
      %v126 = vld [vmem:[%s115 + $0x9] sm:$0x7]
      %v127 = vld [vmem:[%s115 + $0x11] sm:$0x7]
      %v128 = vmax.f32 %v122, %v125
      %v129 = vmax.f32 %v123, %v126
      %v130 = vmax.f32 %v124, %v127
      %v131 = vld [vmem:[%s115 + $0x2] sm:$0x7]
      %v132 = vld [vmem:[%s115 + $0xa] sm:$0x7]
      %v133 = vld [vmem:[%s115 + $0x12] sm:$0x7]
      %v134 = vmax.f32 %v128, %v131
      %v135 = vmax.f32 %v129, %v132
      %v136 = vmax.f32 %v130, %v133
      %s137 = scalar_lea.vmem %s115, 8
      %v138 = vld [vmem:[%s137] sm:$0x7]
      %v139 = vld [vmem:[%s137 + $0x8] sm:$0x7]
      %v140 = vld [vmem:[%s137 + $0x10] sm:$0x7]
      %v141 = vmax.f32 %v134, %v138
      %v142 = vmax.f32 %v135, %v139
      %v143 = vmax.f32 %v136, %v140
      %v144 = vld [vmem:[%s137 + $0x1] sm:$0x7]
      %v145 = vld [vmem:[%s137 + $0x9] sm:$0x7]
      %v146 = vld [vmem:[%s137 + $0x11] sm:$0x7]
      %v147 = vmax.f32 %v141, %v144
      %v148 = vmax.f32 %v142, %v145
      %v149 = vmax.f32 %v143, %v146
      %v150 = vld [vmem:[%s137 + $0x2] sm:$0x7]
      %v151 = vld [vmem:[%s137 + $0xa] sm:$0x7]
      %v152 = vld [vmem:[%s137 + $0x12] sm:$0x7]
      %v153 = vmax.f32 %v147, %v150
      %v154 = vmax.f32 %v148, %v151
      %v155 = vmax.f32 %v149, %v152
      %s156 = scalar_lea.vmem %s115, 16
      %v157 = vld [vmem:[%s156] sm:$0x7]
      %v158 = vld [vmem:[%s156 + $0x8] sm:$0x7]
      %v159 = vld [vmem:[%s156 + $0x10] sm:$0x7]
      %v160 = vmax.f32 %v153, %v157
      %v161 = vmax.f32 %v154, %v158
      %v162 = vmax.f32 %v155, %v159
      %v163 = vld [vmem:[%s156 + $0x1] sm:$0x7]
      %v164 = vld [vmem:[%s156 + $0x9] sm:$0x7]
      %v165 = vld [vmem:[%s156 + $0x11] sm:$0x7]
      %v166 = vmax.f32 %v160, %v163
      %v167 = vmax.f32 %v161, %v164
      %v168 = vmax.f32 %v162, %v165
      %v169 = vld [vmem:[%s156 + $0x2] sm:$0x7]
      %v170 = vld [vmem:[%s156 + $0xa] sm:$0x7]
      %v171 = vld [vmem:[%s156 + $0x12] sm:$0x7]
      %v172 = vmax.f32 %v166, %v169
      %v173 = vmax.f32 %v167, %v170
      %v174 = vmax.f32 %v168, %v171
      %s175 = scalar_lea.vmem %s115, 40
      %v176 = vld [vmem:[%s175] sm:$0x7]
      %v177 = vld [vmem:[%s175 + $0x8] sm:$0x7]
      %v178 = vld [vmem:[%s175 + $0x10] sm:$0x7]
      %v179 = vmax.f32 %v172, %v176
      %v180 = vmax.f32 %v173, %v177
      %v181 = vmax.f32 %v174, %v178
      %v182 = vld [vmem:[%s175 + $0x1] sm:$0x7]
      %v183 = vld [vmem:[%s175 + $0x9] sm:$0x7]
      %v184 = vld [vmem:[%s175 + $0x11] sm:$0x7]
      %v185 = vmax.f32 %v179, %v182
      %v186 = vmax.f32 %v180, %v183
      %v187 = vmax.f32 %v181, %v184
      %s188 = scalar_lea.vmem %s115, 48
      %v189 = vld [vmem:[%s188] sm:$0x7]
      %v190 = vld [vmem:[%s188 + $0x8] sm:$0x7]
      %v191 = vld [vmem:[%s188 + $0x10] sm:$0x7]
      %v192 = vmax.f32 %v185, %v189
      %v193 = vmax.f32 %v186, %v190
      %v194 = vmax.f32 %v187, %v191
      %v195 = vld [vmem:[%s188 + $0x1] sm:$0x7]
      %v196 = vld [vmem:[%s188 + $0x9] sm:$0x7]
      %v197 = vld [vmem:[%s188 + $0x11] sm:$0x7]
      %v198 = vmax.f32 %v192, %v195
      %v199 = vmax.f32 %v193, %v196
      %v200 = vmax.f32 %v194, %v197
      %s201 = scalar_lea.vmem %s115, 56
      %v202 = vld [vmem:[%s201] sm:$0x7]
      %v203 = vld [vmem:[%s201 + $0x8] sm:$0x7]
      %v204 = vld [vmem:[%s201 + $0x10] sm:$0x7]
      %v205 = vmax.f32 %v198, %v202
      %v206 = vmax.f32 %v199, %v203
      %v207 = vmax.f32 %v200, %v204
      %v208 = vld [vmem:[%s201 + $0x1] sm:$0x7]
      %v209 = vld [vmem:[%s201 + $0x9] sm:$0x7]
      %v210 = vld [vmem:[%s201 + $0x11] sm:$0x7]
      %v211 = vmax.f32 %v205, %v208
      %v212 = vmax.f32 %v206, %v209
      %v213 = vmax.f32 %v207, %v210
      %s214 = scalar_lea.vmem %s115, 80
      %v215 = vld [vmem:[%s214] sm:$0x7]
      %v216 = vld [vmem:[%s214 + $0x8] sm:$0x7]
      %v217 = vld [vmem:[%s214 + $0x10] sm:$0x7]
      %v218 = vmax.f32 %v211, %v215
      %v219 = vmax.f32 %v212, %v216
      %v220 = vmax.f32 %v213, %v217
      %v221 = vld [vmem:[%s214 + $0x1] sm:$0x7]
      %v222 = vld [vmem:[%s214 + $0x9] sm:$0x7]
      %v223 = vld [vmem:[%s214 + $0x11] sm:$0x7]
      %v224 = vmax.f32 %v218, %v221
      %v225 = vmax.f32 %v219, %v222
      %v226 = vmax.f32 %v220, %v223
      %s227 = scalar_lea.vmem %s115, 88
      %v228 = vld [vmem:[%s227] sm:$0x7]
      %v229 = vld [vmem:[%s227 + $0x8] sm:$0x7]
      %v230 = vld [vmem:[%s227 + $0x10] sm:$0x7]
      %v231 = vmax.f32 %v224, %v228
      %v232 = vmax.f32 %v225, %v229
      %v233 = vmax.f32 %v226, %v230
      %v234 = vld [vmem:[%s227 + $0x1] sm:$0x7]
      %v235 = vld [vmem:[%s227 + $0x9] sm:$0x7]
      %v236 = vld [vmem:[%s227 + $0x11] sm:$0x7]
      %v237 = vmax.f32 %v231, %v234
      %v238 = vmax.f32 %v232, %v235
      %v239 = vmax.f32 %v233, %v236
      %s240 = scalar_lea.vmem %s115, 96
      %v241 = vld [vmem:[%s240] sm:$0x7]
      %v242 = vld [vmem:[%s240 + $0x8] sm:$0x7]
      %v243 = vld [vmem:[%s240 + $0x10] sm:$0x7]
      %v244 = vmax.f32 %v237, %v241
      %v245 = vmax.f32 %v238, %v242
      %v246 = vmax.f32 %v239, %v243
      %v247 = vld [vmem:[%s240 + $0x1] sm:$0x7]
      %v248 = vld [vmem:[%s240 + $0x9] sm:$0x7]
      %v249 = vld [vmem:[%s240 + $0x11] sm:$0x7]
      %v250 = vmax.f32 %v244, %v247
      %v251 = vmax.f32 %v245, %v248
      %v252 = vmax.f32 %v246, %v249
      %s253 = scalar_lea.vmem %s115, 120
      %v254 = vld [vmem:[%s253] sm:$0x7]
      %v255 = vld [vmem:[%s253 + $0x8] sm:$0x7]
      %v256 = vld [vmem:[%s253 + $0x10] sm:$0x7]
      %v257 = vmax.f32 %v250, %v254
      %v258 = vmax.f32 %v251, %v255
      %v259 = vmax.f32 %v252, %v256
      %v260 = vld [vmem:[%s253 + $0x1] sm:$0x7]
      %v261 = vld [vmem:[%s253 + $0x9] sm:$0x7]
      %v262 = vld [vmem:[%s253 + $0x11] sm:$0x7]
      %v263 = vmax.f32 %v257, %v260
      %v264 = vmax.f32 %v258, %v261
      %v265 = vmax.f32 %v259, %v262
      %v266 = vld [vmem:[%s253 + $0x2] sm:$0x7]
      %v267 = vld [vmem:[%s253 + $0xa] sm:$0x7]
      %v268 = vld [vmem:[%s253 + $0x12] sm:$0x7]
      %v269 = vmax.f32 %v263, %v266
      %v270 = vmax.f32 %v264, %v267
      %v271 = vmax.f32 %v265, %v268
      %s272 = scalar_lea.vmem %s115, 128
      %v273 = vld [vmem:[%s272] sm:$0x7]
      %v274 = vld [vmem:[%s272 + $0x8] sm:$0x7]
      %v275 = vld [vmem:[%s272 + $0x10] sm:$0x7]
      %v276 = vmax.f32 %v269, %v273
      %v277 = vmax.f32 %v270, %v274
      %v278 = vmax.f32 %v271, %v275
      %v279 = vld [vmem:[%s272 + $0x1] sm:$0x7]
      %v280 = vld [vmem:[%s272 + $0x9] sm:$0x7]
      %v281 = vld [vmem:[%s272 + $0x11] sm:$0x7]
      %v282 = vmax.f32 %v276, %v279
      %v283 = vmax.f32 %v277, %v280
      %v284 = vmax.f32 %v278, %v281
      %v285 = vld [vmem:[%s272 + $0x2] sm:$0x7]
      %v286 = vld [vmem:[%s272 + $0xa] sm:$0x7]
      %v287 = vld [vmem:[%s272 + $0x12] sm:$0x7]
      %v288 = vmax.f32 %v282, %v285
      %v289 = vmax.f32 %v283, %v286
      %v290 = vmax.f32 %v284, %v287
      %s291 = scalar_lea.vmem %s115, 160
      %v292 = vld [vmem:[%s291] sm:$0x7]
      %v293 = vld [vmem:[%s291 + $0x8] sm:$0x7]
      %v294 = vld [vmem:[%s291 + $0x10] sm:$0x7]
      %v295 = vmax.f32 %v288, %v292
      %v296 = vmax.f32 %v289, %v293
      %v297 = vmax.f32 %v290, %v294
      %v298 = vld [vmem:[%s291 + $0x1] sm:$0x7]
      %v299 = vld [vmem:[%s291 + $0x9] sm:$0x7]
      %v300 = vld [vmem:[%s291 + $0x11] sm:$0x7]
      %v301 = vmax.f32 %v295, %v298
      %v302 = vmax.f32 %v296, %v299
      %v303 = vmax.f32 %v297, %v300
      %s304 = scalar_lea.vmem %s115, 168
      %v305 = vld [vmem:[%s304] sm:$0x7]
      %v306 = vld [vmem:[%s304 + $0x8] sm:$0x7]
      %v307 = vld [vmem:[%s304 + $0x10] sm:$0x7]
      %v308 = vmax.f32 %v301, %v305
      %v309 = vmax.f32 %v302, %v306
      %v310 = vmax.f32 %v303, %v307
      %v311 = vld [vmem:[%s304 + $0x1] sm:$0x7]
      %v312 = vld [vmem:[%s304 + $0x9] sm:$0x7]
      %v313 = vld [vmem:[%s304 + $0x11] sm:$0x7]
      %v314 = vmax.f32 %v308, %v311
      %v315 = vmax.f32 %v309, %v312
      %v316 = vmax.f32 %v310, %v313
      %s317 = scalar_lea.vmem %s115, 200
      %v318 = vld [vmem:[%s317] sm:$0x7]
      %v319 = vld [vmem:[%s317 + $0x8] sm:$0x7]
      %v320 = vld [vmem:[%s317 + $0x10] sm:$0x7]
      %v321 = vmax.f32 %v314, %v318
      %v322 = vmax.f32 %v315, %v319
      %v323 = vmax.f32 %v316, %v320
      %v324 = vld [vmem:[%s317 + $0x1] sm:$0x7]
      %v325 = vld [vmem:[%s317 + $0x9] sm:$0x7]
      %v326 = vld [vmem:[%s317 + $0x11] sm:$0x7]
      %v327 = vmax.f32 %v321, %v324
      %v328 = vmax.f32 %v322, %v325
      %v329 = vmax.f32 %v323, %v326
      %s330 = scalar_lea.vmem %s115, 208
      %v331 = vld [vmem:[%s330] sm:$0x7]
      %v332 = vld [vmem:[%s330 + $0x8] sm:$0x7]
      %v333 = vld [vmem:[%s330 + $0x10] sm:$0x7]
      %v334 = vmax.f32 %v327, %v331
      %v335 = vmax.f32 %v328, %v332
      %v336 = vmax.f32 %v329, %v333
      %v337 = vld [vmem:[%s330 + $0x1] sm:$0x7]
      %v338 = vld [vmem:[%s330 + $0x9] sm:$0x7]
      %v339 = vld [vmem:[%s330 + $0x11] sm:$0x7]
      %v340 = vmax.f32 %v334, %v337
      %v341 = vmax.f32 %v335, %v338
      %v342 = vmax.f32 %v336, %v339
      %s343 = scalar_lea.vmem %s115, 240
      %v344 = vld [vmem:[%s343] sm:$0x7]
      %v345 = vld [vmem:[%s343 + $0x8] sm:$0x7]
      %v346 = vld [vmem:[%s343 + $0x10] sm:$0x7]
      %v347 = vmax.f32 %v340, %v344
      %v348 = vmax.f32 %v341, %v345
      %v349 = vmax.f32 %v342, %v346
      %v350 = vld [vmem:[%s343 + $0x1] sm:$0x7]
      %v351 = vld [vmem:[%s343 + $0x9] sm:$0x7]
      %v352 = vld [vmem:[%s343 + $0x11] sm:$0x7]
      %v353 = vmax.f32 %v347, %v350
      %v354 = vmax.f32 %v348, %v351
      %v355 = vmax.f32 %v349, %v352
      %v356 = vld [vmem:[%s343 + $0x2] sm:$0x7]
      %v357 = vld [vmem:[%s343 + $0xa] sm:$0x7]
      %v358 = vld [vmem:[%s343 + $0x12] sm:$0x7]
      %v359 = vmax.f32 %v353, %v356
      %v360 = vmax.f32 %v354, %v357
      %v361 = vmax.f32 %v355, %v358
      %s362 = scalar_lea.vmem %s115, 248
      %v363 = vld [vmem:[%s362] sm:$0x7]
      %v364 = vld [vmem:[%s362 + $0x8] sm:$0x7]
      %v365 = vld [vmem:[%s362 + $0x10] sm:$0x7]
      %v366 = vmax.f32 %v359, %v363
      %v367 = vmax.f32 %v360, %v364
      %v368 = vmax.f32 %v361, %v365
      %v369 = vld [vmem:[%s362 + $0x1] sm:$0x7]
      %v370 = vld [vmem:[%s362 + $0x9] sm:$0x7]
      %v371 = vld [vmem:[%s362 + $0x11] sm:$0x7]
      %v372 = vmax.f32 %v366, %v369
      %v373 = vmax.f32 %v367, %v370
      %v374 = vmax.f32 %v368, %v371
      %v375 = vld [vmem:[%s362 + $0x2] sm:$0x7]
      %v376 = vld [vmem:[%s362 + $0xa] sm:$0x7]
      %v377 = vld [vmem:[%s362 + $0x12] sm:$0x7]
      %v378 = vmax.f32 %v372, %v375
      %v379 = vmax.f32 %v373, %v376
      %v380 = vmax.f32 %v374, %v377
      %s381 = scalar_lea.vmem %s115, 280
      %v382 = vld [vmem:[%s381] sm:$0x7]
      %v383 = vld [vmem:[%s381 + $0x8] sm:$0x7]
      %v384 = vld [vmem:[%s381 + $0x10] sm:$0x7]
      %v385 = vmax.f32 %v378, %v382
      %v386 = vmax.f32 %v379, %v383
      %v387 = vmax.f32 %v380, %v384
      %v388 = vld [vmem:[%s381 + $0x1] sm:$0x7]
      %v389 = vld [vmem:[%s381 + $0x9] sm:$0x7]
      %v390 = vld [vmem:[%s381 + $0x11] sm:$0x7]
      %v391 = vmax.f32 %v385, %v388
      %v392 = vmax.f32 %v386, %v389
      %v393 = vmax.f32 %v387, %v390
      %s394 = scalar_lea.vmem %s115, 288
      %v395 = vld [vmem:[%s394] sm:$0x7]
      %v396 = vld [vmem:[%s394 + $0x8] sm:$0x7]
      %v397 = vld [vmem:[%s394 + $0x10] sm:$0x7]
      %v398 = vmax.f32 %v391, %v395
      %v399 = vmax.f32 %v392, %v396
      %v400 = vmax.f32 %v393, %v397
      %v401 = vld [vmem:[%s394 + $0x1] sm:$0x7]
      %v402 = vld [vmem:[%s394 + $0x9] sm:$0x7]
      %v403 = vld [vmem:[%s394 + $0x11] sm:$0x7]
      %v404 = vmax.f32 %v398, %v401
      %v405 = vmax.f32 %v399, %v402
      %v406 = vmax.f32 %v400, %v403
      %s407 = scalar_lea.vmem %s115, 320
      %v408 = vld [vmem:[%s407] sm:$0x7]
      %v409 = vld [vmem:[%s407 + $0x8] sm:$0x7]
      %v410 = vld [vmem:[%s407 + $0x10] sm:$0x7]
      %v411 = vmax.f32 %v404, %v408
      %v412 = vmax.f32 %v405, %v409
      %v413 = vmax.f32 %v406, %v410
      %v414 = vld [vmem:[%s407 + $0x1] sm:$0x7]
      %v415 = vld [vmem:[%s407 + $0x9] sm:$0x7]
      %v416 = vld [vmem:[%s407 + $0x11] sm:$0x7]
      %v417 = vmax.f32 %v411, %v414
      %v418 = vmax.f32 %v412, %v415
      %v419 = vmax.f32 %v413, %v416
      %s420 = scalar_lea.vmem %s115, 328
      %v421 = vld [vmem:[%s420] sm:$0x7]
      %v422 = vld [vmem:[%s420 + $0x8] sm:$0x7]
      %v423 = vld [vmem:[%s420 + $0x10] sm:$0x7]
      %v424 = vmax.f32 %v417, %v421
      %v425 = vmax.f32 %v418, %v422
      %v426 = vmax.f32 %v419, %v423
      %v427 = vld [vmem:[%s420 + $0x1] sm:$0x7]
      %v428 = vld [vmem:[%s420 + $0x9] sm:$0x7]
      %v429 = vld [vmem:[%s420 + $0x11] sm:$0x7]
      %v430 = vmax.f32 %v424, %v427
      %v431 = vmax.f32 %v425, %v428
      %v432 = vmax.f32 %v426, %v429
      %vm433 = vcmask 59392
      %434 = vst.msk [vmem:[%s121] sm:$0x7] %vm433, %v430
      %435 = vst.msk [vmem:[%s121 + $0x4] sm:$0x7] %vm433, %v431
      %436 = vst.msk [vmem:[%s121 + $0x8] sm:$0x7] %vm433, %v432
      %p437 = scmp.lt.s32.totalorder %s12, 1
      %s438 = scalar_select %p437, %s12, 1
      %s439 = smul.addr %s438, 3
      %s440 = smul.addr %s439, 4
      %s441 = scalar_lea.vmem %s1, %s440
      // Predicated region
      $region25: #{esa_forward.9} parent=23 // pred_check
        %p442 = pneg %p56
      $region26: #{esa_forward.9} parent=23 // pred_check_branch
        %444 = sbr.rel (%p442) target = $region28
      $region27: #{esa_forward.9} parent=23 // pred_region
        _
      $region28: #{esa_forward.9} parent=23 // pred_fallthru
        _
    $region24: #{esa_forward.9} parent=5 // pred_fallthru
      _
    %p445 = scmp.le.s32.totalorder 2, %s7
    // Predicated region
    $region29: #{esa_forward.9} parent=5 // pred_check
      %p446 = pneg %p445
    $region30: #{esa_forward.9} parent=5 // pred_check_branch
      %448 = sbr.rel (%p446) target = $region32
    $region31: #{esa_forward.9} parent=5 // pred_region
      %s449 = ssub.s32 %s7, 2
      // Predicated region
      $region33: #{esa_forward.9} parent=31 // pred_check
        %p450 = pneg %p62
      $region34: #{esa_forward.9} parent=31 // pred_check_branch
        %452 = sbr.rel (%p450) target = $region36
      $region35: #{esa_forward.9} parent=31 // pred_region
        %p453 = scmp.lt.s32.totalorder %s13, 1
        %s454 = scalar_select %p453, %s13, 1
        %s455 = smul.addr %s454, 3
        %s456 = smul.addr %s455, 4
        %s457 = scalar_lea.vmem %s1, %s456
      $region36: #{esa_forward.9} parent=31 // pred_fallthru
        _
    $region32: #{esa_forward.9} parent=5 // pred_fallthru
      _
  $region6: #{esa_forward.9} parent=0 // loop_footer
    %s11 = sadd.s32 1, %s7
  $region7: #{esa_forward.9} parent=0 // loop_footer_branch
    %6 = sbr.rel target = $region3
  $region8: #{esa_forward.9} parent=0 // loop_exit
    _

// kernel: esa_forward.11
$region0: #{esa_forward.11}
  #allocation0 [shape = 'u32[]', space=smem, size = 0x4, offset = 0x4, fixed_abs, tag = 'smem constant byte address 0x4 - core index']
  #allocation1 [shape = 'u32[144,128]{1,0:T(1,128)}', space=vmem, size = 0x12000, scoped, tag = 'internal scratch']
  %s0 = inlined_call_operand.vmem [shape: f32[32,3], index: 0, kind: input, shape index: {}]
  %s1 = inlined_call_operand.vmem [shape: f32[3,48], index: 1, kind: input, shape index: {}]
  %s2 = inlined_call_operand.vmem [shape: f32[32,48], index: 2, kind: output, shape index: {}]
  %s3 = sld [smem:[#allocation0]]
  $region18: #{esa_forward.11} parent=0
    _
  %s5 = ssub.s32 1, %s3
  %s6 = scalar_select 0, %s5, %s3
  // Predicated region
  $region2: #{esa_forward.11} parent=0 // pred_check
    _
  $region3: #{esa_forward.11} parent=0 // pred_check_branch
    %8 = sbr.rel (0) target = $region5
  $region4: #{esa_forward.11} parent=0 // pred_region
    _
  $region5: #{esa_forward.11} parent=0 // pred_fallthru
    _
  // Predicated region
  $region6: #{esa_forward.11} parent=0 // pred_check
    _
  $region7: #{esa_forward.11} parent=0 // pred_check_branch
    %10 = sbr.rel (0) target = $region9
  $region8: #{esa_forward.11} parent=0 // pred_region
    _
  $region9: #{esa_forward.11} parent=0 // pred_fallthru
    _
  %v11 = vld [vmem:[%s0] sm:$0xff]
  %v12 = vld [vmem:[%s0 + $0x8] sm:$0xff]
  %v13 = vld [vmem:[%s0 + $0x10] sm:$0xff]
  %v14 = vld [vmem:[%s0 + $0x18] sm:$0xff]
  %v15 = vld [vmem:[%s1] sm:$0x7]
  %vm16 = vcmask 23552
  %v18 = vsel %vm16, %v11, 0
  %v21 = vsel %vm16, %v12, 0
  %v24 = vsel %vm16, %v13, 0
  %v27 = vsel %vm16, %v14, 0
  %vm29 = vcmask 1042432
  %v31 = vsel %vm29, %v15, 0
  %33 = vmatprep.subr.mxu0 0.0
  %34 = vmatpush1.msra.mxu0 0.0
  %35 = vmatprep.subr.mxu0 0.0
  %36 = vmatpush1.msra.mxu0 0.0
  %37 = vmatprep.subr.mxu0 0.0
  %38 = vmatpush1.msra.mxu0 0.0
  %39 = vmatprep.subr.mxu0 0.0
  %40 = vmatpush1.msra.mxu0 0.0
  %41 = vmatprep.subr.mxu0 0.0
  %42 = vmatpush1.msra.mxu0 0.0
  %43 = vmatprep.subr.mxu0 0.0
  %44 = vmatpush1.msra.mxu0 0.0
  %45 = vmatprep.subr.mxu0 0.0
  %46 = vmatpush1.msra.mxu0 0.0
  %47 = vmatprep.subr.mxu0 0.0
  %48 = vmatpush1.msra.mxu0 0.0
  %49 = vmatprep.subr.mxu0 0.0
  %50 = vmatpush1.msra.mxu0 0.0
  %51 = vmatprep.subr.mxu0 0.0
  %52 = vmatpush1.msra.mxu0 0.0
  %53 = vmatprep.subr.mxu0 0.0
  %54 = vmatpush1.msra.mxu0 0.0
  %55 = vmatprep.subr.mxu0 0.0
  %56 = vmatpush1.msra.mxu0 0.0
  %57 = vmatprep.subr.mxu0 0.0
  %58 = vmatpush1.msra.mxu0 0.0
  %59 = vmatprep.subr.mxu0 0.0
  %60 = vmatpush1.msra.mxu0 0.0
  %61 = vmatprep.subr.mxu0 0.0
  %62 = vmatpush1.msra.mxu0 0.0
  %63 = vmatprep.subr.mxu0 0.0
  %64 = vmatpush1.msra.mxu0 %v31
  %65 = vmatprep.subr.mxu0 0.0
  %66 = vmatpush2.msra.mxu0 0.0
  %67 = vmatprep.subr.mxu0 0.0
  %68 = vmatpush2.msra.mxu0 0.0
  %69 = vmatprep.subr.mxu0 0.0
  %70 = vmatpush2.msra.mxu0 0.0
  %71 = vmatprep.subr.mxu0 0.0
  %72 = vmatpush2.msra.mxu0 0.0
  %73 = vmatprep.subr.mxu0 0.0
  %74 = vmatpush2.msra.mxu0 0.0
  %75 = vmatprep.subr.mxu0 0.0
  %76 = vmatpush2.msra.mxu0 0.0
  %77 = vmatprep.subr.mxu0 0.0
  %78 = vmatpush2.msra.mxu0 0.0
  %79 = vmatprep.subr.mxu0 0.0
  %80 = vmatpush2.msra.mxu0 0.0
  %81 = vmatprep.subr.mxu0 0.0
  %82 = vmatpush2.msra.mxu0 0.0
  %83 = vmatprep.subr.mxu0 0.0
  %84 = vmatpush2.msra.mxu0 0.0
  %85 = vmatprep.subr.mxu0 0.0
  %86 = vmatpush2.msra.mxu0 0.0
  %87 = vmatprep.subr.mxu0 0.0
  %88 = vmatpush2.msra.mxu0 0.0
  %89 = vmatprep.subr.mxu0 0.0
  %90 = vmatpush2.msra.mxu0 0.0
  %91 = vmatprep.subr.mxu0 0.0
  %92 = vmatpush2.msra.mxu0 0.0
  %93 = vmatprep.subr.mxu0 0.0
  %94 = vmatpush2.msra.mxu0 0.0
  %95 = vmatprep.subr.mxu0 0.0
  %96 = vmatpush2.msra.mxu0 0.0
  %97 = vmatprep.mubr.f32.mxu0 0.0
  %98 = vmatmul.mubr.f32.gmra.mxu0 %v18
  %v99 = vpop.f32.mrf.mxu0
  %v100 = vadd.f32 0.0, %v99
  %v101 = vpop.f32.mrf.mxu0
  %102 = vmatprep.mubr.f32.mxu0 0.0
  %103 = vmatmul.mubr.f32.gmra.mxu0 %v21
  %v104 = vpop.f32.mrf.mxu0
  %v105 = vadd.f32 0.0, %v104
  %v106 = vpop.f32.mrf.mxu0
  %107 = vmatprep.mubr.f32.mxu0 0.0
  %108 = vmatmul.mubr.f32.gmra.mxu0 %v24
  %v109 = vpop.f32.mrf.mxu0
  %v110 = vadd.f32 0.0, %v109
  %v111 = vpop.f32.mrf.mxu0
  %112 = vmatprep.mubr.f32.mxu0 0.0
  %113 = vmatmul.mubr.f32.gmra.mxu0 %v27
  %v114 = vpop.f32.mrf.mxu0
  %v115 = vadd.f32 0.0, %v114
  %v116 = vpop.f32.mrf.mxu0
  %117 = vdwg.mxu0
  %vm118 = vcmask 392192
  %119 = vst.msk [vmem:[%s2] sm:$0xff] %vm118, %v100
  %120 = vst.msk [vmem:[%s2 + $0x8] sm:$0xff] %vm118, %v105
  %121 = vst.msk [vmem:[%s2 + $0x10] sm:$0xff] %vm118, %v110
  %122 = vst.msk [vmem:[%s2 + $0x18] sm:$0xff] %vm118, %v115
  // Predicated region
  $region10: #{esa_forward.11} parent=0 // pred_check
    _
  $region11: #{esa_forward.11} parent=0 // pred_check_branch
    %124 = sbr.rel (0) target = $region13
  $region12: #{esa_forward.11} parent=0 // pred_region
    _
  $region13: #{esa_forward.11} parent=0 // pred_fallthru
    _
  // Predicated region
  $region14: #{esa_forward.11} parent=0 // pred_check
    _
  $region15: #{esa_forward.11} parent=0 // pred_check_branch
    %126 = sbr.rel (0) target = $region17
  $region16: #{esa_forward.11} parent=0 // pred_region
    _
  $region17: #{esa_forward.11} parent=0 // pred_fallthru
    _

// kernel: esa_forward.12
$region0: #{esa_forward.12}
  #allocation0 [shape = 'u32[]', space=smem, size = 0x4, offset = 0x4, fixed_abs, tag = 'smem constant byte address 0x4 - core index']
  #allocation1 [shape = 'u32[144,128]{1,0:T(1,128)}', space=vmem, size = 0x12000, scoped, tag = 'internal scratch']
  %s0 = inlined_call_operand.vmem [shape: f32[32,3], index: 0, kind: input, shape index: {}]
  %s1 = inlined_call_operand.vmem [shape: f32[3,512], index: 1, kind: input, shape index: {}]
  %s2 = inlined_call_operand.vmem [shape: f32[32,512], index: 2, kind: output, shape index: {}]
  %s3 = sld [smem:[#allocation0]]
  $region18: #{esa_forward.12} parent=0
    _
  %s5 = ssub.s32 1, %s3
  %s6 = scalar_select 0, %s5, %s3
  // Predicated region
  $region2: #{esa_forward.12} parent=0 // pred_check
    _
  $region3: #{esa_forward.12} parent=0 // pred_check_branch
    %8 = sbr.rel (0) target = $region5
  $region4: #{esa_forward.12} parent=0 // pred_region
    _
  $region5: #{esa_forward.12} parent=0 // pred_fallthru
    _
  // Predicated region
  $region6: #{esa_forward.12} parent=0 // pred_check
    _
  $region7: #{esa_forward.12} parent=0 // pred_check_branch
    %10 = sbr.rel (0) target = $region9
  $region8: #{esa_forward.12} parent=0 // pred_region
    _
  $region9: #{esa_forward.12} parent=0 // pred_fallthru
    _
  %v11 = vld [vmem:[%s0] sm:$0xff]
  %v12 = vld [vmem:[%s0 + $0x8] sm:$0xff]
  %v13 = vld [vmem:[%s0 + $0x10] sm:$0xff]
  %v14 = vld [vmem:[%s0 + $0x18] sm:$0xff]
  %v15 = vld [vmem:[%s1] sm:$0x77]
  %v16 = vld [vmem:[%s1 + $0x8] sm:$0x77]
  %v19 = vcombine.high %v15, %v15
  %v20 = vcombine.high %v16, %v16
  %vm21 = vcmask 23552
  %v23 = vsel %vm21, %v11, 0
  %v26 = vsel %vm21, %v12, 0
  %v29 = vsel %vm21, %v13, 0
  %v32 = vsel %vm21, %v14, 0
  %vm34 = vcmask 1042432
  %v35 = vsel %vm34, %v15, 0
  %v37 = vsel %vm34, %v19, 0
  %v39 = vsel %vm34, %v16, 0
  %v41 = vsel %vm34, %v20, 0
  %43 = vmatprep.subr.mxu0 0.0
  %44 = vmatpush1.msra.mxu0 0.0
  %45 = vmatprep.subr.mxu0 0.0
  %46 = vmatpush1.msra.mxu0 0.0
  %47 = vmatprep.subr.mxu0 0.0
  %48 = vmatpush1.msra.mxu0 0.0
  %49 = vmatprep.subr.mxu0 0.0
  %50 = vmatpush1.msra.mxu0 0.0
  %51 = vmatprep.subr.mxu0 0.0
  %52 = vmatpush1.msra.mxu0 0.0
  %53 = vmatprep.subr.mxu0 0.0
  %54 = vmatpush1.msra.mxu0 0.0
  %55 = vmatprep.subr.mxu0 0.0
  %56 = vmatpush1.msra.mxu0 0.0
  %57 = vmatprep.subr.mxu0 0.0
  %58 = vmatpush1.msra.mxu0 0.0
  %59 = vmatprep.subr.mxu0 0.0
  %60 = vmatpush1.msra.mxu0 0.0
  %61 = vmatprep.subr.mxu0 0.0
  %62 = vmatpush1.msra.mxu0 0.0
  %63 = vmatprep.subr.mxu0 0.0
  %64 = vmatpush1.msra.mxu0 0.0
  %65 = vmatprep.subr.mxu0 0.0
  %66 = vmatpush1.msra.mxu0 0.0
  %67 = vmatprep.subr.mxu0 0.0
  %68 = vmatpush1.msra.mxu0 0.0
  %69 = vmatprep.subr.mxu0 0.0
  %70 = vmatpush1.msra.mxu0 0.0
  %71 = vmatprep.subr.mxu0 0.0
  %72 = vmatpush1.msra.mxu0 0.0
  %73 = vmatprep.subr.mxu0 %v37
  %74 = vmatpush1.msra.mxu0 %v35
  %75 = vmatprep.subr.mxu0 0.0
  %76 = vmatpush2.msra.mxu0 0.0
  %77 = vmatprep.subr.mxu0 0.0
  %78 = vmatpush2.msra.mxu0 0.0
  %79 = vmatprep.subr.mxu0 0.0
  %80 = vmatpush2.msra.mxu0 0.0
  %81 = vmatprep.subr.mxu0 0.0
  %82 = vmatpush2.msra.mxu0 0.0
  %83 = vmatprep.subr.mxu0 0.0
  %84 = vmatpush2.msra.mxu0 0.0
  %85 = vmatprep.subr.mxu0 0.0
  %86 = vmatpush2.msra.mxu0 0.0
  %87 = vmatprep.subr.mxu0 0.0
  %88 = vmatpush2.msra.mxu0 0.0
  %89 = vmatprep.subr.mxu0 0.0
  %90 = vmatpush2.msra.mxu0 0.0
  %91 = vmatprep.subr.mxu0 0.0
  %92 = vmatpush2.msra.mxu0 0.0
  %93 = vmatprep.subr.mxu0 0.0
  %94 = vmatpush2.msra.mxu0 0.0
  %95 = vmatprep.subr.mxu0 0.0
  %96 = vmatpush2.msra.mxu0 0.0
  %97 = vmatprep.subr.mxu0 0.0
  %98 = vmatpush2.msra.mxu0 0.0
  %99 = vmatprep.subr.mxu0 0.0
  %100 = vmatpush2.msra.mxu0 0.0
  %101 = vmatprep.subr.mxu0 0.0
  %102 = vmatpush2.msra.mxu0 0.0
  %103 = vmatprep.subr.mxu0 0.0
  %104 = vmatpush2.msra.mxu0 0.0
  %105 = vmatprep.subr.mxu0 0.0
  %106 = vmatpush2.msra.mxu0 0.0
  %107 = vmatprep.mubr.f32.mxu0 0.0
  %108 = vmatmul.mubr.f32.gmra.mxu0 %v23
  %v109 = vpop.f32.mrf.mxu0
  %v110 = vadd.f32 0.0, %v109
  %v111 = vpop.f32.mrf.mxu0
  %v112 = vadd.f32 0.0, %v111
  %113 = vmatprep.mubr.f32.mxu0 0.0
  %114 = vmatmul.mubr.f32.gmra.mxu0 %v26
  %v115 = vpop.f32.mrf.mxu0
  %v116 = vadd.f32 0.0, %v115
  %v117 = vpop.f32.mrf.mxu0
  %v118 = vadd.f32 0.0, %v117
  %119 = vmatprep.mubr.f32.mxu0 0.0
  %120 = vmatmul.mubr.f32.gmra.mxu0 %v29
  %v121 = vpop.f32.mrf.mxu0
  %v122 = vadd.f32 0.0, %v121
  %v123 = vpop.f32.mrf.mxu0
  %v124 = vadd.f32 0.0, %v123
  %125 = vmatprep.mubr.f32.mxu0 0.0
  %126 = vmatmul.mubr.f32.gmra.mxu0 %v32
  %v127 = vpop.f32.mrf.mxu0
  %v128 = vadd.f32 0.0, %v127
  %v129 = vpop.f32.mrf.mxu0
  %v130 = vadd.f32 0.0, %v129
  %131 = vdwg.mxu0
  %132 = vmatprep.subr.mxu0 0.0
  %133 = vmatpush1.msra.mxu0 0.0
  %134 = vmatprep.subr.mxu0 0.0
  %135 = vmatpush1.msra.mxu0 0.0
  %136 = vmatprep.subr.mxu0 0.0
  %137 = vmatpush1.msra.mxu0 0.0
  %138 = vmatprep.subr.mxu0 0.0
  %139 = vmatpush1.msra.mxu0 0.0
  %140 = vmatprep.subr.mxu0 0.0
  %141 = vmatpush1.msra.mxu0 0.0
  %142 = vmatprep.subr.mxu0 0.0
  %143 = vmatpush1.msra.mxu0 0.0
  %144 = vmatprep.subr.mxu0 0.0
  %145 = vmatpush1.msra.mxu0 0.0
  %146 = vmatprep.subr.mxu0 0.0
  %147 = vmatpush1.msra.mxu0 0.0
  %148 = vmatprep.subr.mxu0 0.0
  %149 = vmatpush1.msra.mxu0 0.0
  %150 = vmatprep.subr.mxu0 0.0
  %151 = vmatpush1.msra.mxu0 0.0
  %152 = vmatprep.subr.mxu0 0.0
  %153 = vmatpush1.msra.mxu0 0.0
  %154 = vmatprep.subr.mxu0 0.0
  %155 = vmatpush1.msra.mxu0 0.0
  %156 = vmatprep.subr.mxu0 0.0
  %157 = vmatpush1.msra.mxu0 0.0
  %158 = vmatprep.subr.mxu0 0.0
  %159 = vmatpush1.msra.mxu0 0.0
  %160 = vmatprep.subr.mxu0 0.0
  %161 = vmatpush1.msra.mxu0 0.0
  %162 = vmatprep.subr.mxu0 %v41
  %163 = vmatpush1.msra.mxu0 %v39
  %164 = vmatprep.subr.mxu0 0.0
  %165 = vmatpush2.msra.mxu0 0.0
  %166 = vmatprep.subr.mxu0 0.0
  %167 = vmatpush2.msra.mxu0 0.0
  %168 = vmatprep.subr.mxu0 0.0
  %169 = vmatpush2.msra.mxu0 0.0
  %170 = vmatprep.subr.mxu0 0.0
  %171 = vmatpush2.msra.mxu0 0.0
  %172 = vmatprep.subr.mxu0 0.0
  %173 = vmatpush2.msra.mxu0 0.0
  %174 = vmatprep.subr.mxu0 0.0
  %175 = vmatpush2.msra.mxu0 0.0
  %176 = vmatprep.subr.mxu0 0.0
  %177 = vmatpush2.msra.mxu0 0.0
  %178 = vmatprep.subr.mxu0 0.0
  %179 = vmatpush2.msra.mxu0 0.0
  %180 = vmatprep.subr.mxu0 0.0
  %181 = vmatpush2.msra.mxu0 0.0
  %182 = vmatprep.subr.mxu0 0.0
  %183 = vmatpush2.msra.mxu0 0.0
  %184 = vmatprep.subr.mxu0 0.0
  %185 = vmatpush2.msra.mxu0 0.0
  %186 = vmatprep.subr.mxu0 0.0
  %187 = vmatpush2.msra.mxu0 0.0
  %188 = vmatprep.subr.mxu0 0.0
  %189 = vmatpush2.msra.mxu0 0.0
  %190 = vmatprep.subr.mxu0 0.0
  %191 = vmatpush2.msra.mxu0 0.0
  %192 = vmatprep.subr.mxu0 0.0
  %193 = vmatpush2.msra.mxu0 0.0
  %194 = vmatprep.subr.mxu0 0.0
  %195 = vmatpush2.msra.mxu0 0.0
  %196 = vmatprep.mubr.f32.mxu0 0.0
  %197 = vmatmul.mubr.f32.gmra.mxu0 %v23
  %v198 = vpop.f32.mrf.mxu0
  %v199 = vadd.f32 0.0, %v198
  %v200 = vpop.f32.mrf.mxu0
  %v201 = vadd.f32 0.0, %v200
  %202 = vmatprep.mubr.f32.mxu0 0.0
  %203 = vmatmul.mubr.f32.gmra.mxu0 %v26
  %v204 = vpop.f32.mrf.mxu0
  %v205 = vadd.f32 0.0, %v204
  %v206 = vpop.f32.mrf.mxu0
  %v207 = vadd.f32 0.0, %v206
  %208 = vmatprep.mubr.f32.mxu0 0.0
  %209 = vmatmul.mubr.f32.gmra.mxu0 %v29
  %v210 = vpop.f32.mrf.mxu0
  %v211 = vadd.f32 0.0, %v210
  %v212 = vpop.f32.mrf.mxu0
  %v213 = vadd.f32 0.0, %v212
  %214 = vmatprep.mubr.f32.mxu0 0.0
  %215 = vmatmul.mubr.f32.gmra.mxu0 %v32
  %v216 = vpop.f32.mrf.mxu0
  %v217 = vadd.f32 0.0, %v216
  %v218 = vpop.f32.mrf.mxu0
  %v219 = vadd.f32 0.0, %v218
  %220 = vdwg.mxu0
  %221 = vst [vmem:[%s2] sm:$0xff] %v110
  %222 = vst [vmem:[%s2 + $0x8] sm:$0xff] %v112
  %223 = vst [vmem:[%s2 + $0x10] sm:$0xff] %v199
  %224 = vst [vmem:[%s2 + $0x18] sm:$0xff] %v201
  %225 = vst [vmem:[%s2 + $0x20] sm:$0xff] %v116
  %226 = vst [vmem:[%s2 + $0x28] sm:$0xff] %v118
  %227 = vst [vmem:[%s2 + $0x30] sm:$0xff] %v205
  %228 = vst [vmem:[%s2 + $0x38] sm:$0xff] %v207
  %229 = vst [vmem:[%s2 + $0x40] sm:$0xff] %v122
  %230 = vst [vmem:[%s2 + $0x48] sm:$0xff] %v124
  %231 = vst [vmem:[%s2 + $0x50] sm:$0xff] %v211
  %232 = vst [vmem:[%s2 + $0x58] sm:$0xff] %v213
  %233 = vst [vmem:[%s2 + $0x60] sm:$0xff] %v128
  %234 = vst [vmem:[%s2 + $0x68] sm:$0xff] %v130
  %235 = vst [vmem:[%s2 + $0x70] sm:$0xff] %v217
  %236 = vst [vmem:[%s2 + $0x78] sm:$0xff] %v219
  // Predicated region
  $region10: #{esa_forward.12} parent=0 // pred_check
    _
  $region11: #{esa_forward.12} parent=0 // pred_check_branch
    %238 = sbr.rel (0) target = $region13
  $region12: #{esa_forward.12} parent=0 // pred_region
    _
  $region13: #{esa_forward.12} parent=0 // pred_fallthru
    _
  // Predicated region
  $region14: #{esa_forward.12} parent=0 // pred_check
    _
  $region15: #{esa_forward.12} parent=0 // pred_check_branch
    %240 = sbr.rel (0) target = $region17
  $region16: #{esa_forward.12} parent=0 // pred_region
    _
  $region17: #{esa_forward.12} parent=0 // pred_fallthru
    _

// kernel: esa_forward.13
$region0: #{esa_forward.13}
  #allocation0 [shape = 'u32[]', space=smem, size = 0x4, offset = 0x4, fixed_abs, tag = 'smem constant byte address 0x4 - core index']
  #allocation1 [shape = 'u32[144,128]{1,0:T(1,128)}', space=vmem, size = 0x12000, scoped, tag = 'internal scratch']
  %s0 = inlined_call_operand.vmem [shape: f32[2048,16], index: 0, kind: input, shape index: {}]
  %s1 = inlined_call_operand.vmem [shape: f32[2048,8], index: 1, kind: input, shape index: {}]
  %s2 = inlined_call_operand.vmem [shape: f32[2048,8], index: 2, kind: input, shape index: {}]
  %s3 = inlined_call_operand.vmem [shape: f32[8,8], index: 3, kind: input, shape index: {}]
  %s4 = inlined_call_operand.vmem [shape: f32[1,8], index: 4, kind: input, shape index: {}]
  %s5 = inlined_call_operand.vmem [shape: f32[8,16], index: 5, kind: input, shape index: {}]
  %s6 = inlined_call_operand.vmem [shape: f32[1,16], index: 6, kind: input, shape index: {}]
  %s7 = inlined_call_operand.vmem [shape: f32[2048,16], index: 7, kind: output, shape index: {}]
  %s8 = sld [smem:[#allocation0]]
  $region61: #{esa_forward.13} parent=0
    _
  %s10 = ssub.s32 1, %s8
  %s11 = scalar_select 0, %s10, %s8
  loop: start=0, step=1, limit=4
  $region2: #{esa_forward.13} parent=0 // loop_pre_header
    _
  $region3: #{esa_forward.13} parent=0 // loop_header
    %s13 = sphi 0, %s17
    %p14 = scmp.ge.s32.totalorder %s13, 4
    %s23 = sphi 0, %s25
    %s26 = sphi 0, %s23
    %s27 = sphi 0, %s26
    %s43 = sphi 0, %s27
    %s49 = sphi 0, %s51
    %s52 = sphi 0, %s49
    %s53 = sphi 0, %s52
    %s69 = sphi 0, %s53
    %s75 = sphi 0, %s77
    %s78 = sphi 0, %s75
    %s79 = sphi 0, %s78
    %s95 = sphi 0, %s79
    %s99 = sphi 0, %s99
    %s101 = sphi 0, %s99
    %s102 = sphi 0, %s101
    %s116 = sphi 0, %s102
    %s120 = sphi 0, %s120
    %s122 = sphi 0, %s120
    %s123 = sphi 0, %s122
    %s137 = sphi 0, %s123
    %s141 = sphi 0, %s141
    %s143 = sphi 0, %s141
    %s144 = sphi 0, %s143
    %s158 = sphi 0, %s144
    %s162 = sphi 0, %s162
    %s164 = sphi 0, %s162
    %s165 = sphi 0, %s164
    %s179 = sphi 0, %s165
    %s185 = sphi 0, %s187
    %s188 = sphi 0, %s185
    %s189 = sphi 0, %s188
    %s205 = sphi 0, %s189
  $region4: #{esa_forward.13} parent=0 // loop_header_branch
    %16 = sbr.rel (%p14) target = $region8
  $region5: #{esa_forward.13} parent=0 // loop_body
    %s18 = ssub.s32 %s13, 1
    %s19 = ssub.s32 %s13, 2
    %s20 = sadd.s32 %s13, 1
    %s21 = ssub.s32 %s13, %s20
    %p22 = scmp.eq.s32.totalorder %s21, 0
    %s24 = sadd.s32 %s23, 1
    %s25 = scalar_select %p22, %s23, %s24
    %p28 = pneg %p22
    %p29 = scmp.eq.s32.totalorder %s13, 1
    %p30 = por %p28, %p29
    %p31 = scmp.ne.s32.totalorder %s23, %s26
    %p32 = scmp.eq.s32.totalorder %s13, 0
    %p33 = por %p31, %p32
    %p34 = scmp.ne.s32.totalorder %s23, %s26
    %p35 = scmp.eq.s32.totalorder %s18, 1
    %p36 = por %p34, %p35
    %p37 = scmp.ne.s32.totalorder %s26, %s27
    %p38 = scmp.eq.s32.totalorder %s18, 0
    %p39 = por %p37, %p38
    %p40 = scmp.ne.s32.totalorder %s26, %s27
    %p41 = scmp.eq.s32.totalorder %s19, 1
    %p42 = por %p40, %p41
    %p44 = scmp.ne.s32.totalorder %s27, %s43
    %p45 = scmp.eq.s32.totalorder %s19, 0
    %p46 = por %p44, %p45
    %s47 = ssub.s32 %s13, %s20
    %p48 = scmp.eq.s32.totalorder %s47, 0
    %s50 = sadd.s32 %s49, 1
    %s51 = scalar_select %p48, %s49, %s50
    %p54 = pneg %p48
    %p55 = scmp.eq.s32.totalorder %s13, 1
    %p56 = por %p54, %p55
    %p57 = scmp.ne.s32.totalorder %s49, %s52
    %p58 = scmp.eq.s32.totalorder %s13, 0
    %p59 = por %p57, %p58
    %p60 = scmp.ne.s32.totalorder %s49, %s52
    %p61 = scmp.eq.s32.totalorder %s18, 1
    %p62 = por %p60, %p61
    %p63 = scmp.ne.s32.totalorder %s52, %s53
    %p64 = scmp.eq.s32.totalorder %s18, 0
    %p65 = por %p63, %p64
    %p66 = scmp.ne.s32.totalorder %s52, %s53
    %p67 = scmp.eq.s32.totalorder %s19, 1
    %p68 = por %p66, %p67
    %p70 = scmp.ne.s32.totalorder %s53, %s69
    %p71 = scmp.eq.s32.totalorder %s19, 0
    %p72 = por %p70, %p71
    %s73 = ssub.s32 %s13, %s20
    %p74 = scmp.eq.s32.totalorder %s73, 0
    %s76 = sadd.s32 %s75, 1
    %s77 = scalar_select %p74, %s75, %s76
    %p80 = pneg %p74
    %p81 = scmp.eq.s32.totalorder %s13, 1
    %p82 = por %p80, %p81
    %p83 = scmp.ne.s32.totalorder %s75, %s78
    %p84 = scmp.eq.s32.totalorder %s13, 0
    %p85 = por %p83, %p84
    %p86 = scmp.ne.s32.totalorder %s75, %s78
    %p87 = scmp.eq.s32.totalorder %s18, 1
    %p88 = por %p86, %p87
    %p89 = scmp.ne.s32.totalorder %s78, %s79
    %p90 = scmp.eq.s32.totalorder %s18, 0
    %p91 = por %p89, %p90
    %p92 = scmp.ne.s32.totalorder %s78, %s79
    %p93 = scmp.eq.s32.totalorder %s19, 1
    %p94 = por %p92, %p93
    %p96 = scmp.ne.s32.totalorder %s79, %s95
    %p97 = scmp.eq.s32.totalorder %s19, 0
    %p98 = por %p96, %p97
    %s100 = sadd.s32 %s99, 1
    %p103 = scmp.eq.s32.totalorder %s13, 1
    %p104 = scmp.ne.s32.totalorder %s99, %s101
    %p105 = scmp.eq.s32.totalorder %s13, 0
    %p106 = por %p104, %p105
    %p107 = scmp.ne.s32.totalorder %s99, %s101
    %p108 = scmp.eq.s32.totalorder %s18, 1
    %p109 = por %p107, %p108
    %p110 = scmp.ne.s32.totalorder %s101, %s102
    %p111 = scmp.eq.s32.totalorder %s18, 0
    %p112 = por %p110, %p111
    %p113 = scmp.ne.s32.totalorder %s101, %s102
    %p114 = scmp.eq.s32.totalorder %s19, 1
    %p115 = por %p113, %p114
    %p117 = scmp.ne.s32.totalorder %s102, %s116
    %p118 = scmp.eq.s32.totalorder %s19, 0
    %p119 = por %p117, %p118
    %s121 = sadd.s32 %s120, 1
    %p124 = scmp.eq.s32.totalorder %s13, 1
    %p125 = scmp.ne.s32.totalorder %s120, %s122
    %p126 = scmp.eq.s32.totalorder %s13, 0
    %p127 = por %p125, %p126
    %p128 = scmp.ne.s32.totalorder %s120, %s122
    %p129 = scmp.eq.s32.totalorder %s18, 1
    %p130 = por %p128, %p129
    %p131 = scmp.ne.s32.totalorder %s122, %s123
    %p132 = scmp.eq.s32.totalorder %s18, 0
    %p133 = por %p131, %p132
    %p134 = scmp.ne.s32.totalorder %s122, %s123
    %p135 = scmp.eq.s32.totalorder %s19, 1
    %p136 = por %p134, %p135
    %p138 = scmp.ne.s32.totalorder %s123, %s137
    %p139 = scmp.eq.s32.totalorder %s19, 0
    %p140 = por %p138, %p139
    %s142 = sadd.s32 %s141, 1
    %p145 = scmp.eq.s32.totalorder %s13, 1
    %p146 = scmp.ne.s32.totalorder %s141, %s143
    %p147 = scmp.eq.s32.totalorder %s13, 0
    %p148 = por %p146, %p147
    %p149 = scmp.ne.s32.totalorder %s141, %s143
    %p150 = scmp.eq.s32.totalorder %s18, 1
    %p151 = por %p149, %p150
    %p152 = scmp.ne.s32.totalorder %s143, %s144
    %p153 = scmp.eq.s32.totalorder %s18, 0
    %p154 = por %p152, %p153
    %p155 = scmp.ne.s32.totalorder %s143, %s144
    %p156 = scmp.eq.s32.totalorder %s19, 1
    %p157 = por %p155, %p156
    %p159 = scmp.ne.s32.totalorder %s144, %s158
    %p160 = scmp.eq.s32.totalorder %s19, 0
    %p161 = por %p159, %p160
    %s163 = sadd.s32 %s162, 1
    %p166 = scmp.eq.s32.totalorder %s13, 1
    %p167 = scmp.ne.s32.totalorder %s162, %s164
    %p168 = scmp.eq.s32.totalorder %s13, 0
    %p169 = por %p167, %p168
    %p170 = scmp.ne.s32.totalorder %s162, %s164
    %p171 = scmp.eq.s32.totalorder %s18, 1
    %p172 = por %p170, %p171
    %p173 = scmp.ne.s32.totalorder %s164, %s165
    %p174 = scmp.eq.s32.totalorder %s18, 0
    %p175 = por %p173, %p174
    %p176 = scmp.ne.s32.totalorder %s164, %s165
    %p177 = scmp.eq.s32.totalorder %s19, 1
    %p178 = por %p176, %p177
    %p180 = scmp.ne.s32.totalorder %s165, %s179
    %p181 = scmp.eq.s32.totalorder %s19, 0
    %p182 = por %p180, %p181
    %s183 = ssub.s32 %s13, %s20
    %p184 = scmp.eq.s32.totalorder %s183, 0
    %s186 = sadd.s32 %s185, 1
    %s187 = scalar_select %p184, %s185, %s186
    %p190 = pneg %p184
    %p191 = scmp.eq.s32.totalorder %s13, 1
    %p192 = por %p190, %p191
    %p193 = scmp.ne.s32.totalorder %s185, %s188
    %p194 = scmp.eq.s32.totalorder %s13, 0
    %p195 = por %p193, %p194
    %p196 = scmp.ne.s32.totalorder %s185, %s188
    %p197 = scmp.eq.s32.totalorder %s18, 1
    %p198 = por %p196, %p197
    %p199 = scmp.ne.s32.totalorder %s188, %s189
    %p200 = scmp.eq.s32.totalorder %s18, 0
    %p201 = por %p199, %p200
    %p202 = scmp.ne.s32.totalorder %s188, %s189
    %p203 = scmp.eq.s32.totalorder %s19, 1
    %p204 = por %p202, %p203
    %p206 = scmp.ne.s32.totalorder %s189, %s205
    %p207 = scmp.eq.s32.totalorder %s19, 0
    %p208 = por %p206, %p207
    %p209 = scmp.le.s32.totalorder 1, %s13
    %p210 = scmp.lt.s32.totalorder %s13, 3
    %p211 = pnand %p209, %p210
    %p212 = pneg %p211
    // Predicated region
    $region9: #{esa_forward.13} parent=5 // pred_check
      _
    $region10: #{esa_forward.13} parent=5 // pred_check_branch
      %214 = sbr.rel (%p211) target = $region12
    $region11: #{esa_forward.13} parent=5 // pred_region
      %s215 = ssub.s32 %s13, 1
      // Predicated region
      $region13: #{esa_forward.13} parent=11 // pred_check
        %p216 = pneg %p112
      $region14: #{esa_forward.13} parent=11 // pred_check_branch
        %218 = sbr.rel (%p216) target = $region16
      $region15: #{esa_forward.13} parent=11 // pred_region
        _
      $region16: #{esa_forward.13} parent=11 // pred_fallthru
        _
      // Predicated region
      $region17: #{esa_forward.13} parent=11 // pred_check
        %p219 = pneg %p133
      $region18: #{esa_forward.13} parent=11 // pred_check_branch
        %221 = sbr.rel (%p219) target = $region20
      $region19: #{esa_forward.13} parent=11 // pred_region
        _
      $region20: #{esa_forward.13} parent=11 // pred_fallthru
        _
      // Predicated region
      $region21: #{esa_forward.13} parent=11 // pred_check
        %p222 = pneg %p154
      $region22: #{esa_forward.13} parent=11 // pred_check_branch
        %224 = sbr.rel (%p222) target = $region24
      $region23: #{esa_forward.13} parent=11 // pred_region
        _
      $region24: #{esa_forward.13} parent=11 // pred_fallthru
        _
      // Predicated region
      $region25: #{esa_forward.13} parent=11 // pred_check
        %p225 = pneg %p175
      $region26: #{esa_forward.13} parent=11 // pred_check_branch
        %227 = sbr.rel (%p225) target = $region28
      $region27: #{esa_forward.13} parent=11 // pred_region
        _
      $region28: #{esa_forward.13} parent=11 // pred_fallthru
        _
    $region12: #{esa_forward.13} parent=5 // pred_fallthru
      _
    %p228 = scmp.lt.s32.totalorder %s13, 2
    // Predicated region
    $region29: #{esa_forward.13} parent=5 // pred_check
      %p229 = pneg %p228
    $region30: #{esa_forward.13} parent=5 // pred_check_branch
      %231 = sbr.rel (%p229) target = $region32
    $region31: #{esa_forward.13} parent=5 // pred_region
      // Predicated region
      $region33: #{esa_forward.13} parent=31 // pred_check
        %p232 = pneg %p33
      $region34: #{esa_forward.13} parent=31 // pred_check_branch
        %234 = sbr.rel (%p232) target = $region36
      $region35: #{esa_forward.13} parent=31 // pred_region
        %s235 = smul.u32 128, %s13
        %p236 = scmp.lt.s32.totalorder %s235, 255
        %s237 = scalar_select %p236, %s235, 255
        %s238 = smul.addr %s237, 8
        %s239 = scalar_lea.vmem %s0, %s238
        %s240 = smul.u32 128, %s13
      $region36: #{esa_forward.13} parent=31 // pred_fallthru
        _
      // Predicated region
      $region37: #{esa_forward.13} parent=31 // pred_check
        %p241 = pneg %p59
      $region38: #{esa_forward.13} parent=31 // pred_check_branch
        %243 = sbr.rel (%p241) target = $region40
      $region39: #{esa_forward.13} parent=31 // pred_region
        %s244 = smul.u32 128, %s13
        %p245 = scmp.lt.s32.totalorder %s244, 255
        %s246 = scalar_select %p245, %s244, 255
        %s247 = smul.addr %s246, 8
        %s248 = scalar_lea.vmem %s1, %s247
        %s249 = smul.u32 128, %s13
      $region40: #{esa_forward.13} parent=31 // pred_fallthru
        _
      // Predicated region
      $region41: #{esa_forward.13} parent=31 // pred_check
        %p250 = pneg %p85
      $region42: #{esa_forward.13} parent=31 // pred_check_branch
        %252 = sbr.rel (%p250) target = $region44
      $region43: #{esa_forward.13} parent=31 // pred_region
        %s253 = smul.u32 128, %s13
        %p254 = scmp.lt.s32.totalorder %s253, 255
        %s255 = scalar_select %p254, %s253, 255
        %s256 = smul.addr %s255, 8
        %s257 = scalar_lea.vmem %s2, %s256
        %s258 = smul.u32 128, %s13
      $region44: #{esa_forward.13} parent=31 // pred_fallthru
        _
    $region32: #{esa_forward.13} parent=5 // pred_fallthru
      _
    %p259 = scmp.le.s32.totalorder 1, %s13
    %p260 = scmp.lt.s32.totalorder %s13, 3
    %p261 = pnand %p259, %p260
    %p262 = pneg %p261
    // Predicated region
    $region45: #{esa_forward.13} parent=5 // pred_check
      _
    $region46: #{esa_forward.13} parent=5 // pred_check_branch
      %264 = sbr.rel (%p261) target = $region48
    $region47: #{esa_forward.13} parent=5 // pred_region
      %s265 = ssub.s32 %s13, 1
      %s266 = smul.u32 128, %s18
      %p267 = scmp.lt.s32.totalorder %s266, 255
      %s268 = scalar_select %p267, %s266, 255
      %s269 = smul.addr %s268, 8
      %s270 = scalar_lea.vmem %s0, %s269
      %p271 = pneg %p39
      %p272 = pneg %p36
      %s273 = smul.u32 128, %s18
      %p274 = scmp.lt.s32.totalorder %s273, 255
      %s275 = scalar_select %p274, %s273, 255
      %s276 = smul.addr %s275, 8
      %s277 = scalar_lea.vmem %s1, %s276
      %p278 = pneg %p65
      %p279 = pneg %p62
      %s280 = smul.u32 128, %s18
      %p281 = scmp.lt.s32.totalorder %s280, 255
      %s282 = scalar_select %p281, %s280, 255
      %s283 = smul.addr %s282, 8
      %s284 = scalar_lea.vmem %s2, %s283
      %p285 = pneg %p91
      %p286 = pneg %p88
      %p287 = pneg %p112
      %p288 = pneg %p109
      %p289 = pneg %p133
      %p290 = pneg %p130
      %p291 = pneg %p154
      %p292 = pneg %p151
      %p293 = pneg %p175
      %p294 = pneg %p172
      %p295 = pneg %p201
      %p296 = pneg %p198
      %s297 = smul.u32 128, %s18
      %p298 = scmp.lt.s32.totalorder %s297, 255
      %s299 = scalar_select %p298, %s297, 255
      %s300 = smul.addr %s299, 8
      %s301 = scalar_lea.vmem %s7, %s300
      %s302 = smul.u32 128, %s18
      %p303 = scmp.lt.s32.totalorder %s302, 255
      %s304 = scalar_select %p303, %s302, 255
      %s305 = smul.addr %s304, 8
      %s306 = scalar_lea.vmem %s0, %s305
      %s307 = smul.u32 128, %s18
      %s308 = smul.u32 128, %s18
      %p309 = scmp.lt.s32.totalorder %s308, 255
      %s310 = scalar_select %p309, %s308, 255
      %s311 = smul.addr %s310, 8
      %s312 = scalar_lea.vmem %s1, %s311
      %s313 = smul.u32 128, %s18
      %s314 = smul.u32 128, %s18
      %p315 = scmp.lt.s32.totalorder %s314, 255
      %s316 = scalar_select %p315, %s314, 255
      %s317 = smul.addr %s316, 8
      %s318 = scalar_lea.vmem %s2, %s317
      %s319 = smul.u32 128, %s18
      %s320 = smul.u32 128, %s18
      %p321 = scmp.lt.s32.totalorder %s320, 255
      %s322 = scalar_select %p321, %s320, 255
      %s323 = smul.addr %s322, 8
      %s324 = scalar_lea.vmem %s7, %s323
      %s325 = smul.u32 128, %s18
      %v326 = vld [vmem:[%s312] sm:$0xff]
      %v327 = vld [vmem:[%s312 + $0x8] sm:$0xff]
      %v328 = vld [vmem:[%s312 + $0x10] sm:$0xff]
      %v329 = vld [vmem:[%s312 + $0x18] sm:$0xff]
      %v330 = vld [vmem:[%s312 + $0x20] sm:$0xff]
      %v331 = vld [vmem:[%s312 + $0x28] sm:$0xff]
      %v332 = vld [vmem:[%s312 + $0x30] sm:$0xff]
      %v333 = vld [vmem:[%s312 + $0x38] sm:$0xff]
      %v334 = vld [vmem:[%s312 + $0x40] sm:$0xff]
      %v335 = vld [vmem:[%s312 + $0x48] sm:$0xff]
      %v336 = vld [vmem:[%s312 + $0x50] sm:$0xff]
      %v337 = vld [vmem:[%s312 + $0x58] sm:$0xff]
      %v338 = vld [vmem:[%s312 + $0x60] sm:$0xff]
      %v339 = vld [vmem:[%s312 + $0x68] sm:$0xff]
      %v340 = vld [vmem:[%s312 + $0x70] sm:$0xff]
      %v341 = vld [vmem:[%s312 + $0x78] sm:$0xff]
      %v342 = vld [vmem:[%s312 + $0x80] sm:$0xff]
      %v343 = vld [vmem:[%s312 + $0x88] sm:$0xff]
      %v344 = vld [vmem:[%s312 + $0x90] sm:$0xff]
      %v345 = vld [vmem:[%s312 + $0x98] sm:$0xff]
      %v346 = vld [vmem:[%s312 + $0xa0] sm:$0xff]
      %v347 = vld [vmem:[%s312 + $0xa8] sm:$0xff]
      %v348 = vld [vmem:[%s312 + $0xb0] sm:$0xff]
      %v349 = vld [vmem:[%s312 + $0xb8] sm:$0xff]
      %v350 = vld [vmem:[%s312 + $0xc0] sm:$0xff]
      %v351 = vld [vmem:[%s312 + $0xc8] sm:$0xff]
      %v352 = vld [vmem:[%s312 + $0xd0] sm:$0xff]
      %v353 = vld [vmem:[%s312 + $0xd8] sm:$0xff]
      %v354 = vld [vmem:[%s312 + $0xe0] sm:$0xff]
      %v355 = vld [vmem:[%s312 + $0xe8] sm:$0xff]
      %v356 = vld [vmem:[%s312 + $0xf0] sm:$0xff]
      %v357 = vld [vmem:[%s312 + $0xf8] sm:$0xff]
      %v358 = vld [vmem:[%s312 + $0x100] sm:$0xff]
      %v359 = vld [vmem:[%s312 + $0x108] sm:$0xff]
      %v360 = vld [vmem:[%s312 + $0x110] sm:$0xff]
      %v361 = vld [vmem:[%s312 + $0x118] sm:$0xff]
      %v362 = vld [vmem:[%s312 + $0x120] sm:$0xff]
      %v363 = vld [vmem:[%s312 + $0x128] sm:$0xff]
      %v364 = vld [vmem:[%s312 + $0x130] sm:$0xff]
      %v365 = vld [vmem:[%s312 + $0x138] sm:$0xff]
      %v366 = vld [vmem:[%s312 + $0x140] sm:$0xff]
      %v367 = vld [vmem:[%s312 + $0x148] sm:$0xff]
      %v368 = vld [vmem:[%s312 + $0x150] sm:$0xff]
      %v369 = vld [vmem:[%s312 + $0x158] sm:$0xff]
      %v370 = vld [vmem:[%s312 + $0x160] sm:$0xff]
      %v371 = vld [vmem:[%s312 + $0x168] sm:$0xff]
      %v372 = vld [vmem:[%s312 + $0x170] sm:$0xff]
      %v373 = vld [vmem:[%s312 + $0x178] sm:$0xff]
      %v374 = vld [vmem:[%s312 + $0x180] sm:$0xff]
      %v375 = vld [vmem:[%s312 + $0x188] sm:$0xff]
      %v376 = vld [vmem:[%s312 + $0x190] sm:$0xff]
      %v377 = vld [vmem:[%s312 + $0x198] sm:$0xff]
      %v378 = vld [vmem:[%s312 + $0x1a0] sm:$0xff]
      %v379 = vld [vmem:[%s312 + $0x1a8] sm:$0xff]
      %v380 = vld [vmem:[%s312 + $0x1b0] sm:$0xff]
      %v381 = vld [vmem:[%s312 + $0x1b8] sm:$0xff]
      %v382 = vld [vmem:[%s312 + $0x1c0] sm:$0xff]
      %v383 = vld [vmem:[%s312 + $0x1c8] sm:$0xff]
      %v384 = vld [vmem:[%s312 + $0x1d0] sm:$0xff]
      %v385 = vld [vmem:[%s312 + $0x1d8] sm:$0xff]
      %v386 = vld [vmem:[%s312 + $0x1e0] sm:$0xff]
      %v387 = vld [vmem:[%s312 + $0x1e8] sm:$0xff]
      %v388 = vld [vmem:[%s312 + $0x1f0] sm:$0xff]
      %v389 = vld [vmem:[%s312 + $0x1f8] sm:$0xff]
      %v390 = vld [vmem:[%s312 + $0x200] sm:$0xff]
      %v391 = vld [vmem:[%s312 + $0x208] sm:$0xff]
      %v392 = vld [vmem:[%s312 + $0x210] sm:$0xff]
      %v393 = vld [vmem:[%s312 + $0x218] sm:$0xff]
      %v394 = vld [vmem:[%s312 + $0x220] sm:$0xff]
      %v395 = vld [vmem:[%s312 + $0x228] sm:$0xff]
      %v396 = vld [vmem:[%s312 + $0x230] sm:$0xff]
      %v397 = vld [vmem:[%s312 + $0x238] sm:$0xff]
      %v398 = vld [vmem:[%s312 + $0x240] sm:$0xff]
      %v399 = vld [vmem:[%s312 + $0x248] sm:$0xff]
      %v400 = vld [vmem:[%s312 + $0x250] sm:$0xff]
      %v401 = vld [vmem:[%s312 + $0x258] sm:$0xff]
      %v402 = vld [vmem:[%s312 + $0x260] sm:$0xff]
      %v403 = vld [vmem:[%s312 + $0x268] sm:$0xff]
      %v404 = vld [vmem:[%s312 + $0x270] sm:$0xff]
      %v405 = vld [vmem:[%s312 + $0x278] sm:$0xff]
      %v406 = vld [vmem:[%s312 + $0x280] sm:$0xff]
      %v407 = vld [vmem:[%s312 + $0x288] sm:$0xff]
      %v408 = vld [vmem:[%s312 + $0x290] sm:$0xff]
      %v409 = vld [vmem:[%s312 + $0x298] sm:$0xff]
      %v410 = vld [vmem:[%s312 + $0x2a0] sm:$0xff]
      %v411 = vld [vmem:[%s312 + $0x2a8] sm:$0xff]
      %v412 = vld [vmem:[%s312 + $0x2b0] sm:$0xff]
      %v413 = vld [vmem:[%s312 + $0x2b8] sm:$0xff]
      %v414 = vld [vmem:[%s312 + $0x2c0] sm:$0xff]
      %v415 = vld [vmem:[%s312 + $0x2c8] sm:$0xff]
      %v416 = vld [vmem:[%s312 + $0x2d0] sm:$0xff]
      %v417 = vld [vmem:[%s312 + $0x2d8] sm:$0xff]
      %v418 = vld [vmem:[%s312 + $0x2e0] sm:$0xff]
      %v419 = vld [vmem:[%s312 + $0x2e8] sm:$0xff]
      %v420 = vld [vmem:[%s312 + $0x2f0] sm:$0xff]
      %v421 = vld [vmem:[%s312 + $0x2f8] sm:$0xff]
      %v422 = vld [vmem:[%s312 + $0x300] sm:$0xff]
      %v423 = vld [vmem:[%s312 + $0x308] sm:$0xff]
      %v424 = vld [vmem:[%s312 + $0x310] sm:$0xff]
      %v425 = vld [vmem:[%s312 + $0x318] sm:$0xff]
      %v426 = vld [vmem:[%s312 + $0x320] sm:$0xff]
      %v427 = vld [vmem:[%s312 + $0x328] sm:$0xff]
      %v428 = vld [vmem:[%s312 + $0x330] sm:$0xff]
      %v429 = vld [vmem:[%s312 + $0x338] sm:$0xff]
      %v430 = vld [vmem:[%s312 + $0x340] sm:$0xff]
      %v431 = vld [vmem:[%s312 + $0x348] sm:$0xff]
      %v432 = vld [vmem:[%s312 + $0x350] sm:$0xff]
      %v433 = vld [vmem:[%s312 + $0x358] sm:$0xff]
      %v434 = vld [vmem:[%s312 + $0x360] sm:$0xff]
      %v435 = vld [vmem:[%s312 + $0x368] sm:$0xff]
      %v436 = vld [vmem:[%s312 + $0x370] sm:$0xff]
      %v437 = vld [vmem:[%s312 + $0x378] sm:$0xff]
      %v438 = vld [vmem:[%s312 + $0x380] sm:$0xff]
      %v439 = vld [vmem:[%s312 + $0x388] sm:$0xff]
      %v440 = vld [vmem:[%s312 + $0x390] sm:$0xff]
      %v441 = vld [vmem:[%s312 + $0x398] sm:$0xff]
      %v442 = vld [vmem:[%s312 + $0x3a0] sm:$0xff]
      %v443 = vld [vmem:[%s312 + $0x3a8] sm:$0xff]
      %v444 = vld [vmem:[%s312 + $0x3b0] sm:$0xff]
      %v445 = vld [vmem:[%s312 + $0x3b8] sm:$0xff]
      %v446 = vld [vmem:[%s312 + $0x3c0] sm:$0xff]
      %v447 = vld [vmem:[%s312 + $0x3c8] sm:$0xff]
      %v448 = vld [vmem:[%s312 + $0x3d0] sm:$0xff]
      %v449 = vld [vmem:[%s312 + $0x3d8] sm:$0xff]
      %v450 = vld [vmem:[%s312 + $0x3e0] sm:$0xff]
      %v451 = vld [vmem:[%s312 + $0x3e8] sm:$0xff]
      %v452 = vld [vmem:[%s312 + $0x3f0] sm:$0xff]
      %v453 = vld [vmem:[%s312 + $0x3f8] sm:$0xff]
      %v454 = vld [vmem:[%s3] sm:$0xff]
      %v455 = vld [vmem:[%s4] sm:$0x1]
      %v457 = vlaneseq
      %v458 = vshrl.u32 %v457, 7
      %v459 = vsub.s32 0, %v458
      %v460 = vrot.slane %v455, %v459
      %vm462 = vcmask 64512
      %v464 = vsel %vm462, %v326, 0
      %v467 = vsel %vm462, %v327, 0
      %v470 = vsel %vm462, %v328, 0
      %v473 = vsel %vm462, %v329, 0
      %v476 = vsel %vm462, %v330, 0
      %v479 = vsel %vm462, %v331, 0
      %v482 = vsel %vm462, %v332, 0
      %v485 = vsel %vm462, %v333, 0
      %v488 = vsel %vm462, %v334, 0
      %v491 = vsel %vm462, %v335, 0
      %v494 = vsel %vm462, %v336, 0
      %v497 = vsel %vm462, %v337, 0
      %v500 = vsel %vm462, %v338, 0
      %v503 = vsel %vm462, %v339, 0
      %v506 = vsel %vm462, %v340, 0
      %v509 = vsel %vm462, %v341, 0
      %v512 = vsel %vm462, %v342, 0
      %v515 = vsel %vm462, %v343, 0
      %v518 = vsel %vm462, %v344, 0
      %v521 = vsel %vm462, %v345, 0
      %v524 = vsel %vm462, %v346, 0
      %v527 = vsel %vm462, %v347, 0
      %v530 = vsel %vm462, %v348, 0
      %v533 = vsel %vm462, %v349, 0
      %v536 = vsel %vm462, %v350, 0
      %v539 = vsel %vm462, %v351, 0
      %v542 = vsel %vm462, %v352, 0
      %v545 = vsel %vm462, %v353, 0
      %v548 = vsel %vm462, %v354, 0
      %v551 = vsel %vm462, %v355, 0
      %v554 = vsel %vm462, %v356, 0
      %v557 = vsel %vm462, %v357, 0
      %v560 = vsel %vm462, %v358, 0
      %v563 = vsel %vm462, %v359, 0
      %v566 = vsel %vm462, %v360, 0
      %v569 = vsel %vm462, %v361, 0
      %v572 = vsel %vm462, %v362, 0
      %v575 = vsel %vm462, %v363, 0
      %v578 = vsel %vm462, %v364, 0
      %v581 = vsel %vm462, %v365, 0
      %v584 = vsel %vm462, %v366, 0
      %v587 = vsel %vm462, %v367, 0
      %v590 = vsel %vm462, %v368, 0
      %v593 = vsel %vm462, %v369, 0
      %v596 = vsel %vm462, %v370, 0
      %v599 = vsel %vm462, %v371, 0
      %v602 = vsel %vm462, %v372, 0
      %v605 = vsel %vm462, %v373, 0
      %v608 = vsel %vm462, %v374, 0
      %v611 = vsel %vm462, %v375, 0
      %v614 = vsel %vm462, %v376, 0
      %v617 = vsel %vm462, %v377, 0
      %v620 = vsel %vm462, %v378, 0
      %v623 = vsel %vm462, %v379, 0
      %v626 = vsel %vm462, %v380, 0
      %v629 = vsel %vm462, %v381, 0
      %v632 = vsel %vm462, %v382, 0
      %v635 = vsel %vm462, %v383, 0
      %v638 = vsel %vm462, %v384, 0
      %v641 = vsel %vm462, %v385, 0
      %v644 = vsel %vm462, %v386, 0
      %v647 = vsel %vm462, %v387, 0
      %v650 = vsel %vm462, %v388, 0
      %v653 = vsel %vm462, %v389, 0
      %v656 = vsel %vm462, %v390, 0
      %v659 = vsel %vm462, %v391, 0
      %v662 = vsel %vm462, %v392, 0
      %v665 = vsel %vm462, %v393, 0
      %v668 = vsel %vm462, %v394, 0
      %v671 = vsel %vm462, %v395, 0
      %v674 = vsel %vm462, %v396, 0
      %v677 = vsel %vm462, %v397, 0
      %v680 = vsel %vm462, %v398, 0
      %v683 = vsel %vm462, %v399, 0
      %v686 = vsel %vm462, %v400, 0
      %v689 = vsel %vm462, %v401, 0
      %v692 = vsel %vm462, %v402, 0
      %v695 = vsel %vm462, %v403, 0
      %v698 = vsel %vm462, %v404, 0
      %v701 = vsel %vm462, %v405, 0
      %v704 = vsel %vm462, %v406, 0
      %v707 = vsel %vm462, %v407, 0
      %v710 = vsel %vm462, %v408, 0
      %v713 = vsel %vm462, %v409, 0
      %v716 = vsel %vm462, %v410, 0
      %v719 = vsel %vm462, %v411, 0
      %v722 = vsel %vm462, %v412, 0
      %v725 = vsel %vm462, %v413, 0
      %v728 = vsel %vm462, %v414, 0
      %v731 = vsel %vm462, %v415, 0
      %v734 = vsel %vm462, %v416, 0
      %v737 = vsel %vm462, %v417, 0
      %v740 = vsel %vm462, %v418, 0
      %v743 = vsel %vm462, %v419, 0
      %v746 = vsel %vm462, %v420, 0
      %v749 = vsel %vm462, %v421, 0
      %v752 = vsel %vm462, %v422, 0
      %v755 = vsel %vm462, %v423, 0
      %v758 = vsel %vm462, %v424, 0
      %v761 = vsel %vm462, %v425, 0
      %v764 = vsel %vm462, %v426, 0
      %v767 = vsel %vm462, %v427, 0
      %v770 = vsel %vm462, %v428, 0
      %v773 = vsel %vm462, %v429, 0
      %v776 = vsel %vm462, %v430, 0
      %v779 = vsel %vm462, %v431, 0
      %v782 = vsel %vm462, %v432, 0
      %v785 = vsel %vm462, %v433, 0
      %v788 = vsel %vm462, %v434, 0
      %v791 = vsel %vm462, %v435, 0
      %v794 = vsel %vm462, %v436, 0
      %v797 = vsel %vm462, %v437, 0
      %v800 = vsel %vm462, %v438, 0
      %v803 = vsel %vm462, %v439, 0
      %v806 = vsel %vm462, %v440, 0
      %v809 = vsel %vm462, %v441, 0
      %v812 = vsel %vm462, %v442, 0
      %v815 = vsel %vm462, %v443, 0
      %v818 = vsel %vm462, %v444, 0
      %v821 = vsel %vm462, %v445, 0
      %v824 = vsel %vm462, %v446, 0
      %v827 = vsel %vm462, %v447, 0
      %v830 = vsel %vm462, %v448, 0
      %v833 = vsel %vm462, %v449, 0
      %v836 = vsel %vm462, %v450, 0
      %v839 = vsel %vm462, %v451, 0
      %v842 = vsel %vm462, %v452, 0
      %v845 = vsel %vm462, %v453, 0
      %847 = vmatprep.subr.mxu0 0.0
      %848 = vmatpush1.msra.mxu0 0.0
      %849 = vmatprep.subr.mxu0 0.0
      %850 = vmatpush1.msra.mxu0 0.0
      %851 = vmatprep.subr.mxu0 0.0
      %852 = vmatpush1.msra.mxu0 0.0
      %853 = vmatprep.subr.mxu0 0.0
      %854 = vmatpush1.msra.mxu0 0.0
      %855 = vmatprep.subr.mxu0 0.0
      %856 = vmatpush1.msra.mxu0 0.0
      %857 = vmatprep.subr.mxu0 0.0
      %858 = vmatpush1.msra.mxu0 0.0
      %859 = vmatprep.subr.mxu0 0.0
      %860 = vmatpush1.msra.mxu0 0.0
      %861 = vmatprep.subr.mxu0 0.0
      %862 = vmatpush1.msra.mxu0 0.0
      %863 = vmatprep.subr.mxu0 0.0
      %864 = vmatpush1.msra.mxu0 0.0
      %865 = vmatprep.subr.mxu0 0.0
      %866 = vmatpush1.msra.mxu0 0.0
      %867 = vmatprep.subr.mxu0 0.0
      %868 = vmatpush1.msra.mxu0 0.0
      %869 = vmatprep.subr.mxu0 0.0
      %870 = vmatpush1.msra.mxu0 0.0
      %871 = vmatprep.subr.mxu0 0.0
      %872 = vmatpush1.msra.mxu0 0.0
      %873 = vmatprep.subr.mxu0 0.0
      %874 = vmatpush1.msra.mxu0 0.0
      %875 = vmatprep.subr.mxu0 0.0
      %876 = vmatpush1.msra.mxu0 0.0
      %877 = vmatprep.subr.mxu0 0.0
      %878 = vmatpush1.msra.mxu0 %v454
      %879 = vmatprep.subr.mxu0 0.0
      %880 = vmatpush2.msra.mxu0 0.0
      %881 = vmatprep.subr.mxu0 0.0
      %882 = vmatpush2.msra.mxu0 0.0
      %883 = vmatprep.subr.mxu0 0.0
      %884 = vmatpush2.msra.mxu0 0.0
      %885 = vmatprep.subr.mxu0 0.0
      %886 = vmatpush2.msra.mxu0 0.0
      %887 = vmatprep.subr.mxu0 0.0
      %888 = vmatpush2.msra.mxu0 0.0
      %889 = vmatprep.subr.mxu0 0.0
      %890 = vmatpush2.msra.mxu0 0.0
      %891 = vmatprep.subr.mxu0 0.0
      %892 = vmatpush2.msra.mxu0 0.0
      %893 = vmatprep.subr.mxu0 0.0
      %894 = vmatpush2.msra.mxu0 0.0
      %895 = vmatprep.subr.mxu0 0.0
      %896 = vmatpush2.msra.mxu0 0.0
      %897 = vmatprep.subr.mxu0 0.0
      %898 = vmatpush2.msra.mxu0 0.0
      %899 = vmatprep.subr.mxu0 0.0
      %900 = vmatpush2.msra.mxu0 0.0
      %901 = vmatprep.subr.mxu0 0.0
      %902 = vmatpush2.msra.mxu0 0.0
      %903 = vmatprep.subr.mxu0 0.0
      %904 = vmatpush2.msra.mxu0 0.0
      %905 = vmatprep.subr.mxu0 0.0
      %906 = vmatpush2.msra.mxu0 0.0
      %907 = vmatprep.subr.mxu0 0.0
      %908 = vmatpush2.msra.mxu0 0.0
      %909 = vmatprep.subr.mxu0 0.0
      %910 = vmatpush2.msra.mxu0 0.0
      %911 = vmatprep.mubr.f32.mxu0 0.0
      %912 = vmatmul.mubr.f32.gmra.mxu0 %v464
      %v913 = vpop.f32.mrf.mxu0
      %v914 = vadd.f32 %v460, %v913
      %v915 = vpop.f32.mrf.mxu0
      %916 = vmatprep.mubr.f32.mxu0 0.0
      %917 = vmatmul.mubr.f32.gmra.mxu0 %v467
      %v918 = vpop.f32.mrf.mxu0
      %v919 = vadd.f32 %v460, %v918
      %v920 = vpop.f32.mrf.mxu0
      %921 = vmatprep.mubr.f32.mxu0 0.0
      %922 = vmatmul.mubr.f32.gmra.mxu0 %v470
      %v923 = vpop.f32.mrf.mxu0
      %v924 = vadd.f32 %v460, %v923
      %v925 = vpop.f32.mrf.mxu0
      %926 = vmatprep.mubr.f32.mxu0 0.0
      %927 = vmatmul.mubr.f32.gmra.mxu0 %v473
      %v928 = vpop.f32.mrf.mxu0
      %v929 = vadd.f32 %v460, %v928
      %v930 = vpop.f32.mrf.mxu0
      %931 = vmatprep.mubr.f32.mxu0 0.0
      %932 = vmatmul.mubr.f32.gmra.mxu0 %v476
      %v933 = vpop.f32.mrf.mxu0
      %v934 = vadd.f32 %v460, %v933
      %v935 = vpop.f32.mrf.mxu0
      %936 = vmatprep.mubr.f32.mxu0 0.0
      %937 = vmatmul.mubr.f32.gmra.mxu0 %v479
      %v938 = vpop.f32.mrf.mxu0
      %v939 = vadd.f32 %v460, %v938
      %v940 = vpop.f32.mrf.mxu0
      %941 = vmatprep.mubr.f32.mxu0 0.0
      %942 = vmatmul.mubr.f32.gmra.mxu0 %v482
      %v943 = vpop.f32.mrf.mxu0
      %v944 = vadd.f32 %v460, %v943
      %v945 = vpop.f32.mrf.mxu0
      %946 = vmatprep.mubr.f32.mxu0 0.0
      %947 = vmatmul.mubr.f32.gmra.mxu0 %v485
      %v948 = vpop.f32.mrf.mxu0
      %v949 = vadd.f32 %v460, %v948
      %v950 = vpop.f32.mrf.mxu0
      %951 = vmatprep.mubr.f32.mxu0 0.0
      %952 = vmatmul.mubr.f32.gmra.mxu0 %v488
      %v953 = vpop.f32.mrf.mxu0
      %v954 = vadd.f32 %v460, %v953
      %v955 = vpop.f32.mrf.mxu0
      %956 = vmatprep.mubr.f32.mxu0 0.0
      %957 = vmatmul.mubr.f32.gmra.mxu0 %v491
      %v958 = vpop.f32.mrf.mxu0
      %v959 = vadd.f32 %v460, %v958
      %v960 = vpop.f32.mrf.mxu0
      %961 = vmatprep.mubr.f32.mxu0 0.0
      %962 = vmatmul.mubr.f32.gmra.mxu0 %v494
      %v963 = vpop.f32.mrf.mxu0
      %v964 = vadd.f32 %v460, %v963
      %v965 = vpop.f32.mrf.mxu0
      %966 = vmatprep.mubr.f32.mxu0 0.0
      %967 = vmatmul.mubr.f32.gmra.mxu0 %v497
      %v968 = vpop.f32.mrf.mxu0
      %v969 = vadd.f32 %v460, %v968
      %v970 = vpop.f32.mrf.mxu0
      %971 = vmatprep.mubr.f32.mxu0 0.0
      %972 = vmatmul.mubr.f32.gmra.mxu0 %v500
      %v973 = vpop.f32.mrf.mxu0
      %v974 = vadd.f32 %v460, %v973
      %v975 = vpop.f32.mrf.mxu0
      %976 = vmatprep.mubr.f32.mxu0 0.0
      %977 = vmatmul.mubr.f32.gmra.mxu0 %v503
      %v978 = vpop.f32.mrf.mxu0
      %v979 = vadd.f32 %v460, %v978
      %v980 = vpop.f32.mrf.mxu0
      %981 = vmatprep.mubr.f32.mxu0 0.0
      %982 = vmatmul.mubr.f32.gmra.mxu0 %v506
      %v983 = vpop.f32.mrf.mxu0
      %v984 = vadd.f32 %v460, %v983
      %v985 = vpop.f32.mrf.mxu0
      %986 = vmatprep.mubr.f32.mxu0 0.0
      %987 = vmatmul.mubr.f32.gmra.mxu0 %v509
      %v988 = vpop.f32.mrf.mxu0
      %v989 = vadd.f32 %v460, %v988
      %v990 = vpop.f32.mrf.mxu0
      %991 = vmatprep.mubr.f32.mxu0 0.0
      %992 = vmatmul.mubr.f32.gmra.mxu0 %v512
      %v993 = vpop.f32.mrf.mxu0
      %v994 = vadd.f32 %v460, %v993
      %v995 = vpop.f32.mrf.mxu0
      %996 = vmatprep.mubr.f32.mxu0 0.0
      %997 = vmatmul.mubr.f32.gmra.mxu0 %v515
      %v998 = vpop.f32.mrf.mxu0
      %v999 = vadd.f32 %v460, %v998
      %v1000 = vpop.f32.mrf.mxu0
      %1001 = vmatprep.mubr.f32.mxu0 0.0
      %1002 = vmatmul.mubr.f32.gmra.mxu0 %v518
      %v1003 = vpop.f32.mrf.mxu0
      %v1004 = vadd.f32 %v460, %v1003
      %v1005 = vpop.f32.mrf.mxu0
      %1006 = vmatprep.mubr.f32.mxu0 0.0
      %1007 = vmatmul.mubr.f32.gmra.mxu0 %v521
      %v1008 = vpop.f32.mrf.mxu0
      %v1009 = vadd.f32 %v460, %v1008
      %v1010 = vpop.f32.mrf.mxu0
      %1011 = vmatprep.mubr.f32.mxu0 0.0
      %1012 = vmatmul.mubr.f32.gmra.mxu0 %v524
      %v1013 = vpop.f32.mrf.mxu0
      %v1014 = vadd.f32 %v460, %v1013
      %v1015 = vpop.f32.mrf.mxu0
      %1016 = vmatprep.mubr.f32.mxu0 0.0
      %1017 = vmatmul.mubr.f32.gmra.mxu0 %v527
      %v1018 = vpop.f32.mrf.mxu0
      %v1019 = vadd.f32 %v460, %v1018
      %v1020 = vpop.f32.mrf.mxu0
      %1021 = vmatprep.mubr.f32.mxu0 0.0
      %1022 = vmatmul.mubr.f32.gmra.mxu0 %v530
      %v1023 = vpop.f32.mrf.mxu0
      %v1024 = vadd.f32 %v460, %v1023
      %v1025 = vpop.f32.mrf.mxu0
      %1026 = vmatprep.mubr.f32.mxu0 0.0
      %1027 = vmatmul.mubr.f32.gmra.mxu0 %v533
      %v1028 = vpop.f32.mrf.mxu0
      %v1029 = vadd.f32 %v460, %v1028
      %v1030 = vpop.f32.mrf.mxu0
      %1031 = vmatprep.mubr.f32.mxu0 0.0
      %1032 = vmatmul.mubr.f32.gmra.mxu0 %v536
      %v1033 = vpop.f32.mrf.mxu0
      %v1034 = vadd.f32 %v460, %v1033
      %v1035 = vpop.f32.mrf.mxu0
      %1036 = vmatprep.mubr.f32.mxu0 0.0
      %1037 = vmatmul.mubr.f32.gmra.mxu0 %v539
      %v1038 = vpop.f32.mrf.mxu0
      %v1039 = vadd.f32 %v460, %v1038
      %v1040 = vpop.f32.mrf.mxu0
      %1041 = vmatprep.mubr.f32.mxu0 0.0
      %1042 = vmatmul.mubr.f32.gmra.mxu0 %v542
      %v1043 = vpop.f32.mrf.mxu0
      %v1044 = vadd.f32 %v460, %v1043
      %v1045 = vpop.f32.mrf.mxu0
      %1046 = vmatprep.mubr.f32.mxu0 0.0
      %1047 = vmatmul.mubr.f32.gmra.mxu0 %v545
      %v1048 = vpop.f32.mrf.mxu0
      %v1049 = vadd.f32 %v460, %v1048
      %v1050 = vpop.f32.mrf.mxu0
      %1051 = vmatprep.mubr.f32.mxu0 0.0
      %1052 = vmatmul.mubr.f32.gmra.mxu0 %v548
      %v1053 = vpop.f32.mrf.mxu0
      %v1054 = vadd.f32 %v460, %v1053
      %v1055 = vpop.f32.mrf.mxu0
      %1056 = vmatprep.mubr.f32.mxu0 0.0
      %1057 = vmatmul.mubr.f32.gmra.mxu0 %v551
      %v1058 = vpop.f32.mrf.mxu0
      %v1059 = vadd.f32 %v460, %v1058
      %v1060 = vpop.f32.mrf.mxu0
      %1061 = vmatprep.mubr.f32.mxu0 0.0
      %1062 = vmatmul.mubr.f32.gmra.mxu0 %v554
      %v1063 = vpop.f32.mrf.mxu0
      %v1064 = vadd.f32 %v460, %v1063
      %v1065 = vpop.f32.mrf.mxu0
      %1066 = vmatprep.mubr.f32.mxu0 0.0
      %1067 = vmatmul.mubr.f32.gmra.mxu0 %v557
      %v1068 = vpop.f32.mrf.mxu0
      %v1069 = vadd.f32 %v460, %v1068
      %v1070 = vpop.f32.mrf.mxu0
      %1071 = vmatprep.mubr.f32.mxu0 0.0
      %1072 = vmatmul.mubr.f32.gmra.mxu0 %v560
      %v1073 = vpop.f32.mrf.mxu0
      %v1074 = vadd.f32 %v460, %v1073
      %v1075 = vpop.f32.mrf.mxu0
      %1076 = vmatprep.mubr.f32.mxu0 0.0
      %1077 = vmatmul.mubr.f32.gmra.mxu0 %v563
      %v1078 = vpop.f32.mrf.mxu0
      %v1079 = vadd.f32 %v460, %v1078
      %v1080 = vpop.f32.mrf.mxu0
      %1081 = vmatprep.mubr.f32.mxu0 0.0
      %1082 = vmatmul.mubr.f32.gmra.mxu0 %v566
      %v1083 = vpop.f32.mrf.mxu0
      %v1084 = vadd.f32 %v460, %v1083
      %v1085 = vpop.f32.mrf.mxu0
      %1086 = vmatprep.mubr.f32.mxu0 0.0
      %1087 = vmatmul.mubr.f32.gmra.mxu0 %v569
      %v1088 = vpop.f32.mrf.mxu0
      %v1089 = vadd.f32 %v460, %v1088
      %v1090 = vpop.f32.mrf.mxu0
      %1091 = vmatprep.mubr.f32.mxu0 0.0
      %1092 = vmatmul.mubr.f32.gmra.mxu0 %v572
      %v1093 = vpop.f32.mrf.mxu0
      %v1094 = vadd.f32 %v460, %v1093
      %v1095 = vpop.f32.mrf.mxu0
      %1096 = vmatprep.mubr.f32.mxu0 0.0
      %1097 = vmatmul.mubr.f32.gmra.mxu0 %v575
      %v1098 = vpop.f32.mrf.mxu0
      %v1099 = vadd.f32 %v460, %v1098
      %v1100 = vpop.f32.mrf.mxu0
      %1101 = vmatprep.mubr.f32.mxu0 0.0
      %1102 = vmatmul.mubr.f32.gmra.mxu0 %v578
      %v1103 = vpop.f32.mrf.mxu0
      %v1104 = vadd.f32 %v460, %v1103
      %v1105 = vpop.f32.mrf.mxu0
      %1106 = vmatprep.mubr.f32.mxu0 0.0
      %1107 = vmatmul.mubr.f32.gmra.mxu0 %v581
      %v1108 = vpop.f32.mrf.mxu0
      %v1109 = vadd.f32 %v460, %v1108
      %v1110 = vpop.f32.mrf.mxu0
      %1111 = vmatprep.mubr.f32.mxu0 0.0
      %1112 = vmatmul.mubr.f32.gmra.mxu0 %v584
      %v1113 = vpop.f32.mrf.mxu0
      %v1114 = vadd.f32 %v460, %v1113
      %v1115 = vpop.f32.mrf.mxu0
      %1116 = vmatprep.mubr.f32.mxu0 0.0
      %1117 = vmatmul.mubr.f32.gmra.mxu0 %v587
      %v1118 = vpop.f32.mrf.mxu0
      %v1119 = vadd.f32 %v460, %v1118
      %v1120 = vpop.f32.mrf.mxu0
      %1121 = vmatprep.mubr.f32.mxu0 0.0
      %1122 = vmatmul.mubr.f32.gmra.mxu0 %v590
      %v1123 = vpop.f32.mrf.mxu0
      %v1124 = vadd.f32 %v460, %v1123
      %v1125 = vpop.f32.mrf.mxu0
      %1126 = vmatprep.mubr.f32.mxu0 0.0
      %1127 = vmatmul.mubr.f32.gmra.mxu0 %v593
      %v1128 = vpop.f32.mrf.mxu0
      %v1129 = vadd.f32 %v460, %v1128
      %v1130 = vpop.f32.mrf.mxu0
      %1131 = vmatprep.mubr.f32.mxu0 0.0
      %1132 = vmatmul.mubr.f32.gmra.mxu0 %v596
      %v1133 = vpop.f32.mrf.mxu0
      %v1134 = vadd.f32 %v460, %v1133
      %v1135 = vpop.f32.mrf.mxu0
      %1136 = vmatprep.mubr.f32.mxu0 0.0
      %1137 = vmatmul.mubr.f32.gmra.mxu0 %v599
      %v1138 = vpop.f32.mrf.mxu0
      %v1139 = vadd.f32 %v460, %v1138
      %v1140 = vpop.f32.mrf.mxu0
      %1141 = vmatprep.mubr.f32.mxu0 0.0
      %1142 = vmatmul.mubr.f32.gmra.mxu0 %v602
      %v1143 = vpop.f32.mrf.mxu0
      %v1144 = vadd.f32 %v460, %v1143
      %v1145 = vpop.f32.mrf.mxu0
      %1146 = vmatprep.mubr.f32.mxu0 0.0
      %1147 = vmatmul.mubr.f32.gmra.mxu0 %v605
      %v1148 = vpop.f32.mrf.mxu0
      %v1149 = vadd.f32 %v460, %v1148
      %v1150 = vpop.f32.mrf.mxu0
      %1151 = vmatprep.mubr.f32.mxu0 0.0
      %1152 = vmatmul.mubr.f32.gmra.mxu0 %v608
      %v1153 = vpop.f32.mrf.mxu0
      %v1154 = vadd.f32 %v460, %v1153
      %v1155 = vpop.f32.mrf.mxu0
      %1156 = vmatprep.mubr.f32.mxu0 0.0
      %1157 = vmatmul.mubr.f32.gmra.mxu0 %v611
      %v1158 = vpop.f32.mrf.mxu0
      %v1159 = vadd.f32 %v460, %v1158
      %v1160 = vpop.f32.mrf.mxu0
      %1161 = vmatprep.mubr.f32.mxu0 0.0
      %1162 = vmatmul.mubr.f32.gmra.mxu0 %v614
      %v1163 = vpop.f32.mrf.mxu0
      %v1164 = vadd.f32 %v460, %v1163
      %v1165 = vpop.f32.mrf.mxu0
      %1166 = vmatprep.mubr.f32.mxu0 0.0
      %1167 = vmatmul.mubr.f32.gmra.mxu0 %v617
      %v1168 = vpop.f32.mrf.mxu0
      %v1169 = vadd.f32 %v460, %v1168
      %v1170 = vpop.f32.mrf.mxu0
      %1171 = vmatprep.mubr.f32.mxu0 0.0
      %1172 = vmatmul.mubr.f32.gmra.mxu0 %v620
      %v1173 = vpop.f32.mrf.mxu0
      %v1174 = vadd.f32 %v460, %v1173
      %v1175 = vpop.f32.mrf.mxu0
      %1176 = vmatprep.mubr.f32.mxu0 0.0
      %1177 = vmatmul.mubr.f32.gmra.mxu0 %v623
      %v1178 = vpop.f32.mrf.mxu0
      %v1179 = vadd.f32 %v460, %v1178
      %v1180 = vpop.f32.mrf.mxu0
      %1181 = vmatprep.mubr.f32.mxu0 0.0
      %1182 = vmatmul.mubr.f32.gmra.mxu0 %v626
      %v1183 = vpop.f32.mrf.mxu0
      %v1184 = vadd.f32 %v460, %v1183
      %v1185 = vpop.f32.mrf.mxu0
      %1186 = vmatprep.mubr.f32.mxu0 0.0
      %1187 = vmatmul.mubr.f32.gmra.mxu0 %v629
      %v1188 = vpop.f32.mrf.mxu0
      %v1189 = vadd.f32 %v460, %v1188
      %v1190 = vpop.f32.mrf.mxu0
      %1191 = vmatprep.mubr.f32.mxu0 0.0
      %1192 = vmatmul.mubr.f32.gmra.mxu0 %v632
      %v1193 = vpop.f32.mrf.mxu0
      %v1194 = vadd.f32 %v460, %v1193
      %v1195 = vpop.f32.mrf.mxu0
      %1196 = vmatprep.mubr.f32.mxu0 0.0
      %1197 = vmatmul.mubr.f32.gmra.mxu0 %v635
      %v1198 = vpop.f32.mrf.mxu0
      %v1199 = vadd.f32 %v460, %v1198
      %v1200 = vpop.f32.mrf.mxu0
      %1201 = vmatprep.mubr.f32.mxu0 0.0
      %1202 = vmatmul.mubr.f32.gmra.mxu0 %v638
      %v1203 = vpop.f32.mrf.mxu0
      %v1204 = vadd.f32 %v460, %v1203
      %v1205 = vpop.f32.mrf.mxu0
      %1206 = vmatprep.mubr.f32.mxu0 0.0
      %1207 = vmatmul.mubr.f32.gmra.mxu0 %v641
      %v1208 = vpop.f32.mrf.mxu0
      %v1209 = vadd.f32 %v460, %v1208
      %v1210 = vpop.f32.mrf.mxu0
      %1211 = vmatprep.mubr.f32.mxu0 0.0
      %1212 = vmatmul.mubr.f32.gmra.mxu0 %v644
      %v1213 = vpop.f32.mrf.mxu0
      %v1214 = vadd.f32 %v460, %v1213
      %v1215 = vpop.f32.mrf.mxu0
      %1216 = vmatprep.mubr.f32.mxu0 0.0
      %1217 = vmatmul.mubr.f32.gmra.mxu0 %v647
      %v1218 = vpop.f32.mrf.mxu0
      %v1219 = vadd.f32 %v460, %v1218
      %v1220 = vpop.f32.mrf.mxu0
      %1221 = vmatprep.mubr.f32.mxu0 0.0
      %1222 = vmatmul.mubr.f32.gmra.mxu0 %v650
      %v1223 = vpop.f32.mrf.mxu0
      %v1224 = vadd.f32 %v460, %v1223
      %v1225 = vpop.f32.mrf.mxu0
      %1226 = vmatprep.mubr.f32.mxu0 0.0
      %1227 = vmatmul.mubr.f32.gmra.mxu0 %v653
      %v1228 = vpop.f32.mrf.mxu0
      %v1229 = vadd.f32 %v460, %v1228
      %v1230 = vpop.f32.mrf.mxu0
      %1231 = vmatprep.mubr.f32.mxu0 0.0
      %1232 = vmatmul.mubr.f32.gmra.mxu0 %v656
      %v1233 = vpop.f32.mrf.mxu0
      %v1234 = vadd.f32 %v460, %v1233
      %v1235 = vpop.f32.mrf.mxu0
      %1236 = vmatprep.mubr.f32.mxu0 0.0
      %1237 = vmatmul.mubr.f32.gmra.mxu0 %v659
      %v1238 = vpop.f32.mrf.mxu0
      %v1239 = vadd.f32 %v460, %v1238
      %v1240 = vpop.f32.mrf.mxu0
      %1241 = vmatprep.mubr.f32.mxu0 0.0
      %1242 = vmatmul.mubr.f32.gmra.mxu0 %v662
      %v1243 = vpop.f32.mrf.mxu0
      %v1244 = vadd.f32 %v460, %v1243
      %v1245 = vpop.f32.mrf.mxu0
      %1246 = vmatprep.mubr.f32.mxu0 0.0
      %1247 = vmatmul.mubr.f32.gmra.mxu0 %v665
      %v1248 = vpop.f32.mrf.mxu0
      %v1249 = vadd.f32 %v460, %v1248
      %v1250 = vpop.f32.mrf.mxu0
      %1251 = vmatprep.mubr.f32.mxu0 0.0
      %1252 = vmatmul.mubr.f32.gmra.mxu0 %v668
      %v1253 = vpop.f32.mrf.mxu0
      %v1254 = vadd.f32 %v460, %v1253
      %v1255 = vpop.f32.mrf.mxu0
      %1256 = vmatprep.mubr.f32.mxu0 0.0
      %1257 = vmatmul.mubr.f32.gmra.mxu0 %v671
      %v1258 = vpop.f32.mrf.mxu0
      %v1259 = vadd.f32 %v460, %v1258
      %v1260 = vpop.f32.mrf.mxu0
      %1261 = vmatprep.mubr.f32.mxu0 0.0
      %1262 = vmatmul.mubr.f32.gmra.mxu0 %v674
      %v1263 = vpop.f32.mrf.mxu0
      %v1264 = vadd.f32 %v460, %v1263
      %v1265 = vpop.f32.mrf.mxu0
      %1266 = vmatprep.mubr.f32.mxu0 0.0
      %1267 = vmatmul.mubr.f32.gmra.mxu0 %v677
      %v1268 = vpop.f32.mrf.mxu0
      %v1269 = vadd.f32 %v460, %v1268
      %v1270 = vpop.f32.mrf.mxu0
      %1271 = vmatprep.mubr.f32.mxu0 0.0
      %1272 = vmatmul.mubr.f32.gmra.mxu0 %v680
      %v1273 = vpop.f32.mrf.mxu0
      %v1274 = vadd.f32 %v460, %v1273
      %v1275 = vpop.f32.mrf.mxu0
      %1276 = vmatprep.mubr.f32.mxu0 0.0
      %1277 = vmatmul.mubr.f32.gmra.mxu0 %v683
      %v1278 = vpop.f32.mrf.mxu0
      %v1279 = vadd.f32 %v460, %v1278
      %v1280 = vpop.f32.mrf.mxu0
      %1281 = vmatprep.mubr.f32.mxu0 0.0
      %1282 = vmatmul.mubr.f32.gmra.mxu0 %v686
      %v1283 = vpop.f32.mrf.mxu0
      %v1284 = vadd.f32 %v460, %v1283
      %v1285 = vpop.f32.mrf.mxu0
      %1286 = vmatprep.mubr.f32.mxu0 0.0
      %1287 = vmatmul.mubr.f32.gmra.mxu0 %v689
      %v1288 = vpop.f32.mrf.mxu0
      %v1289 = vadd.f32 %v460, %v1288
      %v1290 = vpop.f32.mrf.mxu0
      %1291 = vmatprep.mubr.f32.mxu0 0.0
      %1292 = vmatmul.mubr.f32.gmra.mxu0 %v692
      %v1293 = vpop.f32.mrf.mxu0
      %v1294 = vadd.f32 %v460, %v1293
      %v1295 = vpop.f32.mrf.mxu0
      %1296 = vmatprep.mubr.f32.mxu0 0.0
      %1297 = vmatmul.mubr.f32.gmra.mxu0 %v695
      %v1298 = vpop.f32.mrf.mxu0
      %v1299 = vadd.f32 %v460, %v1298
      %v1300 = vpop.f32.mrf.mxu0
      %1301 = vmatprep.mubr.f32.mxu0 0.0
      %1302 = vmatmul.mubr.f32.gmra.mxu0 %v698
      %v1303 = vpop.f32.mrf.mxu0
      %v1304 = vadd.f32 %v460, %v1303
      %v1305 = vpop.f32.mrf.mxu0
      %1306 = vmatprep.mubr.f32.mxu0 0.0
      %1307 = vmatmul.mubr.f32.gmra.mxu0 %v701
      %v1308 = vpop.f32.mrf.mxu0
      %v1309 = vadd.f32 %v460, %v1308
      %v1310 = vpop.f32.mrf.mxu0
      %1311 = vmatprep.mubr.f32.mxu0 0.0
      %1312 = vmatmul.mubr.f32.gmra.mxu0 %v704
      %v1313 = vpop.f32.mrf.mxu0
      %v1314 = vadd.f32 %v460, %v1313
      %v1315 = vpop.f32.mrf.mxu0
      %1316 = vmatprep.mubr.f32.mxu0 0.0
      %1317 = vmatmul.mubr.f32.gmra.mxu0 %v707
      %v1318 = vpop.f32.mrf.mxu0
      %v1319 = vadd.f32 %v460, %v1318
      %v1320 = vpop.f32.mrf.mxu0
      %1321 = vmatprep.mubr.f32.mxu0 0.0
      %1322 = vmatmul.mubr.f32.gmra.mxu0 %v710
      %v1323 = vpop.f32.mrf.mxu0
      %v1324 = vadd.f32 %v460, %v1323
      %v1325 = vpop.f32.mrf.mxu0
      %1326 = vmatprep.mubr.f32.mxu0 0.0
      %1327 = vmatmul.mubr.f32.gmra.mxu0 %v713
      %v1328 = vpop.f32.mrf.mxu0
      %v1329 = vadd.f32 %v460, %v1328
      %v1330 = vpop.f32.mrf.mxu0
      %1331 = vmatprep.mubr.f32.mxu0 0.0
      %1332 = vmatmul.mubr.f32.gmra.mxu0 %v716
      %v1333 = vpop.f32.mrf.mxu0
      %v1334 = vadd.f32 %v460, %v1333
      %v1335 = vpop.f32.mrf.mxu0
      %1336 = vmatprep.mubr.f32.mxu0 0.0
      %1337 = vmatmul.mubr.f32.gmra.mxu0 %v719
      %v1338 = vpop.f32.mrf.mxu0
      %v1339 = vadd.f32 %v460, %v1338
      %v1340 = vpop.f32.mrf.mxu0
      %1341 = vmatprep.mubr.f32.mxu0 0.0
      %1342 = vmatmul.mubr.f32.gmra.mxu0 %v722
      %v1343 = vpop.f32.mrf.mxu0
      %v1344 = vadd.f32 %v460, %v1343
      %v1345 = vpop.f32.mrf.mxu0
      %1346 = vmatprep.mubr.f32.mxu0 0.0
      %1347 = vmatmul.mubr.f32.gmra.mxu0 %v725
      %v1348 = vpop.f32.mrf.mxu0
      %v1349 = vadd.f32 %v460, %v1348
      %v1350 = vpop.f32.mrf.mxu0
      %1351 = vmatprep.mubr.f32.mxu0 0.0
      %1352 = vmatmul.mubr.f32.gmra.mxu0 %v728
      %v1353 = vpop.f32.mrf.mxu0
      %v1354 = vadd.f32 %v460, %v1353
      %v1355 = vpop.f32.mrf.mxu0
      %1356 = vmatprep.mubr.f32.mxu0 0.0
      %1357 = vmatmul.mubr.f32.gmra.mxu0 %v731
      %v1358 = vpop.f32.mrf.mxu0
      %v1359 = vadd.f32 %v460, %v1358
      %v1360 = vpop.f32.mrf.mxu0
      %1361 = vmatprep.mubr.f32.mxu0 0.0
      %1362 = vmatmul.mubr.f32.gmra.mxu0 %v734
      %v1363 = vpop.f32.mrf.mxu0
      %v1364 = vadd.f32 %v460, %v1363
      %v1365 = vpop.f32.mrf.mxu0
      %1366 = vmatprep.mubr.f32.mxu0 0.0
      %1367 = vmatmul.mubr.f32.gmra.mxu0 %v737
      %v1368 = vpop.f32.mrf.mxu0
      %v1369 = vadd.f32 %v460, %v1368
      %v1370 = vpop.f32.mrf.mxu0
      %1371 = vmatprep.mubr.f32.mxu0 0.0
      %1372 = vmatmul.mubr.f32.gmra.mxu0 %v740
      %v1373 = vpop.f32.mrf.mxu0
      %v1374 = vadd.f32 %v460, %v1373
      %v1375 = vpop.f32.mrf.mxu0
      %1376 = vmatprep.mubr.f32.mxu0 0.0
      %1377 = vmatmul.mubr.f32.gmra.mxu0 %v743
      %v1378 = vpop.f32.mrf.mxu0
      %v1379 = vadd.f32 %v460, %v1378
      %v1380 = vpop.f32.mrf.mxu0
      %1381 = vmatprep.mubr.f32.mxu0 0.0
      %1382 = vmatmul.mubr.f32.gmra.mxu0 %v746
      %v1383 = vpop.f32.mrf.mxu0
      %v1384 = vadd.f32 %v460, %v1383
      %v1385 = vpop.f32.mrf.mxu0
      %1386 = vmatprep.mubr.f32.mxu0 0.0
      %1387 = vmatmul.mubr.f32.gmra.mxu0 %v749
      %v1388 = vpop.f32.mrf.mxu0
      %v1389 = vadd.f32 %v460, %v1388
      %v1390 = vpop.f32.mrf.mxu0
      %1391 = vmatprep.mubr.f32.mxu0 0.0
      %1392 = vmatmul.mubr.f32.gmra.mxu0 %v752
      %v1393 = vpop.f32.mrf.mxu0
      %v1394 = vadd.f32 %v460, %v1393
      %v1395 = vpop.f32.mrf.mxu0
      %1396 = vmatprep.mubr.f32.mxu0 0.0
      %1397 = vmatmul.mubr.f32.gmra.mxu0 %v755
      %v1398 = vpop.f32.mrf.mxu0
      %v1399 = vadd.f32 %v460, %v1398
      %v1400 = vpop.f32.mrf.mxu0
      %1401 = vmatprep.mubr.f32.mxu0 0.0
      %1402 = vmatmul.mubr.f32.gmra.mxu0 %v758
      %v1403 = vpop.f32.mrf.mxu0
      %v1404 = vadd.f32 %v460, %v1403
      %v1405 = vpop.f32.mrf.mxu0
      %1406 = vmatprep.mubr.f32.mxu0 0.0
      %1407 = vmatmul.mubr.f32.gmra.mxu0 %v761
      %v1408 = vpop.f32.mrf.mxu0
      %v1409 = vadd.f32 %v460, %v1408
      %v1410 = vpop.f32.mrf.mxu0
      %1411 = vmatprep.mubr.f32.mxu0 0.0
      %1412 = vmatmul.mubr.f32.gmra.mxu0 %v764
      %v1413 = vpop.f32.mrf.mxu0
      %v1414 = vadd.f32 %v460, %v1413
      %v1415 = vpop.f32.mrf.mxu0
      %1416 = vmatprep.mubr.f32.mxu0 0.0
      %1417 = vmatmul.mubr.f32.gmra.mxu0 %v767
      %v1418 = vpop.f32.mrf.mxu0
      %v1419 = vadd.f32 %v460, %v1418
      %v1420 = vpop.f32.mrf.mxu0
      %1421 = vmatprep.mubr.f32.mxu0 0.0
      %1422 = vmatmul.mubr.f32.gmra.mxu0 %v770
      %v1423 = vpop.f32.mrf.mxu0
      %v1424 = vadd.f32 %v460, %v1423
      %v1425 = vpop.f32.mrf.mxu0
      %1426 = vmatprep.mubr.f32.mxu0 0.0
      %1427 = vmatmul.mubr.f32.gmra.mxu0 %v773
      %v1428 = vpop.f32.mrf.mxu0
      %v1429 = vadd.f32 %v460, %v1428
      %v1430 = vpop.f32.mrf.mxu0
      %1431 = vmatprep.mubr.f32.mxu0 0.0
      %1432 = vmatmul.mubr.f32.gmra.mxu0 %v776
      %v1433 = vpop.f32.mrf.mxu0
      %v1434 = vadd.f32 %v460, %v1433
      %v1435 = vpop.f32.mrf.mxu0
      %1436 = vmatprep.mubr.f32.mxu0 0.0
      %1437 = vmatmul.mubr.f32.gmra.mxu0 %v779
      %v1438 = vpop.f32.mrf.mxu0
      %v1439 = vadd.f32 %v460, %v1438
      %v1440 = vpop.f32.mrf.mxu0
      %1441 = vmatprep.mubr.f32.mxu0 0.0
      %1442 = vmatmul.mubr.f32.gmra.mxu0 %v782
      %v1443 = vpop.f32.mrf.mxu0
      %v1444 = vadd.f32 %v460, %v1443
      %v1445 = vpop.f32.mrf.mxu0
      %1446 = vmatprep.mubr.f32.mxu0 0.0
      %1447 = vmatmul.mubr.f32.gmra.mxu0 %v785
      %v1448 = vpop.f32.mrf.mxu0
      %v1449 = vadd.f32 %v460, %v1448
      %v1450 = vpop.f32.mrf.mxu0
      %1451 = vmatprep.mubr.f32.mxu0 0.0
      %1452 = vmatmul.mubr.f32.gmra.mxu0 %v788
      %v1453 = vpop.f32.mrf.mxu0
      %v1454 = vadd.f32 %v460, %v1453
      %v1455 = vpop.f32.mrf.mxu0
      %1456 = vmatprep.mubr.f32.mxu0 0.0
      %1457 = vmatmul.mubr.f32.gmra.mxu0 %v791
      %v1458 = vpop.f32.mrf.mxu0
      %v1459 = vadd.f32 %v460, %v1458
      %v1460 = vpop.f32.mrf.mxu0
      %1461 = vmatprep.mubr.f32.mxu0 0.0
      %1462 = vmatmul.mubr.f32.gmra.mxu0 %v794
      %v1463 = vpop.f32.mrf.mxu0
      %v1464 = vadd.f32 %v460, %v1463
      %v1465 = vpop.f32.mrf.mxu0
      %1466 = vmatprep.mubr.f32.mxu0 0.0
      %1467 = vmatmul.mubr.f32.gmra.mxu0 %v797
      %v1468 = vpop.f32.mrf.mxu0
      %v1469 = vadd.f32 %v460, %v1468
      %v1470 = vpop.f32.mrf.mxu0
      %1471 = vmatprep.mubr.f32.mxu0 0.0
      %1472 = vmatmul.mubr.f32.gmra.mxu0 %v800
      %v1473 = vpop.f32.mrf.mxu0
      %v1474 = vadd.f32 %v460, %v1473
      %v1475 = vpop.f32.mrf.mxu0
      %1476 = vmatprep.mubr.f32.mxu0 0.0
      %1477 = vmatmul.mubr.f32.gmra.mxu0 %v803
      %v1478 = vpop.f32.mrf.mxu0
      %v1479 = vadd.f32 %v460, %v1478
      %v1480 = vpop.f32.mrf.mxu0
      %1481 = vmatprep.mubr.f32.mxu0 0.0
      %1482 = vmatmul.mubr.f32.gmra.mxu0 %v806
      %v1483 = vpop.f32.mrf.mxu0
      %v1484 = vadd.f32 %v460, %v1483
      %v1485 = vpop.f32.mrf.mxu0
      %1486 = vmatprep.mubr.f32.mxu0 0.0
      %1487 = vmatmul.mubr.f32.gmra.mxu0 %v809
      %v1488 = vpop.f32.mrf.mxu0
      %v1489 = vadd.f32 %v460, %v1488
      %v1490 = vpop.f32.mrf.mxu0
      %1491 = vmatprep.mubr.f32.mxu0 0.0
      %1492 = vmatmul.mubr.f32.gmra.mxu0 %v812
      %v1493 = vpop.f32.mrf.mxu0
      %v1494 = vadd.f32 %v460, %v1493
      %v1495 = vpop.f32.mrf.mxu0
      %1496 = vmatprep.mubr.f32.mxu0 0.0
      %1497 = vmatmul.mubr.f32.gmra.mxu0 %v815
      %v1498 = vpop.f32.mrf.mxu0
      %v1499 = vadd.f32 %v460, %v1498
      %v1500 = vpop.f32.mrf.mxu0
      %1501 = vmatprep.mubr.f32.mxu0 0.0
      %1502 = vmatmul.mubr.f32.gmra.mxu0 %v818
      %v1503 = vpop.f32.mrf.mxu0
      %v1504 = vadd.f32 %v460, %v1503
      %v1505 = vpop.f32.mrf.mxu0
      %1506 = vmatprep.mubr.f32.mxu0 0.0
      %1507 = vmatmul.mubr.f32.gmra.mxu0 %v821
      %v1508 = vpop.f32.mrf.mxu0
      %v1509 = vadd.f32 %v460, %v1508
      %v1510 = vpop.f32.mrf.mxu0
      %1511 = vmatprep.mubr.f32.mxu0 0.0
      %1512 = vmatmul.mubr.f32.gmra.mxu0 %v824
      %v1513 = vpop.f32.mrf.mxu0
      %v1514 = vadd.f32 %v460, %v1513
      %v1515 = vpop.f32.mrf.mxu0
      %1516 = vmatprep.mubr.f32.mxu0 0.0
      %1517 = vmatmul.mubr.f32.gmra.mxu0 %v827
      %v1518 = vpop.f32.mrf.mxu0
      %v1519 = vadd.f32 %v460, %v1518
      %v1520 = vpop.f32.mrf.mxu0
      %1521 = vmatprep.mubr.f32.mxu0 0.0
      %1522 = vmatmul.mubr.f32.gmra.mxu0 %v830
      %v1523 = vpop.f32.mrf.mxu0
      %v1524 = vadd.f32 %v460, %v1523
      %v1525 = vpop.f32.mrf.mxu0
      %1526 = vmatprep.mubr.f32.mxu0 0.0
      %1527 = vmatmul.mubr.f32.gmra.mxu0 %v833
      %v1528 = vpop.f32.mrf.mxu0
      %v1529 = vadd.f32 %v460, %v1528
      %v1530 = vpop.f32.mrf.mxu0
      %1531 = vmatprep.mubr.f32.mxu0 0.0
      %1532 = vmatmul.mubr.f32.gmra.mxu0 %v836
      %v1533 = vpop.f32.mrf.mxu0
      %v1534 = vadd.f32 %v460, %v1533
      %v1535 = vpop.f32.mrf.mxu0
      %1536 = vmatprep.mubr.f32.mxu0 0.0
      %1537 = vmatmul.mubr.f32.gmra.mxu0 %v839
      %v1538 = vpop.f32.mrf.mxu0
      %v1539 = vadd.f32 %v460, %v1538
      %v1540 = vpop.f32.mrf.mxu0
      %1541 = vmatprep.mubr.f32.mxu0 0.0
      %1542 = vmatmul.mubr.f32.gmra.mxu0 %v842
      %v1543 = vpop.f32.mrf.mxu0
      %v1544 = vadd.f32 %v460, %v1543
      %v1545 = vpop.f32.mrf.mxu0
      %1546 = vmatprep.mubr.f32.mxu0 0.0
      %1547 = vmatmul.mubr.f32.gmra.mxu0 %v845
      %v1548 = vpop.f32.mrf.mxu0
      %v1549 = vadd.f32 %v460, %v1548
      %v1550 = vpop.f32.mrf.mxu0
      %1551 = vdwg.mxu0
      %v1552 = vld [vmem:[%s318] sm:$0xff]
      %v1553 = vld [vmem:[%s318 + $0x8] sm:$0xff]
      %v1554 = vld [vmem:[%s318 + $0x10] sm:$0xff]
      %v1555 = vld [vmem:[%s318 + $0x18] sm:$0xff]
      %v1556 = vld [vmem:[%s318 + $0x20] sm:$0xff]
      %v1557 = vld [vmem:[%s318 + $0x28] sm:$0xff]
      %v1558 = vld [vmem:[%s318 + $0x30] sm:$0xff]
      %v1559 = vld [vmem:[%s318 + $0x38] sm:$0xff]
      %v1560 = vld [vmem:[%s318 + $0x40] sm:$0xff]
      %v1561 = vld [vmem:[%s318 + $0x48] sm:$0xff]
      %v1562 = vld [vmem:[%s318 + $0x50] sm:$0xff]
      %v1563 = vld [vmem:[%s318 + $0x58] sm:$0xff]
      %v1564 = vld [vmem:[%s318 + $0x60] sm:$0xff]
      %v1565 = vld [vmem:[%s318 + $0x68] sm:$0xff]
      %v1566 = vld [vmem:[%s318 + $0x70] sm:$0xff]
      %v1567 = vld [vmem:[%s318 + $0x78] sm:$0xff]
      %v1568 = vld [vmem:[%s318 + $0x80] sm:$0xff]
      %v1569 = vld [vmem:[%s318 + $0x88] sm:$0xff]
      %v1570 = vld [vmem:[%s318 + $0x90] sm:$0xff]
      %v1571 = vld [vmem:[%s318 + $0x98] sm:$0xff]
      %v1572 = vld [vmem:[%s318 + $0xa0] sm:$0xff]
      %v1573 = vld [vmem:[%s318 + $0xa8] sm:$0xff]
      %v1574 = vld [vmem:[%s318 + $0xb0] sm:$0xff]
      %v1575 = vld [vmem:[%s318 + $0xb8] sm:$0xff]
      %v1576 = vld [vmem:[%s318 + $0xc0] sm:$0xff]
      %v1577 = vld [vmem:[%s318 + $0xc8] sm:$0xff]
      %v1578 = vld [vmem:[%s318 + $0xd0] sm:$0xff]
      %v1579 = vld [vmem:[%s318 + $0xd8] sm:$0xff]
      %v1580 = vld [vmem:[%s318 + $0xe0] sm:$0xff]
      %v1581 = vld [vmem:[%s318 + $0xe8] sm:$0xff]
      %v1582 = vld [vmem:[%s318 + $0xf0] sm:$0xff]
      %v1583 = vld [vmem:[%s318 + $0xf8] sm:$0xff]
      %v1584 = vld [vmem:[%s318 + $0x100] sm:$0xff]
      %v1585 = vld [vmem:[%s318 + $0x108] sm:$0xff]
      %v1586 = vld [vmem:[%s318 + $0x110] sm:$0xff]
      %v1587 = vld [vmem:[%s318 + $0x118] sm:$0xff]
      %v1588 = vld [vmem:[%s318 + $0x120] sm:$0xff]
      %v1589 = vld [vmem:[%s318 + $0x128] sm:$0xff]
      %v1590 = vld [vmem:[%s318 + $0x130] sm:$0xff]
      %v1591 = vld [vmem:[%s318 + $0x138] sm:$0xff]
      %v1592 = vld [vmem:[%s318 + $0x140] sm:$0xff]
      %v1593 = vld [vmem:[%s318 + $0x148] sm:$0xff]
      %v1594 = vld [vmem:[%s318 + $0x150] sm:$0xff]
      %v1595 = vld [vmem:[%s318 + $0x158] sm:$0xff]
      %v1596 = vld [vmem:[%s318 + $0x160] sm:$0xff]
      %v1597 = vld [vmem:[%s318 + $0x168] sm:$0xff]
      %v1598 = vld [vmem:[%s318 + $0x170] sm:$0xff]
      %v1599 = vld [vmem:[%s318 + $0x178] sm:$0xff]
      %v1600 = vld [vmem:[%s318 + $0x180] sm:$0xff]
      %v1601 = vld [vmem:[%s318 + $0x188] sm:$0xff]
      %v1602 = vld [vmem:[%s318 + $0x190] sm:$0xff]
      %v1603 = vld [vmem:[%s318 + $0x198] sm:$0xff]
      %v1604 = vld [vmem:[%s318 + $0x1a0] sm:$0xff]
      %v1605 = vld [vmem:[%s318 + $0x1a8] sm:$0xff]
      %v1606 = vld [vmem:[%s318 + $0x1b0] sm:$0xff]
      %v1607 = vld [vmem:[%s318 + $0x1b8] sm:$0xff]
      %v1608 = vld [vmem:[%s318 + $0x1c0] sm:$0xff]
      %v1609 = vld [vmem:[%s318 + $0x1c8] sm:$0xff]
      %v1610 = vld [vmem:[%s318 + $0x1d0] sm:$0xff]
      %v1611 = vld [vmem:[%s318 + $0x1d8] sm:$0xff]
      %v1612 = vld [vmem:[%s318 + $0x1e0] sm:$0xff]
      %v1613 = vld [vmem:[%s318 + $0x1e8] sm:$0xff]
      %v1614 = vld [vmem:[%s318 + $0x1f0] sm:$0xff]
      %v1615 = vld [vmem:[%s318 + $0x1f8] sm:$0xff]
      %v1616 = vld [vmem:[%s318 + $0x200] sm:$0xff]
      %v1617 = vld [vmem:[%s318 + $0x208] sm:$0xff]
      %v1618 = vld [vmem:[%s318 + $0x210] sm:$0xff]
      %v1619 = vld [vmem:[%s318 + $0x218] sm:$0xff]
      %v1620 = vld [vmem:[%s318 + $0x220] sm:$0xff]
      %v1621 = vld [vmem:[%s318 + $0x228] sm:$0xff]
      %v1622 = vld [vmem:[%s318 + $0x230] sm:$0xff]
      %v1623 = vld [vmem:[%s318 + $0x238] sm:$0xff]
      %v1624 = vld [vmem:[%s318 + $0x240] sm:$0xff]
      %v1625 = vld [vmem:[%s318 + $0x248] sm:$0xff]
      %v1626 = vld [vmem:[%s318 + $0x250] sm:$0xff]
      %v1627 = vld [vmem:[%s318 + $0x258] sm:$0xff]
      %v1628 = vld [vmem:[%s318 + $0x260] sm:$0xff]
      %v1629 = vld [vmem:[%s318 + $0x268] sm:$0xff]
      %v1630 = vld [vmem:[%s318 + $0x270] sm:$0xff]
      %v1631 = vld [vmem:[%s318 + $0x278] sm:$0xff]
      %v1632 = vld [vmem:[%s318 + $0x280] sm:$0xff]
      %v1633 = vld [vmem:[%s318 + $0x288] sm:$0xff]
      %v1634 = vld [vmem:[%s318 + $0x290] sm:$0xff]
      %v1635 = vld [vmem:[%s318 + $0x298] sm:$0xff]
      %v1636 = vld [vmem:[%s318 + $0x2a0] sm:$0xff]
      %v1637 = vld [vmem:[%s318 + $0x2a8] sm:$0xff]
      %v1638 = vld [vmem:[%s318 + $0x2b0] sm:$0xff]
      %v1639 = vld [vmem:[%s318 + $0x2b8] sm:$0xff]
      %v1640 = vld [vmem:[%s318 + $0x2c0] sm:$0xff]
      %v1641 = vld [vmem:[%s318 + $0x2c8] sm:$0xff]
      %v1642 = vld [vmem:[%s318 + $0x2d0] sm:$0xff]
      %v1643 = vld [vmem:[%s318 + $0x2d8] sm:$0xff]
      %v1644 = vld [vmem:[%s318 + $0x2e0] sm:$0xff]
      %v1645 = vld [vmem:[%s318 + $0x2e8] sm:$0xff]
      %v1646 = vld [vmem:[%s318 + $0x2f0] sm:$0xff]
      %v1647 = vld [vmem:[%s318 + $0x2f8] sm:$0xff]
      %v1648 = vld [vmem:[%s318 + $0x300] sm:$0xff]
      %v1649 = vld [vmem:[%s318 + $0x308] sm:$0xff]
      %v1650 = vld [vmem:[%s318 + $0x310] sm:$0xff]
      %v1651 = vld [vmem:[%s318 + $0x318] sm:$0xff]
      %v1652 = vld [vmem:[%s318 + $0x320] sm:$0xff]
      %v1653 = vld [vmem:[%s318 + $0x328] sm:$0xff]
      %v1654 = vld [vmem:[%s318 + $0x330] sm:$0xff]
      %v1655 = vld [vmem:[%s318 + $0x338] sm:$0xff]
      %v1656 = vld [vmem:[%s318 + $0x340] sm:$0xff]
      %v1657 = vld [vmem:[%s318 + $0x348] sm:$0xff]
      %v1658 = vld [vmem:[%s318 + $0x350] sm:$0xff]
      %v1659 = vld [vmem:[%s318 + $0x358] sm:$0xff]
      %v1660 = vld [vmem:[%s318 + $0x360] sm:$0xff]
      %v1661 = vld [vmem:[%s318 + $0x368] sm:$0xff]
      %v1662 = vld [vmem:[%s318 + $0x370] sm:$0xff]
      %v1663 = vld [vmem:[%s318 + $0x378] sm:$0xff]
      %v1664 = vld [vmem:[%s318 + $0x380] sm:$0xff]
      %v1665 = vld [vmem:[%s318 + $0x388] sm:$0xff]
      %v1666 = vld [vmem:[%s318 + $0x390] sm:$0xff]
      %v1667 = vld [vmem:[%s318 + $0x398] sm:$0xff]
      %v1668 = vld [vmem:[%s318 + $0x3a0] sm:$0xff]
      %v1669 = vld [vmem:[%s318 + $0x3a8] sm:$0xff]
      %v1670 = vld [vmem:[%s318 + $0x3b0] sm:$0xff]
      %v1671 = vld [vmem:[%s318 + $0x3b8] sm:$0xff]
      %v1672 = vld [vmem:[%s318 + $0x3c0] sm:$0xff]
      %v1673 = vld [vmem:[%s318 + $0x3c8] sm:$0xff]
      %v1674 = vld [vmem:[%s318 + $0x3d0] sm:$0xff]
      %v1675 = vld [vmem:[%s318 + $0x3d8] sm:$0xff]
      %v1676 = vld [vmem:[%s318 + $0x3e0] sm:$0xff]
      %v1677 = vld [vmem:[%s318 + $0x3e8] sm:$0xff]
      %v1678 = vld [vmem:[%s318 + $0x3f0] sm:$0xff]
      %v1679 = vld [vmem:[%s318 + $0x3f8] sm:$0xff]
      %v1680 = vadd.f32 %v1552, %v914
      %v1681 = vadd.f32 %v1553, %v919
      %v1682 = vadd.f32 %v1554, %v924
      %v1683 = vadd.f32 %v1555, %v929
      %v1684 = vadd.f32 %v1556, %v934
      %v1685 = vadd.f32 %v1557, %v939
      %v1686 = vadd.f32 %v1558, %v944
      %v1687 = vadd.f32 %v1559, %v949
      %v1688 = vadd.f32 %v1560, %v954
      %v1689 = vadd.f32 %v1561, %v959
      %v1690 = vadd.f32 %v1562, %v964
      %v1691 = vadd.f32 %v1563, %v969
      %v1692 = vadd.f32 %v1564, %v974
      %v1693 = vadd.f32 %v1565, %v979
      %v1694 = vadd.f32 %v1566, %v984
      %v1695 = vadd.f32 %v1567, %v989
      %v1696 = vadd.f32 %v1568, %v994
      %v1697 = vadd.f32 %v1569, %v999
      %v1698 = vadd.f32 %v1570, %v1004
      %v1699 = vadd.f32 %v1571, %v1009
      %v1700 = vadd.f32 %v1572, %v1014
      %v1701 = vadd.f32 %v1573, %v1019
      %v1702 = vadd.f32 %v1574, %v1024
      %v1703 = vadd.f32 %v1575, %v1029
      %v1704 = vadd.f32 %v1576, %v1034
      %v1705 = vadd.f32 %v1577, %v1039
      %v1706 = vadd.f32 %v1578, %v1044
      %v1707 = vadd.f32 %v1579, %v1049
      %v1708 = vadd.f32 %v1580, %v1054
      %v1709 = vadd.f32 %v1581, %v1059
      %v1710 = vadd.f32 %v1582, %v1064
      %v1711 = vadd.f32 %v1583, %v1069
      %v1712 = vadd.f32 %v1584, %v1074
      %v1713 = vadd.f32 %v1585, %v1079
      %v1714 = vadd.f32 %v1586, %v1084
      %v1715 = vadd.f32 %v1587, %v1089
      %v1716 = vadd.f32 %v1588, %v1094
      %v1717 = vadd.f32 %v1589, %v1099
      %v1718 = vadd.f32 %v1590, %v1104
      %v1719 = vadd.f32 %v1591, %v1109
      %v1720 = vadd.f32 %v1592, %v1114
      %v1721 = vadd.f32 %v1593, %v1119
      %v1722 = vadd.f32 %v1594, %v1124
      %v1723 = vadd.f32 %v1595, %v1129
      %v1724 = vadd.f32 %v1596, %v1134
      %v1725 = vadd.f32 %v1597, %v1139
      %v1726 = vadd.f32 %v1598, %v1144
      %v1727 = vadd.f32 %v1599, %v1149
      %v1728 = vadd.f32 %v1600, %v1154
      %v1729 = vadd.f32 %v1601, %v1159
      %v1730 = vadd.f32 %v1602, %v1164
      %v1731 = vadd.f32 %v1603, %v1169
      %v1732 = vadd.f32 %v1604, %v1174
      %v1733 = vadd.f32 %v1605, %v1179
      %v1734 = vadd.f32 %v1606, %v1184
      %v1735 = vadd.f32 %v1607, %v1189
      %v1736 = vadd.f32 %v1608, %v1194
      %v1737 = vadd.f32 %v1609, %v1199
      %v1738 = vadd.f32 %v1610, %v1204
      %v1739 = vadd.f32 %v1611, %v1209
      %v1740 = vadd.f32 %v1612, %v1214
      %v1741 = vadd.f32 %v1613, %v1219
      %v1742 = vadd.f32 %v1614, %v1224
      %v1743 = vadd.f32 %v1615, %v1229
      %v1744 = vadd.f32 %v1616, %v1234
      %v1745 = vadd.f32 %v1617, %v1239
      %v1746 = vadd.f32 %v1618, %v1244
      %v1747 = vadd.f32 %v1619, %v1249
      %v1748 = vadd.f32 %v1620, %v1254
      %v1749 = vadd.f32 %v1621, %v1259
      %v1750 = vadd.f32 %v1622, %v1264
      %v1751 = vadd.f32 %v1623, %v1269
      %v1752 = vadd.f32 %v1624, %v1274
      %v1753 = vadd.f32 %v1625, %v1279
      %v1754 = vadd.f32 %v1626, %v1284
      %v1755 = vadd.f32 %v1627, %v1289
      %v1756 = vadd.f32 %v1628, %v1294
      %v1757 = vadd.f32 %v1629, %v1299
      %v1758 = vadd.f32 %v1630, %v1304
      %v1759 = vadd.f32 %v1631, %v1309
      %v1760 = vadd.f32 %v1632, %v1314
      %v1761 = vadd.f32 %v1633, %v1319
      %v1762 = vadd.f32 %v1634, %v1324
      %v1763 = vadd.f32 %v1635, %v1329
      %v1764 = vadd.f32 %v1636, %v1334
      %v1765 = vadd.f32 %v1637, %v1339
      %v1766 = vadd.f32 %v1638, %v1344
      %v1767 = vadd.f32 %v1639, %v1349
      %v1768 = vadd.f32 %v1640, %v1354
      %v1769 = vadd.f32 %v1641, %v1359
      %v1770 = vadd.f32 %v1642, %v1364
      %v1771 = vadd.f32 %v1643, %v1369
      %v1772 = vadd.f32 %v1644, %v1374
      %v1773 = vadd.f32 %v1645, %v1379
      %v1774 = vadd.f32 %v1646, %v1384
      %v1775 = vadd.f32 %v1647, %v1389
      %v1776 = vadd.f32 %v1648, %v1394
      %v1777 = vadd.f32 %v1649, %v1399
      %v1778 = vadd.f32 %v1650, %v1404
      %v1779 = vadd.f32 %v1651, %v1409
      %v1780 = vadd.f32 %v1652, %v1414
      %v1781 = vadd.f32 %v1653, %v1419
      %v1782 = vadd.f32 %v1654, %v1424
      %v1783 = vadd.f32 %v1655, %v1429
      %v1784 = vadd.f32 %v1656, %v1434
      %v1785 = vadd.f32 %v1657, %v1439
      %v1786 = vadd.f32 %v1658, %v1444
      %v1787 = vadd.f32 %v1659, %v1449
      %v1788 = vadd.f32 %v1660, %v1454
      %v1789 = vadd.f32 %v1661, %v1459
      %v1790 = vadd.f32 %v1662, %v1464
      %v1791 = vadd.f32 %v1663, %v1469
      %v1792 = vadd.f32 %v1664, %v1474
      %v1793 = vadd.f32 %v1665, %v1479
      %v1794 = vadd.f32 %v1666, %v1484
      %v1795 = vadd.f32 %v1667, %v1489
      %v1796 = vadd.f32 %v1668, %v1494
      %v1797 = vadd.f32 %v1669, %v1499
      %v1798 = vadd.f32 %v1670, %v1504
      %v1799 = vadd.f32 %v1671, %v1509
      %v1800 = vadd.f32 %v1672, %v1514
      %v1801 = vadd.f32 %v1673, %v1519
      %v1802 = vadd.f32 %v1674, %v1524
      %v1803 = vadd.f32 %v1675, %v1529
      %v1804 = vadd.f32 %v1676, %v1534
      %v1805 = vadd.f32 %v1677, %v1539
      %v1806 = vadd.f32 %v1678, %v1544
      %v1807 = vadd.f32 %v1679, %v1549
      %v1808 = vld [vmem:[%s5] sm:$0xff]
      %v1809 = vld [vmem:[%s6] sm:$0x1]
      %v1811 = vlaneseq
      %v1812 = vshrl.u32 %v1811, 7
      %v1813 = vsub.s32 0, %v1812
      %v1814 = vrot.slane %v1809, %v1813
      %v1817 = vsel %vm462, %v1680, 0
      %v1820 = vsel %vm462, %v1681, 0
      %v1823 = vsel %vm462, %v1682, 0
      %v1826 = vsel %vm462, %v1683, 0
      %v1829 = vsel %vm462, %v1684, 0
      %v1832 = vsel %vm462, %v1685, 0
      %v1835 = vsel %vm462, %v1686, 0
      %v1838 = vsel %vm462, %v1687, 0
      %v1841 = vsel %vm462, %v1688, 0
      %v1844 = vsel %vm462, %v1689, 0
      %v1847 = vsel %vm462, %v1690, 0
      %v1850 = vsel %vm462, %v1691, 0
      %v1853 = vsel %vm462, %v1692, 0
      %v1856 = vsel %vm462, %v1693, 0
      %v1859 = vsel %vm462, %v1694, 0
      %v1862 = vsel %vm462, %v1695, 0
      %v1865 = vsel %vm462, %v1696, 0
      %v1868 = vsel %vm462, %v1697, 0
      %v1871 = vsel %vm462, %v1698, 0
      %v1874 = vsel %vm462, %v1699, 0
      %v1877 = vsel %vm462, %v1700, 0
      %v1880 = vsel %vm462, %v1701, 0
      %v1883 = vsel %vm462, %v1702, 0
      %v1886 = vsel %vm462, %v1703, 0
      %v1889 = vsel %vm462, %v1704, 0
      %v1892 = vsel %vm462, %v1705, 0
      %v1895 = vsel %vm462, %v1706, 0
      %v1898 = vsel %vm462, %v1707, 0
      %v1901 = vsel %vm462, %v1708, 0
      %v1904 = vsel %vm462, %v1709, 0
      %v1907 = vsel %vm462, %v1710, 0
      %v1910 = vsel %vm462, %v1711, 0
      %v1913 = vsel %vm462, %v1712, 0
      %v1916 = vsel %vm462, %v1713, 0
      %v1919 = vsel %vm462, %v1714, 0
      %v1922 = vsel %vm462, %v1715, 0
      %v1925 = vsel %vm462, %v1716, 0
      %v1928 = vsel %vm462, %v1717, 0
      %v1931 = vsel %vm462, %v1718, 0
      %v1934 = vsel %vm462, %v1719, 0
      %v1937 = vsel %vm462, %v1720, 0
      %v1940 = vsel %vm462, %v1721, 0
      %v1943 = vsel %vm462, %v1722, 0
      %v1946 = vsel %vm462, %v1723, 0
      %v1949 = vsel %vm462, %v1724, 0
      %v1952 = vsel %vm462, %v1725, 0
      %v1955 = vsel %vm462, %v1726, 0
      %v1958 = vsel %vm462, %v1727, 0
      %v1961 = vsel %vm462, %v1728, 0
      %v1964 = vsel %vm462, %v1729, 0
      %v1967 = vsel %vm462, %v1730, 0
      %v1970 = vsel %vm462, %v1731, 0
      %v1973 = vsel %vm462, %v1732, 0
      %v1976 = vsel %vm462, %v1733, 0
      %v1979 = vsel %vm462, %v1734, 0
      %v1982 = vsel %vm462, %v1735, 0
      %v1985 = vsel %vm462, %v1736, 0
      %v1988 = vsel %vm462, %v1737, 0
      %v1991 = vsel %vm462, %v1738, 0
      %v1994 = vsel %vm462, %v1739, 0
      %v1997 = vsel %vm462, %v1740, 0
      %v2000 = vsel %vm462, %v1741, 0
      %v2003 = vsel %vm462, %v1742, 0
      %v2006 = vsel %vm462, %v1743, 0
      %v2009 = vsel %vm462, %v1744, 0
      %v2012 = vsel %vm462, %v1745, 0
      %v2015 = vsel %vm462, %v1746, 0
      %v2018 = vsel %vm462, %v1747, 0
      %v2021 = vsel %vm462, %v1748, 0
      %v2024 = vsel %vm462, %v1749, 0
      %v2027 = vsel %vm462, %v1750, 0
      %v2030 = vsel %vm462, %v1751, 0
      %v2033 = vsel %vm462, %v1752, 0
      %v2036 = vsel %vm462, %v1753, 0
      %v2039 = vsel %vm462, %v1754, 0
      %v2042 = vsel %vm462, %v1755, 0
      %v2045 = vsel %vm462, %v1756, 0
      %v2048 = vsel %vm462, %v1757, 0
      %v2051 = vsel %vm462, %v1758, 0
      %v2054 = vsel %vm462, %v1759, 0
      %v2057 = vsel %vm462, %v1760, 0
      %v2060 = vsel %vm462, %v1761, 0
      %v2063 = vsel %vm462, %v1762, 0
      %v2066 = vsel %vm462, %v1763, 0
      %v2069 = vsel %vm462, %v1764, 0
      %v2072 = vsel %vm462, %v1765, 0
      %v2075 = vsel %vm462, %v1766, 0
      %v2078 = vsel %vm462, %v1767, 0
      %v2081 = vsel %vm462, %v1768, 0
      %v2084 = vsel %vm462, %v1769, 0
      %v2087 = vsel %vm462, %v1770, 0
      %v2090 = vsel %vm462, %v1771, 0
      %v2093 = vsel %vm462, %v1772, 0
      %v2096 = vsel %vm462, %v1773, 0
      %v2099 = vsel %vm462, %v1774, 0
      %v2102 = vsel %vm462, %v1775, 0
      %v2105 = vsel %vm462, %v1776, 0
      %v2108 = vsel %vm462, %v1777, 0
      %v2111 = vsel %vm462, %v1778, 0
      %v2114 = vsel %vm462, %v1779, 0
      %v2117 = vsel %vm462, %v1780, 0
      %v2120 = vsel %vm462, %v1781, 0
      %v2123 = vsel %vm462, %v1782, 0
      %v2126 = vsel %vm462, %v1783, 0
      %v2129 = vsel %vm462, %v1784, 0
      %v2132 = vsel %vm462, %v1785, 0
      %v2135 = vsel %vm462, %v1786, 0
      %v2138 = vsel %vm462, %v1787, 0
      %v2141 = vsel %vm462, %v1788, 0
      %v2144 = vsel %vm462, %v1789, 0
      %v2147 = vsel %vm462, %v1790, 0
      %v2150 = vsel %vm462, %v1791, 0
      %v2153 = vsel %vm462, %v1792, 0
      %v2156 = vsel %vm462, %v1793, 0
      %v2159 = vsel %vm462, %v1794, 0
      %v2162 = vsel %vm462, %v1795, 0
      %v2165 = vsel %vm462, %v1796, 0
      %v2168 = vsel %vm462, %v1797, 0
      %v2171 = vsel %vm462, %v1798, 0
      %v2174 = vsel %vm462, %v1799, 0
      %v2177 = vsel %vm462, %v1800, 0
      %v2180 = vsel %vm462, %v1801, 0
      %v2183 = vsel %vm462, %v1802, 0
      %v2186 = vsel %vm462, %v1803, 0
      %v2189 = vsel %vm462, %v1804, 0
      %v2192 = vsel %vm462, %v1805, 0
      %v2195 = vsel %vm462, %v1806, 0
      %v2198 = vsel %vm462, %v1807, 0
      %2200 = vmatprep.subr.mxu0 0.0
      %2201 = vmatpush1.msra.mxu0 0.0
      %2202 = vmatprep.subr.mxu0 0.0
      %2203 = vmatpush1.msra.mxu0 0.0
      %2204 = vmatprep.subr.mxu0 0.0
      %2205 = vmatpush1.msra.mxu0 0.0
      %2206 = vmatprep.subr.mxu0 0.0
      %2207 = vmatpush1.msra.mxu0 0.0
      %2208 = vmatprep.subr.mxu0 0.0
      %2209 = vmatpush1.msra.mxu0 0.0
      %2210 = vmatprep.subr.mxu0 0.0
      %2211 = vmatpush1.msra.mxu0 0.0
      %2212 = vmatprep.subr.mxu0 0.0
      %2213 = vmatpush1.msra.mxu0 0.0
      %2214 = vmatprep.subr.mxu0 0.0
      %2215 = vmatpush1.msra.mxu0 0.0
      %2216 = vmatprep.subr.mxu0 0.0
      %2217 = vmatpush1.msra.mxu0 0.0
      %2218 = vmatprep.subr.mxu0 0.0
      %2219 = vmatpush1.msra.mxu0 0.0
      %2220 = vmatprep.subr.mxu0 0.0
      %2221 = vmatpush1.msra.mxu0 0.0
      %2222 = vmatprep.subr.mxu0 0.0
      %2223 = vmatpush1.msra.mxu0 0.0
      %2224 = vmatprep.subr.mxu0 0.0
      %2225 = vmatpush1.msra.mxu0 0.0
      %2226 = vmatprep.subr.mxu0 0.0
      %2227 = vmatpush1.msra.mxu0 0.0
      %2228 = vmatprep.subr.mxu0 0.0
      %2229 = vmatpush1.msra.mxu0 0.0
      %2230 = vmatprep.subr.mxu0 0.0
      %2231 = vmatpush1.msra.mxu0 %v1808
      %2232 = vmatprep.subr.mxu0 0.0
      %2233 = vmatpush2.msra.mxu0 0.0
      %2234 = vmatprep.subr.mxu0 0.0
      %2235 = vmatpush2.msra.mxu0 0.0
      %2236 = vmatprep.subr.mxu0 0.0
      %2237 = vmatpush2.msra.mxu0 0.0
      %2238 = vmatprep.subr.mxu0 0.0
      %2239 = vmatpush2.msra.mxu0 0.0
      %2240 = vmatprep.subr.mxu0 0.0
      %2241 = vmatpush2.msra.mxu0 0.0
      %2242 = vmatprep.subr.mxu0 0.0
      %2243 = vmatpush2.msra.mxu0 0.0
      %2244 = vmatprep.subr.mxu0 0.0
      %2245 = vmatpush2.msra.mxu0 0.0
      %2246 = vmatprep.subr.mxu0 0.0
      %2247 = vmatpush2.msra.mxu0 0.0
      %2248 = vmatprep.subr.mxu0 0.0
      %2249 = vmatpush2.msra.mxu0 0.0
      %2250 = vmatprep.subr.mxu0 0.0
      %2251 = vmatpush2.msra.mxu0 0.0
      %2252 = vmatprep.subr.mxu0 0.0
      %2253 = vmatpush2.msra.mxu0 0.0
      %2254 = vmatprep.subr.mxu0 0.0
      %2255 = vmatpush2.msra.mxu0 0.0
      %2256 = vmatprep.subr.mxu0 0.0
      %2257 = vmatpush2.msra.mxu0 0.0
      %2258 = vmatprep.subr.mxu0 0.0
      %2259 = vmatpush2.msra.mxu0 0.0
      %2260 = vmatprep.subr.mxu0 0.0
      %2261 = vmatpush2.msra.mxu0 0.0
      %2262 = vmatprep.subr.mxu0 0.0
      %2263 = vmatpush2.msra.mxu0 0.0
      %2264 = vmatprep.mubr.f32.mxu0 0.0
      %2265 = vmatmul.mubr.f32.gmra.mxu0 %v1817
      %v2266 = vpop.f32.mrf.mxu0
      %v2267 = vadd.f32 %v1814, %v2266
      %v2268 = vpop.f32.mrf.mxu0
      %2269 = vmatprep.mubr.f32.mxu0 0.0
      %2270 = vmatmul.mubr.f32.gmra.mxu0 %v1820
      %v2271 = vpop.f32.mrf.mxu0
      %v2272 = vadd.f32 %v1814, %v2271
      %v2273 = vpop.f32.mrf.mxu0
      %2274 = vmatprep.mubr.f32.mxu0 0.0
      %2275 = vmatmul.mubr.f32.gmra.mxu0 %v1823
      %v2276 = vpop.f32.mrf.mxu0
      %v2277 = vadd.f32 %v1814, %v2276
      %v2278 = vpop.f32.mrf.mxu0
      %2279 = vmatprep.mubr.f32.mxu0 0.0
      %2280 = vmatmul.mubr.f32.gmra.mxu0 %v1826
      %v2281 = vpop.f32.mrf.mxu0
      %v2282 = vadd.f32 %v1814, %v2281
      %v2283 = vpop.f32.mrf.mxu0
      %2284 = vmatprep.mubr.f32.mxu0 0.0
      %2285 = vmatmul.mubr.f32.gmra.mxu0 %v1829
      %v2286 = vpop.f32.mrf.mxu0
      %v2287 = vadd.f32 %v1814, %v2286
      %v2288 = vpop.f32.mrf.mxu0
      %2289 = vmatprep.mubr.f32.mxu0 0.0
      %2290 = vmatmul.mubr.f32.gmra.mxu0 %v1832
      %v2291 = vpop.f32.mrf.mxu0
      %v2292 = vadd.f32 %v1814, %v2291
      %v2293 = vpop.f32.mrf.mxu0
      %2294 = vmatprep.mubr.f32.mxu0 0.0
      %2295 = vmatmul.mubr.f32.gmra.mxu0 %v1835
      %v2296 = vpop.f32.mrf.mxu0
      %v2297 = vadd.f32 %v1814, %v2296
      %v2298 = vpop.f32.mrf.mxu0
      %2299 = vmatprep.mubr.f32.mxu0 0.0
      %2300 = vmatmul.mubr.f32.gmra.mxu0 %v1838
      %v2301 = vpop.f32.mrf.mxu0
      %v2302 = vadd.f32 %v1814, %v2301
      %v2303 = vpop.f32.mrf.mxu0
      %2304 = vmatprep.mubr.f32.mxu0 0.0
      %2305 = vmatmul.mubr.f32.gmra.mxu0 %v1841
      %v2306 = vpop.f32.mrf.mxu0
      %v2307 = vadd.f32 %v1814, %v2306
      %v2308 = vpop.f32.mrf.mxu0
      %2309 = vmatprep.mubr.f32.mxu0 0.0
      %2310 = vmatmul.mubr.f32.gmra.mxu0 %v1844
      %v2311 = vpop.f32.mrf.mxu0
      %v2312 = vadd.f32 %v1814, %v2311
      %v2313 = vpop.f32.mrf.mxu0
      %2314 = vmatprep.mubr.f32.mxu0 0.0
      %2315 = vmatmul.mubr.f32.gmra.mxu0 %v1847
      %v2316 = vpop.f32.mrf.mxu0
      %v2317 = vadd.f32 %v1814, %v2316
      %v2318 = vpop.f32.mrf.mxu0
      %2319 = vmatprep.mubr.f32.mxu0 0.0
      %2320 = vmatmul.mubr.f32.gmra.mxu0 %v1850
      %v2321 = vpop.f32.mrf.mxu0
      %v2322 = vadd.f32 %v1814, %v2321
      %v2323 = vpop.f32.mrf.mxu0
      %2324 = vmatprep.mubr.f32.mxu0 0.0
      %2325 = vmatmul.mubr.f32.gmra.mxu0 %v1853
      %v2326 = vpop.f32.mrf.mxu0
      %v2327 = vadd.f32 %v1814, %v2326
      %v2328 = vpop.f32.mrf.mxu0
      %2329 = vmatprep.mubr.f32.mxu0 0.0
      %2330 = vmatmul.mubr.f32.gmra.mxu0 %v1856
      %v2331 = vpop.f32.mrf.mxu0
      %v2332 = vadd.f32 %v1814, %v2331
      %v2333 = vpop.f32.mrf.mxu0
      %2334 = vmatprep.mubr.f32.mxu0 0.0
      %2335 = vmatmul.mubr.f32.gmra.mxu0 %v1859
      %v2336 = vpop.f32.mrf.mxu0
      %v2337 = vadd.f32 %v1814, %v2336
      %v2338 = vpop.f32.mrf.mxu0
      %2339 = vmatprep.mubr.f32.mxu0 0.0
      %2340 = vmatmul.mubr.f32.gmra.mxu0 %v1862
      %v2341 = vpop.f32.mrf.mxu0
      %v2342 = vadd.f32 %v1814, %v2341
      %v2343 = vpop.f32.mrf.mxu0
      %2344 = vmatprep.mubr.f32.mxu0 0.0
      %2345 = vmatmul.mubr.f32.gmra.mxu0 %v1865
      %v2346 = vpop.f32.mrf.mxu0
      %v2347 = vadd.f32 %v1814, %v2346
      %v2348 = vpop.f32.mrf.mxu0
      %2349 = vmatprep.mubr.f32.mxu0 0.0
      %2350 = vmatmul.mubr.f32.gmra.mxu0 %v1868
      %v2351 = vpop.f32.mrf.mxu0
      %v2352 = vadd.f32 %v1814, %v2351
      %v2353 = vpop.f32.mrf.mxu0
      %2354 = vmatprep.mubr.f32.mxu0 0.0
      %2355 = vmatmul.mubr.f32.gmra.mxu0 %v1871
      %v2356 = vpop.f32.mrf.mxu0
      %v2357 = vadd.f32 %v1814, %v2356
      %v2358 = vpop.f32.mrf.mxu0
      %2359 = vmatprep.mubr.f32.mxu0 0.0
      %2360 = vmatmul.mubr.f32.gmra.mxu0 %v1874
      %v2361 = vpop.f32.mrf.mxu0
      %v2362 = vadd.f32 %v1814, %v2361
      %v2363 = vpop.f32.mrf.mxu0
      %2364 = vmatprep.mubr.f32.mxu0 0.0
      %2365 = vmatmul.mubr.f32.gmra.mxu0 %v1877
      %v2366 = vpop.f32.mrf.mxu0
      %v2367 = vadd.f32 %v1814, %v2366
      %v2368 = vpop.f32.mrf.mxu0
      %2369 = vmatprep.mubr.f32.mxu0 0.0
      %2370 = vmatmul.mubr.f32.gmra.mxu0 %v1880
      %v2371 = vpop.f32.mrf.mxu0
      %v2372 = vadd.f32 %v1814, %v2371
      %v2373 = vpop.f32.mrf.mxu0
      %2374 = vmatprep.mubr.f32.mxu0 0.0
      %2375 = vmatmul.mubr.f32.gmra.mxu0 %v1883
      %v2376 = vpop.f32.mrf.mxu0
      %v2377 = vadd.f32 %v1814, %v2376
      %v2378 = vpop.f32.mrf.mxu0
      %2379 = vmatprep.mubr.f32.mxu0 0.0
      %2380 = vmatmul.mubr.f32.gmra.mxu0 %v1886
      %v2381 = vpop.f32.mrf.mxu0
      %v2382 = vadd.f32 %v1814, %v2381
      %v2383 = vpop.f32.mrf.mxu0
      %2384 = vmatprep.mubr.f32.mxu0 0.0
      %2385 = vmatmul.mubr.f32.gmra.mxu0 %v1889
      %v2386 = vpop.f32.mrf.mxu0
      %v2387 = vadd.f32 %v1814, %v2386
      %v2388 = vpop.f32.mrf.mxu0
      %2389 = vmatprep.mubr.f32.mxu0 0.0
      %2390 = vmatmul.mubr.f32.gmra.mxu0 %v1892
      %v2391 = vpop.f32.mrf.mxu0
      %v2392 = vadd.f32 %v1814, %v2391
      %v2393 = vpop.f32.mrf.mxu0
      %2394 = vmatprep.mubr.f32.mxu0 0.0
      %2395 = vmatmul.mubr.f32.gmra.mxu0 %v1895
      %v2396 = vpop.f32.mrf.mxu0
      %v2397 = vadd.f32 %v1814, %v2396
      %v2398 = vpop.f32.mrf.mxu0
      %2399 = vmatprep.mubr.f32.mxu0 0.0
      %2400 = vmatmul.mubr.f32.gmra.mxu0 %v1898
      %v2401 = vpop.f32.mrf.mxu0
      %v2402 = vadd.f32 %v1814, %v2401
      %v2403 = vpop.f32.mrf.mxu0
      %2404 = vmatprep.mubr.f32.mxu0 0.0
      %2405 = vmatmul.mubr.f32.gmra.mxu0 %v1901
      %v2406 = vpop.f32.mrf.mxu0
      %v2407 = vadd.f32 %v1814, %v2406
      %v2408 = vpop.f32.mrf.mxu0
      %2409 = vmatprep.mubr.f32.mxu0 0.0
      %2410 = vmatmul.mubr.f32.gmra.mxu0 %v1904
      %v2411 = vpop.f32.mrf.mxu0
      %v2412 = vadd.f32 %v1814, %v2411
      %v2413 = vpop.f32.mrf.mxu0
      %2414 = vmatprep.mubr.f32.mxu0 0.0
      %2415 = vmatmul.mubr.f32.gmra.mxu0 %v1907
      %v2416 = vpop.f32.mrf.mxu0
      %v2417 = vadd.f32 %v1814, %v2416
      %v2418 = vpop.f32.mrf.mxu0
      %2419 = vmatprep.mubr.f32.mxu0 0.0
      %2420 = vmatmul.mubr.f32.gmra.mxu0 %v1910
      %v2421 = vpop.f32.mrf.mxu0
      %v2422 = vadd.f32 %v1814, %v2421
      %v2423 = vpop.f32.mrf.mxu0
      %2424 = vmatprep.mubr.f32.mxu0 0.0
      %2425 = vmatmul.mubr.f32.gmra.mxu0 %v1913
      %v2426 = vpop.f32.mrf.mxu0
      %v2427 = vadd.f32 %v1814, %v2426
      %v2428 = vpop.f32.mrf.mxu0
      %2429 = vmatprep.mubr.f32.mxu0 0.0
      %2430 = vmatmul.mubr.f32.gmra.mxu0 %v1916
      %v2431 = vpop.f32.mrf.mxu0
      %v2432 = vadd.f32 %v1814, %v2431
      %v2433 = vpop.f32.mrf.mxu0
      %2434 = vmatprep.mubr.f32.mxu0 0.0
      %2435 = vmatmul.mubr.f32.gmra.mxu0 %v1919
      %v2436 = vpop.f32.mrf.mxu0
      %v2437 = vadd.f32 %v1814, %v2436
      %v2438 = vpop.f32.mrf.mxu0
      %2439 = vmatprep.mubr.f32.mxu0 0.0
      %2440 = vmatmul.mubr.f32.gmra.mxu0 %v1922
      %v2441 = vpop.f32.mrf.mxu0
      %v2442 = vadd.f32 %v1814, %v2441
      %v2443 = vpop.f32.mrf.mxu0
      %2444 = vmatprep.mubr.f32.mxu0 0.0
      %2445 = vmatmul.mubr.f32.gmra.mxu0 %v1925
      %v2446 = vpop.f32.mrf.mxu0
      %v2447 = vadd.f32 %v1814, %v2446
      %v2448 = vpop.f32.mrf.mxu0
      %2449 = vmatprep.mubr.f32.mxu0 0.0
      %2450 = vmatmul.mubr.f32.gmra.mxu0 %v1928
      %v2451 = vpop.f32.mrf.mxu0
      %v2452 = vadd.f32 %v1814, %v2451
      %v2453 = vpop.f32.mrf.mxu0
      %2454 = vmatprep.mubr.f32.mxu0 0.0
      %2455 = vmatmul.mubr.f32.gmra.mxu0 %v1931
      %v2456 = vpop.f32.mrf.mxu0
      %v2457 = vadd.f32 %v1814, %v2456
      %v2458 = vpop.f32.mrf.mxu0
      %2459 = vmatprep.mubr.f32.mxu0 0.0
      %2460 = vmatmul.mubr.f32.gmra.mxu0 %v1934
      %v2461 = vpop.f32.mrf.mxu0
      %v2462 = vadd.f32 %v1814, %v2461
      %v2463 = vpop.f32.mrf.mxu0
      %2464 = vmatprep.mubr.f32.mxu0 0.0
      %2465 = vmatmul.mubr.f32.gmra.mxu0 %v1937
      %v2466 = vpop.f32.mrf.mxu0
      %v2467 = vadd.f32 %v1814, %v2466
      %v2468 = vpop.f32.mrf.mxu0
      %2469 = vmatprep.mubr.f32.mxu0 0.0
      %2470 = vmatmul.mubr.f32.gmra.mxu0 %v1940
      %v2471 = vpop.f32.mrf.mxu0
      %v2472 = vadd.f32 %v1814, %v2471
      %v2473 = vpop.f32.mrf.mxu0
      %2474 = vmatprep.mubr.f32.mxu0 0.0
      %2475 = vmatmul.mubr.f32.gmra.mxu0 %v1943
      %v2476 = vpop.f32.mrf.mxu0
      %v2477 = vadd.f32 %v1814, %v2476
      %v2478 = vpop.f32.mrf.mxu0
      %2479 = vmatprep.mubr.f32.mxu0 0.0
      %2480 = vmatmul.mubr.f32.gmra.mxu0 %v1946
      %v2481 = vpop.f32.mrf.mxu0
      %v2482 = vadd.f32 %v1814, %v2481
      %v2483 = vpop.f32.mrf.mxu0
      %2484 = vmatprep.mubr.f32.mxu0 0.0
      %2485 = vmatmul.mubr.f32.gmra.mxu0 %v1949
      %v2486 = vpop.f32.mrf.mxu0
      %v2487 = vadd.f32 %v1814, %v2486
      %v2488 = vpop.f32.mrf.mxu0
      %2489 = vmatprep.mubr.f32.mxu0 0.0
      %2490 = vmatmul.mubr.f32.gmra.mxu0 %v1952
      %v2491 = vpop.f32.mrf.mxu0
      %v2492 = vadd.f32 %v1814, %v2491
      %v2493 = vpop.f32.mrf.mxu0
      %2494 = vmatprep.mubr.f32.mxu0 0.0
      %2495 = vmatmul.mubr.f32.gmra.mxu0 %v1955
      %v2496 = vpop.f32.mrf.mxu0
      %v2497 = vadd.f32 %v1814, %v2496
      %v2498 = vpop.f32.mrf.mxu0
      %2499 = vmatprep.mubr.f32.mxu0 0.0
      %2500 = vmatmul.mubr.f32.gmra.mxu0 %v1958
      %v2501 = vpop.f32.mrf.mxu0
      %v2502 = vadd.f32 %v1814, %v2501
      %v2503 = vpop.f32.mrf.mxu0
      %2504 = vmatprep.mubr.f32.mxu0 0.0
      %2505 = vmatmul.mubr.f32.gmra.mxu0 %v1961
      %v2506 = vpop.f32.mrf.mxu0
      %v2507 = vadd.f32 %v1814, %v2506
      %v2508 = vpop.f32.mrf.mxu0
      %2509 = vmatprep.mubr.f32.mxu0 0.0
      %2510 = vmatmul.mubr.f32.gmra.mxu0 %v1964
      %v2511 = vpop.f32.mrf.mxu0
      %v2512 = vadd.f32 %v1814, %v2511
      %v2513 = vpop.f32.mrf.mxu0
      %2514 = vmatprep.mubr.f32.mxu0 0.0
      %2515 = vmatmul.mubr.f32.gmra.mxu0 %v1967
      %v2516 = vpop.f32.mrf.mxu0
      %v2517 = vadd.f32 %v1814, %v2516
      %v2518 = vpop.f32.mrf.mxu0
      %2519 = vmatprep.mubr.f32.mxu0 0.0
      %2520 = vmatmul.mubr.f32.gmra.mxu0 %v1970
      %v2521 = vpop.f32.mrf.mxu0
      %v2522 = vadd.f32 %v1814, %v2521
      %v2523 = vpop.f32.mrf.mxu0
      %2524 = vmatprep.mubr.f32.mxu0 0.0
      %2525 = vmatmul.mubr.f32.gmra.mxu0 %v1973
      %v2526 = vpop.f32.mrf.mxu0
      %v2527 = vadd.f32 %v1814, %v2526
      %v2528 = vpop.f32.mrf.mxu0
      %2529 = vmatprep.mubr.f32.mxu0 0.0
      %2530 = vmatmul.mubr.f32.gmra.mxu0 %v1976
      %v2531 = vpop.f32.mrf.mxu0
      %v2532 = vadd.f32 %v1814, %v2531
      %v2533 = vpop.f32.mrf.mxu0
      %2534 = vmatprep.mubr.f32.mxu0 0.0
      %2535 = vmatmul.mubr.f32.gmra.mxu0 %v1979
      %v2536 = vpop.f32.mrf.mxu0
      %v2537 = vadd.f32 %v1814, %v2536
      %v2538 = vpop.f32.mrf.mxu0
      %2539 = vmatprep.mubr.f32.mxu0 0.0
      %2540 = vmatmul.mubr.f32.gmra.mxu0 %v1982
      %v2541 = vpop.f32.mrf.mxu0
      %v2542 = vadd.f32 %v1814, %v2541
      %v2543 = vpop.f32.mrf.mxu0
      %2544 = vmatprep.mubr.f32.mxu0 0.0
      %2545 = vmatmul.mubr.f32.gmra.mxu0 %v1985
      %v2546 = vpop.f32.mrf.mxu0
      %v2547 = vadd.f32 %v1814, %v2546
      %v2548 = vpop.f32.mrf.mxu0
      %2549 = vmatprep.mubr.f32.mxu0 0.0
      %2550 = vmatmul.mubr.f32.gmra.mxu0 %v1988
      %v2551 = vpop.f32.mrf.mxu0
      %v2552 = vadd.f32 %v1814, %v2551
      %v2553 = vpop.f32.mrf.mxu0
      %2554 = vmatprep.mubr.f32.mxu0 0.0
      %2555 = vmatmul.mubr.f32.gmra.mxu0 %v1991
      %v2556 = vpop.f32.mrf.mxu0
      %v2557 = vadd.f32 %v1814, %v2556
      %v2558 = vpop.f32.mrf.mxu0
      %2559 = vmatprep.mubr.f32.mxu0 0.0
      %2560 = vmatmul.mubr.f32.gmra.mxu0 %v1994
      %v2561 = vpop.f32.mrf.mxu0
      %v2562 = vadd.f32 %v1814, %v2561
      %v2563 = vpop.f32.mrf.mxu0
      %2564 = vmatprep.mubr.f32.mxu0 0.0
      %2565 = vmatmul.mubr.f32.gmra.mxu0 %v1997
      %v2566 = vpop.f32.mrf.mxu0
      %v2567 = vadd.f32 %v1814, %v2566
      %v2568 = vpop.f32.mrf.mxu0
      %2569 = vmatprep.mubr.f32.mxu0 0.0
      %2570 = vmatmul.mubr.f32.gmra.mxu0 %v2000
      %v2571 = vpop.f32.mrf.mxu0
      %v2572 = vadd.f32 %v1814, %v2571
      %v2573 = vpop.f32.mrf.mxu0
      %2574 = vmatprep.mubr.f32.mxu0 0.0
      %2575 = vmatmul.mubr.f32.gmra.mxu0 %v2003
      %v2576 = vpop.f32.mrf.mxu0
      %v2577 = vadd.f32 %v1814, %v2576
      %v2578 = vpop.f32.mrf.mxu0
      %2579 = vmatprep.mubr.f32.mxu0 0.0
      %2580 = vmatmul.mubr.f32.gmra.mxu0 %v2006
      %v2581 = vpop.f32.mrf.mxu0
      %v2582 = vadd.f32 %v1814, %v2581
      %v2583 = vpop.f32.mrf.mxu0
      %2584 = vmatprep.mubr.f32.mxu0 0.0
      %2585 = vmatmul.mubr.f32.gmra.mxu0 %v2009
      %v2586 = vpop.f32.mrf.mxu0
      %v2587 = vadd.f32 %v1814, %v2586
      %v2588 = vpop.f32.mrf.mxu0
      %2589 = vmatprep.mubr.f32.mxu0 0.0
      %2590 = vmatmul.mubr.f32.gmra.mxu0 %v2012
      %v2591 = vpop.f32.mrf.mxu0
      %v2592 = vadd.f32 %v1814, %v2591
      %v2593 = vpop.f32.mrf.mxu0
      %2594 = vmatprep.mubr.f32.mxu0 0.0
      %2595 = vmatmul.mubr.f32.gmra.mxu0 %v2015
      %v2596 = vpop.f32.mrf.mxu0
      %v2597 = vadd.f32 %v1814, %v2596
      %v2598 = vpop.f32.mrf.mxu0
      %2599 = vmatprep.mubr.f32.mxu0 0.0
      %2600 = vmatmul.mubr.f32.gmra.mxu0 %v2018
      %v2601 = vpop.f32.mrf.mxu0
      %v2602 = vadd.f32 %v1814, %v2601
      %v2603 = vpop.f32.mrf.mxu0
      %2604 = vmatprep.mubr.f32.mxu0 0.0
      %2605 = vmatmul.mubr.f32.gmra.mxu0 %v2021
      %v2606 = vpop.f32.mrf.mxu0
      %v2607 = vadd.f32 %v1814, %v2606
      %v2608 = vpop.f32.mrf.mxu0
      %2609 = vmatprep.mubr.f32.mxu0 0.0
      %2610 = vmatmul.mubr.f32.gmra.mxu0 %v2024
      %v2611 = vpop.f32.mrf.mxu0
      %v2612 = vadd.f32 %v1814, %v2611
      %v2613 = vpop.f32.mrf.mxu0
      %2614 = vmatprep.mubr.f32.mxu0 0.0
      %2615 = vmatmul.mubr.f32.gmra.mxu0 %v2027
      %v2616 = vpop.f32.mrf.mxu0
      %v2617 = vadd.f32 %v1814, %v2616
      %v2618 = vpop.f32.mrf.mxu0
      %2619 = vmatprep.mubr.f32.mxu0 0.0
      %2620 = vmatmul.mubr.f32.gmra.mxu0 %v2030
      %v2621 = vpop.f32.mrf.mxu0
      %v2622 = vadd.f32 %v1814, %v2621
      %v2623 = vpop.f32.mrf.mxu0
      %2624 = vmatprep.mubr.f32.mxu0 0.0
      %2625 = vmatmul.mubr.f32.gmra.mxu0 %v2033
      %v2626 = vpop.f32.mrf.mxu0
      %v2627 = vadd.f32 %v1814, %v2626
      %v2628 = vpop.f32.mrf.mxu0
      %2629 = vmatprep.mubr.f32.mxu0 0.0
      %2630 = vmatmul.mubr.f32.gmra.mxu0 %v2036
      %v2631 = vpop.f32.mrf.mxu0
      %v2632 = vadd.f32 %v1814, %v2631
      %v2633 = vpop.f32.mrf.mxu0
      %2634 = vmatprep.mubr.f32.mxu0 0.0
      %2635 = vmatmul.mubr.f32.gmra.mxu0 %v2039
      %v2636 = vpop.f32.mrf.mxu0
      %v2637 = vadd.f32 %v1814, %v2636
      %v2638 = vpop.f32.mrf.mxu0
      %2639 = vmatprep.mubr.f32.mxu0 0.0
      %2640 = vmatmul.mubr.f32.gmra.mxu0 %v2042
      %v2641 = vpop.f32.mrf.mxu0
      %v2642 = vadd.f32 %v1814, %v2641
      %v2643 = vpop.f32.mrf.mxu0
      %2644 = vmatprep.mubr.f32.mxu0 0.0
      %2645 = vmatmul.mubr.f32.gmra.mxu0 %v2045
      %v2646 = vpop.f32.mrf.mxu0
      %v2647 = vadd.f32 %v1814, %v2646
      %v2648 = vpop.f32.mrf.mxu0
      %2649 = vmatprep.mubr.f32.mxu0 0.0
      %2650 = vmatmul.mubr.f32.gmra.mxu0 %v2048
      %v2651 = vpop.f32.mrf.mxu0
      %v2652 = vadd.f32 %v1814, %v2651
      %v2653 = vpop.f32.mrf.mxu0
      %2654 = vmatprep.mubr.f32.mxu0 0.0
      %2655 = vmatmul.mubr.f32.gmra.mxu0 %v2051
      %v2656 = vpop.f32.mrf.mxu0
      %v2657 = vadd.f32 %v1814, %v2656
      %v2658 = vpop.f32.mrf.mxu0
      %2659 = vmatprep.mubr.f32.mxu0 0.0
      %2660 = vmatmul.mubr.f32.gmra.mxu0 %v2054
      %v2661 = vpop.f32.mrf.mxu0
      %v2662 = vadd.f32 %v1814, %v2661
      %v2663 = vpop.f32.mrf.mxu0
      %2664 = vmatprep.mubr.f32.mxu0 0.0
      %2665 = vmatmul.mubr.f32.gmra.mxu0 %v2057
      %v2666 = vpop.f32.mrf.mxu0
      %v2667 = vadd.f32 %v1814, %v2666
      %v2668 = vpop.f32.mrf.mxu0
      %2669 = vmatprep.mubr.f32.mxu0 0.0
      %2670 = vmatmul.mubr.f32.gmra.mxu0 %v2060
      %v2671 = vpop.f32.mrf.mxu0
      %v2672 = vadd.f32 %v1814, %v2671
      %v2673 = vpop.f32.mrf.mxu0
      %2674 = vmatprep.mubr.f32.mxu0 0.0
      %2675 = vmatmul.mubr.f32.gmra.mxu0 %v2063
      %v2676 = vpop.f32.mrf.mxu0
      %v2677 = vadd.f32 %v1814, %v2676
      %v2678 = vpop.f32.mrf.mxu0
      %2679 = vmatprep.mubr.f32.mxu0 0.0
      %2680 = vmatmul.mubr.f32.gmra.mxu0 %v2066
      %v2681 = vpop.f32.mrf.mxu0
      %v2682 = vadd.f32 %v1814, %v2681
      %v2683 = vpop.f32.mrf.mxu0
      %2684 = vmatprep.mubr.f32.mxu0 0.0
      %2685 = vmatmul.mubr.f32.gmra.mxu0 %v2069
      %v2686 = vpop.f32.mrf.mxu0
      %v2687 = vadd.f32 %v1814, %v2686
      %v2688 = vpop.f32.mrf.mxu0
      %2689 = vmatprep.mubr.f32.mxu0 0.0
      %2690 = vmatmul.mubr.f32.gmra.mxu0 %v2072
      %v2691 = vpop.f32.mrf.mxu0
      %v2692 = vadd.f32 %v1814, %v2691
      %v2693 = vpop.f32.mrf.mxu0
      %2694 = vmatprep.mubr.f32.mxu0 0.0
      %2695 = vmatmul.mubr.f32.gmra.mxu0 %v2075
      %v2696 = vpop.f32.mrf.mxu0
      %v2697 = vadd.f32 %v1814, %v2696
      %v2698 = vpop.f32.mrf.mxu0
      %2699 = vmatprep.mubr.f32.mxu0 0.0
      %2700 = vmatmul.mubr.f32.gmra.mxu0 %v2078
      %v2701 = vpop.f32.mrf.mxu0
      %v2702 = vadd.f32 %v1814, %v2701
      %v2703 = vpop.f32.mrf.mxu0
      %2704 = vmatprep.mubr.f32.mxu0 0.0
      %2705 = vmatmul.mubr.f32.gmra.mxu0 %v2081
      %v2706 = vpop.f32.mrf.mxu0
      %v2707 = vadd.f32 %v1814, %v2706
      %v2708 = vpop.f32.mrf.mxu0
      %2709 = vmatprep.mubr.f32.mxu0 0.0
      %2710 = vmatmul.mubr.f32.gmra.mxu0 %v2084
      %v2711 = vpop.f32.mrf.mxu0
      %v2712 = vadd.f32 %v1814, %v2711
      %v2713 = vpop.f32.mrf.mxu0
      %2714 = vmatprep.mubr.f32.mxu0 0.0
      %2715 = vmatmul.mubr.f32.gmra.mxu0 %v2087
      %v2716 = vpop.f32.mrf.mxu0
      %v2717 = vadd.f32 %v1814, %v2716
      %v2718 = vpop.f32.mrf.mxu0
      %2719 = vmatprep.mubr.f32.mxu0 0.0
      %2720 = vmatmul.mubr.f32.gmra.mxu0 %v2090
      %v2721 = vpop.f32.mrf.mxu0
      %v2722 = vadd.f32 %v1814, %v2721
      %v2723 = vpop.f32.mrf.mxu0
      %2724 = vmatprep.mubr.f32.mxu0 0.0
      %2725 = vmatmul.mubr.f32.gmra.mxu0 %v2093
      %v2726 = vpop.f32.mrf.mxu0
      %v2727 = vadd.f32 %v1814, %v2726
      %v2728 = vpop.f32.mrf.mxu0
      %2729 = vmatprep.mubr.f32.mxu0 0.0
      %2730 = vmatmul.mubr.f32.gmra.mxu0 %v2096
      %v2731 = vpop.f32.mrf.mxu0
      %v2732 = vadd.f32 %v1814, %v2731
      %v2733 = vpop.f32.mrf.mxu0
      %2734 = vmatprep.mubr.f32.mxu0 0.0
      %2735 = vmatmul.mubr.f32.gmra.mxu0 %v2099
      %v2736 = vpop.f32.mrf.mxu0
      %v2737 = vadd.f32 %v1814, %v2736
      %v2738 = vpop.f32.mrf.mxu0
      %2739 = vmatprep.mubr.f32.mxu0 0.0
      %2740 = vmatmul.mubr.f32.gmra.mxu0 %v2102
      %v2741 = vpop.f32.mrf.mxu0
      %v2742 = vadd.f32 %v1814, %v2741
      %v2743 = vpop.f32.mrf.mxu0
      %2744 = vmatprep.mubr.f32.mxu0 0.0
      %2745 = vmatmul.mubr.f32.gmra.mxu0 %v2105
      %v2746 = vpop.f32.mrf.mxu0
      %v2747 = vadd.f32 %v1814, %v2746
      %v2748 = vpop.f32.mrf.mxu0
      %2749 = vmatprep.mubr.f32.mxu0 0.0
      %2750 = vmatmul.mubr.f32.gmra.mxu0 %v2108
      %v2751 = vpop.f32.mrf.mxu0
      %v2752 = vadd.f32 %v1814, %v2751
      %v2753 = vpop.f32.mrf.mxu0
      %2754 = vmatprep.mubr.f32.mxu0 0.0
      %2755 = vmatmul.mubr.f32.gmra.mxu0 %v2111
      %v2756 = vpop.f32.mrf.mxu0
      %v2757 = vadd.f32 %v1814, %v2756
      %v2758 = vpop.f32.mrf.mxu0
      %2759 = vmatprep.mubr.f32.mxu0 0.0
      %2760 = vmatmul.mubr.f32.gmra.mxu0 %v2114
      %v2761 = vpop.f32.mrf.mxu0
      %v2762 = vadd.f32 %v1814, %v2761
      %v2763 = vpop.f32.mrf.mxu0
      %2764 = vmatprep.mubr.f32.mxu0 0.0
      %2765 = vmatmul.mubr.f32.gmra.mxu0 %v2117
      %v2766 = vpop.f32.mrf.mxu0
      %v2767 = vadd.f32 %v1814, %v2766
      %v2768 = vpop.f32.mrf.mxu0
      %2769 = vmatprep.mubr.f32.mxu0 0.0
      %2770 = vmatmul.mubr.f32.gmra.mxu0 %v2120
      %v2771 = vpop.f32.mrf.mxu0
      %v2772 = vadd.f32 %v1814, %v2771
      %v2773 = vpop.f32.mrf.mxu0
      %2774 = vmatprep.mubr.f32.mxu0 0.0
      %2775 = vmatmul.mubr.f32.gmra.mxu0 %v2123
      %v2776 = vpop.f32.mrf.mxu0
      %v2777 = vadd.f32 %v1814, %v2776
      %v2778 = vpop.f32.mrf.mxu0
      %2779 = vmatprep.mubr.f32.mxu0 0.0
      %2780 = vmatmul.mubr.f32.gmra.mxu0 %v2126
      %v2781 = vpop.f32.mrf.mxu0
      %v2782 = vadd.f32 %v1814, %v2781
      %v2783 = vpop.f32.mrf.mxu0
      %2784 = vmatprep.mubr.f32.mxu0 0.0
      %2785 = vmatmul.mubr.f32.gmra.mxu0 %v2129
      %v2786 = vpop.f32.mrf.mxu0
      %v2787 = vadd.f32 %v1814, %v2786
      %v2788 = vpop.f32.mrf.mxu0
      %2789 = vmatprep.mubr.f32.mxu0 0.0
      %2790 = vmatmul.mubr.f32.gmra.mxu0 %v2132
      %v2791 = vpop.f32.mrf.mxu0
      %v2792 = vadd.f32 %v1814, %v2791
      %v2793 = vpop.f32.mrf.mxu0
      %2794 = vmatprep.mubr.f32.mxu0 0.0
      %2795 = vmatmul.mubr.f32.gmra.mxu0 %v2135
      %v2796 = vpop.f32.mrf.mxu0
      %v2797 = vadd.f32 %v1814, %v2796
      %v2798 = vpop.f32.mrf.mxu0
      %2799 = vmatprep.mubr.f32.mxu0 0.0
      %2800 = vmatmul.mubr.f32.gmra.mxu0 %v2138
      %v2801 = vpop.f32.mrf.mxu0
      %v2802 = vadd.f32 %v1814, %v2801
      %v2803 = vpop.f32.mrf.mxu0
      %2804 = vmatprep.mubr.f32.mxu0 0.0
      %2805 = vmatmul.mubr.f32.gmra.mxu0 %v2141
      %v2806 = vpop.f32.mrf.mxu0
      %v2807 = vadd.f32 %v1814, %v2806
      %v2808 = vpop.f32.mrf.mxu0
      %2809 = vmatprep.mubr.f32.mxu0 0.0
      %2810 = vmatmul.mubr.f32.gmra.mxu0 %v2144
      %v2811 = vpop.f32.mrf.mxu0
      %v2812 = vadd.f32 %v1814, %v2811
      %v2813 = vpop.f32.mrf.mxu0
      %2814 = vmatprep.mubr.f32.mxu0 0.0
      %2815 = vmatmul.mubr.f32.gmra.mxu0 %v2147
      %v2816 = vpop.f32.mrf.mxu0
      %v2817 = vadd.f32 %v1814, %v2816
      %v2818 = vpop.f32.mrf.mxu0
      %2819 = vmatprep.mubr.f32.mxu0 0.0
      %2820 = vmatmul.mubr.f32.gmra.mxu0 %v2150
      %v2821 = vpop.f32.mrf.mxu0
      %v2822 = vadd.f32 %v1814, %v2821
      %v2823 = vpop.f32.mrf.mxu0
      %2824 = vmatprep.mubr.f32.mxu0 0.0
      %2825 = vmatmul.mubr.f32.gmra.mxu0 %v2153
      %v2826 = vpop.f32.mrf.mxu0
      %v2827 = vadd.f32 %v1814, %v2826
      %v2828 = vpop.f32.mrf.mxu0
      %2829 = vmatprep.mubr.f32.mxu0 0.0
      %2830 = vmatmul.mubr.f32.gmra.mxu0 %v2156
      %v2831 = vpop.f32.mrf.mxu0
      %v2832 = vadd.f32 %v1814, %v2831
      %v2833 = vpop.f32.mrf.mxu0
      %2834 = vmatprep.mubr.f32.mxu0 0.0
      %2835 = vmatmul.mubr.f32.gmra.mxu0 %v2159
      %v2836 = vpop.f32.mrf.mxu0
      %v2837 = vadd.f32 %v1814, %v2836
      %v2838 = vpop.f32.mrf.mxu0
      %2839 = vmatprep.mubr.f32.mxu0 0.0
      %2840 = vmatmul.mubr.f32.gmra.mxu0 %v2162
      %v2841 = vpop.f32.mrf.mxu0
      %v2842 = vadd.f32 %v1814, %v2841
      %v2843 = vpop.f32.mrf.mxu0
      %2844 = vmatprep.mubr.f32.mxu0 0.0
      %2845 = vmatmul.mubr.f32.gmra.mxu0 %v2165
      %v2846 = vpop.f32.mrf.mxu0
      %v2847 = vadd.f32 %v1814, %v2846
      %v2848 = vpop.f32.mrf.mxu0
      %2849 = vmatprep.mubr.f32.mxu0 0.0
      %2850 = vmatmul.mubr.f32.gmra.mxu0 %v2168
      %v2851 = vpop.f32.mrf.mxu0
      %v2852 = vadd.f32 %v1814, %v2851
      %v2853 = vpop.f32.mrf.mxu0
      %2854 = vmatprep.mubr.f32.mxu0 0.0
      %2855 = vmatmul.mubr.f32.gmra.mxu0 %v2171
      %v2856 = vpop.f32.mrf.mxu0
      %v2857 = vadd.f32 %v1814, %v2856
      %v2858 = vpop.f32.mrf.mxu0
      %2859 = vmatprep.mubr.f32.mxu0 0.0
      %2860 = vmatmul.mubr.f32.gmra.mxu0 %v2174
      %v2861 = vpop.f32.mrf.mxu0
      %v2862 = vadd.f32 %v1814, %v2861
      %v2863 = vpop.f32.mrf.mxu0
      %2864 = vmatprep.mubr.f32.mxu0 0.0
      %2865 = vmatmul.mubr.f32.gmra.mxu0 %v2177
      %v2866 = vpop.f32.mrf.mxu0
      %v2867 = vadd.f32 %v1814, %v2866
      %v2868 = vpop.f32.mrf.mxu0
      %2869 = vmatprep.mubr.f32.mxu0 0.0
      %2870 = vmatmul.mubr.f32.gmra.mxu0 %v2180
      %v2871 = vpop.f32.mrf.mxu0
      %v2872 = vadd.f32 %v1814, %v2871
      %v2873 = vpop.f32.mrf.mxu0
      %2874 = vmatprep.mubr.f32.mxu0 0.0
      %2875 = vmatmul.mubr.f32.gmra.mxu0 %v2183
      %v2876 = vpop.f32.mrf.mxu0
      %v2877 = vadd.f32 %v1814, %v2876
      %v2878 = vpop.f32.mrf.mxu0
      %2879 = vmatprep.mubr.f32.mxu0 0.0
      %2880 = vmatmul.mubr.f32.gmra.mxu0 %v2186
      %v2881 = vpop.f32.mrf.mxu0
      %v2882 = vadd.f32 %v1814, %v2881
      %v2883 = vpop.f32.mrf.mxu0
      %2884 = vmatprep.mubr.f32.mxu0 0.0
      %2885 = vmatmul.mubr.f32.gmra.mxu0 %v2189
      %v2886 = vpop.f32.mrf.mxu0
      %v2887 = vadd.f32 %v1814, %v2886
      %v2888 = vpop.f32.mrf.mxu0
      %2889 = vmatprep.mubr.f32.mxu0 0.0
      %2890 = vmatmul.mubr.f32.gmra.mxu0 %v2192
      %v2891 = vpop.f32.mrf.mxu0
      %v2892 = vadd.f32 %v1814, %v2891
      %v2893 = vpop.f32.mrf.mxu0
      %2894 = vmatprep.mubr.f32.mxu0 0.0
      %2895 = vmatmul.mubr.f32.gmra.mxu0 %v2195
      %v2896 = vpop.f32.mrf.mxu0
      %v2897 = vadd.f32 %v1814, %v2896
      %v2898 = vpop.f32.mrf.mxu0
      %2899 = vmatprep.mubr.f32.mxu0 0.0
      %2900 = vmatmul.mubr.f32.gmra.mxu0 %v2198
      %v2901 = vpop.f32.mrf.mxu0
      %v2902 = vadd.f32 %v1814, %v2901
      %v2903 = vpop.f32.mrf.mxu0
      %2904 = vdwg.mxu0
      %v2905 = vld [vmem:[%s306] sm:$0xff]
      %v2906 = vld [vmem:[%s306 + $0x8] sm:$0xff]
      %v2907 = vld [vmem:[%s306 + $0x10] sm:$0xff]
      %v2908 = vld [vmem:[%s306 + $0x18] sm:$0xff]
      %v2909 = vld [vmem:[%s306 + $0x20] sm:$0xff]
      %v2910 = vld [vmem:[%s306 + $0x28] sm:$0xff]
      %v2911 = vld [vmem:[%s306 + $0x30] sm:$0xff]
      %v2912 = vld [vmem:[%s306 + $0x38] sm:$0xff]
      %v2913 = vld [vmem:[%s306 + $0x40] sm:$0xff]
      %v2914 = vld [vmem:[%s306 + $0x48] sm:$0xff]
      %v2915 = vld [vmem:[%s306 + $0x50] sm:$0xff]
      %v2916 = vld [vmem:[%s306 + $0x58] sm:$0xff]
      %v2917 = vld [vmem:[%s306 + $0x60] sm:$0xff]
      %v2918 = vld [vmem:[%s306 + $0x68] sm:$0xff]
      %v2919 = vld [vmem:[%s306 + $0x70] sm:$0xff]
      %v2920 = vld [vmem:[%s306 + $0x78] sm:$0xff]
      %v2921 = vld [vmem:[%s306 + $0x80] sm:$0xff]
      %v2922 = vld [vmem:[%s306 + $0x88] sm:$0xff]
      %v2923 = vld [vmem:[%s306 + $0x90] sm:$0xff]
      %v2924 = vld [vmem:[%s306 + $0x98] sm:$0xff]
      %v2925 = vld [vmem:[%s306 + $0xa0] sm:$0xff]
      %v2926 = vld [vmem:[%s306 + $0xa8] sm:$0xff]
      %v2927 = vld [vmem:[%s306 + $0xb0] sm:$0xff]
      %v2928 = vld [vmem:[%s306 + $0xb8] sm:$0xff]
      %v2929 = vld [vmem:[%s306 + $0xc0] sm:$0xff]
      %v2930 = vld [vmem:[%s306 + $0xc8] sm:$0xff]
      %v2931 = vld [vmem:[%s306 + $0xd0] sm:$0xff]
      %v2932 = vld [vmem:[%s306 + $0xd8] sm:$0xff]
      %v2933 = vld [vmem:[%s306 + $0xe0] sm:$0xff]
      %v2934 = vld [vmem:[%s306 + $0xe8] sm:$0xff]
      %v2935 = vld [vmem:[%s306 + $0xf0] sm:$0xff]
      %v2936 = vld [vmem:[%s306 + $0xf8] sm:$0xff]
      %v2937 = vld [vmem:[%s306 + $0x100] sm:$0xff]
      %v2938 = vld [vmem:[%s306 + $0x108] sm:$0xff]
      %v2939 = vld [vmem:[%s306 + $0x110] sm:$0xff]
      %v2940 = vld [vmem:[%s306 + $0x118] sm:$0xff]
      %v2941 = vld [vmem:[%s306 + $0x120] sm:$0xff]
      %v2942 = vld [vmem:[%s306 + $0x128] sm:$0xff]
      %v2943 = vld [vmem:[%s306 + $0x130] sm:$0xff]
      %v2944 = vld [vmem:[%s306 + $0x138] sm:$0xff]
      %v2945 = vld [vmem:[%s306 + $0x140] sm:$0xff]
      %v2946 = vld [vmem:[%s306 + $0x148] sm:$0xff]
      %v2947 = vld [vmem:[%s306 + $0x150] sm:$0xff]
      %v2948 = vld [vmem:[%s306 + $0x158] sm:$0xff]
      %v2949 = vld [vmem:[%s306 + $0x160] sm:$0xff]
      %v2950 = vld [vmem:[%s306 + $0x168] sm:$0xff]
      %v2951 = vld [vmem:[%s306 + $0x170] sm:$0xff]
      %v2952 = vld [vmem:[%s306 + $0x178] sm:$0xff]
      %v2953 = vld [vmem:[%s306 + $0x180] sm:$0xff]
      %v2954 = vld [vmem:[%s306 + $0x188] sm:$0xff]
      %v2955 = vld [vmem:[%s306 + $0x190] sm:$0xff]
      %v2956 = vld [vmem:[%s306 + $0x198] sm:$0xff]
      %v2957 = vld [vmem:[%s306 + $0x1a0] sm:$0xff]
      %v2958 = vld [vmem:[%s306 + $0x1a8] sm:$0xff]
      %v2959 = vld [vmem:[%s306 + $0x1b0] sm:$0xff]
      %v2960 = vld [vmem:[%s306 + $0x1b8] sm:$0xff]
      %v2961 = vld [vmem:[%s306 + $0x1c0] sm:$0xff]
      %v2962 = vld [vmem:[%s306 + $0x1c8] sm:$0xff]
      %v2963 = vld [vmem:[%s306 + $0x1d0] sm:$0xff]
      %v2964 = vld [vmem:[%s306 + $0x1d8] sm:$0xff]
      %v2965 = vld [vmem:[%s306 + $0x1e0] sm:$0xff]
      %v2966 = vld [vmem:[%s306 + $0x1e8] sm:$0xff]
      %v2967 = vld [vmem:[%s306 + $0x1f0] sm:$0xff]
      %v2968 = vld [vmem:[%s306 + $0x1f8] sm:$0xff]
      %v2969 = vld [vmem:[%s306 + $0x200] sm:$0xff]
      %v2970 = vld [vmem:[%s306 + $0x208] sm:$0xff]
      %v2971 = vld [vmem:[%s306 + $0x210] sm:$0xff]
      %v2972 = vld [vmem:[%s306 + $0x218] sm:$0xff]
      %v2973 = vld [vmem:[%s306 + $0x220] sm:$0xff]
      %v2974 = vld [vmem:[%s306 + $0x228] sm:$0xff]
      %v2975 = vld [vmem:[%s306 + $0x230] sm:$0xff]
      %v2976 = vld [vmem:[%s306 + $0x238] sm:$0xff]
      %v2977 = vld [vmem:[%s306 + $0x240] sm:$0xff]
      %v2978 = vld [vmem:[%s306 + $0x248] sm:$0xff]
      %v2979 = vld [vmem:[%s306 + $0x250] sm:$0xff]
      %v2980 = vld [vmem:[%s306 + $0x258] sm:$0xff]
      %v2981 = vld [vmem:[%s306 + $0x260] sm:$0xff]
      %v2982 = vld [vmem:[%s306 + $0x268] sm:$0xff]
      %v2983 = vld [vmem:[%s306 + $0x270] sm:$0xff]
      %v2984 = vld [vmem:[%s306 + $0x278] sm:$0xff]
      %v2985 = vld [vmem:[%s306 + $0x280] sm:$0xff]
      %v2986 = vld [vmem:[%s306 + $0x288] sm:$0xff]
      %v2987 = vld [vmem:[%s306 + $0x290] sm:$0xff]
      %v2988 = vld [vmem:[%s306 + $0x298] sm:$0xff]
      %v2989 = vld [vmem:[%s306 + $0x2a0] sm:$0xff]
      %v2990 = vld [vmem:[%s306 + $0x2a8] sm:$0xff]
      %v2991 = vld [vmem:[%s306 + $0x2b0] sm:$0xff]
      %v2992 = vld [vmem:[%s306 + $0x2b8] sm:$0xff]
      %v2993 = vld [vmem:[%s306 + $0x2c0] sm:$0xff]
      %v2994 = vld [vmem:[%s306 + $0x2c8] sm:$0xff]
      %v2995 = vld [vmem:[%s306 + $0x2d0] sm:$0xff]
      %v2996 = vld [vmem:[%s306 + $0x2d8] sm:$0xff]
      %v2997 = vld [vmem:[%s306 + $0x2e0] sm:$0xff]
      %v2998 = vld [vmem:[%s306 + $0x2e8] sm:$0xff]
      %v2999 = vld [vmem:[%s306 + $0x2f0] sm:$0xff]
      %v3000 = vld [vmem:[%s306 + $0x2f8] sm:$0xff]
      %v3001 = vld [vmem:[%s306 + $0x300] sm:$0xff]
      %v3002 = vld [vmem:[%s306 + $0x308] sm:$0xff]
      %v3003 = vld [vmem:[%s306 + $0x310] sm:$0xff]
      %v3004 = vld [vmem:[%s306 + $0x318] sm:$0xff]
      %v3005 = vld [vmem:[%s306 + $0x320] sm:$0xff]
      %v3006 = vld [vmem:[%s306 + $0x328] sm:$0xff]
      %v3007 = vld [vmem:[%s306 + $0x330] sm:$0xff]
      %v3008 = vld [vmem:[%s306 + $0x338] sm:$0xff]
      %v3009 = vld [vmem:[%s306 + $0x340] sm:$0xff]
      %v3010 = vld [vmem:[%s306 + $0x348] sm:$0xff]
      %v3011 = vld [vmem:[%s306 + $0x350] sm:$0xff]
      %v3012 = vld [vmem:[%s306 + $0x358] sm:$0xff]
      %v3013 = vld [vmem:[%s306 + $0x360] sm:$0xff]
      %v3014 = vld [vmem:[%s306 + $0x368] sm:$0xff]
      %v3015 = vld [vmem:[%s306 + $0x370] sm:$0xff]
      %v3016 = vld [vmem:[%s306 + $0x378] sm:$0xff]
      %v3017 = vld [vmem:[%s306 + $0x380] sm:$0xff]
      %v3018 = vld [vmem:[%s306 + $0x388] sm:$0xff]
      %v3019 = vld [vmem:[%s306 + $0x390] sm:$0xff]
      %v3020 = vld [vmem:[%s306 + $0x398] sm:$0xff]
      %v3021 = vld [vmem:[%s306 + $0x3a0] sm:$0xff]
      %v3022 = vld [vmem:[%s306 + $0x3a8] sm:$0xff]
      %v3023 = vld [vmem:[%s306 + $0x3b0] sm:$0xff]
      %v3024 = vld [vmem:[%s306 + $0x3b8] sm:$0xff]
      %v3025 = vld [vmem:[%s306 + $0x3c0] sm:$0xff]
      %v3026 = vld [vmem:[%s306 + $0x3c8] sm:$0xff]
      %v3027 = vld [vmem:[%s306 + $0x3d0] sm:$0xff]
      %v3028 = vld [vmem:[%s306 + $0x3d8] sm:$0xff]
      %v3029 = vld [vmem:[%s306 + $0x3e0] sm:$0xff]
      %v3030 = vld [vmem:[%s306 + $0x3e8] sm:$0xff]
      %v3031 = vld [vmem:[%s306 + $0x3f0] sm:$0xff]
      %v3032 = vld [vmem:[%s306 + $0x3f8] sm:$0xff]
      %v3033 = vxor.u32 %v2267, 2147483648
      %v3034 = vxor.u32 %v2272, 2147483648
      %v3035 = vxor.u32 %v2277, 2147483648
      %v3036 = vxor.u32 %v2282, 2147483648
      %v3037 = vxor.u32 %v2287, 2147483648
      %v3038 = vxor.u32 %v2292, 2147483648
      %v3039 = vxor.u32 %v2297, 2147483648
      %v3040 = vxor.u32 %v2302, 2147483648
      %v3041 = vxor.u32 %v2307, 2147483648
      %v3042 = vxor.u32 %v2312, 2147483648
      %v3043 = vxor.u32 %v2317, 2147483648
      %v3044 = vxor.u32 %v2322, 2147483648
      %v3045 = vxor.u32 %v2327, 2147483648
      %v3046 = vxor.u32 %v2332, 2147483648
      %v3047 = vxor.u32 %v2337, 2147483648
      %v3048 = vxor.u32 %v2342, 2147483648
      %v3049 = vxor.u32 %v2347, 2147483648
      %v3050 = vxor.u32 %v2352, 2147483648
      %v3051 = vxor.u32 %v2357, 2147483648
      %v3052 = vxor.u32 %v2362, 2147483648
      %v3053 = vxor.u32 %v2367, 2147483648
      %v3054 = vxor.u32 %v2372, 2147483648
      %v3055 = vxor.u32 %v2377, 2147483648
      %v3056 = vxor.u32 %v2382, 2147483648
      %v3057 = vxor.u32 %v2387, 2147483648
      %v3058 = vxor.u32 %v2392, 2147483648
      %v3059 = vxor.u32 %v2397, 2147483648
      %v3060 = vxor.u32 %v2402, 2147483648
      %v3061 = vxor.u32 %v2407, 2147483648
      %v3062 = vxor.u32 %v2412, 2147483648
      %v3063 = vxor.u32 %v2417, 2147483648
      %v3064 = vxor.u32 %v2422, 2147483648
      %v3065 = vxor.u32 %v2427, 2147483648
      %v3066 = vxor.u32 %v2432, 2147483648
      %v3067 = vxor.u32 %v2437, 2147483648
      %v3068 = vxor.u32 %v2442, 2147483648
      %v3069 = vxor.u32 %v2447, 2147483648
      %v3070 = vxor.u32 %v2452, 2147483648
      %v3071 = vxor.u32 %v2457, 2147483648
      %v3072 = vxor.u32 %v2462, 2147483648
      %v3073 = vxor.u32 %v2467, 2147483648
      %v3074 = vxor.u32 %v2472, 2147483648
      %v3075 = vxor.u32 %v2477, 2147483648
      %v3076 = vxor.u32 %v2482, 2147483648
      %v3077 = vxor.u32 %v2487, 2147483648
      %v3078 = vxor.u32 %v2492, 2147483648
      %v3079 = vxor.u32 %v2497, 2147483648
      %v3080 = vxor.u32 %v2502, 2147483648
      %v3081 = vxor.u32 %v2507, 2147483648
      %v3082 = vxor.u32 %v2512, 2147483648
      %v3083 = vxor.u32 %v2517, 2147483648
      %v3084 = vxor.u32 %v2522, 2147483648
      %v3085 = vxor.u32 %v2527, 2147483648
      %v3086 = vxor.u32 %v2532, 2147483648
      %v3087 = vxor.u32 %v2537, 2147483648
      %v3088 = vxor.u32 %v2542, 2147483648
      %v3089 = vxor.u32 %v2547, 2147483648
      %v3090 = vxor.u32 %v2552, 2147483648
      %v3091 = vxor.u32 %v2557, 2147483648
      %v3092 = vxor.u32 %v2562, 2147483648
      %v3093 = vxor.u32 %v2567, 2147483648
      %v3094 = vxor.u32 %v2572, 2147483648
      %v3095 = vxor.u32 %v2577, 2147483648
      %v3096 = vxor.u32 %v2582, 2147483648
      %v3097 = vxor.u32 %v2587, 2147483648
      %v3098 = vxor.u32 %v2592, 2147483648
      %v3099 = vxor.u32 %v2597, 2147483648
      %v3100 = vxor.u32 %v2602, 2147483648
      %v3101 = vxor.u32 %v2607, 2147483648
      %v3102 = vxor.u32 %v2612, 2147483648
      %v3103 = vxor.u32 %v2617, 2147483648
      %v3104 = vxor.u32 %v2622, 2147483648
      %v3105 = vxor.u32 %v2627, 2147483648
      %v3106 = vxor.u32 %v2632, 2147483648
      %v3107 = vxor.u32 %v2637, 2147483648
      %v3108 = vxor.u32 %v2642, 2147483648
      %v3109 = vxor.u32 %v2647, 2147483648
      %v3110 = vxor.u32 %v2652, 2147483648
      %v3111 = vxor.u32 %v2657, 2147483648
      %v3112 = vxor.u32 %v2662, 2147483648
      %v3113 = vxor.u32 %v2667, 2147483648
      %v3114 = vxor.u32 %v2672, 2147483648
      %v3115 = vxor.u32 %v2677, 2147483648
      %v3116 = vxor.u32 %v2682, 2147483648
      %v3117 = vxor.u32 %v2687, 2147483648
      %v3118 = vxor.u32 %v2692, 2147483648
      %v3119 = vxor.u32 %v2697, 2147483648
      %v3120 = vxor.u32 %v2702, 2147483648
      %v3121 = vxor.u32 %v2707, 2147483648
      %v3122 = vxor.u32 %v2712, 2147483648
      %v3123 = vxor.u32 %v2717, 2147483648
      %v3124 = vxor.u32 %v2722, 2147483648
      %v3125 = vxor.u32 %v2727, 2147483648
      %v3126 = vxor.u32 %v2732, 2147483648
      %v3127 = vxor.u32 %v2737, 2147483648
      %v3128 = vxor.u32 %v2742, 2147483648
      %v3129 = vxor.u32 %v2747, 2147483648
      %v3130 = vxor.u32 %v2752, 2147483648
      %v3131 = vxor.u32 %v2757, 2147483648
      %v3132 = vxor.u32 %v2762, 2147483648
      %v3133 = vxor.u32 %v2767, 2147483648
      %v3134 = vxor.u32 %v2772, 2147483648
      %v3135 = vxor.u32 %v2777, 2147483648
      %v3136 = vxor.u32 %v2782, 2147483648
      %v3137 = vxor.u32 %v2787, 2147483648
      %v3138 = vxor.u32 %v2792, 2147483648
      %v3139 = vxor.u32 %v2797, 2147483648
      %v3140 = vxor.u32 %v2802, 2147483648
      %v3141 = vxor.u32 %v2807, 2147483648
      %v3142 = vxor.u32 %v2812, 2147483648
      %v3143 = vxor.u32 %v2817, 2147483648
      %v3144 = vxor.u32 %v2822, 2147483648
      %v3145 = vxor.u32 %v2827, 2147483648
      %v3146 = vxor.u32 %v2832, 2147483648
      %v3147 = vxor.u32 %v2837, 2147483648
      %v3148 = vxor.u32 %v2842, 2147483648
      %v3149 = vxor.u32 %v2847, 2147483648
      %v3150 = vxor.u32 %v2852, 2147483648
      %v3151 = vxor.u32 %v2857, 2147483648
      %v3152 = vxor.u32 %v2862, 2147483648
      %v3153 = vxor.u32 %v2867, 2147483648
      %v3154 = vxor.u32 %v2872, 2147483648
      %v3155 = vxor.u32 %v2877, 2147483648
      %v3156 = vxor.u32 %v2882, 2147483648
      %v3157 = vxor.u32 %v2887, 2147483648
      %v3158 = vxor.u32 %v2892, 2147483648
      %v3159 = vxor.u32 %v2897, 2147483648
      %v3160 = vxor.u32 %v2902, 2147483648
      %v3161 = vmul.f32 %v3033, 1.442695
      %v3162 = vpow.pop %v3161
      %v3163 = vmul.f32 %v3034, 1.442695
      %v3164 = vpow.pop %v3163
      %v3165 = vmul.f32 %v3035, 1.442695
      %v3166 = vpow.pop %v3165
      %v3167 = vmul.f32 %v3036, 1.442695
      %v3168 = vpow.pop %v3167
      %v3169 = vmul.f32 %v3037, 1.442695
      %v3170 = vpow.pop %v3169
      %v3171 = vmul.f32 %v3038, 1.442695
      %v3172 = vpow.pop %v3171
      %v3173 = vmul.f32 %v3039, 1.442695
      %v3174 = vpow.pop %v3173
      %v3175 = vmul.f32 %v3040, 1.442695
      %v3176 = vpow.pop %v3175
      %v3177 = vmul.f32 %v3041, 1.442695
      %v3178 = vpow.pop %v3177
      %v3179 = vmul.f32 %v3042, 1.442695
      %v3180 = vpow.pop %v3179
      %v3181 = vmul.f32 %v3043, 1.442695
      %v3182 = vpow.pop %v3181
      %v3183 = vmul.f32 %v3044, 1.442695
      %v3184 = vpow.pop %v3183
      %v3185 = vmul.f32 %v3045, 1.442695
      %v3186 = vpow.pop %v3185
      %v3187 = vmul.f32 %v3046, 1.442695
      %v3188 = vpow.pop %v3187
      %v3189 = vmul.f32 %v3047, 1.442695
      %v3190 = vpow.pop %v3189
      %v3191 = vmul.f32 %v3048, 1.442695
      %v3192 = vpow.pop %v3191
      %v3193 = vmul.f32 %v3049, 1.442695
      %v3194 = vpow.pop %v3193
      %v3195 = vmul.f32 %v3050, 1.442695
      %v3196 = vpow.pop %v3195
      %v3197 = vmul.f32 %v3051, 1.442695
      %v3198 = vpow.pop %v3197
      %v3199 = vmul.f32 %v3052, 1.442695
      %v3200 = vpow.pop %v3199
      %v3201 = vmul.f32 %v3053, 1.442695
      %v3202 = vpow.pop %v3201
      %v3203 = vmul.f32 %v3054, 1.442695
      %v3204 = vpow.pop %v3203
      %v3205 = vmul.f32 %v3055, 1.442695
      %v3206 = vpow.pop %v3205
      %v3207 = vmul.f32 %v3056, 1.442695
      %v3208 = vpow.pop %v3207
      %v3209 = vmul.f32 %v3057, 1.442695
      %v3210 = vpow.pop %v3209
      %v3211 = vmul.f32 %v3058, 1.442695
      %v3212 = vpow.pop %v3211
      %v3213 = vmul.f32 %v3059, 1.442695
      %v3214 = vpow.pop %v3213
      %v3215 = vmul.f32 %v3060, 1.442695
      %v3216 = vpow.pop %v3215
      %v3217 = vmul.f32 %v3061, 1.442695
      %v3218 = vpow.pop %v3217
      %v3219 = vmul.f32 %v3062, 1.442695
      %v3220 = vpow.pop %v3219
      %v3221 = vmul.f32 %v3063, 1.442695
      %v3222 = vpow.pop %v3221
      %v3223 = vmul.f32 %v3064, 1.442695
      %v3224 = vpow.pop %v3223
      %v3225 = vmul.f32 %v3065, 1.442695
      %v3226 = vpow.pop %v3225
      %v3227 = vmul.f32 %v3066, 1.442695
      %v3228 = vpow.pop %v3227
      %v3229 = vmul.f32 %v3067, 1.442695
      %v3230 = vpow.pop %v3229
      %v3231 = vmul.f32 %v3068, 1.442695
      %v3232 = vpow.pop %v3231
      %v3233 = vmul.f32 %v3069, 1.442695
      %v3234 = vpow.pop %v3233
      %v3235 = vmul.f32 %v3070, 1.442695
      %v3236 = vpow.pop %v3235
      %v3237 = vmul.f32 %v3071, 1.442695
      %v3238 = vpow.pop %v3237
      %v3239 = vmul.f32 %v3072, 1.442695
      %v3240 = vpow.pop %v3239
      %v3241 = vmul.f32 %v3073, 1.442695
      %v3242 = vpow.pop %v3241
      %v3243 = vmul.f32 %v3074, 1.442695
      %v3244 = vpow.pop %v3243
      %v3245 = vmul.f32 %v3075, 1.442695
      %v3246 = vpow.pop %v3245
      %v3247 = vmul.f32 %v3076, 1.442695
      %v3248 = vpow.pop %v3247
      %v3249 = vmul.f32 %v3077, 1.442695
      %v3250 = vpow.pop %v3249
      %v3251 = vmul.f32 %v3078, 1.442695
      %v3252 = vpow.pop %v3251
      %v3253 = vmul.f32 %v3079, 1.442695
      %v3254 = vpow.pop %v3253
      %v3255 = vmul.f32 %v3080, 1.442695
      %v3256 = vpow.pop %v3255
      %v3257 = vmul.f32 %v3081, 1.442695
      %v3258 = vpow.pop %v3257
      %v3259 = vmul.f32 %v3082, 1.442695
      %v3260 = vpow.pop %v3259
      %v3261 = vmul.f32 %v3083, 1.442695
      %v3262 = vpow.pop %v3261
      %v3263 = vmul.f32 %v3084, 1.442695
      %v3264 = vpow.pop %v3263
      %v3265 = vmul.f32 %v3085, 1.442695
      %v3266 = vpow.pop %v3265
      %v3267 = vmul.f32 %v3086, 1.442695
      %v3268 = vpow.pop %v3267
      %v3269 = vmul.f32 %v3087, 1.442695
      %v3270 = vpow.pop %v3269
      %v3271 = vmul.f32 %v3088, 1.442695
      %v3272 = vpow.pop %v3271
      %v3273 = vmul.f32 %v3089, 1.442695
      %v3274 = vpow.pop %v3273
      %v3275 = vmul.f32 %v3090, 1.442695
      %v3276 = vpow.pop %v3275
      %v3277 = vmul.f32 %v3091, 1.442695
      %v3278 = vpow.pop %v3277
      %v3279 = vmul.f32 %v3092, 1.442695
      %v3280 = vpow.pop %v3279
      %v3281 = vmul.f32 %v3093, 1.442695
      %v3282 = vpow.pop %v3281
      %v3283 = vmul.f32 %v3094, 1.442695
      %v3284 = vpow.pop %v3283
      %v3285 = vmul.f32 %v3095, 1.442695
      %v3286 = vpow.pop %v3285
      %v3287 = vmul.f32 %v3096, 1.442695
      %v3288 = vpow.pop %v3287
      %v3289 = vmul.f32 %v3097, 1.442695
      %v3290 = vpow.pop %v3289
      %v3291 = vmul.f32 %v3098, 1.442695
      %v3292 = vpow.pop %v3291
      %v3293 = vmul.f32 %v3099, 1.442695
      %v3294 = vpow.pop %v3293
      %v3295 = vmul.f32 %v3100, 1.442695
      %v3296 = vpow.pop %v3295
      %v3297 = vmul.f32 %v3101, 1.442695
      %v3298 = vpow.pop %v3297
      %v3299 = vmul.f32 %v3102, 1.442695
      %v3300 = vpow.pop %v3299
      %v3301 = vmul.f32 %v3103, 1.442695
      %v3302 = vpow.pop %v3301
      %v3303 = vmul.f32 %v3104, 1.442695
      %v3304 = vpow.pop %v3303
      %v3305 = vmul.f32 %v3105, 1.442695
      %v3306 = vpow.pop %v3305
      %v3307 = vmul.f32 %v3106, 1.442695
      %v3308 = vpow.pop %v3307
      %v3309 = vmul.f32 %v3107, 1.442695
      %v3310 = vpow.pop %v3309
      %v3311 = vmul.f32 %v3108, 1.442695
      %v3312 = vpow.pop %v3311
      %v3313 = vmul.f32 %v3109, 1.442695
      %v3314 = vpow.pop %v3313
      %v3315 = vmul.f32 %v3110, 1.442695
      %v3316 = vpow.pop %v3315
      %v3317 = vmul.f32 %v3111, 1.442695
      %v3318 = vpow.pop %v3317
      %v3319 = vmul.f32 %v3112, 1.442695
      %v3320 = vpow.pop %v3319
      %v3321 = vmul.f32 %v3113, 1.442695
      %v3322 = vpow.pop %v3321
      %v3323 = vmul.f32 %v3114, 1.442695
      %v3324 = vpow.pop %v3323
      %v3325 = vmul.f32 %v3115, 1.442695
      %v3326 = vpow.pop %v3325
      %v3327 = vmul.f32 %v3116, 1.442695
      %v3328 = vpow.pop %v3327
      %v3329 = vmul.f32 %v3117, 1.442695
      %v3330 = vpow.pop %v3329
      %v3331 = vmul.f32 %v3118, 1.442695
      %v3332 = vpow.pop %v3331
      %v3333 = vmul.f32 %v3119, 1.442695
      %v3334 = vpow.pop %v3333
      %v3335 = vmul.f32 %v3120, 1.442695
      %v3336 = vpow.pop %v3335
      %v3337 = vmul.f32 %v3121, 1.442695
      %v3338 = vpow.pop %v3337
      %v3339 = vmul.f32 %v3122, 1.442695
      %v3340 = vpow.pop %v3339
      %v3341 = vmul.f32 %v3123, 1.442695
      %v3342 = vpow.pop %v3341
      %v3343 = vmul.f32 %v3124, 1.442695
      %v3344 = vpow.pop %v3343
      %v3345 = vmul.f32 %v3125, 1.442695
      %v3346 = vpow.pop %v3345
      %v3347 = vmul.f32 %v3126, 1.442695
      %v3348 = vpow.pop %v3347
      %v3349 = vmul.f32 %v3127, 1.442695
      %v3350 = vpow.pop %v3349
      %v3351 = vmul.f32 %v3128, 1.442695
      %v3352 = vpow.pop %v3351
      %v3353 = vmul.f32 %v3129, 1.442695
      %v3354 = vpow.pop %v3353
      %v3355 = vmul.f32 %v3130, 1.442695
      %v3356 = vpow.pop %v3355
      %v3357 = vmul.f32 %v3131, 1.442695
      %v3358 = vpow.pop %v3357
      %v3359 = vmul.f32 %v3132, 1.442695
      %v3360 = vpow.pop %v3359
      %v3361 = vmul.f32 %v3133, 1.442695
      %v3362 = vpow.pop %v3361
      %v3363 = vmul.f32 %v3134, 1.442695
      %v3364 = vpow.pop %v3363
      %v3365 = vmul.f32 %v3135, 1.442695
      %v3366 = vpow.pop %v3365
      %v3367 = vmul.f32 %v3136, 1.442695
      %v3368 = vpow.pop %v3367
      %v3369 = vmul.f32 %v3137, 1.442695
      %v3370 = vpow.pop %v3369
      %v3371 = vmul.f32 %v3138, 1.442695
      %v3372 = vpow.pop %v3371
      %v3373 = vmul.f32 %v3139, 1.442695
      %v3374 = vpow.pop %v3373
      %v3375 = vmul.f32 %v3140, 1.442695
      %v3376 = vpow.pop %v3375
      %v3377 = vmul.f32 %v3141, 1.442695
      %v3378 = vpow.pop %v3377
      %v3379 = vmul.f32 %v3142, 1.442695
      %v3380 = vpow.pop %v3379
      %v3381 = vmul.f32 %v3143, 1.442695
      %v3382 = vpow.pop %v3381
      %v3383 = vmul.f32 %v3144, 1.442695
      %v3384 = vpow.pop %v3383
      %v3385 = vmul.f32 %v3145, 1.442695
      %v3386 = vpow.pop %v3385
      %v3387 = vmul.f32 %v3146, 1.442695
      %v3388 = vpow.pop %v3387
      %v3389 = vmul.f32 %v3147, 1.442695
      %v3390 = vpow.pop %v3389
      %v3391 = vmul.f32 %v3148, 1.442695
      %v3392 = vpow.pop %v3391
      %v3393 = vmul.f32 %v3149, 1.442695
      %v3394 = vpow.pop %v3393
      %v3395 = vmul.f32 %v3150, 1.442695
      %v3396 = vpow.pop %v3395
      %v3397 = vmul.f32 %v3151, 1.442695
      %v3398 = vpow.pop %v3397
      %v3399 = vmul.f32 %v3152, 1.442695
      %v3400 = vpow.pop %v3399
      %v3401 = vmul.f32 %v3153, 1.442695
      %v3402 = vpow.pop %v3401
      %v3403 = vmul.f32 %v3154, 1.442695
      %v3404 = vpow.pop %v3403
      %v3405 = vmul.f32 %v3155, 1.442695
      %v3406 = vpow.pop %v3405
      %v3407 = vmul.f32 %v3156, 1.442695
      %v3408 = vpow.pop %v3407
      %v3409 = vmul.f32 %v3157, 1.442695
      %v3410 = vpow.pop %v3409
      %v3411 = vmul.f32 %v3158, 1.442695
      %v3412 = vpow.pop %v3411
      %v3413 = vmul.f32 %v3159, 1.442695
      %v3414 = vpow.pop %v3413
      %v3415 = vmul.f32 %v3160, 1.442695
      %v3416 = vpow.pop %v3415
      %v3417 = vadd.f32 %v3162, 1.0
      %v3418 = vadd.f32 %v3164, 1.0
      %v3419 = vadd.f32 %v3166, 1.0
      %v3420 = vadd.f32 %v3168, 1.0
      %v3421 = vadd.f32 %v3170, 1.0
      %v3422 = vadd.f32 %v3172, 1.0
      %v3423 = vadd.f32 %v3174, 1.0
      %v3424 = vadd.f32 %v3176, 1.0
      %v3425 = vadd.f32 %v3178, 1.0
      %v3426 = vadd.f32 %v3180, 1.0
      %v3427 = vadd.f32 %v3182, 1.0
      %v3428 = vadd.f32 %v3184, 1.0
      %v3429 = vadd.f32 %v3186, 1.0
      %v3430 = vadd.f32 %v3188, 1.0
      %v3431 = vadd.f32 %v3190, 1.0
      %v3432 = vadd.f32 %v3192, 1.0
      %v3433 = vadd.f32 %v3194, 1.0
      %v3434 = vadd.f32 %v3196, 1.0
      %v3435 = vadd.f32 %v3198, 1.0
      %v3436 = vadd.f32 %v3200, 1.0
      %v3437 = vadd.f32 %v3202, 1.0
      %v3438 = vadd.f32 %v3204, 1.0
      %v3439 = vadd.f32 %v3206, 1.0
      %v3440 = vadd.f32 %v3208, 1.0
      %v3441 = vadd.f32 %v3210, 1.0
      %v3442 = vadd.f32 %v3212, 1.0
      %v3443 = vadd.f32 %v3214, 1.0
      %v3444 = vadd.f32 %v3216, 1.0
      %v3445 = vadd.f32 %v3218, 1.0
      %v3446 = vadd.f32 %v3220, 1.0
      %v3447 = vadd.f32 %v3222, 1.0
      %v3448 = vadd.f32 %v3224, 1.0
      %v3449 = vadd.f32 %v3226, 1.0
      %v3450 = vadd.f32 %v3228, 1.0
      %v3451 = vadd.f32 %v3230, 1.0
      %v3452 = vadd.f32 %v3232, 1.0
      %v3453 = vadd.f32 %v3234, 1.0
      %v3454 = vadd.f32 %v3236, 1.0
      %v3455 = vadd.f32 %v3238, 1.0
      %v3456 = vadd.f32 %v3240, 1.0
      %v3457 = vadd.f32 %v3242, 1.0
      %v3458 = vadd.f32 %v3244, 1.0
      %v3459 = vadd.f32 %v3246, 1.0
      %v3460 = vadd.f32 %v3248, 1.0
      %v3461 = vadd.f32 %v3250, 1.0
      %v3462 = vadd.f32 %v3252, 1.0
      %v3463 = vadd.f32 %v3254, 1.0
      %v3464 = vadd.f32 %v3256, 1.0
      %v3465 = vadd.f32 %v3258, 1.0
      %v3466 = vadd.f32 %v3260, 1.0
      %v3467 = vadd.f32 %v3262, 1.0
      %v3468 = vadd.f32 %v3264, 1.0
      %v3469 = vadd.f32 %v3266, 1.0
      %v3470 = vadd.f32 %v3268, 1.0
      %v3471 = vadd.f32 %v3270, 1.0
      %v3472 = vadd.f32 %v3272, 1.0
      %v3473 = vadd.f32 %v3274, 1.0
      %v3474 = vadd.f32 %v3276, 1.0
      %v3475 = vadd.f32 %v3278, 1.0
      %v3476 = vadd.f32 %v3280, 1.0
      %v3477 = vadd.f32 %v3282, 1.0
      %v3478 = vadd.f32 %v3284, 1.0
      %v3479 = vadd.f32 %v3286, 1.0
      %v3480 = vadd.f32 %v3288, 1.0
      %v3481 = vadd.f32 %v3290, 1.0
      %v3482 = vadd.f32 %v3292, 1.0
      %v3483 = vadd.f32 %v3294, 1.0
      %v3484 = vadd.f32 %v3296, 1.0
      %v3485 = vadd.f32 %v3298, 1.0
      %v3486 = vadd.f32 %v3300, 1.0
      %v3487 = vadd.f32 %v3302, 1.0
      %v3488 = vadd.f32 %v3304, 1.0
      %v3489 = vadd.f32 %v3306, 1.0
      %v3490 = vadd.f32 %v3308, 1.0
      %v3491 = vadd.f32 %v3310, 1.0
      %v3492 = vadd.f32 %v3312, 1.0
      %v3493 = vadd.f32 %v3314, 1.0
      %v3494 = vadd.f32 %v3316, 1.0
      %v3495 = vadd.f32 %v3318, 1.0
      %v3496 = vadd.f32 %v3320, 1.0
      %v3497 = vadd.f32 %v3322, 1.0
      %v3498 = vadd.f32 %v3324, 1.0
      %v3499 = vadd.f32 %v3326, 1.0
      %v3500 = vadd.f32 %v3328, 1.0
      %v3501 = vadd.f32 %v3330, 1.0
      %v3502 = vadd.f32 %v3332, 1.0
      %v3503 = vadd.f32 %v3334, 1.0
      %v3504 = vadd.f32 %v3336, 1.0
      %v3505 = vadd.f32 %v3338, 1.0
      %v3506 = vadd.f32 %v3340, 1.0
      %v3507 = vadd.f32 %v3342, 1.0
      %v3508 = vadd.f32 %v3344, 1.0
      %v3509 = vadd.f32 %v3346, 1.0
      %v3510 = vadd.f32 %v3348, 1.0
      %v3511 = vadd.f32 %v3350, 1.0
      %v3512 = vadd.f32 %v3352, 1.0
      %v3513 = vadd.f32 %v3354, 1.0
      %v3514 = vadd.f32 %v3356, 1.0
      %v3515 = vadd.f32 %v3358, 1.0
      %v3516 = vadd.f32 %v3360, 1.0
      %v3517 = vadd.f32 %v3362, 1.0
      %v3518 = vadd.f32 %v3364, 1.0
      %v3519 = vadd.f32 %v3366, 1.0
      %v3520 = vadd.f32 %v3368, 1.0
      %v3521 = vadd.f32 %v3370, 1.0
      %v3522 = vadd.f32 %v3372, 1.0
      %v3523 = vadd.f32 %v3374, 1.0
      %v3524 = vadd.f32 %v3376, 1.0
      %v3525 = vadd.f32 %v3378, 1.0
      %v3526 = vadd.f32 %v3380, 1.0
      %v3527 = vadd.f32 %v3382, 1.0
      %v3528 = vadd.f32 %v3384, 1.0
      %v3529 = vadd.f32 %v3386, 1.0
      %v3530 = vadd.f32 %v3388, 1.0
      %v3531 = vadd.f32 %v3390, 1.0
      %v3532 = vadd.f32 %v3392, 1.0
      %v3533 = vadd.f32 %v3394, 1.0
      %v3534 = vadd.f32 %v3396, 1.0
      %v3535 = vadd.f32 %v3398, 1.0
      %v3536 = vadd.f32 %v3400, 1.0
      %v3537 = vadd.f32 %v3402, 1.0
      %v3538 = vadd.f32 %v3404, 1.0
      %v3539 = vadd.f32 %v3406, 1.0
      %v3540 = vadd.f32 %v3408, 1.0
      %v3541 = vadd.f32 %v3410, 1.0
      %v3542 = vadd.f32 %v3412, 1.0
      %v3543 = vadd.f32 %v3414, 1.0
      %v3544 = vadd.f32 %v3416, 1.0
      %v3545 = vrcp.pop %v3417
      %v3546 = vmul.f32 1.0, %v3545
      %v3547 = vrcp.pop %v3418
      %v3548 = vmul.f32 1.0, %v3547
      %v3549 = vrcp.pop %v3419
      %v3550 = vmul.f32 1.0, %v3549
      %v3551 = vrcp.pop %v3420
      %v3552 = vmul.f32 1.0, %v3551
      %v3553 = vrcp.pop %v3421
      %v3554 = vmul.f32 1.0, %v3553
      %v3555 = vrcp.pop %v3422
      %v3556 = vmul.f32 1.0, %v3555
      %v3557 = vrcp.pop %v3423
      %v3558 = vmul.f32 1.0, %v3557
      %v3559 = vrcp.pop %v3424
      %v3560 = vmul.f32 1.0, %v3559
      %v3561 = vrcp.pop %v3425
      %v3562 = vmul.f32 1.0, %v3561
      %v3563 = vrcp.pop %v3426
      %v3564 = vmul.f32 1.0, %v3563
      %v3565 = vrcp.pop %v3427
      %v3566 = vmul.f32 1.0, %v3565
      %v3567 = vrcp.pop %v3428
      %v3568 = vmul.f32 1.0, %v3567
      %v3569 = vrcp.pop %v3429
      %v3570 = vmul.f32 1.0, %v3569
      %v3571 = vrcp.pop %v3430
      %v3572 = vmul.f32 1.0, %v3571
      %v3573 = vrcp.pop %v3431
      %v3574 = vmul.f32 1.0, %v3573
      %v3575 = vrcp.pop %v3432
      %v3576 = vmul.f32 1.0, %v3575
      %v3577 = vrcp.pop %v3433
      %v3578 = vmul.f32 1.0, %v3577
      %v3579 = vrcp.pop %v3434
      %v3580 = vmul.f32 1.0, %v3579
      %v3581 = vrcp.pop %v3435
      %v3582 = vmul.f32 1.0, %v3581
      %v3583 = vrcp.pop %v3436
      %v3584 = vmul.f32 1.0, %v3583
      %v3585 = vrcp.pop %v3437
      %v3586 = vmul.f32 1.0, %v3585
      %v3587 = vrcp.pop %v3438
      %v3588 = vmul.f32 1.0, %v3587
      %v3589 = vrcp.pop %v3439
      %v3590 = vmul.f32 1.0, %v3589
      %v3591 = vrcp.pop %v3440
      %v3592 = vmul.f32 1.0, %v3591
      %v3593 = vrcp.pop %v3441
      %v3594 = vmul.f32 1.0, %v3593
      %v3595 = vrcp.pop %v3442
      %v3596 = vmul.f32 1.0, %v3595
      %v3597 = vrcp.pop %v3443
      %v3598 = vmul.f32 1.0, %v3597
      %v3599 = vrcp.pop %v3444
      %v3600 = vmul.f32 1.0, %v3599
      %v3601 = vrcp.pop %v3445
      %v3602 = vmul.f32 1.0, %v3601
      %v3603 = vrcp.pop %v3446
      %v3604 = vmul.f32 1.0, %v3603
      %v3605 = vrcp.pop %v3447
      %v3606 = vmul.f32 1.0, %v3605
      %v3607 = vrcp.pop %v3448
      %v3608 = vmul.f32 1.0, %v3607
      %v3609 = vrcp.pop %v3449
      %v3610 = vmul.f32 1.0, %v3609
      %v3611 = vrcp.pop %v3450
      %v3612 = vmul.f32 1.0, %v3611
      %v3613 = vrcp.pop %v3451
      %v3614 = vmul.f32 1.0, %v3613
      %v3615 = vrcp.pop %v3452
      %v3616 = vmul.f32 1.0, %v3615
      %v3617 = vrcp.pop %v3453
      %v3618 = vmul.f32 1.0, %v3617
      %v3619 = vrcp.pop %v3454
      %v3620 = vmul.f32 1.0, %v3619
      %v3621 = vrcp.pop %v3455
      %v3622 = vmul.f32 1.0, %v3621
      %v3623 = vrcp.pop %v3456
      %v3624 = vmul.f32 1.0, %v3623
      %v3625 = vrcp.pop %v3457
      %v3626 = vmul.f32 1.0, %v3625
      %v3627 = vrcp.pop %v3458
      %v3628 = vmul.f32 1.0, %v3627
      %v3629 = vrcp.pop %v3459
      %v3630 = vmul.f32 1.0, %v3629
      %v3631 = vrcp.pop %v3460
      %v3632 = vmul.f32 1.0, %v3631
      %v3633 = vrcp.pop %v3461
      %v3634 = vmul.f32 1.0, %v3633
      %v3635 = vrcp.pop %v3462
      %v3636 = vmul.f32 1.0, %v3635
      %v3637 = vrcp.pop %v3463
      %v3638 = vmul.f32 1.0, %v3637
      %v3639 = vrcp.pop %v3464
      %v3640 = vmul.f32 1.0, %v3639
      %v3641 = vrcp.pop %v3465
      %v3642 = vmul.f32 1.0, %v3641
      %v3643 = vrcp.pop %v3466
      %v3644 = vmul.f32 1.0, %v3643
      %v3645 = vrcp.pop %v3467
      %v3646 = vmul.f32 1.0, %v3645
      %v3647 = vrcp.pop %v3468
      %v3648 = vmul.f32 1.0, %v3647
      %v3649 = vrcp.pop %v3469
      %v3650 = vmul.f32 1.0, %v3649
      %v3651 = vrcp.pop %v3470
      %v3652 = vmul.f32 1.0, %v3651
      %v3653 = vrcp.pop %v3471
      %v3654 = vmul.f32 1.0, %v3653
      %v3655 = vrcp.pop %v3472
      %v3656 = vmul.f32 1.0, %v3655
      %v3657 = vrcp.pop %v3473
      %v3658 = vmul.f32 1.0, %v3657
      %v3659 = vrcp.pop %v3474
      %v3660 = vmul.f32 1.0, %v3659
      %v3661 = vrcp.pop %v3475
      %v3662 = vmul.f32 1.0, %v3661
      %v3663 = vrcp.pop %v3476
      %v3664 = vmul.f32 1.0, %v3663
      %v3665 = vrcp.pop %v3477
      %v3666 = vmul.f32 1.0, %v3665
      %v3667 = vrcp.pop %v3478
      %v3668 = vmul.f32 1.0, %v3667
      %v3669 = vrcp.pop %v3479
      %v3670 = vmul.f32 1.0, %v3669
      %v3671 = vrcp.pop %v3480
      %v3672 = vmul.f32 1.0, %v3671
      %v3673 = vrcp.pop %v3481
      %v3674 = vmul.f32 1.0, %v3673
      %v3675 = vrcp.pop %v3482
      %v3676 = vmul.f32 1.0, %v3675
      %v3677 = vrcp.pop %v3483
      %v3678 = vmul.f32 1.0, %v3677
      %v3679 = vrcp.pop %v3484
      %v3680 = vmul.f32 1.0, %v3679
      %v3681 = vrcp.pop %v3485
      %v3682 = vmul.f32 1.0, %v3681
      %v3683 = vrcp.pop %v3486
      %v3684 = vmul.f32 1.0, %v3683
      %v3685 = vrcp.pop %v3487
      %v3686 = vmul.f32 1.0, %v3685
      %v3687 = vrcp.pop %v3488
      %v3688 = vmul.f32 1.0, %v3687
      %v3689 = vrcp.pop %v3489
      %v3690 = vmul.f32 1.0, %v3689
      %v3691 = vrcp.pop %v3490
      %v3692 = vmul.f32 1.0, %v3691
      %v3693 = vrcp.pop %v3491
      %v3694 = vmul.f32 1.0, %v3693
      %v3695 = vrcp.pop %v3492
      %v3696 = vmul.f32 1.0, %v3695
      %v3697 = vrcp.pop %v3493
      %v3698 = vmul.f32 1.0, %v3697
      %v3699 = vrcp.pop %v3494
      %v3700 = vmul.f32 1.0, %v3699
      %v3701 = vrcp.pop %v3495
      %v3702 = vmul.f32 1.0, %v3701
      %v3703 = vrcp.pop %v3496
      %v3704 = vmul.f32 1.0, %v3703
      %v3705 = vrcp.pop %v3497
      %v3706 = vmul.f32 1.0, %v3705
      %v3707 = vrcp.pop %v3498
      %v3708 = vmul.f32 1.0, %v3707
      %v3709 = vrcp.pop %v3499
      %v3710 = vmul.f32 1.0, %v3709
      %v3711 = vrcp.pop %v3500
      %v3712 = vmul.f32 1.0, %v3711
      %v3713 = vrcp.pop %v3501
      %v3714 = vmul.f32 1.0, %v3713
      %v3715 = vrcp.pop %v3502
      %v3716 = vmul.f32 1.0, %v3715
      %v3717 = vrcp.pop %v3503
      %v3718 = vmul.f32 1.0, %v3717
      %v3719 = vrcp.pop %v3504
      %v3720 = vmul.f32 1.0, %v3719
      %v3721 = vrcp.pop %v3505
      %v3722 = vmul.f32 1.0, %v3721
      %v3723 = vrcp.pop %v3506
      %v3724 = vmul.f32 1.0, %v3723
      %v3725 = vrcp.pop %v3507
      %v3726 = vmul.f32 1.0, %v3725
      %v3727 = vrcp.pop %v3508
      %v3728 = vmul.f32 1.0, %v3727
      %v3729 = vrcp.pop %v3509
      %v3730 = vmul.f32 1.0, %v3729
      %v3731 = vrcp.pop %v3510
      %v3732 = vmul.f32 1.0, %v3731
      %v3733 = vrcp.pop %v3511
      %v3734 = vmul.f32 1.0, %v3733
      %v3735 = vrcp.pop %v3512
      %v3736 = vmul.f32 1.0, %v3735
      %v3737 = vrcp.pop %v3513
      %v3738 = vmul.f32 1.0, %v3737
      %v3739 = vrcp.pop %v3514
      %v3740 = vmul.f32 1.0, %v3739
      %v3741 = vrcp.pop %v3515
      %v3742 = vmul.f32 1.0, %v3741
      %v3743 = vrcp.pop %v3516
      %v3744 = vmul.f32 1.0, %v3743
      %v3745 = vrcp.pop %v3517
      %v3746 = vmul.f32 1.0, %v3745
      %v3747 = vrcp.pop %v3518
      %v3748 = vmul.f32 1.0, %v3747
      %v3749 = vrcp.pop %v3519
      %v3750 = vmul.f32 1.0, %v3749
      %v3751 = vrcp.pop %v3520
      %v3752 = vmul.f32 1.0, %v3751
      %v3753 = vrcp.pop %v3521
      %v3754 = vmul.f32 1.0, %v3753
      %v3755 = vrcp.pop %v3522
      %v3756 = vmul.f32 1.0, %v3755
      %v3757 = vrcp.pop %v3523
      %v3758 = vmul.f32 1.0, %v3757
      %v3759 = vrcp.pop %v3524
      %v3760 = vmul.f32 1.0, %v3759
      %v3761 = vrcp.pop %v3525
      %v3762 = vmul.f32 1.0, %v3761
      %v3763 = vrcp.pop %v3526
      %v3764 = vmul.f32 1.0, %v3763
      %v3765 = vrcp.pop %v3527
      %v3766 = vmul.f32 1.0, %v3765
      %v3767 = vrcp.pop %v3528
      %v3768 = vmul.f32 1.0, %v3767
      %v3769 = vrcp.pop %v3529
      %v3770 = vmul.f32 1.0, %v3769
      %v3771 = vrcp.pop %v3530
      %v3772 = vmul.f32 1.0, %v3771
      %v3773 = vrcp.pop %v3531
      %v3774 = vmul.f32 1.0, %v3773
      %v3775 = vrcp.pop %v3532
      %v3776 = vmul.f32 1.0, %v3775
      %v3777 = vrcp.pop %v3533
      %v3778 = vmul.f32 1.0, %v3777
      %v3779 = vrcp.pop %v3534
      %v3780 = vmul.f32 1.0, %v3779
      %v3781 = vrcp.pop %v3535
      %v3782 = vmul.f32 1.0, %v3781
      %v3783 = vrcp.pop %v3536
      %v3784 = vmul.f32 1.0, %v3783
      %v3785 = vrcp.pop %v3537
      %v3786 = vmul.f32 1.0, %v3785
      %v3787 = vrcp.pop %v3538
      %v3788 = vmul.f32 1.0, %v3787
      %v3789 = vrcp.pop %v3539
      %v3790 = vmul.f32 1.0, %v3789
      %v3791 = vrcp.pop %v3540
      %v3792 = vmul.f32 1.0, %v3791
      %v3793 = vrcp.pop %v3541
      %v3794 = vmul.f32 1.0, %v3793
      %v3795 = vrcp.pop %v3542
      %v3796 = vmul.f32 1.0, %v3795
      %v3797 = vrcp.pop %v3543
      %v3798 = vmul.f32 1.0, %v3797
      %v3799 = vrcp.pop %v3544
      %v3800 = vmul.f32 1.0, %v3799
      %v3801 = vmul.f32 %v2905, %v3546
      %v3802 = vmul.f32 %v2906, %v3548
      %v3803 = vmul.f32 %v2907, %v3550
      %v3804 = vmul.f32 %v2908, %v3552
      %v3805 = vmul.f32 %v2909, %v3554
      %v3806 = vmul.f32 %v2910, %v3556
      %v3807 = vmul.f32 %v2911, %v3558
      %v3808 = vmul.f32 %v2912, %v3560
      %v3809 = vmul.f32 %v2913, %v3562
      %v3810 = vmul.f32 %v2914, %v3564
      %v3811 = vmul.f32 %v2915, %v3566
      %v3812 = vmul.f32 %v2916, %v3568
      %v3813 = vmul.f32 %v2917, %v3570
      %v3814 = vmul.f32 %v2918, %v3572
      %v3815 = vmul.f32 %v2919, %v3574
      %v3816 = vmul.f32 %v2920, %v3576
      %v3817 = vmul.f32 %v2921, %v3578
      %v3818 = vmul.f32 %v2922, %v3580
      %v3819 = vmul.f32 %v2923, %v3582
      %v3820 = vmul.f32 %v2924, %v3584
      %v3821 = vmul.f32 %v2925, %v3586
      %v3822 = vmul.f32 %v2926, %v3588
      %v3823 = vmul.f32 %v2927, %v3590
      %v3824 = vmul.f32 %v2928, %v3592
      %v3825 = vmul.f32 %v2929, %v3594
      %v3826 = vmul.f32 %v2930, %v3596
      %v3827 = vmul.f32 %v2931, %v3598
      %v3828 = vmul.f32 %v2932, %v3600
      %v3829 = vmul.f32 %v2933, %v3602
      %v3830 = vmul.f32 %v2934, %v3604
      %v3831 = vmul.f32 %v2935, %v3606
      %v3832 = vmul.f32 %v2936, %v3608
      %v3833 = vmul.f32 %v2937, %v3610
      %v3834 = vmul.f32 %v2938, %v3612
      %v3835 = vmul.f32 %v2939, %v3614
      %v3836 = vmul.f32 %v2940, %v3616
      %v3837 = vmul.f32 %v2941, %v3618
      %v3838 = vmul.f32 %v2942, %v3620
      %v3839 = vmul.f32 %v2943, %v3622
      %v3840 = vmul.f32 %v2944, %v3624
      %v3841 = vmul.f32 %v2945, %v3626
      %v3842 = vmul.f32 %v2946, %v3628
      %v3843 = vmul.f32 %v2947, %v3630
      %v3844 = vmul.f32 %v2948, %v3632
      %v3845 = vmul.f32 %v2949, %v3634
      %v3846 = vmul.f32 %v2950, %v3636
      %v3847 = vmul.f32 %v2951, %v3638
      %v3848 = vmul.f32 %v2952, %v3640
      %v3849 = vmul.f32 %v2953, %v3642
      %v3850 = vmul.f32 %v2954, %v3644
      %v3851 = vmul.f32 %v2955, %v3646
      %v3852 = vmul.f32 %v2956, %v3648
      %v3853 = vmul.f32 %v2957, %v3650
      %v3854 = vmul.f32 %v2958, %v3652
      %v3855 = vmul.f32 %v2959, %v3654
      %v3856 = vmul.f32 %v2960, %v3656
      %v3857 = vmul.f32 %v2961, %v3658
      %v3858 = vmul.f32 %v2962, %v3660
      %v3859 = vmul.f32 %v2963, %v3662
      %v3860 = vmul.f32 %v2964, %v3664
      %v3861 = vmul.f32 %v2965, %v3666
      %v3862 = vmul.f32 %v2966, %v3668
      %v3863 = vmul.f32 %v2967, %v3670
      %v3864 = vmul.f32 %v2968, %v3672
      %v3865 = vmul.f32 %v2969, %v3674
      %v3866 = vmul.f32 %v2970, %v3676
      %v3867 = vmul.f32 %v2971, %v3678
      %v3868 = vmul.f32 %v2972, %v3680
      %v3869 = vmul.f32 %v2973, %v3682
      %v3870 = vmul.f32 %v2974, %v3684
      %v3871 = vmul.f32 %v2975, %v3686
      %v3872 = vmul.f32 %v2976, %v3688
      %v3873 = vmul.f32 %v2977, %v3690
      %v3874 = vmul.f32 %v2978, %v3692
      %v3875 = vmul.f32 %v2979, %v3694
      %v3876 = vmul.f32 %v2980, %v3696
      %v3877 = vmul.f32 %v2981, %v3698
      %v3878 = vmul.f32 %v2982, %v3700
      %v3879 = vmul.f32 %v2983, %v3702
      %v3880 = vmul.f32 %v2984, %v3704
      %v3881 = vmul.f32 %v2985, %v3706
      %v3882 = vmul.f32 %v2986, %v3708
      %v3883 = vmul.f32 %v2987, %v3710
      %v3884 = vmul.f32 %v2988, %v3712
      %v3885 = vmul.f32 %v2989, %v3714
      %v3886 = vmul.f32 %v2990, %v3716
      %v3887 = vmul.f32 %v2991, %v3718
      %v3888 = vmul.f32 %v2992, %v3720
      %v3889 = vmul.f32 %v2993, %v3722
      %v3890 = vmul.f32 %v2994, %v3724
      %v3891 = vmul.f32 %v2995, %v3726
      %v3892 = vmul.f32 %v2996, %v3728
      %v3893 = vmul.f32 %v2997, %v3730
      %v3894 = vmul.f32 %v2998, %v3732
      %v3895 = vmul.f32 %v2999, %v3734
      %v3896 = vmul.f32 %v3000, %v3736
      %v3897 = vmul.f32 %v3001, %v3738
      %v3898 = vmul.f32 %v3002, %v3740
      %v3899 = vmul.f32 %v3003, %v3742
      %v3900 = vmul.f32 %v3004, %v3744
      %v3901 = vmul.f32 %v3005, %v3746
      %v3902 = vmul.f32 %v3006, %v3748
      %v3903 = vmul.f32 %v3007, %v3750
      %v3904 = vmul.f32 %v3008, %v3752
      %v3905 = vmul.f32 %v3009, %v3754
      %v3906 = vmul.f32 %v3010, %v3756
      %v3907 = vmul.f32 %v3011, %v3758
      %v3908 = vmul.f32 %v3012, %v3760
      %v3909 = vmul.f32 %v3013, %v3762
      %v3910 = vmul.f32 %v3014, %v3764
      %v3911 = vmul.f32 %v3015, %v3766
      %v3912 = vmul.f32 %v3016, %v3768
      %v3913 = vmul.f32 %v3017, %v3770
      %v3914 = vmul.f32 %v3018, %v3772
      %v3915 = vmul.f32 %v3019, %v3774
      %v3916 = vmul.f32 %v3020, %v3776
      %v3917 = vmul.f32 %v3021, %v3778
      %v3918 = vmul.f32 %v3022, %v3780
      %v3919 = vmul.f32 %v3023, %v3782
      %v3920 = vmul.f32 %v3024, %v3784
      %v3921 = vmul.f32 %v3025, %v3786
      %v3922 = vmul.f32 %v3026, %v3788
      %v3923 = vmul.f32 %v3027, %v3790
      %v3924 = vmul.f32 %v3028, %v3792
      %v3925 = vmul.f32 %v3029, %v3794
      %v3926 = vmul.f32 %v3030, %v3796
      %v3927 = vmul.f32 %v3031, %v3798
      %v3928 = vmul.f32 %v3032, %v3800
      %vm3929 = vcmask 130048
      %3930 = vst.msk [vmem:[%s324] sm:$0xff] %vm3929, %v3801
      %3931 = vst.msk [vmem:[%s324 + $0x8] sm:$0xff] %vm3929, %v3802
      %3932 = vst.msk [vmem:[%s324 + $0x10] sm:$0xff] %vm3929, %v3803
      %3933 = vst.msk [vmem:[%s324 + $0x18] sm:$0xff] %vm3929, %v3804
      %3934 = vst.msk [vmem:[%s324 + $0x20] sm:$0xff] %vm3929, %v3805
      %3935 = vst.msk [vmem:[%s324 + $0x28] sm:$0xff] %vm3929, %v3806
      %3936 = vst.msk [vmem:[%s324 + $0x30] sm:$0xff] %vm3929, %v3807
      %3937 = vst.msk [vmem:[%s324 + $0x38] sm:$0xff] %vm3929, %v3808
      %3938 = vst.msk [vmem:[%s324 + $0x40] sm:$0xff] %vm3929, %v3809
      %3939 = vst.msk [vmem:[%s324 + $0x48] sm:$0xff] %vm3929, %v3810
      %3940 = vst.msk [vmem:[%s324 + $0x50] sm:$0xff] %vm3929, %v3811
      %3941 = vst.msk [vmem:[%s324 + $0x58] sm:$0xff] %vm3929, %v3812
      %3942 = vst.msk [vmem:[%s324 + $0x60] sm:$0xff] %vm3929, %v3813
      %3943 = vst.msk [vmem:[%s324 + $0x68] sm:$0xff] %vm3929, %v3814
      %3944 = vst.msk [vmem:[%s324 + $0x70] sm:$0xff] %vm3929, %v3815
      %3945 = vst.msk [vmem:[%s324 + $0x78] sm:$0xff] %vm3929, %v3816
      %3946 = vst.msk [vmem:[%s324 + $0x80] sm:$0xff] %vm3929, %v3817
      %3947 = vst.msk [vmem:[%s324 + $0x88] sm:$0xff] %vm3929, %v3818
      %3948 = vst.msk [vmem:[%s324 + $0x90] sm:$0xff] %vm3929, %v3819
      %3949 = vst.msk [vmem:[%s324 + $0x98] sm:$0xff] %vm3929, %v3820
      %3950 = vst.msk [vmem:[%s324 + $0xa0] sm:$0xff] %vm3929, %v3821
      %3951 = vst.msk [vmem:[%s324 + $0xa8] sm:$0xff] %vm3929, %v3822
      %3952 = vst.msk [vmem:[%s324 + $0xb0] sm:$0xff] %vm3929, %v3823
      %3953 = vst.msk [vmem:[%s324 + $0xb8] sm:$0xff] %vm3929, %v3824
      %3954 = vst.msk [vmem:[%s324 + $0xc0] sm:$0xff] %vm3929, %v3825
      %3955 = vst.msk [vmem:[%s324 + $0xc8] sm:$0xff] %vm3929, %v3826
      %3956 = vst.msk [vmem:[%s324 + $0xd0] sm:$0xff] %vm3929, %v3827
      %3957 = vst.msk [vmem:[%s324 + $0xd8] sm:$0xff] %vm3929, %v3828
      %3958 = vst.msk [vmem:[%s324 + $0xe0] sm:$0xff] %vm3929, %v3829
      %3959 = vst.msk [vmem:[%s324 + $0xe8] sm:$0xff] %vm3929, %v3830
      %3960 = vst.msk [vmem:[%s324 + $0xf0] sm:$0xff] %vm3929, %v3831
      %3961 = vst.msk [vmem:[%s324 + $0xf8] sm:$0xff] %vm3929, %v3832
      %3962 = vst.msk [vmem:[%s324 + $0x100] sm:$0xff] %vm3929, %v3833
      %3963 = vst.msk [vmem:[%s324 + $0x108] sm:$0xff] %vm3929, %v3834
      %3964 = vst.msk [vmem:[%s324 + $0x110] sm:$0xff] %vm3929, %v3835
      %3965 = vst.msk [vmem:[%s324 + $0x118] sm:$0xff] %vm3929, %v3836
      %3966 = vst.msk [vmem:[%s324 + $0x120] sm:$0xff] %vm3929, %v3837
      %3967 = vst.msk [vmem:[%s324 + $0x128] sm:$0xff] %vm3929, %v3838
      %3968 = vst.msk [vmem:[%s324 + $0x130] sm:$0xff] %vm3929, %v3839
      %3969 = vst.msk [vmem:[%s324 + $0x138] sm:$0xff] %vm3929, %v3840
      %3970 = vst.msk [vmem:[%s324 + $0x140] sm:$0xff] %vm3929, %v3841
      %3971 = vst.msk [vmem:[%s324 + $0x148] sm:$0xff] %vm3929, %v3842
      %3972 = vst.msk [vmem:[%s324 + $0x150] sm:$0xff] %vm3929, %v3843
      %3973 = vst.msk [vmem:[%s324 + $0x158] sm:$0xff] %vm3929, %v3844
      %3974 = vst.msk [vmem:[%s324 + $0x160] sm:$0xff] %vm3929, %v3845
      %3975 = vst.msk [vmem:[%s324 + $0x168] sm:$0xff] %vm3929, %v3846
      %3976 = vst.msk [vmem:[%s324 + $0x170] sm:$0xff] %vm3929, %v3847
      %3977 = vst.msk [vmem:[%s324 + $0x178] sm:$0xff] %vm3929, %v3848
      %3978 = vst.msk [vmem:[%s324 + $0x180] sm:$0xff] %vm3929, %v3849
      %3979 = vst.msk [vmem:[%s324 + $0x188] sm:$0xff] %vm3929, %v3850
      %3980 = vst.msk [vmem:[%s324 + $0x190] sm:$0xff] %vm3929, %v3851
      %3981 = vst.msk [vmem:[%s324 + $0x198] sm:$0xff] %vm3929, %v3852
      %3982 = vst.msk [vmem:[%s324 + $0x1a0] sm:$0xff] %vm3929, %v3853
      %3983 = vst.msk [vmem:[%s324 + $0x1a8] sm:$0xff] %vm3929, %v3854
      %3984 = vst.msk [vmem:[%s324 + $0x1b0] sm:$0xff] %vm3929, %v3855
      %3985 = vst.msk [vmem:[%s324 + $0x1b8] sm:$0xff] %vm3929, %v3856
      %3986 = vst.msk [vmem:[%s324 + $0x1c0] sm:$0xff] %vm3929, %v3857
      %3987 = vst.msk [vmem:[%s324 + $0x1c8] sm:$0xff] %vm3929, %v3858
      %3988 = vst.msk [vmem:[%s324 + $0x1d0] sm:$0xff] %vm3929, %v3859
      %3989 = vst.msk [vmem:[%s324 + $0x1d8] sm:$0xff] %vm3929, %v3860
      %3990 = vst.msk [vmem:[%s324 + $0x1e0] sm:$0xff] %vm3929, %v3861
      %3991 = vst.msk [vmem:[%s324 + $0x1e8] sm:$0xff] %vm3929, %v3862
      %3992 = vst.msk [vmem:[%s324 + $0x1f0] sm:$0xff] %vm3929, %v3863
      %3993 = vst.msk [vmem:[%s324 + $0x1f8] sm:$0xff] %vm3929, %v3864
      %3994 = vst.msk [vmem:[%s324 + $0x200] sm:$0xff] %vm3929, %v3865
      %3995 = vst.msk [vmem:[%s324 + $0x208] sm:$0xff] %vm3929, %v3866
      %3996 = vst.msk [vmem:[%s324 + $0x210] sm:$0xff] %vm3929, %v3867
      %3997 = vst.msk [vmem:[%s324 + $0x218] sm:$0xff] %vm3929, %v3868
      %3998 = vst.msk [vmem:[%s324 + $0x220] sm:$0xff] %vm3929, %v3869
      %3999 = vst.msk [vmem:[%s324 + $0x228] sm:$0xff] %vm3929, %v3870
      %4000 = vst.msk [vmem:[%s324 + $0x230] sm:$0xff] %vm3929, %v3871
      %4001 = vst.msk [vmem:[%s324 + $0x238] sm:$0xff] %vm3929, %v3872
      %4002 = vst.msk [vmem:[%s324 + $0x240] sm:$0xff] %vm3929, %v3873
      %4003 = vst.msk [vmem:[%s324 + $0x248] sm:$0xff] %vm3929, %v3874
      %4004 = vst.msk [vmem:[%s324 + $0x250] sm:$0xff] %vm3929, %v3875
      %4005 = vst.msk [vmem:[%s324 + $0x258] sm:$0xff] %vm3929, %v3876
      %4006 = vst.msk [vmem:[%s324 + $0x260] sm:$0xff] %vm3929, %v3877
      %4007 = vst.msk [vmem:[%s324 + $0x268] sm:$0xff] %vm3929, %v3878
      %4008 = vst.msk [vmem:[%s324 + $0x270] sm:$0xff] %vm3929, %v3879
      %4009 = vst.msk [vmem:[%s324 + $0x278] sm:$0xff] %vm3929, %v3880
      %4010 = vst.msk [vmem:[%s324 + $0x280] sm:$0xff] %vm3929, %v3881
      %4011 = vst.msk [vmem:[%s324 + $0x288] sm:$0xff] %vm3929, %v3882
      %4012 = vst.msk [vmem:[%s324 + $0x290] sm:$0xff] %vm3929, %v3883
      %4013 = vst.msk [vmem:[%s324 + $0x298] sm:$0xff] %vm3929, %v3884
      %4014 = vst.msk [vmem:[%s324 + $0x2a0] sm:$0xff] %vm3929, %v3885
      %4015 = vst.msk [vmem:[%s324 + $0x2a8] sm:$0xff] %vm3929, %v3886
      %4016 = vst.msk [vmem:[%s324 + $0x2b0] sm:$0xff] %vm3929, %v3887
      %4017 = vst.msk [vmem:[%s324 + $0x2b8] sm:$0xff] %vm3929, %v3888
      %4018 = vst.msk [vmem:[%s324 + $0x2c0] sm:$0xff] %vm3929, %v3889
      %4019 = vst.msk [vmem:[%s324 + $0x2c8] sm:$0xff] %vm3929, %v3890
      %4020 = vst.msk [vmem:[%s324 + $0x2d0] sm:$0xff] %vm3929, %v3891
      %4021 = vst.msk [vmem:[%s324 + $0x2d8] sm:$0xff] %vm3929, %v3892
      %4022 = vst.msk [vmem:[%s324 + $0x2e0] sm:$0xff] %vm3929, %v3893
      %4023 = vst.msk [vmem:[%s324 + $0x2e8] sm:$0xff] %vm3929, %v3894
      %4024 = vst.msk [vmem:[%s324 + $0x2f0] sm:$0xff] %vm3929, %v3895
      %4025 = vst.msk [vmem:[%s324 + $0x2f8] sm:$0xff] %vm3929, %v3896
      %4026 = vst.msk [vmem:[%s324 + $0x300] sm:$0xff] %vm3929, %v3897
      %4027 = vst.msk [vmem:[%s324 + $0x308] sm:$0xff] %vm3929, %v3898
      %4028 = vst.msk [vmem:[%s324 + $0x310] sm:$0xff] %vm3929, %v3899
      %4029 = vst.msk [vmem:[%s324 + $0x318] sm:$0xff] %vm3929, %v3900
      %4030 = vst.msk [vmem:[%s324 + $0x320] sm:$0xff] %vm3929, %v3901
      %4031 = vst.msk [vmem:[%s324 + $0x328] sm:$0xff] %vm3929, %v3902
      %4032 = vst.msk [vmem:[%s324 + $0x330] sm:$0xff] %vm3929, %v3903
      %4033 = vst.msk [vmem:[%s324 + $0x338] sm:$0xff] %vm3929, %v3904
      %4034 = vst.msk [vmem:[%s324 + $0x340] sm:$0xff] %vm3929, %v3905
      %4035 = vst.msk [vmem:[%s324 + $0x348] sm:$0xff] %vm3929, %v3906
      %4036 = vst.msk [vmem:[%s324 + $0x350] sm:$0xff] %vm3929, %v3907
      %4037 = vst.msk [vmem:[%s324 + $0x358] sm:$0xff] %vm3929, %v3908
      %4038 = vst.msk [vmem:[%s324 + $0x360] sm:$0xff] %vm3929, %v3909
      %4039 = vst.msk [vmem:[%s324 + $0x368] sm:$0xff] %vm3929, %v3910
      %4040 = vst.msk [vmem:[%s324 + $0x370] sm:$0xff] %vm3929, %v3911
      %4041 = vst.msk [vmem:[%s324 + $0x378] sm:$0xff] %vm3929, %v3912
      %4042 = vst.msk [vmem:[%s324 + $0x380] sm:$0xff] %vm3929, %v3913
      %4043 = vst.msk [vmem:[%s324 + $0x388] sm:$0xff] %vm3929, %v3914
      %4044 = vst.msk [vmem:[%s324 + $0x390] sm:$0xff] %vm3929, %v3915
      %4045 = vst.msk [vmem:[%s324 + $0x398] sm:$0xff] %vm3929, %v3916
      %4046 = vst.msk [vmem:[%s324 + $0x3a0] sm:$0xff] %vm3929, %v3917
      %4047 = vst.msk [vmem:[%s324 + $0x3a8] sm:$0xff] %vm3929, %v3918
      %4048 = vst.msk [vmem:[%s324 + $0x3b0] sm:$0xff] %vm3929, %v3919
      %4049 = vst.msk [vmem:[%s324 + $0x3b8] sm:$0xff] %vm3929, %v3920
      %4050 = vst.msk [vmem:[%s324 + $0x3c0] sm:$0xff] %vm3929, %v3921
      %4051 = vst.msk [vmem:[%s324 + $0x3c8] sm:$0xff] %vm3929, %v3922
      %4052 = vst.msk [vmem:[%s324 + $0x3d0] sm:$0xff] %vm3929, %v3923
      %4053 = vst.msk [vmem:[%s324 + $0x3d8] sm:$0xff] %vm3929, %v3924
      %4054 = vst.msk [vmem:[%s324 + $0x3e0] sm:$0xff] %vm3929, %v3925
      %4055 = vst.msk [vmem:[%s324 + $0x3e8] sm:$0xff] %vm3929, %v3926
      %4056 = vst.msk [vmem:[%s324 + $0x3f0] sm:$0xff] %vm3929, %v3927
      %4057 = vst.msk [vmem:[%s324 + $0x3f8] sm:$0xff] %vm3929, %v3928
      %s4058 = smul.u32 128, %s18
      %p4059 = scmp.lt.s32.totalorder %s4058, 255
      %s4060 = scalar_select %p4059, %s4058, 255
      %s4061 = smul.addr %s4060, 8
      %s4062 = scalar_lea.vmem %s7, %s4061
      // Predicated region
      $region49: #{esa_forward.13} parent=47 // pred_check
        %p4063 = pneg %p198
      $region50: #{esa_forward.13} parent=47 // pred_check_branch
        %4065 = sbr.rel (%p4063) target = $region52
      $region51: #{esa_forward.13} parent=47 // pred_region
        %s4066 = smul.u32 128, %s18
      $region52: #{esa_forward.13} parent=47 // pred_fallthru
        _
    $region48: #{esa_forward.13} parent=5 // pred_fallthru
      _
    %p4067 = scmp.le.s32.totalorder 2, %s13
    // Predicated region
    $region53: #{esa_forward.13} parent=5 // pred_check
      %p4068 = pneg %p4067
    $region54: #{esa_forward.13} parent=5 // pred_check_branch
      %4070 = sbr.rel (%p4068) target = $region56
    $region55: #{esa_forward.13} parent=5 // pred_region
      %s4071 = ssub.s32 %s13, 2
      // Predicated region
      $region57: #{esa_forward.13} parent=55 // pred_check
        %p4072 = pneg %p204
      $region58: #{esa_forward.13} parent=55 // pred_check_branch
        %4074 = sbr.rel (%p4072) target = $region60
      $region59: #{esa_forward.13} parent=55 // pred_region
        %s4075 = smul.u32 128, %s19
        %p4076 = scmp.lt.s32.totalorder %s4075, 255
        %s4077 = scalar_select %p4076, %s4075, 255
        %s4078 = smul.addr %s4077, 8
        %s4079 = scalar_lea.vmem %s7, %s4078
      $region60: #{esa_forward.13} parent=55 // pred_fallthru
        _
    $region56: #{esa_forward.13} parent=5 // pred_fallthru
      _
  $region6: #{esa_forward.13} parent=0 // loop_footer
    %s17 = sadd.s32 1, %s13
  $region7: #{esa_forward.13} parent=0 // loop_footer_branch
    %12 = sbr.rel target = $region3
  $region8: #{esa_forward.13} parent=0 // loop_exit
    _

</llo_original>
